<compile_context>
chip_gen: v6e
topology: v6e:2x2x1
jax: 0.10.0
libtpu: 0.0.40
codegen_flags: <defaults>
</compile_context>

<pallas_src>
import functools

import jax
import jax.numpy as jnp
import numpy as np
from jax import lax
from jax.experimental import pallas as pl
from jax.experimental.pallas import tpu as pltpu

C1, C2, HID = 32, 64, 128   # conv1 out-ch, conv2 out-ch, fc hidden
K1 = 16                     # conv1 im2col contraction (9 taps zero-padded to 16)


# ----------------------------------------------------------------------------
# Fused kernel: conv1 -> conv2 -> fc -> action_head -> num_actions mask
# ----------------------------------------------------------------------------
def actor_kernel(na_ref,                                        # scalar prefetch
                 p1_ref, w1_ref, b1_ref, w2_ref, b2_ref,
                 wfc_ref, bfc_ref, wh_ref, bh_ref,              # inputs
                 logits_ref,                                    # output
                 h1pad_ref):                                    # VMEM scratch
    H, W, BT, KT = p1_ref.shape
    HW = H * W
    c1 = w1_ref.shape[1]
    c2 = w2_ref.shape[1]
    n_grp = wfc_ref.shape[0]
    grp = wfc_ref.shape[1] // c2
    taps = [(kh, kw) for kh in range(3) for kw in range(3)]

    # --- stage 1: conv1 as a single im2col matmul (im2col built in wrapper) -
    p1 = p1_ref[...].reshape(HW * BT, KT)                       # regroup only
    h1 = jnp.dot(p1, w1_ref[...], preferred_element_type=jnp.float32)
    h1 = jnp.maximum(h1 + b1_ref[...], 0.0)                     # (HW*BT, C1)

    # --- stage 2a: write h1 into the padded scratch; zero only the borders --
    zrow = jnp.zeros((W + 2, BT, c1), jnp.float32)
    h1pad_ref[0] = zrow
    h1pad_ref[H + 1] = zrow
    zcol = jnp.zeros((H, 1, BT, c1), jnp.float32)
    h1pad_ref[1:H + 1, 0:1] = zcol
    h1pad_ref[1:H + 1, W + 1:W + 2] = zcol
    h1pad_ref[1:H + 1, 1:W + 1] = h1.reshape(H, W, BT, c1)

    # --- stage 2b: conv2 as 9 accumulated matmuls (no im2col scratch) -------
    h2 = jnp.zeros((HW * BT, c2), jnp.float32)
    for t, (kh, kw) in enumerate(taps):
        win = h1pad_ref[kh:kh + H, kw:kw + W].reshape(HW * BT, c1)
        h2 = h2 + jnp.dot(win, w2_ref[t * c1:(t + 1) * c1, :],
                          preferred_element_type=jnp.float32)
    h2 = jnp.maximum(h2 + b2_ref[...], 0.0)                     # (HW*BT, C2)

    # --- stage 3+4: fc as grouped accumulation (no flatten scratch) ---------
    h2_3d = h2.reshape(HW, BT, c2)                              # rows = (h, w)
    hid = jnp.zeros((BT, wfc_ref.shape[2]), jnp.float32)
    for g in range(n_grp):
        chunk = jnp.concatenate(
            [h2_3d[g * grp + j] for j in range(grp)], axis=-1)  # (BT, grp*C2)
        hid = hid + jnp.dot(chunk.astype(jnp.bfloat16), wfc_ref[g],
                            preferred_element_type=jnp.float32)
    hid = jnp.maximum(hid + bfc_ref[...], 0.0)                  # (BT, HID)

    # --- stage 5: action head + num_actions mask ----------------------------
    logits = jnp.dot(hid.astype(jnp.bfloat16), wh_ref[...],
                     preferred_element_type=jnp.float32) + bh_ref[...]
    col = lax.broadcasted_iota(jnp.int32, logits.shape, 1)
    logits_ref[...] = jnp.where(col < na_ref[0], logits, -jnp.inf)


# ----------------------------------------------------------------------------
# Wrapper
# ----------------------------------------------------------------------------
@functools.partial(jax.jit, static_argnames=("max_actions",))
def actor_forward(state, num_actions, kernel_params, *, max_actions):
    # TODO(synk): the PyTorch forward raises ValueError on NaN in state/logits;
    # data-dependent host-side exceptions have no Pallas equivalent (omitted).
    w1, b1, w2, b2, wfc3, bfc, wh, bh = kernel_params
    B, H, W = state.shape
    HW = H * W
    a_pad = wh.shape[1]
    k1 = w1.shape[0]
    c1 = w1.shape[1]

    # Balanced batch tiles: multiple of 8, cap 128, and >=2 grid steps when
    # B >= 16 so the "parallel" axis can shard across v7x's two TensorCores.
    n_tiles = max(-(-B // 128), 2 if B >= 16 else 1)
    per = -(-B // n_tiles)
    bt = min(-(-per // 8) * 8, 128)
    b_pad = -(-B // bt) * bt
    if b_pad != B:
        state = jnp.concatenate(
            [state, jnp.zeros((b_pad - B, H, W), state.dtype)], axis=0)

    # conv1 im2col in the wrapper: pad + 9 shifted windows, (h, w, b, tap)
    # layout so the in-kernel reshape to (HW*BT, K1) is a pure tile regroup.
    xpad = jnp.pad(state, ((0, 0), (1, 1), (1, 1)))
    windows = [xpad[:, kh:kh + H, kw:kw + W]
               for kh in range(3) for kw in range(3)]
    p1 = jnp.stack(windows, axis=-1)                            # (Bp, H, W, 9)
    if k1 > 9:
        p1 = jnp.pad(p1, ((0, 0), (0, 0), (0, 0), (0, k1 - 9)))
    p1 = jnp.transpose(p1, (1, 2, 0, 3))                        # (H, W, Bp, K1)

    # VMEM budget from actual footprint (weights are double-buffered by the
    # pipeline; generous slack for compiler-materialized value intermediates).
    def nbytes(a):
        return int(np.prod(a.shape)) * a.dtype.itemsize
    weight_b = sum(nbytes(a) for a in (w1, b1, w2, b2, wfc3, bfc, wh, bh))
    io_b = H * W * bt * k1 * 4 + bt * a_pad * 4
    scratch_b = (H + 2) * (W + 2) * bt * c1 * 4
    interm_b = HW * bt * (c1 + 2 * w2.shape[1]) * 4
    vmem_limit = int(min(48 * 2**20,
                         max(32 * 2**20,
                             2 * (weight_b + io_b) + scratch_b + interm_b
                             + 8 * 2**20)))

    out = pl.pallas_call(
        actor_kernel,
        out_shape=jax.ShapeDtypeStruct((b_pad, a_pad), jnp.float32),
        grid_spec=pltpu.PrefetchScalarGridSpec(
            num_scalar_prefetch=1,
            grid=(b_pad // bt,),
            in_specs=[
                pl.BlockSpec((H, W, bt, k1), lambda i, na: (0, 0, i, 0)),
                pl.BlockSpec(w1.shape, lambda i, na: (0, 0)),
                pl.BlockSpec(b1.shape, lambda i, na: (0, 0)),
                pl.BlockSpec(w2.shape, lambda i, na: (0, 0)),
                pl.BlockSpec(b2.shape, lambda i, na: (0, 0)),
                pl.BlockSpec(wfc3.shape, lambda i, na: (0, 0, 0)),
                pl.BlockSpec(bfc.shape, lambda i, na: (0, 0)),
                pl.BlockSpec(wh.shape, lambda i, na: (0, 0)),
                pl.BlockSpec(bh.shape, lambda i, na: (0, 0)),
            ],
            out_specs=pl.BlockSpec((bt, a_pad), lambda i, na: (i, 0)),
            scratch_shapes=[
                pltpu.VMEM((H + 2, W + 2, bt, c1), jnp.float32),  # padded h1
            ],
        ),
        compiler_params=pltpu.CompilerParams(
            dimension_semantics=("parallel",),
            vmem_limit_bytes=vmem_limit),
    )(num_actions, p1, w1, b1, w2, b2, wfc3, bfc, wh, bh)
    return out[:B, :max_actions]


# ----------------------------------------------------------------------------
# Deterministic init (xavier_uniform weights, zero biases) in PyTorch layouts,
# plus conversion to the kernel layouts.
# ----------------------------------------------------------------------------
def init_params(key, H, W, max_actions):
    def xavier(k, shape, fan_in, fan_out):
        bound = float(np.sqrt(6.0 / (fan_in + fan_out)))
        return jax.random.uniform(k, shape, jnp.float32, -bound, bound)

    k1, k2, k3, k4 = jax.random.split(key, 4)
    # PyTorch layouts
    W1t = xavier(k1, (C1, 1, 3, 3), 1 * 9, C1 * 9)           # conv1.weight
    W2t = xavier(k2, (C2, C1, 3, 3), C1 * 9, C2 * 9)         # conv2.weight
    Wfct = xavier(k3, (HID, C2 * H * W), C2 * H * W, HID)    # fc.weight
    Wht = xavier(k4, (max_actions, HID), HID, max_actions)   # action_head.weight
    b1t = jnp.zeros((C1,), jnp.float32)
    b2t = jnp.zeros((C2,), jnp.float32)
    bfct = jnp.zeros((HID,), jnp.float32)
    bht = jnp.zeros((max_actions,), jnp.float32)
    torch_params = (W1t, b1t, W2t, b2t, Wfct, bfct, Wht, bht)

    # Kernel layouts
    HW = H * W
    a_pad = -(-max_actions // 128) * 128
    grp = 4 if HW % 4 == 0 else (2 if HW % 2 == 0 else 1)
    # conv1: (tap, out) with tap rows 9..K1-1 zero (matches wrapper zero-pad)
    w1 = jnp.zeros((K1, C1), jnp.float32).at[:9].set(W1t.reshape(C1, 9).T)
    # conv2: rows ordered (kh, kw, c_in)
    w2 = jnp.transpose(W2t, (2, 3, 1, 0)).reshape(9 * C1, C2)
    # fc rows: PyTorch feature order (c, h, w) -> kernel feature order (h, w, c),
    # grouped by `grp` spatial positions for the accumulated-matmul form (bf16).
    wfc = jnp.transpose(Wfct.reshape(HID, C2, H, W),
                        (2, 3, 1, 0)).reshape(HW * C2, HID)
    wfc3 = wfc.reshape(HW // grp, grp * C2, HID).astype(jnp.bfloat16)
    # action head: zero-padded to lane-dense a_pad columns (bf16)
    wh = jnp.zeros((HID, a_pad), jnp.float32).at[:, :max_actions].set(Wht.T)
    wh = wh.astype(jnp.bfloat16)
    bh = jnp.zeros((1, a_pad), jnp.float32).at[0, :max_actions].set(bht)
    kernel_params = (w1, b1t.reshape(1, C1), w2, b2t.reshape(1, C2),
                     wfc3, bfct.reshape(1, HID), wh, bh)
    return torch_params, kernel_params


# Pure-JAX reference mirroring the PyTorch forward (for validation).
def actor_reference(state, num_actions, torch_params):
    W1t, b1t, W2t, b2t, Wfct, bfct, Wht, bht = torch_params
    dn = ("NCHW", "OIHW", "NCHW")
    x = state[:, None, :, :]
    x = lax.conv_general_dilated(x, W1t, (1, 1), "SAME", dimension_numbers=dn)
    x = jnp.maximum(x + b1t[None, :, None, None], 0.0)
    x = lax.conv_general_dilated(x, W2t, (1, 1), "SAME", dimension_numbers=dn)
    x = jnp.maximum(x + b2t[None, :, None, None], 0.0)
    x = x.reshape(x.shape[0], -1)
    h = jnp.maximum(x @ Wfct.T + bfct, 0.0)
    logits = h @ Wht.T + bht
    mask = jnp.arange(logits.shape[-1]) < num_actions
    return jnp.where(mask, logits, -jnp.inf)


if __name__ == "__main__":
    B, H, W = 2, 8, 8
    MAX_ACTIONS = 1000
    NUM_ACTIONS = 937

    key = jax.random.PRNGKey(0)
    kp, kx = jax.random.split(key)
    torch_params, kernel_params = init_params(kp, H, W, MAX_ACTIONS)
    state = jax.random.normal(kx, (B, H, W), jnp.float32)
    num_actions = jnp.array([NUM_ACTIONS], jnp.int32)

    logits = actor_forward(state, num_actions, kernel_params,
                           max_actions=MAX_ACTIONS)
    jax.block_until_ready(logits)
    assert logits.shape == (B, MAX_ACTIONS) and logits.dtype == jnp.float32

    ref = actor_reference(state, NUM_ACTIONS, torch_params)
    np.testing.assert_allclose(np.asarray(logits), np.asarray(ref),
                               rtol=1e-2, atol=1e-2)
    print("KERNEL_OK")
</pallas_src>

<mosaic_0001>
module attributes {stable_mosaic.version = 11 : i64} {
  func.func @actor_kernel(%arg0: i32, %arg1: memref<1xi32, #tpu.memory_space<smem>>, %arg2: memref<8x8x8x16xf32, #tpu.memory_space<vmem>>, %arg3: memref<16x32xf32, #tpu.memory_space<vmem>>, %arg4: memref<1x32xf32, #tpu.memory_space<vmem>>, %arg5: memref<288x64xf32, #tpu.memory_space<vmem>>, %arg6: memref<1x64xf32, #tpu.memory_space<vmem>>, %arg7: memref<16x256x128xbf16, #tpu.memory_space<vmem>>, %arg8: memref<1x128xf32, #tpu.memory_space<vmem>>, %arg9: memref<128x1024xbf16, #tpu.memory_space<vmem>>, %arg10: memref<1x1024xf32, #tpu.memory_space<vmem>>, %arg11: memref<8x1024xf32, #tpu.memory_space<vmem>>, %arg12: memref<10x10x8x32xf32, #tpu.memory_space<vmem>>) attributes {dimension_semantics = [#tpu.dimension_semantics<parallel>], iteration_bounds = array<i64: 1>, scalar_prefetch = 1 : i64, scratch_operands = 1 : i64, tpu.core_type = #tpu.core_type<tc>, window_params = [{transform_indices = @transform_0, window_bounds = array<i64: 8, 8, 8, 16>}, {pipeline_mode = #tpu.pipeline_mode<synchronous>, transform_indices = @transform_1, window_bounds = array<i64: 16, 32>}, {pipeline_mode = #tpu.pipeline_mode<synchronous>, transform_indices = @transform_2, window_bounds = array<i64: 1, 32>}, {pipeline_mode = #tpu.pipeline_mode<synchronous>, transform_indices = @transform_3, window_bounds = array<i64: 288, 64>}, {pipeline_mode = #tpu.pipeline_mode<synchronous>, transform_indices = @transform_4, window_bounds = array<i64: 1, 64>}, {pipeline_mode = #tpu.pipeline_mode<synchronous>, transform_indices = @transform_5, window_bounds = array<i64: 16, 256, 128>}, {pipeline_mode = #tpu.pipeline_mode<synchronous>, transform_indices = @transform_6, window_bounds = array<i64: 1, 128>}, {pipeline_mode = #tpu.pipeline_mode<synchronous>, transform_indices = @transform_7, window_bounds = array<i64: 128, 1024>}, {pipeline_mode = #tpu.pipeline_mode<synchronous>, transform_indices = @transform_8, window_bounds = array<i64: 1, 1024>}, {transform_indices = @transform_9, window_bounds = array<i64: 8, 1024>}]} {
    %c0 = arith.constant 0 : index
    %c0_0 = arith.constant 0 : index
    %c0_1 = arith.constant 0 : index
    %c0_2 = arith.constant 0 : index
    %0 = vector.load %arg2[%c0, %c0_0, %c0_1, %c0_2] : memref<8x8x8x16xf32, #tpu.memory_space<vmem>>, vector<8x8x8x16xf32>
    %1 = vector.shape_cast %0 : vector<8x8x8x16xf32> to vector<512x16xf32>
    %c0_3 = arith.constant 0 : index
    %c0_4 = arith.constant 0 : index
    %2 = vector.load %arg3[%c0_3, %c0_4] : memref<16x32xf32, #tpu.memory_space<vmem>>, vector<16x32xf32>
    %cst = arith.constant dense<0.000000e+00> : vector<512x32xf32>
    %3 = tpu.matmul %1, %2, %cst {dimension_numbers = #tpu.dot_dimension_numbers<[1], [0], [0], [1], [0, 0, 1, 1], [], []>} : vector<512x16xf32>, vector<16x32xf32>, vector<512x32xf32> -> vector<512x32xf32>
    %c0_5 = arith.constant 0 : index
    %c0_6 = arith.constant 0 : index
    %4 = vector.load %arg4[%c0_5, %c0_6] : memref<1x32xf32, #tpu.memory_space<vmem>>, vector<1x32xf32>
    %5 = vector.broadcast %4 : vector<1x32xf32> to vector<512x32xf32>
    %6 = arith.addf %3, %5 : vector<512x32xf32>
    %cst_7 = arith.constant 0.000000e+00 : f32
    %7 = vector.broadcast %cst_7 : f32 to vector<512x32xf32>
    %8 = arith.maximumf %6, %7 : vector<512x32xf32>
    %cst_8 = arith.constant 0.000000e+00 : f32
    %9 = vector.broadcast %cst_8 : f32 to vector<10x8x32xf32>
    %c0_9 = arith.constant 0 : index
    %c0_10 = arith.constant 0 : index
    %c0_11 = arith.constant 0 : index
    %c0_12 = arith.constant 0 : index
    %10 = vector.load %arg12[%c0_9, %c0_10, %c0_11, %c0_12] : memref<10x10x8x32xf32, #tpu.memory_space<vmem>>, vector<1x10x8x32xf32>
    %11 = vector.shape_cast %10 : vector<1x10x8x32xf32> to vector<10x8x32xf32>
    %12 = vector.shape_cast %9 : vector<10x8x32xf32> to vector<1x10x8x32xf32>
    tpu.vector_store %arg12[%c0_9, %c0_10, %c0_11, %c0_12], %12 {strides = array<i32>} : memref<10x10x8x32xf32, #tpu.memory_space<vmem>>, vector<1x10x8x32xf32>,
    %c9 = arith.constant 9 : index
    %c0_13 = arith.constant 0 : index
    %c0_14 = arith.constant 0 : index
    %c0_15 = arith.constant 0 : index
    %13 = vector.load %arg12[%c9, %c0_13, %c0_14, %c0_15] : memref<10x10x8x32xf32, #tpu.memory_space<vmem>>, vector<1x10x8x32xf32>
    %14 = vector.shape_cast %13 : vector<1x10x8x32xf32> to vector<10x8x32xf32>
    %15 = vector.shape_cast %9 : vector<10x8x32xf32> to vector<1x10x8x32xf32>
    tpu.vector_store %arg12[%c9, %c0_13, %c0_14, %c0_15], %15 {strides = array<i32>} : memref<10x10x8x32xf32, #tpu.memory_space<vmem>>, vector<1x10x8x32xf32>,
    %cst_16 = arith.constant 0.000000e+00 : f32
    %16 = vector.broadcast %cst_16 : f32 to vector<8x1x8x32xf32>
    %c1 = arith.constant 1 : index
    %c0_17 = arith.constant 0 : index
    %c0_18 = arith.constant 0 : index
    %c0_19 = arith.constant 0 : index
    %17 = vector.load %arg12[%c1, %c0_17, %c0_18, %c0_19] : memref<10x10x8x32xf32, #tpu.memory_space<vmem>>, vector<8x1x8x32xf32>
    tpu.vector_store %arg12[%c1, %c0_17, %c0_18, %c0_19], %16 {strides = array<i32>} : memref<10x10x8x32xf32, #tpu.memory_space<vmem>>, vector<8x1x8x32xf32>,
    %c1_20 = arith.constant 1 : index
    %c9_21 = arith.constant 9 : index
    %c0_22 = arith.constant 0 : index
    %c0_23 = arith.constant 0 : index
    %18 = vector.load %arg12[%c1_20, %c9_21, %c0_22, %c0_23] : memref<10x10x8x32xf32, #tpu.memory_space<vmem>>, vector<8x1x8x32xf32>
    tpu.vector_store %arg12[%c1_20, %c9_21, %c0_22, %c0_23], %16 {strides = array<i32>} : memref<10x10x8x32xf32, #tpu.memory_space<vmem>>, vector<8x1x8x32xf32>,
    %19 = vector.shape_cast %8 : vector<512x32xf32> to vector<8x8x8x32xf32>
    %c1_24 = arith.constant 1 : index
    %c1_25 = arith.constant 1 : index
    %c0_26 = arith.constant 0 : index
    %c0_27 = arith.constant 0 : index
    %20 = vector.load %arg12[%c1_24, %c1_25, %c0_26, %c0_27] : memref<10x10x8x32xf32, #tpu.memory_space<vmem>>, vector<8x8x8x32xf32>
    tpu.vector_store %arg12[%c1_24, %c1_25, %c0_26, %c0_27], %19 {strides = array<i32>} : memref<10x10x8x32xf32, #tpu.memory_space<vmem>>, vector<8x8x8x32xf32>,
    %cst_28 = arith.constant 0.000000e+00 : f32
    %21 = vector.broadcast %cst_28 : f32 to vector<512x64xf32>
    %c0_29 = arith.constant 0 : index
    %c0_30 = arith.constant 0 : index
    %c0_31 = arith.constant 0 : index
    %c0_32 = arith.constant 0 : index
    %22 = vector.load %arg12[%c0_29, %c0_30, %c0_31, %c0_32] : memref<10x10x8x32xf32, #tpu.memory_space<vmem>>, vector<8x8x8x32xf32>
    %23 = vector.shape_cast %22 : vector<8x8x8x32xf32> to vector<512x32xf32>
    %c0_33 = arith.constant 0 : index
    %c0_34 = arith.constant 0 : index
    %24 = vector.load %arg5[%c0_33, %c0_34] : memref<288x64xf32, #tpu.memory_space<vmem>>, vector<32x64xf32>
    %cst_35 = arith.constant dense<0.000000e+00> : vector<512x64xf32>
    %25 = tpu.matmul %23, %24, %cst_35 {dimension_numbers = #tpu.dot_dimension_numbers<[1], [0], [0], [1], [0, 0, 1, 1], [], []>} : vector<512x32xf32>, vector<32x64xf32>, vector<512x64xf32> -> vector<512x64xf32>
    %26 = arith.addf %21, %25 : vector<512x64xf32>
    %c0_36 = arith.constant 0 : index
    %c1_37 = arith.constant 1 : index
    %c0_38 = arith.constant 0 : index
    %c0_39 = arith.constant 0 : index
    %27 = vector.load %arg12[%c0_36, %c1_37, %c0_38, %c0_39] : memref<10x10x8x32xf32, #tpu.memory_space<vmem>>, vector<8x8x8x32xf32>
    %28 = vector.shape_cast %27 : vector<8x8x8x32xf32> to vector<512x32xf32>
    %c32 = arith.constant 32 : index
    %c0_40 = arith.constant 0 : index
    %29 = vector.load %arg5[%c32, %c0_40] : memref<288x64xf32, #tpu.memory_space<vmem>>, vector<32x64xf32>
    %cst_41 = arith.constant dense<0.000000e+00> : vector<512x64xf32>
    %30 = tpu.matmul %28, %29, %cst_41 {dimension_numbers = #tpu.dot_dimension_numbers<[1], [0], [0], [1], [0, 0, 1, 1], [], []>} : vector<512x32xf32>, vector<32x64xf32>, vector<512x64xf32> -> vector<512x64xf32>
    %31 = arith.addf %26, %30 : vector<512x64xf32>
    %c0_42 = arith.constant 0 : index
    %c2 = arith.constant 2 : index
    %c0_43 = arith.constant 0 : index
    %c0_44 = arith.constant 0 : index
    %32 = vector.load %arg12[%c0_42, %c2, %c0_43, %c0_44] : memref<10x10x8x32xf32, #tpu.memory_space<vmem>>, vector<8x8x8x32xf32>
    %33 = vector.shape_cast %32 : vector<8x8x8x32xf32> to vector<512x32xf32>
    %c64 = arith.constant 64 : index
    %c0_45 = arith.constant 0 : index
    %34 = vector.load %arg5[%c64, %c0_45] : memref<288x64xf32, #tpu.memory_space<vmem>>, vector<32x64xf32>
    %cst_46 = arith.constant dense<0.000000e+00> : vector<512x64xf32>
    %35 = tpu.matmul %33, %34, %cst_46 {dimension_numbers = #tpu.dot_dimension_numbers<[1], [0], [0], [1], [0, 0, 1, 1], [], []>} : vector<512x32xf32>, vector<32x64xf32>, vector<512x64xf32> -> vector<512x64xf32>
    %36 = arith.addf %31, %35 : vector<512x64xf32>
    %c1_47 = arith.constant 1 : index
    %c0_48 = arith.constant 0 : index
    %c0_49 = arith.constant 0 : index
    %c0_50 = arith.constant 0 : index
    %37 = vector.load %arg12[%c1_47, %c0_48, %c0_49, %c0_50] : memref<10x10x8x32xf32, #tpu.memory_space<vmem>>, vector<8x8x8x32xf32>
    %38 = vector.shape_cast %37 : vector<8x8x8x32xf32> to vector<512x32xf32>
    %c96 = arith.constant 96 : index
    %c0_51 = arith.constant 0 : index
    %39 = vector.load %arg5[%c96, %c0_51] : memref<288x64xf32, #tpu.memory_space<vmem>>, vector<32x64xf32>
    %cst_52 = arith.constant dense<0.000000e+00> : vector<512x64xf32>
    %40 = tpu.matmul %38, %39, %cst_52 {dimension_numbers = #tpu.dot_dimension_numbers<[1], [0], [0], [1], [0, 0, 1, 1], [], []>} : vector<512x32xf32>, vector<32x64xf32>, vector<512x64xf32> -> vector<512x64xf32>
    %41 = arith.addf %36, %40 : vector<512x64xf32>
    %c1_53 = arith.constant 1 : index
    %c1_54 = arith.constant 1 : index
    %c0_55 = arith.constant 0 : index
    %c0_56 = arith.constant 0 : index
    %42 = vector.load %arg12[%c1_53, %c1_54, %c0_55, %c0_56] : memref<10x10x8x32xf32, #tpu.memory_space<vmem>>, vector<8x8x8x32xf32>
    %43 = vector.shape_cast %42 : vector<8x8x8x32xf32> to vector<512x32xf32>
    %c128 = arith.constant 128 : index
    %c0_57 = arith.constant 0 : index
    %44 = vector.load %arg5[%c128, %c0_57] : memref<288x64xf32, #tpu.memory_space<vmem>>, vector<32x64xf32>
    %cst_58 = arith.constant dense<0.000000e+00> : vector<512x64xf32>
    %45 = tpu.matmul %43, %44, %cst_58 {dimension_numbers = #tpu.dot_dimension_numbers<[1], [0], [0], [1], [0, 0, 1, 1], [], []>} : vector<512x32xf32>, vector<32x64xf32>, vector<512x64xf32> -> vector<512x64xf32>
    %46 = arith.addf %41, %45 : vector<512x64xf32>
    %c1_59 = arith.constant 1 : index
    %c2_60 = arith.constant 2 : index
    %c0_61 = arith.constant 0 : index
    %c0_62 = arith.constant 0 : index
    %47 = vector.load %arg12[%c1_59, %c2_60, %c0_61, %c0_62] : memref<10x10x8x32xf32, #tpu.memory_space<vmem>>, vector<8x8x8x32xf32>
    %48 = vector.shape_cast %47 : vector<8x8x8x32xf32> to vector<512x32xf32>
    %c160 = arith.constant 160 : index
    %c0_63 = arith.constant 0 : index
    %49 = vector.load %arg5[%c160, %c0_63] : memref<288x64xf32, #tpu.memory_space<vmem>>, vector<32x64xf32>
    %cst_64 = arith.constant dense<0.000000e+00> : vector<512x64xf32>
    %50 = tpu.matmul %48, %49, %cst_64 {dimension_numbers = #tpu.dot_dimension_numbers<[1], [0], [0], [1], [0, 0, 1, 1], [], []>} : vector<512x32xf32>, vector<32x64xf32>, vector<512x64xf32> -> vector<512x64xf32>
    %51 = arith.addf %46, %50 : vector<512x64xf32>
    %c2_65 = arith.constant 2 : index
    %c0_66 = arith.constant 0 : index
    %c0_67 = arith.constant 0 : index
    %c0_68 = arith.constant 0 : index
    %52 = vector.load %arg12[%c2_65, %c0_66, %c0_67, %c0_68] : memref<10x10x8x32xf32, #tpu.memory_space<vmem>>, vector<8x8x8x32xf32>
    %53 = vector.shape_cast %52 : vector<8x8x8x32xf32> to vector<512x32xf32>
    %c192 = arith.constant 192 : index
    %c0_69 = arith.constant 0 : index
    %54 = vector.load %arg5[%c192, %c0_69] : memref<288x64xf32, #tpu.memory_space<vmem>>, vector<32x64xf32>
    %cst_70 = arith.constant dense<0.000000e+00> : vector<512x64xf32>
    %55 = tpu.matmul %53, %54, %cst_70 {dimension_numbers = #tpu.dot_dimension_numbers<[1], [0], [0], [1], [0, 0, 1, 1], [], []>} : vector<512x32xf32>, vector<32x64xf32>, vector<512x64xf32> -> vector<512x64xf32>
    %56 = arith.addf %51, %55 : vector<512x64xf32>
    %c2_71 = arith.constant 2 : index
    %c1_72 = arith.constant 1 : index
    %c0_73 = arith.constant 0 : index
    %c0_74 = arith.constant 0 : index
    %57 = vector.load %arg12[%c2_71, %c1_72, %c0_73, %c0_74] : memref<10x10x8x32xf32, #tpu.memory_space<vmem>>, vector<8x8x8x32xf32>
    %58 = vector.shape_cast %57 : vector<8x8x8x32xf32> to vector<512x32xf32>
    %c224 = arith.constant 224 : index
    %c0_75 = arith.constant 0 : index
    %59 = vector.load %arg5[%c224, %c0_75] : memref<288x64xf32, #tpu.memory_space<vmem>>, vector<32x64xf32>
    %cst_76 = arith.constant dense<0.000000e+00> : vector<512x64xf32>
    %60 = tpu.matmul %58, %59, %cst_76 {dimension_numbers = #tpu.dot_dimension_numbers<[1], [0], [0], [1], [0, 0, 1, 1], [], []>} : vector<512x32xf32>, vector<32x64xf32>, vector<512x64xf32> -> vector<512x64xf32>
    %61 = arith.addf %56, %60 : vector<512x64xf32>
    %c2_77 = arith.constant 2 : index
    %c2_78 = arith.constant 2 : index
    %c0_79 = arith.constant 0 : index
    %c0_80 = arith.constant 0 : index
    %62 = vector.load %arg12[%c2_77, %c2_78, %c0_79, %c0_80] : memref<10x10x8x32xf32, #tpu.memory_space<vmem>>, vector<8x8x8x32xf32>
    %63 = vector.shape_cast %62 : vector<8x8x8x32xf32> to vector<512x32xf32>
    %c256 = arith.constant 256 : index
    %c0_81 = arith.constant 0 : index
    %64 = vector.load %arg5[%c256, %c0_81] : memref<288x64xf32, #tpu.memory_space<vmem>>, vector<32x64xf32>
    %cst_82 = arith.constant dense<0.000000e+00> : vector<512x64xf32>
    %65 = tpu.matmul %63, %64, %cst_82 {dimension_numbers = #tpu.dot_dimension_numbers<[1], [0], [0], [1], [0, 0, 1, 1], [], []>} : vector<512x32xf32>, vector<32x64xf32>, vector<512x64xf32> -> vector<512x64xf32>
    %66 = arith.addf %61, %65 : vector<512x64xf32>
    %c0_83 = arith.constant 0 : index
    %c0_84 = arith.constant 0 : index
    %67 = vector.load %arg6[%c0_83, %c0_84] : memref<1x64xf32, #tpu.memory_space<vmem>>, vector<1x64xf32>
    %68 = vector.broadcast %67 : vector<1x64xf32> to vector<512x64xf32>
    %69 = arith.addf %66, %68 : vector<512x64xf32>
    %cst_85 = arith.constant 0.000000e+00 : f32
    %70 = vector.broadcast %cst_85 : f32 to vector<512x64xf32>
    %71 = arith.maximumf %69, %70 : vector<512x64xf32>
    %72 = vector.shape_cast %71 : vector<512x64xf32> to vector<64x8x64xf32>
    %cst_86 = arith.constant 0.000000e+00 : f32
    %73 = vector.broadcast %cst_86 : f32 to vector<8x128xf32>
    %74 = vector.extract_strided_slice %72 {offsets = [0, 0, 0], sizes = [1, 8, 64], strides = [1, 1, 1]} : vector<64x8x64xf32> to vector<1x8x64xf32>
    %75 = vector.shape_cast %74 : vector<1x8x64xf32> to vector<8x64xf32>
    %76 = vector.extract_strided_slice %72 {offsets = [1, 0, 0], sizes = [1, 8, 64], strides = [1, 1, 1]} : vector<64x8x64xf32> to vector<1x8x64xf32>
    %77 = vector.shape_cast %76 : vector<1x8x64xf32> to vector<8x64xf32>
    %78 = vector.extract_strided_slice %72 {offsets = [2, 0, 0], sizes = [1, 8, 64], strides = [1, 1, 1]} : vector<64x8x64xf32> to vector<1x8x64xf32>
    %79 = vector.shape_cast %78 : vector<1x8x64xf32> to vector<8x64xf32>
    %80 = vector.extract_strided_slice %72 {offsets = [3, 0, 0], sizes = [1, 8, 64], strides = [1, 1, 1]} : vector<64x8x64xf32> to vector<1x8x64xf32>
    %81 = vector.shape_cast %80 : vector<1x8x64xf32> to vector<8x64xf32>
    %82 = tpu.concatenate %75, %77, %79, %81 in 1 : vector<8x64xf32>, vector<8x64xf32>, vector<8x64xf32>, vector<8x64xf32> -> vector<8x256xf32>
    %83 = arith.truncf %82 : vector<8x256xf32> to vector<8x256xbf16>
    %c0_87 = arith.constant 0 : index
    %c0_88 = arith.constant 0 : index
    %c0_89 = arith.constant 0 : index
    %84 = vector.load %arg7[%c0_87, %c0_88, %c0_89] : memref<16x256x128xbf16, #tpu.memory_space<vmem>>, vector<1x256x128xbf16>
    %85 = vector.shape_cast %84 : vector<1x256x128xbf16> to vector<256x128xbf16>
    %cst_90 = arith.constant dense<0.000000e+00> : vector<8x128xf32>
    %86 = tpu.matmul %83, %85, %cst_90 {dimension_numbers = #tpu.dot_dimension_numbers<[1], [0], [0], [1], [0, 0, 1, 1], [], []>} : vector<8x256xbf16>, vector<256x128xbf16>, vector<8x128xf32> -> vector<8x128xf32>
    %87 = arith.addf %73, %86 : vector<8x128xf32>
    %88 = vector.extract_strided_slice %72 {offsets = [4, 0, 0], sizes = [1, 8, 64], strides = [1, 1, 1]} : vector<64x8x64xf32> to vector<1x8x64xf32>
    %89 = vector.shape_cast %88 : vector<1x8x64xf32> to vector<8x64xf32>
    %90 = vector.extract_strided_slice %72 {offsets = [5, 0, 0], sizes = [1, 8, 64], strides = [1, 1, 1]} : vector<64x8x64xf32> to vector<1x8x64xf32>
    %91 = vector.shape_cast %90 : vector<1x8x64xf32> to vector<8x64xf32>
    %92 = vector.extract_strided_slice %72 {offsets = [6, 0, 0], sizes = [1, 8, 64], strides = [1, 1, 1]} : vector<64x8x64xf32> to vector<1x8x64xf32>
    %93 = vector.shape_cast %92 : vector<1x8x64xf32> to vector<8x64xf32>
    %94 = vector.extract_strided_slice %72 {offsets = [7, 0, 0], sizes = [1, 8, 64], strides = [1, 1, 1]} : vector<64x8x64xf32> to vector<1x8x64xf32>
    %95 = vector.shape_cast %94 : vector<1x8x64xf32> to vector<8x64xf32>
    %96 = tpu.concatenate %89, %91, %93, %95 in 1 : vector<8x64xf32>, vector<8x64xf32>, vector<8x64xf32>, vector<8x64xf32> -> vector<8x256xf32>
    %97 = arith.truncf %96 : vector<8x256xf32> to vector<8x256xbf16>
    %c1_91 = arith.constant 1 : index
    %c0_92 = arith.constant 0 : index
    %c0_93 = arith.constant 0 : index
    %98 = vector.load %arg7[%c1_91, %c0_92, %c0_93] : memref<16x256x128xbf16, #tpu.memory_space<vmem>>, vector<1x256x128xbf16>
    %99 = vector.shape_cast %98 : vector<1x256x128xbf16> to vector<256x128xbf16>
    %cst_94 = arith.constant dense<0.000000e+00> : vector<8x128xf32>
    %100 = tpu.matmul %97, %99, %cst_94 {dimension_numbers = #tpu.dot_dimension_numbers<[1], [0], [0], [1], [0, 0, 1, 1], [], []>} : vector<8x256xbf16>, vector<256x128xbf16>, vector<8x128xf32> -> vector<8x128xf32>
    %101 = arith.addf %87, %100 : vector<8x128xf32>
    %102 = vector.extract_strided_slice %72 {offsets = [8, 0, 0], sizes = [1, 8, 64], strides = [1, 1, 1]} : vector<64x8x64xf32> to vector<1x8x64xf32>
    %103 = vector.shape_cast %102 : vector<1x8x64xf32> to vector<8x64xf32>
    %104 = vector.extract_strided_slice %72 {offsets = [9, 0, 0], sizes = [1, 8, 64], strides = [1, 1, 1]} : vector<64x8x64xf32> to vector<1x8x64xf32>
    %105 = vector.shape_cast %104 : vector<1x8x64xf32> to vector<8x64xf32>
    %106 = vector.extract_strided_slice %72 {offsets = [10, 0, 0], sizes = [1, 8, 64], strides = [1, 1, 1]} : vector<64x8x64xf32> to vector<1x8x64xf32>
    %107 = vector.shape_cast %106 : vector<1x8x64xf32> to vector<8x64xf32>
    %108 = vector.extract_strided_slice %72 {offsets = [11, 0, 0], sizes = [1, 8, 64], strides = [1, 1, 1]} : vector<64x8x64xf32> to vector<1x8x64xf32>
    %109 = vector.shape_cast %108 : vector<1x8x64xf32> to vector<8x64xf32>
    %110 = tpu.concatenate %103, %105, %107, %109 in 1 : vector<8x64xf32>, vector<8x64xf32>, vector<8x64xf32>, vector<8x64xf32> -> vector<8x256xf32>
    %111 = arith.truncf %110 : vector<8x256xf32> to vector<8x256xbf16>
    %c2_95 = arith.constant 2 : index
    %c0_96 = arith.constant 0 : index
    %c0_97 = arith.constant 0 : index
    %112 = vector.load %arg7[%c2_95, %c0_96, %c0_97] : memref<16x256x128xbf16, #tpu.memory_space<vmem>>, vector<1x256x128xbf16>
    %113 = vector.shape_cast %112 : vector<1x256x128xbf16> to vector<256x128xbf16>
    %cst_98 = arith.constant dense<0.000000e+00> : vector<8x128xf32>
    %114 = tpu.matmul %111, %113, %cst_98 {dimension_numbers = #tpu.dot_dimension_numbers<[1], [0], [0], [1], [0, 0, 1, 1], [], []>} : vector<8x256xbf16>, vector<256x128xbf16>, vector<8x128xf32> -> vector<8x128xf32>
    %115 = arith.addf %101, %114 : vector<8x128xf32>
    %116 = vector.extract_strided_slice %72 {offsets = [12, 0, 0], sizes = [1, 8, 64], strides = [1, 1, 1]} : vector<64x8x64xf32> to vector<1x8x64xf32>
    %117 = vector.shape_cast %116 : vector<1x8x64xf32> to vector<8x64xf32>
    %118 = vector.extract_strided_slice %72 {offsets = [13, 0, 0], sizes = [1, 8, 64], strides = [1, 1, 1]} : vector<64x8x64xf32> to vector<1x8x64xf32>
    %119 = vector.shape_cast %118 : vector<1x8x64xf32> to vector<8x64xf32>
    %120 = vector.extract_strided_slice %72 {offsets = [14, 0, 0], sizes = [1, 8, 64], strides = [1, 1, 1]} : vector<64x8x64xf32> to vector<1x8x64xf32>
    %121 = vector.shape_cast %120 : vector<1x8x64xf32> to vector<8x64xf32>
    %122 = vector.extract_strided_slice %72 {offsets = [15, 0, 0], sizes = [1, 8, 64], strides = [1, 1, 1]} : vector<64x8x64xf32> to vector<1x8x64xf32>
    %123 = vector.shape_cast %122 : vector<1x8x64xf32> to vector<8x64xf32>
    %124 = tpu.concatenate %117, %119, %121, %123 in 1 : vector<8x64xf32>, vector<8x64xf32>, vector<8x64xf32>, vector<8x64xf32> -> vector<8x256xf32>
    %125 = arith.truncf %124 : vector<8x256xf32> to vector<8x256xbf16>
    %c3 = arith.constant 3 : index
    %c0_99 = arith.constant 0 : index
    %c0_100 = arith.constant 0 : index
    %126 = vector.load %arg7[%c3, %c0_99, %c0_100] : memref<16x256x128xbf16, #tpu.memory_space<vmem>>, vector<1x256x128xbf16>
    %127 = vector.shape_cast %126 : vector<1x256x128xbf16> to vector<256x128xbf16>
    %cst_101 = arith.constant dense<0.000000e+00> : vector<8x128xf32>
    %128 = tpu.matmul %125, %127, %cst_101 {dimension_numbers = #tpu.dot_dimension_numbers<[1], [0], [0], [1], [0, 0, 1, 1], [], []>} : vector<8x256xbf16>, vector<256x128xbf16>, vector<8x128xf32> -> vector<8x128xf32>
    %129 = arith.addf %115, %128 : vector<8x128xf32>
    %130 = vector.extract_strided_slice %72 {offsets = [16, 0, 0], sizes = [1, 8, 64], strides = [1, 1, 1]} : vector<64x8x64xf32> to vector<1x8x64xf32>
    %131 = vector.shape_cast %130 : vector<1x8x64xf32> to vector<8x64xf32>
    %132 = vector.extract_strided_slice %72 {offsets = [17, 0, 0], sizes = [1, 8, 64], strides = [1, 1, 1]} : vector<64x8x64xf32> to vector<1x8x64xf32>
    %133 = vector.shape_cast %132 : vector<1x8x64xf32> to vector<8x64xf32>
    %134 = vector.extract_strided_slice %72 {offsets = [18, 0, 0], sizes = [1, 8, 64], strides = [1, 1, 1]} : vector<64x8x64xf32> to vector<1x8x64xf32>
    %135 = vector.shape_cast %134 : vector<1x8x64xf32> to vector<8x64xf32>
    %136 = vector.extract_strided_slice %72 {offsets = [19, 0, 0], sizes = [1, 8, 64], strides = [1, 1, 1]} : vector<64x8x64xf32> to vector<1x8x64xf32>
    %137 = vector.shape_cast %136 : vector<1x8x64xf32> to vector<8x64xf32>
    %138 = tpu.concatenate %131, %133, %135, %137 in 1 : vector<8x64xf32>, vector<8x64xf32>, vector<8x64xf32>, vector<8x64xf32> -> vector<8x256xf32>
    %139 = arith.truncf %138 : vector<8x256xf32> to vector<8x256xbf16>
    %c4 = arith.constant 4 : index
    %c0_102 = arith.constant 0 : index
    %c0_103 = arith.constant 0 : index
    %140 = vector.load %arg7[%c4, %c0_102, %c0_103] : memref<16x256x128xbf16, #tpu.memory_space<vmem>>, vector<1x256x128xbf16>
    %141 = vector.shape_cast %140 : vector<1x256x128xbf16> to vector<256x128xbf16>
    %cst_104 = arith.constant dense<0.000000e+00> : vector<8x128xf32>
    %142 = tpu.matmul %139, %141, %cst_104 {dimension_numbers = #tpu.dot_dimension_numbers<[1], [0], [0], [1], [0, 0, 1, 1], [], []>} : vector<8x256xbf16>, vector<256x128xbf16>, vector<8x128xf32> -> vector<8x128xf32>
    %143 = arith.addf %129, %142 : vector<8x128xf32>
    %144 = vector.extract_strided_slice %72 {offsets = [20, 0, 0], sizes = [1, 8, 64], strides = [1, 1, 1]} : vector<64x8x64xf32> to vector<1x8x64xf32>
    %145 = vector.shape_cast %144 : vector<1x8x64xf32> to vector<8x64xf32>
    %146 = vector.extract_strided_slice %72 {offsets = [21, 0, 0], sizes = [1, 8, 64], strides = [1, 1, 1]} : vector<64x8x64xf32> to vector<1x8x64xf32>
    %147 = vector.shape_cast %146 : vector<1x8x64xf32> to vector<8x64xf32>
    %148 = vector.extract_strided_slice %72 {offsets = [22, 0, 0], sizes = [1, 8, 64], strides = [1, 1, 1]} : vector<64x8x64xf32> to vector<1x8x64xf32>
    %149 = vector.shape_cast %148 : vector<1x8x64xf32> to vector<8x64xf32>
    %150 = vector.extract_strided_slice %72 {offsets = [23, 0, 0], sizes = [1, 8, 64], strides = [1, 1, 1]} : vector<64x8x64xf32> to vector<1x8x64xf32>
    %151 = vector.shape_cast %150 : vector<1x8x64xf32> to vector<8x64xf32>
    %152 = tpu.concatenate %145, %147, %149, %151 in 1 : vector<8x64xf32>, vector<8x64xf32>, vector<8x64xf32>, vector<8x64xf32> -> vector<8x256xf32>
    %153 = arith.truncf %152 : vector<8x256xf32> to vector<8x256xbf16>
    %c5 = arith.constant 5 : index
    %c0_105 = arith.constant 0 : index
    %c0_106 = arith.constant 0 : index
    %154 = vector.load %arg7[%c5, %c0_105, %c0_106] : memref<16x256x128xbf16, #tpu.memory_space<vmem>>, vector<1x256x128xbf16>
    %155 = vector.shape_cast %154 : vector<1x256x128xbf16> to vector<256x128xbf16>
    %cst_107 = arith.constant dense<0.000000e+00> : vector<8x128xf32>
    %156 = tpu.matmul %153, %155, %cst_107 {dimension_numbers = #tpu.dot_dimension_numbers<[1], [0], [0], [1], [0, 0, 1, 1], [], []>} : vector<8x256xbf16>, vector<256x128xbf16>, vector<8x128xf32> -> vector<8x128xf32>
    %157 = arith.addf %143, %156 : vector<8x128xf32>
    %158 = vector.extract_strided_slice %72 {offsets = [24, 0, 0], sizes = [1, 8, 64], strides = [1, 1, 1]} : vector<64x8x64xf32> to vector<1x8x64xf32>
    %159 = vector.shape_cast %158 : vector<1x8x64xf32> to vector<8x64xf32>
    %160 = vector.extract_strided_slice %72 {offsets = [25, 0, 0], sizes = [1, 8, 64], strides = [1, 1, 1]} : vector<64x8x64xf32> to vector<1x8x64xf32>
    %161 = vector.shape_cast %160 : vector<1x8x64xf32> to vector<8x64xf32>
    %162 = vector.extract_strided_slice %72 {offsets = [26, 0, 0], sizes = [1, 8, 64], strides = [1, 1, 1]} : vector<64x8x64xf32> to vector<1x8x64xf32>
    %163 = vector.shape_cast %162 : vector<1x8x64xf32> to vector<8x64xf32>
    %164 = vector.extract_strided_slice %72 {offsets = [27, 0, 0], sizes = [1, 8, 64], strides = [1, 1, 1]} : vector<64x8x64xf32> to vector<1x8x64xf32>
    %165 = vector.shape_cast %164 : vector<1x8x64xf32> to vector<8x64xf32>
    %166 = tpu.concatenate %159, %161, %163, %165 in 1 : vector<8x64xf32>, vector<8x64xf32>, vector<8x64xf32>, vector<8x64xf32> -> vector<8x256xf32>
    %167 = arith.truncf %166 : vector<8x256xf32> to vector<8x256xbf16>
    %c6 = arith.constant 6 : index
    %c0_108 = arith.constant 0 : index
    %c0_109 = arith.constant 0 : index
    %168 = vector.load %arg7[%c6, %c0_108, %c0_109] : memref<16x256x128xbf16, #tpu.memory_space<vmem>>, vector<1x256x128xbf16>
    %169 = vector.shape_cast %168 : vector<1x256x128xbf16> to vector<256x128xbf16>
    %cst_110 = arith.constant dense<0.000000e+00> : vector<8x128xf32>
    %170 = tpu.matmul %167, %169, %cst_110 {dimension_numbers = #tpu.dot_dimension_numbers<[1], [0], [0], [1], [0, 0, 1, 1], [], []>} : vector<8x256xbf16>, vector<256x128xbf16>, vector<8x128xf32> -> vector<8x128xf32>
    %171 = arith.addf %157, %170 : vector<8x128xf32>
    %172 = vector.extract_strided_slice %72 {offsets = [28, 0, 0], sizes = [1, 8, 64], strides = [1, 1, 1]} : vector<64x8x64xf32> to vector<1x8x64xf32>
    %173 = vector.shape_cast %172 : vector<1x8x64xf32> to vector<8x64xf32>
    %174 = vector.extract_strided_slice %72 {offsets = [29, 0, 0], sizes = [1, 8, 64], strides = [1, 1, 1]} : vector<64x8x64xf32> to vector<1x8x64xf32>
    %175 = vector.shape_cast %174 : vector<1x8x64xf32> to vector<8x64xf32>
    %176 = vector.extract_strided_slice %72 {offsets = [30, 0, 0], sizes = [1, 8, 64], strides = [1, 1, 1]} : vector<64x8x64xf32> to vector<1x8x64xf32>
    %177 = vector.shape_cast %176 : vector<1x8x64xf32> to vector<8x64xf32>
    %178 = vector.extract_strided_slice %72 {offsets = [31, 0, 0], sizes = [1, 8, 64], strides = [1, 1, 1]} : vector<64x8x64xf32> to vector<1x8x64xf32>
    %179 = vector.shape_cast %178 : vector<1x8x64xf32> to vector<8x64xf32>
    %180 = tpu.concatenate %173, %175, %177, %179 in 1 : vector<8x64xf32>, vector<8x64xf32>, vector<8x64xf32>, vector<8x64xf32> -> vector<8x256xf32>
    %181 = arith.truncf %180 : vector<8x256xf32> to vector<8x256xbf16>
    %c7 = arith.constant 7 : index
    %c0_111 = arith.constant 0 : index
    %c0_112 = arith.constant 0 : index
    %182 = vector.load %arg7[%c7, %c0_111, %c0_112] : memref<16x256x128xbf16, #tpu.memory_space<vmem>>, vector<1x256x128xbf16>
    %183 = vector.shape_cast %182 : vector<1x256x128xbf16> to vector<256x128xbf16>
    %cst_113 = arith.constant dense<0.000000e+00> : vector<8x128xf32>
    %184 = tpu.matmul %181, %183, %cst_113 {dimension_numbers = #tpu.dot_dimension_numbers<[1], [0], [0], [1], [0, 0, 1, 1], [], []>} : vector<8x256xbf16>, vector<256x128xbf16>, vector<8x128xf32> -> vector<8x128xf32>
    %185 = arith.addf %171, %184 : vector<8x128xf32>
    %186 = vector.extract_strided_slice %72 {offsets = [32, 0, 0], sizes = [1, 8, 64], strides = [1, 1, 1]} : vector<64x8x64xf32> to vector<1x8x64xf32>
    %187 = vector.shape_cast %186 : vector<1x8x64xf32> to vector<8x64xf32>
    %188 = vector.extract_strided_slice %72 {offsets = [33, 0, 0], sizes = [1, 8, 64], strides = [1, 1, 1]} : vector<64x8x64xf32> to vector<1x8x64xf32>
    %189 = vector.shape_cast %188 : vector<1x8x64xf32> to vector<8x64xf32>
    %190 = vector.extract_strided_slice %72 {offsets = [34, 0, 0], sizes = [1, 8, 64], strides = [1, 1, 1]} : vector<64x8x64xf32> to vector<1x8x64xf32>
    %191 = vector.shape_cast %190 : vector<1x8x64xf32> to vector<8x64xf32>
    %192 = vector.extract_strided_slice %72 {offsets = [35, 0, 0], sizes = [1, 8, 64], strides = [1, 1, 1]} : vector<64x8x64xf32> to vector<1x8x64xf32>
    %193 = vector.shape_cast %192 : vector<1x8x64xf32> to vector<8x64xf32>
    %194 = tpu.concatenate %187, %189, %191, %193 in 1 : vector<8x64xf32>, vector<8x64xf32>, vector<8x64xf32>, vector<8x64xf32> -> vector<8x256xf32>
    %195 = arith.truncf %194 : vector<8x256xf32> to vector<8x256xbf16>
    %c8 = arith.constant 8 : index
    %c0_114 = arith.constant 0 : index
    %c0_115 = arith.constant 0 : index
    %196 = vector.load %arg7[%c8, %c0_114, %c0_115] : memref<16x256x128xbf16, #tpu.memory_space<vmem>>, vector<1x256x128xbf16>
    %197 = vector.shape_cast %196 : vector<1x256x128xbf16> to vector<256x128xbf16>
    %cst_116 = arith.constant dense<0.000000e+00> : vector<8x128xf32>
    %198 = tpu.matmul %195, %197, %cst_116 {dimension_numbers = #tpu.dot_dimension_numbers<[1], [0], [0], [1], [0, 0, 1, 1], [], []>} : vector<8x256xbf16>, vector<256x128xbf16>, vector<8x128xf32> -> vector<8x128xf32>
    %199 = arith.addf %185, %198 : vector<8x128xf32>
    %200 = vector.extract_strided_slice %72 {offsets = [36, 0, 0], sizes = [1, 8, 64], strides = [1, 1, 1]} : vector<64x8x64xf32> to vector<1x8x64xf32>
    %201 = vector.shape_cast %200 : vector<1x8x64xf32> to vector<8x64xf32>
    %202 = vector.extract_strided_slice %72 {offsets = [37, 0, 0], sizes = [1, 8, 64], strides = [1, 1, 1]} : vector<64x8x64xf32> to vector<1x8x64xf32>
    %203 = vector.shape_cast %202 : vector<1x8x64xf32> to vector<8x64xf32>
    %204 = vector.extract_strided_slice %72 {offsets = [38, 0, 0], sizes = [1, 8, 64], strides = [1, 1, 1]} : vector<64x8x64xf32> to vector<1x8x64xf32>
    %205 = vector.shape_cast %204 : vector<1x8x64xf32> to vector<8x64xf32>
    %206 = vector.extract_strided_slice %72 {offsets = [39, 0, 0], sizes = [1, 8, 64], strides = [1, 1, 1]} : vector<64x8x64xf32> to vector<1x8x64xf32>
    %207 = vector.shape_cast %206 : vector<1x8x64xf32> to vector<8x64xf32>
    %208 = tpu.concatenate %201, %203, %205, %207 in 1 : vector<8x64xf32>, vector<8x64xf32>, vector<8x64xf32>, vector<8x64xf32> -> vector<8x256xf32>
    %209 = arith.truncf %208 : vector<8x256xf32> to vector<8x256xbf16>
    %c9_117 = arith.constant 9 : index
    %c0_118 = arith.constant 0 : index
    %c0_119 = arith.constant 0 : index
    %210 = vector.load %arg7[%c9_117, %c0_118, %c0_119] : memref<16x256x128xbf16, #tpu.memory_space<vmem>>, vector<1x256x128xbf16>
    %211 = vector.shape_cast %210 : vector<1x256x128xbf16> to vector<256x128xbf16>
    %cst_120 = arith.constant dense<0.000000e+00> : vector<8x128xf32>
    %212 = tpu.matmul %209, %211, %cst_120 {dimension_numbers = #tpu.dot_dimension_numbers<[1], [0], [0], [1], [0, 0, 1, 1], [], []>} : vector<8x256xbf16>, vector<256x128xbf16>, vector<8x128xf32> -> vector<8x128xf32>
    %213 = arith.addf %199, %212 : vector<8x128xf32>
    %214 = vector.extract_strided_slice %72 {offsets = [40, 0, 0], sizes = [1, 8, 64], strides = [1, 1, 1]} : vector<64x8x64xf32> to vector<1x8x64xf32>
    %215 = vector.shape_cast %214 : vector<1x8x64xf32> to vector<8x64xf32>
    %216 = vector.extract_strided_slice %72 {offsets = [41, 0, 0], sizes = [1, 8, 64], strides = [1, 1, 1]} : vector<64x8x64xf32> to vector<1x8x64xf32>
    %217 = vector.shape_cast %216 : vector<1x8x64xf32> to vector<8x64xf32>
    %218 = vector.extract_strided_slice %72 {offsets = [42, 0, 0], sizes = [1, 8, 64], strides = [1, 1, 1]} : vector<64x8x64xf32> to vector<1x8x64xf32>
    %219 = vector.shape_cast %218 : vector<1x8x64xf32> to vector<8x64xf32>
    %220 = vector.extract_strided_slice %72 {offsets = [43, 0, 0], sizes = [1, 8, 64], strides = [1, 1, 1]} : vector<64x8x64xf32> to vector<1x8x64xf32>
    %221 = vector.shape_cast %220 : vector<1x8x64xf32> to vector<8x64xf32>
    %222 = tpu.concatenate %215, %217, %219, %221 in 1 : vector<8x64xf32>, vector<8x64xf32>, vector<8x64xf32>, vector<8x64xf32> -> vector<8x256xf32>
    %223 = arith.truncf %222 : vector<8x256xf32> to vector<8x256xbf16>
    %c10 = arith.constant 10 : index
    %c0_121 = arith.constant 0 : index
    %c0_122 = arith.constant 0 : index
    %224 = vector.load %arg7[%c10, %c0_121, %c0_122] : memref<16x256x128xbf16, #tpu.memory_space<vmem>>, vector<1x256x128xbf16>
    %225 = vector.shape_cast %224 : vector<1x256x128xbf16> to vector<256x128xbf16>
    %cst_123 = arith.constant dense<0.000000e+00> : vector<8x128xf32>
    %226 = tpu.matmul %223, %225, %cst_123 {dimension_numbers = #tpu.dot_dimension_numbers<[1], [0], [0], [1], [0, 0, 1, 1], [], []>} : vector<8x256xbf16>, vector<256x128xbf16>, vector<8x128xf32> -> vector<8x128xf32>
    %227 = arith.addf %213, %226 : vector<8x128xf32>
    %228 = vector.extract_strided_slice %72 {offsets = [44, 0, 0], sizes = [1, 8, 64], strides = [1, 1, 1]} : vector<64x8x64xf32> to vector<1x8x64xf32>
    %229 = vector.shape_cast %228 : vector<1x8x64xf32> to vector<8x64xf32>
    %230 = vector.extract_strided_slice %72 {offsets = [45, 0, 0], sizes = [1, 8, 64], strides = [1, 1, 1]} : vector<64x8x64xf32> to vector<1x8x64xf32>
    %231 = vector.shape_cast %230 : vector<1x8x64xf32> to vector<8x64xf32>
    %232 = vector.extract_strided_slice %72 {offsets = [46, 0, 0], sizes = [1, 8, 64], strides = [1, 1, 1]} : vector<64x8x64xf32> to vector<1x8x64xf32>
    %233 = vector.shape_cast %232 : vector<1x8x64xf32> to vector<8x64xf32>
    %234 = vector.extract_strided_slice %72 {offsets = [47, 0, 0], sizes = [1, 8, 64], strides = [1, 1, 1]} : vector<64x8x64xf32> to vector<1x8x64xf32>
    %235 = vector.shape_cast %234 : vector<1x8x64xf32> to vector<8x64xf32>
    %236 = tpu.concatenate %229, %231, %233, %235 in 1 : vector<8x64xf32>, vector<8x64xf32>, vector<8x64xf32>, vector<8x64xf32> -> vector<8x256xf32>
    %237 = arith.truncf %236 : vector<8x256xf32> to vector<8x256xbf16>
    %c11 = arith.constant 11 : index
    %c0_124 = arith.constant 0 : index
    %c0_125 = arith.constant 0 : index
    %238 = vector.load %arg7[%c11, %c0_124, %c0_125] : memref<16x256x128xbf16, #tpu.memory_space<vmem>>, vector<1x256x128xbf16>
    %239 = vector.shape_cast %238 : vector<1x256x128xbf16> to vector<256x128xbf16>
    %cst_126 = arith.constant dense<0.000000e+00> : vector<8x128xf32>
    %240 = tpu.matmul %237, %239, %cst_126 {dimension_numbers = #tpu.dot_dimension_numbers<[1], [0], [0], [1], [0, 0, 1, 1], [], []>} : vector<8x256xbf16>, vector<256x128xbf16>, vector<8x128xf32> -> vector<8x128xf32>
    %241 = arith.addf %227, %240 : vector<8x128xf32>
    %242 = vector.extract_strided_slice %72 {offsets = [48, 0, 0], sizes = [1, 8, 64], strides = [1, 1, 1]} : vector<64x8x64xf32> to vector<1x8x64xf32>
    %243 = vector.shape_cast %242 : vector<1x8x64xf32> to vector<8x64xf32>
    %244 = vector.extract_strided_slice %72 {offsets = [49, 0, 0], sizes = [1, 8, 64], strides = [1, 1, 1]} : vector<64x8x64xf32> to vector<1x8x64xf32>
    %245 = vector.shape_cast %244 : vector<1x8x64xf32> to vector<8x64xf32>
    %246 = vector.extract_strided_slice %72 {offsets = [50, 0, 0], sizes = [1, 8, 64], strides = [1, 1, 1]} : vector<64x8x64xf32> to vector<1x8x64xf32>
    %247 = vector.shape_cast %246 : vector<1x8x64xf32> to vector<8x64xf32>
    %248 = vector.extract_strided_slice %72 {offsets = [51, 0, 0], sizes = [1, 8, 64], strides = [1, 1, 1]} : vector<64x8x64xf32> to vector<1x8x64xf32>
    %249 = vector.shape_cast %248 : vector<1x8x64xf32> to vector<8x64xf32>
    %250 = tpu.concatenate %243, %245, %247, %249 in 1 : vector<8x64xf32>, vector<8x64xf32>, vector<8x64xf32>, vector<8x64xf32> -> vector<8x256xf32>
    %251 = arith.truncf %250 : vector<8x256xf32> to vector<8x256xbf16>
    %c12 = arith.constant 12 : index
    %c0_127 = arith.constant 0 : index
    %c0_128 = arith.constant 0 : index
    %252 = vector.load %arg7[%c12, %c0_127, %c0_128] : memref<16x256x128xbf16, #tpu.memory_space<vmem>>, vector<1x256x128xbf16>
    %253 = vector.shape_cast %252 : vector<1x256x128xbf16> to vector<256x128xbf16>
    %cst_129 = arith.constant dense<0.000000e+00> : vector<8x128xf32>
    %254 = tpu.matmul %251, %253, %cst_129 {dimension_numbers = #tpu.dot_dimension_numbers<[1], [0], [0], [1], [0, 0, 1, 1], [], []>} : vector<8x256xbf16>, vector<256x128xbf16>, vector<8x128xf32> -> vector<8x128xf32>
    %255 = arith.addf %241, %254 : vector<8x128xf32>
    %256 = vector.extract_strided_slice %72 {offsets = [52, 0, 0], sizes = [1, 8, 64], strides = [1, 1, 1]} : vector<64x8x64xf32> to vector<1x8x64xf32>
    %257 = vector.shape_cast %256 : vector<1x8x64xf32> to vector<8x64xf32>
    %258 = vector.extract_strided_slice %72 {offsets = [53, 0, 0], sizes = [1, 8, 64], strides = [1, 1, 1]} : vector<64x8x64xf32> to vector<1x8x64xf32>
    %259 = vector.shape_cast %258 : vector<1x8x64xf32> to vector<8x64xf32>
    %260 = vector.extract_strided_slice %72 {offsets = [54, 0, 0], sizes = [1, 8, 64], strides = [1, 1, 1]} : vector<64x8x64xf32> to vector<1x8x64xf32>
    %261 = vector.shape_cast %260 : vector<1x8x64xf32> to vector<8x64xf32>
    %262 = vector.extract_strided_slice %72 {offsets = [55, 0, 0], sizes = [1, 8, 64], strides = [1, 1, 1]} : vector<64x8x64xf32> to vector<1x8x64xf32>
    %263 = vector.shape_cast %262 : vector<1x8x64xf32> to vector<8x64xf32>
    %264 = tpu.concatenate %257, %259, %261, %263 in 1 : vector<8x64xf32>, vector<8x64xf32>, vector<8x64xf32>, vector<8x64xf32> -> vector<8x256xf32>
    %265 = arith.truncf %264 : vector<8x256xf32> to vector<8x256xbf16>
    %c13 = arith.constant 13 : index
    %c0_130 = arith.constant 0 : index
    %c0_131 = arith.constant 0 : index
    %266 = vector.load %arg7[%c13, %c0_130, %c0_131] : memref<16x256x128xbf16, #tpu.memory_space<vmem>>, vector<1x256x128xbf16>
    %267 = vector.shape_cast %266 : vector<1x256x128xbf16> to vector<256x128xbf16>
    %cst_132 = arith.constant dense<0.000000e+00> : vector<8x128xf32>
    %268 = tpu.matmul %265, %267, %cst_132 {dimension_numbers = #tpu.dot_dimension_numbers<[1], [0], [0], [1], [0, 0, 1, 1], [], []>} : vector<8x256xbf16>, vector<256x128xbf16>, vector<8x128xf32> -> vector<8x128xf32>
    %269 = arith.addf %255, %268 : vector<8x128xf32>
    %270 = vector.extract_strided_slice %72 {offsets = [56, 0, 0], sizes = [1, 8, 64], strides = [1, 1, 1]} : vector<64x8x64xf32> to vector<1x8x64xf32>
    %271 = vector.shape_cast %270 : vector<1x8x64xf32> to vector<8x64xf32>
    %272 = vector.extract_strided_slice %72 {offsets = [57, 0, 0], sizes = [1, 8, 64], strides = [1, 1, 1]} : vector<64x8x64xf32> to vector<1x8x64xf32>
    %273 = vector.shape_cast %272 : vector<1x8x64xf32> to vector<8x64xf32>
    %274 = vector.extract_strided_slice %72 {offsets = [58, 0, 0], sizes = [1, 8, 64], strides = [1, 1, 1]} : vector<64x8x64xf32> to vector<1x8x64xf32>
    %275 = vector.shape_cast %274 : vector<1x8x64xf32> to vector<8x64xf32>
    %276 = vector.extract_strided_slice %72 {offsets = [59, 0, 0], sizes = [1, 8, 64], strides = [1, 1, 1]} : vector<64x8x64xf32> to vector<1x8x64xf32>
    %277 = vector.shape_cast %276 : vector<1x8x64xf32> to vector<8x64xf32>
    %278 = tpu.concatenate %271, %273, %275, %277 in 1 : vector<8x64xf32>, vector<8x64xf32>, vector<8x64xf32>, vector<8x64xf32> -> vector<8x256xf32>
    %279 = arith.truncf %278 : vector<8x256xf32> to vector<8x256xbf16>
    %c14 = arith.constant 14 : index
    %c0_133 = arith.constant 0 : index
    %c0_134 = arith.constant 0 : index
    %280 = vector.load %arg7[%c14, %c0_133, %c0_134] : memref<16x256x128xbf16, #tpu.memory_space<vmem>>, vector<1x256x128xbf16>
    %281 = vector.shape_cast %280 : vector<1x256x128xbf16> to vector<256x128xbf16>
    %cst_135 = arith.constant dense<0.000000e+00> : vector<8x128xf32>
    %282 = tpu.matmul %279, %281, %cst_135 {dimension_numbers = #tpu.dot_dimension_numbers<[1], [0], [0], [1], [0, 0, 1, 1], [], []>} : vector<8x256xbf16>, vector<256x128xbf16>, vector<8x128xf32> -> vector<8x128xf32>
    %283 = arith.addf %269, %282 : vector<8x128xf32>
    %284 = vector.extract_strided_slice %72 {offsets = [60, 0, 0], sizes = [1, 8, 64], strides = [1, 1, 1]} : vector<64x8x64xf32> to vector<1x8x64xf32>
    %285 = vector.shape_cast %284 : vector<1x8x64xf32> to vector<8x64xf32>
    %286 = vector.extract_strided_slice %72 {offsets = [61, 0, 0], sizes = [1, 8, 64], strides = [1, 1, 1]} : vector<64x8x64xf32> to vector<1x8x64xf32>
    %287 = vector.shape_cast %286 : vector<1x8x64xf32> to vector<8x64xf32>
    %288 = vector.extract_strided_slice %72 {offsets = [62, 0, 0], sizes = [1, 8, 64], strides = [1, 1, 1]} : vector<64x8x64xf32> to vector<1x8x64xf32>
    %289 = vector.shape_cast %288 : vector<1x8x64xf32> to vector<8x64xf32>
    %290 = vector.extract_strided_slice %72 {offsets = [63, 0, 0], sizes = [1, 8, 64], strides = [1, 1, 1]} : vector<64x8x64xf32> to vector<1x8x64xf32>
    %291 = vector.shape_cast %290 : vector<1x8x64xf32> to vector<8x64xf32>
    %292 = tpu.concatenate %285, %287, %289, %291 in 1 : vector<8x64xf32>, vector<8x64xf32>, vector<8x64xf32>, vector<8x64xf32> -> vector<8x256xf32>
    %293 = arith.truncf %292 : vector<8x256xf32> to vector<8x256xbf16>
    %c15 = arith.constant 15 : index
    %c0_136 = arith.constant 0 : index
    %c0_137 = arith.constant 0 : index
    %294 = vector.load %arg7[%c15, %c0_136, %c0_137] : memref<16x256x128xbf16, #tpu.memory_space<vmem>>, vector<1x256x128xbf16>
    %295 = vector.shape_cast %294 : vector<1x256x128xbf16> to vector<256x128xbf16>
    %cst_138 = arith.constant dense<0.000000e+00> : vector<8x128xf32>
    %296 = tpu.matmul %293, %295, %cst_138 {dimension_numbers = #tpu.dot_dimension_numbers<[1], [0], [0], [1], [0, 0, 1, 1], [], []>} : vector<8x256xbf16>, vector<256x128xbf16>, vector<8x128xf32> -> vector<8x128xf32>
    %297 = arith.addf %283, %296 : vector<8x128xf32>
    %c0_139 = arith.constant 0 : index
    %c0_140 = arith.constant 0 : index
    %298 = vector.load %arg8[%c0_139, %c0_140] : memref<1x128xf32, #tpu.memory_space<vmem>>, vector<1x128xf32>
    %299 = vector.broadcast %298 : vector<1x128xf32> to vector<8x128xf32>
    %300 = arith.addf %297, %299 : vector<8x128xf32>
    %cst_141 = arith.constant 0.000000e+00 : f32
    %301 = vector.broadcast %cst_141 : f32 to vector<8x128xf32>
    %302 = arith.maximumf %300, %301 : vector<8x128xf32>
    %303 = arith.truncf %302 : vector<8x128xf32> to vector<8x128xbf16>
    %c0_142 = arith.constant 0 : index
    %c0_143 = arith.constant 0 : index
    %304 = vector.load %arg9[%c0_142, %c0_143] : memref<128x1024xbf16, #tpu.memory_space<vmem>>, vector<128x1024xbf16>
    %cst_144 = arith.constant dense<0.000000e+00> : vector<8x1024xf32>
    %305 = tpu.matmul %303, %304, %cst_144 {dimension_numbers = #tpu.dot_dimension_numbers<[1], [0], [0], [1], [0, 0, 1, 1], [], []>} : vector<8x128xbf16>, vector<128x1024xbf16>, vector<8x1024xf32> -> vector<8x1024xf32>
    %c0_145 = arith.constant 0 : index
    %c0_146 = arith.constant 0 : index
    %306 = vector.load %arg10[%c0_145, %c0_146] : memref<1x1024xf32, #tpu.memory_space<vmem>>, vector<1x1024xf32>
    %307 = vector.broadcast %306 : vector<1x1024xf32> to vector<8x1024xf32>
    %308 = arith.addf %305, %307 : vector<8x1024xf32>
    %309 = tpu.iota {dimensions = array<i32: 1>} : vector<8x1024xi32>
    %c0_147 = arith.constant 0 : index
    %310 = memref.load %arg1[%c0_147] : memref<1xi32, #tpu.memory_space<smem>>
    %311 = vector.broadcast %310 : i32 to vector<8x1024xi32>
    %312 = arith.cmpi slt, %309, %311 : vector<8x1024xi32>
    %cst_148 = arith.constant 0xFF800000 : f32
    %313 = vector.broadcast %cst_148 : f32 to vector<8x1024xf32>
    %314 = arith.select %312, %308, %313 : vector<8x1024xi1>, vector<8x1024xf32>
    %c0_149 = arith.constant 0 : index
    %c0_150 = arith.constant 0 : index
    %315 = vector.load %arg11[%c0_149, %c0_150] : memref<8x1024xf32, #tpu.memory_space<vmem>>, vector<8x1024xf32>
    tpu.vector_store %arg11[%c0_149, %c0_150], %314 {strides = array<i32>} : memref<8x1024xf32, #tpu.memory_space<vmem>>, vector<8x1024xf32>,
    return
  }
  func.func @transform_0(%arg0: i32, %arg1: memref<1xi32, #tpu.memory_space<smem>>) -> (i32, i32, i32, i32) {
    %c0_i32 = arith.constant 0 : i32
    %c0_i32_0 = arith.constant 0 : i32
    %c0_i32_1 = arith.constant 0 : i32
    %c0_i32_2 = arith.constant 0 : i32
    return %c0_i32, %c0_i32_0, %arg0, %c0_i32_1 : i32, i32, i32, i32
  }
  func.func @transform_1(%arg0: i32, %arg1: memref<1xi32, #tpu.memory_space<smem>>) -> (i32, i32) {
    %c0_i32 = arith.constant 0 : i32
    %c0_i32_0 = arith.constant 0 : i32
    %c0_i32_1 = arith.constant 0 : i32
    return %c0_i32, %c0_i32_0 : i32, i32
  }
  func.func @transform_2(%arg0: i32, %arg1: memref<1xi32, #tpu.memory_space<smem>>) -> (i32, i32) {
    %c0_i32 = arith.constant 0 : i32
    %c0_i32_0 = arith.constant 0 : i32
    %c0_i32_1 = arith.constant 0 : i32
    return %c0_i32, %c0_i32_0 : i32, i32
  }
  func.func @transform_3(%arg0: i32, %arg1: memref<1xi32, #tpu.memory_space<smem>>) -> (i32, i32) {
    %c0_i32 = arith.constant 0 : i32
    %c0_i32_0 = arith.constant 0 : i32
    %c0_i32_1 = arith.constant 0 : i32
    return %c0_i32, %c0_i32_0 : i32, i32
  }
  func.func @transform_4(%arg0: i32, %arg1: memref<1xi32, #tpu.memory_space<smem>>) -> (i32, i32) {
    %c0_i32 = arith.constant 0 : i32
    %c0_i32_0 = arith.constant 0 : i32
    %c0_i32_1 = arith.constant 0 : i32
    return %c0_i32, %c0_i32_0 : i32, i32
  }
  func.func @transform_5(%arg0: i32, %arg1: memref<1xi32, #tpu.memory_space<smem>>) -> (i32, i32, i32) {
    %c0_i32 = arith.constant 0 : i32
    %c0_i32_0 = arith.constant 0 : i32
    %c0_i32_1 = arith.constant 0 : i32
    %c0_i32_2 = arith.constant 0 : i32
    return %c0_i32, %c0_i32_0, %c0_i32_1 : i32, i32, i32
  }
  func.func @transform_6(%arg0: i32, %arg1: memref<1xi32, #tpu.memory_space<smem>>) -> (i32, i32) {
    %c0_i32 = arith.constant 0 : i32
    %c0_i32_0 = arith.constant 0 : i32
    %c0_i32_1 = arith.constant 0 : i32
    return %c0_i32, %c0_i32_0 : i32, i32
  }
  func.func @transform_7(%arg0: i32, %arg1: memref<1xi32, #tpu.memory_space<smem>>) -> (i32, i32) {
    %c0_i32 = arith.constant 0 : i32
    %c0_i32_0 = arith.constant 0 : i32
    %c0_i32_1 = arith.constant 0 : i32
    return %c0_i32, %c0_i32_0 : i32, i32
  }
  func.func @transform_8(%arg0: i32, %arg1: memref<1xi32, #tpu.memory_space<smem>>) -> (i32, i32) {
    %c0_i32 = arith.constant 0 : i32
    %c0_i32_0 = arith.constant 0 : i32
    %c0_i32_1 = arith.constant 0 : i32
    return %c0_i32, %c0_i32_0 : i32, i32
  }
  func.func @transform_9(%arg0: i32, %arg1: memref<1xi32, #tpu.memory_space<smem>>) -> (i32, i32) {
    %c0_i32 = arith.constant 0 : i32
    %c0_i32_0 = arith.constant 0 : i32
    return %arg0, %c0_i32 : i32, i32
  }
}

</mosaic_0001>

<llo_original>
// kernel: actor_forward.1
$region0: #{actor_forward.1}
  #allocation0 [shape = 'u32[]', space=smem, size = 0x4, offset = 0x4, fixed_abs, tag = 'smem constant byte address 0x4 - core index']
  #allocation1 [shape = 'u32[144,128]{1,0:T(1,128)}', space=vmem, size = 0x12000, scoped, tag = 'internal scratch']
  #allocation2 [shape = 'f32[10,10,8,32]{3,2,1,0:T(8,128)}', space=vmem, size = 0x64000, scoped, tag = 'scratch operand']
  #allocation3 [shape = 's32[1]{0}', space=sflag, size = 0x4, scoped, tag = 'scoped memory for actor_forward.1']
  #allocation4 [shape = 's32[1]{0:T(128)S(6)}', space=smem, size = 0x200, scoped, tag = 'prefetched SMEM operand 0']
  %s0 = inlined_call_operand.<no memory space> [shape: s32[1], index: 0, kind: input, shape index: {}]
  %s1 = inlined_call_operand.vmem [shape: f32[8,8,8,16], index: 1, kind: input, shape index: {}]
  %s2 = inlined_call_operand.vmem [shape: f32[16,32], index: 2, kind: input, shape index: {}]
  %s3 = inlined_call_operand.vmem [shape: f32[1,32], index: 3, kind: input, shape index: {}]
  %s4 = inlined_call_operand.vmem [shape: f32[288,64], index: 4, kind: input, shape index: {}]
  %s5 = inlined_call_operand.vmem [shape: f32[1,64], index: 5, kind: input, shape index: {}]
  %s6 = inlined_call_operand.vmem [shape: bf16[16,256,128], index: 6, kind: input, shape index: {}]
  %s7 = inlined_call_operand.vmem [shape: f32[1,128], index: 7, kind: input, shape index: {}]
  %s8 = inlined_call_operand.vmem [shape: bf16[128,1024], index: 8, kind: input, shape index: {}]
  %s9 = inlined_call_operand.vmem [shape: f32[1,1024], index: 9, kind: input, shape index: {}]
  %s10 = inlined_call_operand.vmem [shape: f32[8,1024], index: 10, kind: output, shape index: {}]
  %s11 = sld [smem:[#allocation0]]
  $region46: #{actor_forward.1} parent=0
    _
  %s13 = ssub.s32 1, %s11
  %s14 = scalar_select 0, %s13, %s11
  %15 = sst [smem:[#allocation4]] %s0
  // Predicated region
  $region2: #{actor_forward.1} parent=0 // pred_check
    _
  $region3: #{actor_forward.1} parent=0 // pred_check_branch
    %17 = sbr.rel (0) target = $region5
  $region4: #{actor_forward.1} parent=0 // pred_region
    _
  $region5: #{actor_forward.1} parent=0 // pred_fallthru
    _
  // Predicated region
  $region6: #{actor_forward.1} parent=0 // pred_check
    _
  $region7: #{actor_forward.1} parent=0 // pred_check_branch
    %19 = sbr.rel (0) target = $region9
  $region8: #{actor_forward.1} parent=0 // pred_region
    _
  $region9: #{actor_forward.1} parent=0 // pred_fallthru
    _
  // Predicated region
  $region10: #{actor_forward.1} parent=0 // pred_check
    _
  $region11: #{actor_forward.1} parent=0 // pred_check_branch
    %21 = sbr.rel (0) target = $region13
  $region12: #{actor_forward.1} parent=0 // pred_region
    _
  $region13: #{actor_forward.1} parent=0 // pred_fallthru
    _
  // Predicated region
  $region14: #{actor_forward.1} parent=0 // pred_check
    _
  $region15: #{actor_forward.1} parent=0 // pred_check_branch
    %23 = sbr.rel (0) target = $region17
  $region16: #{actor_forward.1} parent=0 // pred_region
    _
  $region17: #{actor_forward.1} parent=0 // pred_fallthru
    _
  // Predicated region
  $region18: #{actor_forward.1} parent=0 // pred_check
    _
  $region19: #{actor_forward.1} parent=0 // pred_check_branch
    %25 = sbr.rel (0) target = $region21
  $region20: #{actor_forward.1} parent=0 // pred_region
    _
  $region21: #{actor_forward.1} parent=0 // pred_fallthru
    _
  // Predicated region
  $region22: #{actor_forward.1} parent=0 // pred_check
    _
  $region23: #{actor_forward.1} parent=0 // pred_check_branch
    %27 = sbr.rel (0) target = $region25
  $region24: #{actor_forward.1} parent=0 // pred_region
    _
  $region25: #{actor_forward.1} parent=0 // pred_fallthru
    _
  // Predicated region
  $region26: #{actor_forward.1} parent=0 // pred_check
    _
  $region27: #{actor_forward.1} parent=0 // pred_check_branch
    %29 = sbr.rel (0) target = $region29
  $region28: #{actor_forward.1} parent=0 // pred_region
    _
  $region29: #{actor_forward.1} parent=0 // pred_fallthru
    _
  // Predicated region
  $region30: #{actor_forward.1} parent=0 // pred_check
    _
  $region31: #{actor_forward.1} parent=0 // pred_check_branch
    %31 = sbr.rel (0) target = $region33
  $region32: #{actor_forward.1} parent=0 // pred_region
    _
  $region33: #{actor_forward.1} parent=0 // pred_fallthru
    _
  // Predicated region
  $region34: #{actor_forward.1} parent=0 // pred_check
    _
  $region35: #{actor_forward.1} parent=0 // pred_check_branch
    %33 = sbr.rel (0) target = $region37
  $region36: #{actor_forward.1} parent=0 // pred_region
    _
  $region37: #{actor_forward.1} parent=0 // pred_fallthru
    _
  %v35 = vld [vmem:[%s1] sm:$0xff]
  %v36 = vld [vmem:[%s1 + $0x8] sm:$0xff]
  %v37 = vld [vmem:[%s1 + $0x10] sm:$0xff]
  %v38 = vld [vmem:[%s1 + $0x18] sm:$0xff]
  %v39 = vld [vmem:[%s1 + $0x20] sm:$0xff]
  %v40 = vld [vmem:[%s1 + $0x28] sm:$0xff]
  %v41 = vld [vmem:[%s1 + $0x30] sm:$0xff]
  %v42 = vld [vmem:[%s1 + $0x38] sm:$0xff]
  %v43 = vld [vmem:[%s1 + $0x40] sm:$0xff]
  %v44 = vld [vmem:[%s1 + $0x48] sm:$0xff]
  %v45 = vld [vmem:[%s1 + $0x50] sm:$0xff]
  %v46 = vld [vmem:[%s1 + $0x58] sm:$0xff]
  %v47 = vld [vmem:[%s1 + $0x60] sm:$0xff]
  %v48 = vld [vmem:[%s1 + $0x68] sm:$0xff]
  %v49 = vld [vmem:[%s1 + $0x70] sm:$0xff]
  %v50 = vld [vmem:[%s1 + $0x78] sm:$0xff]
  %v51 = vld [vmem:[%s1 + $0x80] sm:$0xff]
  %v52 = vld [vmem:[%s1 + $0x88] sm:$0xff]
  %v53 = vld [vmem:[%s1 + $0x90] sm:$0xff]
  %v54 = vld [vmem:[%s1 + $0x98] sm:$0xff]
  %v55 = vld [vmem:[%s1 + $0xa0] sm:$0xff]
  %v56 = vld [vmem:[%s1 + $0xa8] sm:$0xff]
  %v57 = vld [vmem:[%s1 + $0xb0] sm:$0xff]
  %v58 = vld [vmem:[%s1 + $0xb8] sm:$0xff]
  %v59 = vld [vmem:[%s1 + $0xc0] sm:$0xff]
  %v60 = vld [vmem:[%s1 + $0xc8] sm:$0xff]
  %v61 = vld [vmem:[%s1 + $0xd0] sm:$0xff]
  %v62 = vld [vmem:[%s1 + $0xd8] sm:$0xff]
  %v63 = vld [vmem:[%s1 + $0xe0] sm:$0xff]
  %v64 = vld [vmem:[%s1 + $0xe8] sm:$0xff]
  %v65 = vld [vmem:[%s1 + $0xf0] sm:$0xff]
  %v66 = vld [vmem:[%s1 + $0xf8] sm:$0xff]
  %v67 = vld [vmem:[%s1 + $0x100] sm:$0xff]
  %v68 = vld [vmem:[%s1 + $0x108] sm:$0xff]
  %v69 = vld [vmem:[%s1 + $0x110] sm:$0xff]
  %v70 = vld [vmem:[%s1 + $0x118] sm:$0xff]
  %v71 = vld [vmem:[%s1 + $0x120] sm:$0xff]
  %v72 = vld [vmem:[%s1 + $0x128] sm:$0xff]
  %v73 = vld [vmem:[%s1 + $0x130] sm:$0xff]
  %v74 = vld [vmem:[%s1 + $0x138] sm:$0xff]
  %v75 = vld [vmem:[%s1 + $0x140] sm:$0xff]
  %v76 = vld [vmem:[%s1 + $0x148] sm:$0xff]
  %v77 = vld [vmem:[%s1 + $0x150] sm:$0xff]
  %v78 = vld [vmem:[%s1 + $0x158] sm:$0xff]
  %v79 = vld [vmem:[%s1 + $0x160] sm:$0xff]
  %v80 = vld [vmem:[%s1 + $0x168] sm:$0xff]
  %v81 = vld [vmem:[%s1 + $0x170] sm:$0xff]
  %v82 = vld [vmem:[%s1 + $0x178] sm:$0xff]
  %v83 = vld [vmem:[%s1 + $0x180] sm:$0xff]
  %v84 = vld [vmem:[%s1 + $0x188] sm:$0xff]
  %v85 = vld [vmem:[%s1 + $0x190] sm:$0xff]
  %v86 = vld [vmem:[%s1 + $0x198] sm:$0xff]
  %v87 = vld [vmem:[%s1 + $0x1a0] sm:$0xff]
  %v88 = vld [vmem:[%s1 + $0x1a8] sm:$0xff]
  %v89 = vld [vmem:[%s1 + $0x1b0] sm:$0xff]
  %v90 = vld [vmem:[%s1 + $0x1b8] sm:$0xff]
  %v91 = vld [vmem:[%s1 + $0x1c0] sm:$0xff]
  %v92 = vld [vmem:[%s1 + $0x1c8] sm:$0xff]
  %v93 = vld [vmem:[%s1 + $0x1d0] sm:$0xff]
  %v94 = vld [vmem:[%s1 + $0x1d8] sm:$0xff]
  %v95 = vld [vmem:[%s1 + $0x1e0] sm:$0xff]
  %v96 = vld [vmem:[%s1 + $0x1e8] sm:$0xff]
  %v97 = vld [vmem:[%s1 + $0x1f0] sm:$0xff]
  %v98 = vld [vmem:[%s1 + $0x1f8] sm:$0xff]
  %v99 = vld [vmem:[%s2] sm:$0xff]
  %v100 = vld [vmem:[%s2 + $0x8] sm:$0xff]
  %v101 = vld [vmem:[%s3] sm:$0x1]
  %v103 = vlaneseq
  %v104 = vshrl.u32 %v103, 7
  %v105 = vsub.s32 0, %v104
  %v106 = vrot.slane %v101, %v105
  %vm108 = vcmask 130048
  %v110 = vsel %vm108, %v35, 0
  %v113 = vsel %vm108, %v36, 0
  %v116 = vsel %vm108, %v37, 0
  %v119 = vsel %vm108, %v38, 0
  %v122 = vsel %vm108, %v39, 0
  %v125 = vsel %vm108, %v40, 0
  %v128 = vsel %vm108, %v41, 0
  %v131 = vsel %vm108, %v42, 0
  %v134 = vsel %vm108, %v43, 0
  %v137 = vsel %vm108, %v44, 0
  %v140 = vsel %vm108, %v45, 0
  %v143 = vsel %vm108, %v46, 0
  %v146 = vsel %vm108, %v47, 0
  %v149 = vsel %vm108, %v48, 0
  %v152 = vsel %vm108, %v49, 0
  %v155 = vsel %vm108, %v50, 0
  %v158 = vsel %vm108, %v51, 0
  %v161 = vsel %vm108, %v52, 0
  %v164 = vsel %vm108, %v53, 0
  %v167 = vsel %vm108, %v54, 0
  %v170 = vsel %vm108, %v55, 0
  %v173 = vsel %vm108, %v56, 0
  %v176 = vsel %vm108, %v57, 0
  %v179 = vsel %vm108, %v58, 0
  %v182 = vsel %vm108, %v59, 0
  %v185 = vsel %vm108, %v60, 0
  %v188 = vsel %vm108, %v61, 0
  %v191 = vsel %vm108, %v62, 0
  %v194 = vsel %vm108, %v63, 0
  %v197 = vsel %vm108, %v64, 0
  %v200 = vsel %vm108, %v65, 0
  %v203 = vsel %vm108, %v66, 0
  %v206 = vsel %vm108, %v67, 0
  %v209 = vsel %vm108, %v68, 0
  %v212 = vsel %vm108, %v69, 0
  %v215 = vsel %vm108, %v70, 0
  %v218 = vsel %vm108, %v71, 0
  %v221 = vsel %vm108, %v72, 0
  %v224 = vsel %vm108, %v73, 0
  %v227 = vsel %vm108, %v74, 0
  %v230 = vsel %vm108, %v75, 0
  %v233 = vsel %vm108, %v76, 0
  %v236 = vsel %vm108, %v77, 0
  %v239 = vsel %vm108, %v78, 0
  %v242 = vsel %vm108, %v79, 0
  %v245 = vsel %vm108, %v80, 0
  %v248 = vsel %vm108, %v81, 0
  %v251 = vsel %vm108, %v82, 0
  %v254 = vsel %vm108, %v83, 0
  %v257 = vsel %vm108, %v84, 0
  %v260 = vsel %vm108, %v85, 0
  %v263 = vsel %vm108, %v86, 0
  %v266 = vsel %vm108, %v87, 0
  %v269 = vsel %vm108, %v88, 0
  %v272 = vsel %vm108, %v89, 0
  %v275 = vsel %vm108, %v90, 0
  %v278 = vsel %vm108, %v91, 0
  %v281 = vsel %vm108, %v92, 0
  %v284 = vsel %vm108, %v93, 0
  %v287 = vsel %vm108, %v94, 0
  %v290 = vsel %vm108, %v95, 0
  %v293 = vsel %vm108, %v96, 0
  %v296 = vsel %vm108, %v97, 0
  %v299 = vsel %vm108, %v98, 0
  %301 = vmatprep.subr.mxu0 0.0
  %302 = vmatpush1.msra.mxu0 0.0
  %303 = vmatprep.subr.mxu0 0.0
  %304 = vmatpush1.msra.mxu0 0.0
  %305 = vmatprep.subr.mxu0 0.0
  %306 = vmatpush1.msra.mxu0 0.0
  %307 = vmatprep.subr.mxu0 0.0
  %308 = vmatpush1.msra.mxu0 0.0
  %309 = vmatprep.subr.mxu0 0.0
  %310 = vmatpush1.msra.mxu0 0.0
  %311 = vmatprep.subr.mxu0 0.0
  %312 = vmatpush1.msra.mxu0 0.0
  %313 = vmatprep.subr.mxu0 0.0
  %314 = vmatpush1.msra.mxu0 0.0
  %315 = vmatprep.subr.mxu0 0.0
  %316 = vmatpush1.msra.mxu0 0.0
  %317 = vmatprep.subr.mxu0 0.0
  %318 = vmatpush1.msra.mxu0 0.0
  %319 = vmatprep.subr.mxu0 0.0
  %320 = vmatpush1.msra.mxu0 0.0
  %321 = vmatprep.subr.mxu0 0.0
  %322 = vmatpush1.msra.mxu0 0.0
  %323 = vmatprep.subr.mxu0 0.0
  %324 = vmatpush1.msra.mxu0 0.0
  %325 = vmatprep.subr.mxu0 0.0
  %326 = vmatpush1.msra.mxu0 0.0
  %327 = vmatprep.subr.mxu0 0.0
  %328 = vmatpush1.msra.mxu0 0.0
  %329 = vmatprep.subr.mxu0 0.0
  %330 = vmatpush1.msra.mxu0 %v100
  %331 = vmatprep.subr.mxu0 0.0
  %332 = vmatpush1.msra.mxu0 %v99
  %333 = vmatprep.subr.mxu0 0.0
  %334 = vmatpush2.msra.mxu0 0.0
  %335 = vmatprep.subr.mxu0 0.0
  %336 = vmatpush2.msra.mxu0 0.0
  %337 = vmatprep.subr.mxu0 0.0
  %338 = vmatpush2.msra.mxu0 0.0
  %339 = vmatprep.subr.mxu0 0.0
  %340 = vmatpush2.msra.mxu0 0.0
  %341 = vmatprep.subr.mxu0 0.0
  %342 = vmatpush2.msra.mxu0 0.0
  %343 = vmatprep.subr.mxu0 0.0
  %344 = vmatpush2.msra.mxu0 0.0
  %345 = vmatprep.subr.mxu0 0.0
  %346 = vmatpush2.msra.mxu0 0.0
  %347 = vmatprep.subr.mxu0 0.0
  %348 = vmatpush2.msra.mxu0 0.0
  %349 = vmatprep.subr.mxu0 0.0
  %350 = vmatpush2.msra.mxu0 0.0
  %351 = vmatprep.subr.mxu0 0.0
  %352 = vmatpush2.msra.mxu0 0.0
  %353 = vmatprep.subr.mxu0 0.0
  %354 = vmatpush2.msra.mxu0 0.0
  %355 = vmatprep.subr.mxu0 0.0
  %356 = vmatpush2.msra.mxu0 0.0
  %357 = vmatprep.subr.mxu0 0.0
  %358 = vmatpush2.msra.mxu0 0.0
  %359 = vmatprep.subr.mxu0 0.0
  %360 = vmatpush2.msra.mxu0 0.0
  %361 = vmatprep.subr.mxu0 0.0
  %362 = vmatpush2.msra.mxu0 0.0
  %363 = vmatprep.subr.mxu0 0.0
  %364 = vmatpush2.msra.mxu0 0.0
  %365 = vmatprep.mubr.f32.mxu0 0.0
  %366 = vmatmul.mubr.f32.gmra.mxu0 %v110
  %v367 = vpop.f32.mrf.mxu0
  %v368 = vadd.f32 %v106, %v367
  %v369 = vpop.f32.mrf.mxu0
  %370 = vmatprep.mubr.f32.mxu0 0.0
  %371 = vmatmul.mubr.f32.gmra.mxu0 %v113
  %v372 = vpop.f32.mrf.mxu0
  %v373 = vadd.f32 %v106, %v372
  %v374 = vpop.f32.mrf.mxu0
  %375 = vmatprep.mubr.f32.mxu0 0.0
  %376 = vmatmul.mubr.f32.gmra.mxu0 %v116
  %v377 = vpop.f32.mrf.mxu0
  %v378 = vadd.f32 %v106, %v377
  %v379 = vpop.f32.mrf.mxu0
  %380 = vmatprep.mubr.f32.mxu0 0.0
  %381 = vmatmul.mubr.f32.gmra.mxu0 %v119
  %v382 = vpop.f32.mrf.mxu0
  %v383 = vadd.f32 %v106, %v382
  %v384 = vpop.f32.mrf.mxu0
  %385 = vmatprep.mubr.f32.mxu0 0.0
  %386 = vmatmul.mubr.f32.gmra.mxu0 %v122
  %v387 = vpop.f32.mrf.mxu0
  %v388 = vadd.f32 %v106, %v387
  %v389 = vpop.f32.mrf.mxu0
  %390 = vmatprep.mubr.f32.mxu0 0.0
  %391 = vmatmul.mubr.f32.gmra.mxu0 %v125
  %v392 = vpop.f32.mrf.mxu0
  %v393 = vadd.f32 %v106, %v392
  %v394 = vpop.f32.mrf.mxu0
  %395 = vmatprep.mubr.f32.mxu0 0.0
  %396 = vmatmul.mubr.f32.gmra.mxu0 %v128
  %v397 = vpop.f32.mrf.mxu0
  %v398 = vadd.f32 %v106, %v397
  %v399 = vpop.f32.mrf.mxu0
  %400 = vmatprep.mubr.f32.mxu0 0.0
  %401 = vmatmul.mubr.f32.gmra.mxu0 %v131
  %v402 = vpop.f32.mrf.mxu0
  %v403 = vadd.f32 %v106, %v402
  %v404 = vpop.f32.mrf.mxu0
  %405 = vmatprep.mubr.f32.mxu0 0.0
  %406 = vmatmul.mubr.f32.gmra.mxu0 %v134
  %v407 = vpop.f32.mrf.mxu0
  %v408 = vadd.f32 %v106, %v407
  %v409 = vpop.f32.mrf.mxu0
  %410 = vmatprep.mubr.f32.mxu0 0.0
  %411 = vmatmul.mubr.f32.gmra.mxu0 %v137
  %v412 = vpop.f32.mrf.mxu0
  %v413 = vadd.f32 %v106, %v412
  %v414 = vpop.f32.mrf.mxu0
  %415 = vmatprep.mubr.f32.mxu0 0.0
  %416 = vmatmul.mubr.f32.gmra.mxu0 %v140
  %v417 = vpop.f32.mrf.mxu0
  %v418 = vadd.f32 %v106, %v417
  %v419 = vpop.f32.mrf.mxu0
  %420 = vmatprep.mubr.f32.mxu0 0.0
  %421 = vmatmul.mubr.f32.gmra.mxu0 %v143
  %v422 = vpop.f32.mrf.mxu0
  %v423 = vadd.f32 %v106, %v422
  %v424 = vpop.f32.mrf.mxu0
  %425 = vmatprep.mubr.f32.mxu0 0.0
  %426 = vmatmul.mubr.f32.gmra.mxu0 %v146
  %v427 = vpop.f32.mrf.mxu0
  %v428 = vadd.f32 %v106, %v427
  %v429 = vpop.f32.mrf.mxu0
  %430 = vmatprep.mubr.f32.mxu0 0.0
  %431 = vmatmul.mubr.f32.gmra.mxu0 %v149
  %v432 = vpop.f32.mrf.mxu0
  %v433 = vadd.f32 %v106, %v432
  %v434 = vpop.f32.mrf.mxu0
  %435 = vmatprep.mubr.f32.mxu0 0.0
  %436 = vmatmul.mubr.f32.gmra.mxu0 %v152
  %v437 = vpop.f32.mrf.mxu0
  %v438 = vadd.f32 %v106, %v437
  %v439 = vpop.f32.mrf.mxu0
  %440 = vmatprep.mubr.f32.mxu0 0.0
  %441 = vmatmul.mubr.f32.gmra.mxu0 %v155
  %v442 = vpop.f32.mrf.mxu0
  %v443 = vadd.f32 %v106, %v442
  %v444 = vpop.f32.mrf.mxu0
  %445 = vmatprep.mubr.f32.mxu0 0.0
  %446 = vmatmul.mubr.f32.gmra.mxu0 %v158
  %v447 = vpop.f32.mrf.mxu0
  %v448 = vadd.f32 %v106, %v447
  %v449 = vpop.f32.mrf.mxu0
  %450 = vmatprep.mubr.f32.mxu0 0.0
  %451 = vmatmul.mubr.f32.gmra.mxu0 %v161
  %v452 = vpop.f32.mrf.mxu0
  %v453 = vadd.f32 %v106, %v452
  %v454 = vpop.f32.mrf.mxu0
  %455 = vmatprep.mubr.f32.mxu0 0.0
  %456 = vmatmul.mubr.f32.gmra.mxu0 %v164
  %v457 = vpop.f32.mrf.mxu0
  %v458 = vadd.f32 %v106, %v457
  %v459 = vpop.f32.mrf.mxu0
  %460 = vmatprep.mubr.f32.mxu0 0.0
  %461 = vmatmul.mubr.f32.gmra.mxu0 %v167
  %v462 = vpop.f32.mrf.mxu0
  %v463 = vadd.f32 %v106, %v462
  %v464 = vpop.f32.mrf.mxu0
  %465 = vmatprep.mubr.f32.mxu0 0.0
  %466 = vmatmul.mubr.f32.gmra.mxu0 %v170
  %v467 = vpop.f32.mrf.mxu0
  %v468 = vadd.f32 %v106, %v467
  %v469 = vpop.f32.mrf.mxu0
  %470 = vmatprep.mubr.f32.mxu0 0.0
  %471 = vmatmul.mubr.f32.gmra.mxu0 %v173
  %v472 = vpop.f32.mrf.mxu0
  %v473 = vadd.f32 %v106, %v472
  %v474 = vpop.f32.mrf.mxu0
  %475 = vmatprep.mubr.f32.mxu0 0.0
  %476 = vmatmul.mubr.f32.gmra.mxu0 %v176
  %v477 = vpop.f32.mrf.mxu0
  %v478 = vadd.f32 %v106, %v477
  %v479 = vpop.f32.mrf.mxu0
  %480 = vmatprep.mubr.f32.mxu0 0.0
  %481 = vmatmul.mubr.f32.gmra.mxu0 %v179
  %v482 = vpop.f32.mrf.mxu0
  %v483 = vadd.f32 %v106, %v482
  %v484 = vpop.f32.mrf.mxu0
  %485 = vmatprep.mubr.f32.mxu0 0.0
  %486 = vmatmul.mubr.f32.gmra.mxu0 %v182
  %v487 = vpop.f32.mrf.mxu0
  %v488 = vadd.f32 %v106, %v487
  %v489 = vpop.f32.mrf.mxu0
  %490 = vmatprep.mubr.f32.mxu0 0.0
  %491 = vmatmul.mubr.f32.gmra.mxu0 %v185
  %v492 = vpop.f32.mrf.mxu0
  %v493 = vadd.f32 %v106, %v492
  %v494 = vpop.f32.mrf.mxu0
  %495 = vmatprep.mubr.f32.mxu0 0.0
  %496 = vmatmul.mubr.f32.gmra.mxu0 %v188
  %v497 = vpop.f32.mrf.mxu0
  %v498 = vadd.f32 %v106, %v497
  %v499 = vpop.f32.mrf.mxu0
  %500 = vmatprep.mubr.f32.mxu0 0.0
  %501 = vmatmul.mubr.f32.gmra.mxu0 %v191
  %v502 = vpop.f32.mrf.mxu0
  %v503 = vadd.f32 %v106, %v502
  %v504 = vpop.f32.mrf.mxu0
  %505 = vmatprep.mubr.f32.mxu0 0.0
  %506 = vmatmul.mubr.f32.gmra.mxu0 %v194
  %v507 = vpop.f32.mrf.mxu0
  %v508 = vadd.f32 %v106, %v507
  %v509 = vpop.f32.mrf.mxu0
  %510 = vmatprep.mubr.f32.mxu0 0.0
  %511 = vmatmul.mubr.f32.gmra.mxu0 %v197
  %v512 = vpop.f32.mrf.mxu0
  %v513 = vadd.f32 %v106, %v512
  %v514 = vpop.f32.mrf.mxu0
  %515 = vmatprep.mubr.f32.mxu0 0.0
  %516 = vmatmul.mubr.f32.gmra.mxu0 %v200
  %v517 = vpop.f32.mrf.mxu0
  %v518 = vadd.f32 %v106, %v517
  %v519 = vpop.f32.mrf.mxu0
  %520 = vmatprep.mubr.f32.mxu0 0.0
  %521 = vmatmul.mubr.f32.gmra.mxu0 %v203
  %v522 = vpop.f32.mrf.mxu0
  %v523 = vadd.f32 %v106, %v522
  %v524 = vpop.f32.mrf.mxu0
  %525 = vmatprep.mubr.f32.mxu0 0.0
  %526 = vmatmul.mubr.f32.gmra.mxu0 %v206
  %v527 = vpop.f32.mrf.mxu0
  %v528 = vadd.f32 %v106, %v527
  %v529 = vpop.f32.mrf.mxu0
  %530 = vmatprep.mubr.f32.mxu0 0.0
  %531 = vmatmul.mubr.f32.gmra.mxu0 %v209
  %v532 = vpop.f32.mrf.mxu0
  %v533 = vadd.f32 %v106, %v532
  %v534 = vpop.f32.mrf.mxu0
  %535 = vmatprep.mubr.f32.mxu0 0.0
  %536 = vmatmul.mubr.f32.gmra.mxu0 %v212
  %v537 = vpop.f32.mrf.mxu0
  %v538 = vadd.f32 %v106, %v537
  %v539 = vpop.f32.mrf.mxu0
  %540 = vmatprep.mubr.f32.mxu0 0.0
  %541 = vmatmul.mubr.f32.gmra.mxu0 %v215
  %v542 = vpop.f32.mrf.mxu0
  %v543 = vadd.f32 %v106, %v542
  %v544 = vpop.f32.mrf.mxu0
  %545 = vmatprep.mubr.f32.mxu0 0.0
  %546 = vmatmul.mubr.f32.gmra.mxu0 %v218
  %v547 = vpop.f32.mrf.mxu0
  %v548 = vadd.f32 %v106, %v547
  %v549 = vpop.f32.mrf.mxu0
  %550 = vmatprep.mubr.f32.mxu0 0.0
  %551 = vmatmul.mubr.f32.gmra.mxu0 %v221
  %v552 = vpop.f32.mrf.mxu0
  %v553 = vadd.f32 %v106, %v552
  %v554 = vpop.f32.mrf.mxu0
  %555 = vmatprep.mubr.f32.mxu0 0.0
  %556 = vmatmul.mubr.f32.gmra.mxu0 %v224
  %v557 = vpop.f32.mrf.mxu0
  %v558 = vadd.f32 %v106, %v557
  %v559 = vpop.f32.mrf.mxu0
  %560 = vmatprep.mubr.f32.mxu0 0.0
  %561 = vmatmul.mubr.f32.gmra.mxu0 %v227
  %v562 = vpop.f32.mrf.mxu0
  %v563 = vadd.f32 %v106, %v562
  %v564 = vpop.f32.mrf.mxu0
  %565 = vmatprep.mubr.f32.mxu0 0.0
  %566 = vmatmul.mubr.f32.gmra.mxu0 %v230
  %v567 = vpop.f32.mrf.mxu0
  %v568 = vadd.f32 %v106, %v567
  %v569 = vpop.f32.mrf.mxu0
  %570 = vmatprep.mubr.f32.mxu0 0.0
  %571 = vmatmul.mubr.f32.gmra.mxu0 %v233
  %v572 = vpop.f32.mrf.mxu0
  %v573 = vadd.f32 %v106, %v572
  %v574 = vpop.f32.mrf.mxu0
  %575 = vmatprep.mubr.f32.mxu0 0.0
  %576 = vmatmul.mubr.f32.gmra.mxu0 %v236
  %v577 = vpop.f32.mrf.mxu0
  %v578 = vadd.f32 %v106, %v577
  %v579 = vpop.f32.mrf.mxu0
  %580 = vmatprep.mubr.f32.mxu0 0.0
  %581 = vmatmul.mubr.f32.gmra.mxu0 %v239
  %v582 = vpop.f32.mrf.mxu0
  %v583 = vadd.f32 %v106, %v582
  %v584 = vpop.f32.mrf.mxu0
  %585 = vmatprep.mubr.f32.mxu0 0.0
  %586 = vmatmul.mubr.f32.gmra.mxu0 %v242
  %v587 = vpop.f32.mrf.mxu0
  %v588 = vadd.f32 %v106, %v587
  %v589 = vpop.f32.mrf.mxu0
  %590 = vmatprep.mubr.f32.mxu0 0.0
  %591 = vmatmul.mubr.f32.gmra.mxu0 %v245
  %v592 = vpop.f32.mrf.mxu0
  %v593 = vadd.f32 %v106, %v592
  %v594 = vpop.f32.mrf.mxu0
  %595 = vmatprep.mubr.f32.mxu0 0.0
  %596 = vmatmul.mubr.f32.gmra.mxu0 %v248
  %v597 = vpop.f32.mrf.mxu0
  %v598 = vadd.f32 %v106, %v597
  %v599 = vpop.f32.mrf.mxu0
  %600 = vmatprep.mubr.f32.mxu0 0.0
  %601 = vmatmul.mubr.f32.gmra.mxu0 %v251
  %v602 = vpop.f32.mrf.mxu0
  %v603 = vadd.f32 %v106, %v602
  %v604 = vpop.f32.mrf.mxu0
  %605 = vmatprep.mubr.f32.mxu0 0.0
  %606 = vmatmul.mubr.f32.gmra.mxu0 %v254
  %v607 = vpop.f32.mrf.mxu0
  %v608 = vadd.f32 %v106, %v607
  %v609 = vpop.f32.mrf.mxu0
  %610 = vmatprep.mubr.f32.mxu0 0.0
  %611 = vmatmul.mubr.f32.gmra.mxu0 %v257
  %v612 = vpop.f32.mrf.mxu0
  %v613 = vadd.f32 %v106, %v612
  %v614 = vpop.f32.mrf.mxu0
  %615 = vmatprep.mubr.f32.mxu0 0.0
  %616 = vmatmul.mubr.f32.gmra.mxu0 %v260
  %v617 = vpop.f32.mrf.mxu0
  %v618 = vadd.f32 %v106, %v617
  %v619 = vpop.f32.mrf.mxu0
  %620 = vmatprep.mubr.f32.mxu0 0.0
  %621 = vmatmul.mubr.f32.gmra.mxu0 %v263
  %v622 = vpop.f32.mrf.mxu0
  %v623 = vadd.f32 %v106, %v622
  %v624 = vpop.f32.mrf.mxu0
  %625 = vmatprep.mubr.f32.mxu0 0.0
  %626 = vmatmul.mubr.f32.gmra.mxu0 %v266
  %v627 = vpop.f32.mrf.mxu0
  %v628 = vadd.f32 %v106, %v627
  %v629 = vpop.f32.mrf.mxu0
  %630 = vmatprep.mubr.f32.mxu0 0.0
  %631 = vmatmul.mubr.f32.gmra.mxu0 %v269
  %v632 = vpop.f32.mrf.mxu0
  %v633 = vadd.f32 %v106, %v632
  %v634 = vpop.f32.mrf.mxu0
  %635 = vmatprep.mubr.f32.mxu0 0.0
  %636 = vmatmul.mubr.f32.gmra.mxu0 %v272
  %v637 = vpop.f32.mrf.mxu0
  %v638 = vadd.f32 %v106, %v637
  %v639 = vpop.f32.mrf.mxu0
  %640 = vmatprep.mubr.f32.mxu0 0.0
  %641 = vmatmul.mubr.f32.gmra.mxu0 %v275
  %v642 = vpop.f32.mrf.mxu0
  %v643 = vadd.f32 %v106, %v642
  %v644 = vpop.f32.mrf.mxu0
  %645 = vmatprep.mubr.f32.mxu0 0.0
  %646 = vmatmul.mubr.f32.gmra.mxu0 %v278
  %v647 = vpop.f32.mrf.mxu0
  %v648 = vadd.f32 %v106, %v647
  %v649 = vpop.f32.mrf.mxu0
  %650 = vmatprep.mubr.f32.mxu0 0.0
  %651 = vmatmul.mubr.f32.gmra.mxu0 %v281
  %v652 = vpop.f32.mrf.mxu0
  %v653 = vadd.f32 %v106, %v652
  %v654 = vpop.f32.mrf.mxu0
  %655 = vmatprep.mubr.f32.mxu0 0.0
  %656 = vmatmul.mubr.f32.gmra.mxu0 %v284
  %v657 = vpop.f32.mrf.mxu0
  %v658 = vadd.f32 %v106, %v657
  %v659 = vpop.f32.mrf.mxu0
  %660 = vmatprep.mubr.f32.mxu0 0.0
  %661 = vmatmul.mubr.f32.gmra.mxu0 %v287
  %v662 = vpop.f32.mrf.mxu0
  %v663 = vadd.f32 %v106, %v662
  %v664 = vpop.f32.mrf.mxu0
  %665 = vmatprep.mubr.f32.mxu0 0.0
  %666 = vmatmul.mubr.f32.gmra.mxu0 %v290
  %v667 = vpop.f32.mrf.mxu0
  %v668 = vadd.f32 %v106, %v667
  %v669 = vpop.f32.mrf.mxu0
  %670 = vmatprep.mubr.f32.mxu0 0.0
  %671 = vmatmul.mubr.f32.gmra.mxu0 %v293
  %v672 = vpop.f32.mrf.mxu0
  %v673 = vadd.f32 %v106, %v672
  %v674 = vpop.f32.mrf.mxu0
  %675 = vmatprep.mubr.f32.mxu0 0.0
  %676 = vmatmul.mubr.f32.gmra.mxu0 %v296
  %v677 = vpop.f32.mrf.mxu0
  %v678 = vadd.f32 %v106, %v677
  %v679 = vpop.f32.mrf.mxu0
  %680 = vmatprep.mubr.f32.mxu0 0.0
  %681 = vmatmul.mubr.f32.gmra.mxu0 %v299
  %v682 = vpop.f32.mrf.mxu0
  %v683 = vadd.f32 %v106, %v682
  %v684 = vpop.f32.mrf.mxu0
  %685 = vdwg.mxu0
  %v686 = vmax.f32 %v368, 0.0
  %v687 = vmax.f32 %v373, 0.0
  %v688 = vmax.f32 %v378, 0.0
  %v689 = vmax.f32 %v383, 0.0
  %v690 = vmax.f32 %v388, 0.0
  %v691 = vmax.f32 %v393, 0.0
  %v692 = vmax.f32 %v398, 0.0
  %v693 = vmax.f32 %v403, 0.0
  %v694 = vmax.f32 %v408, 0.0
  %v695 = vmax.f32 %v413, 0.0
  %v696 = vmax.f32 %v418, 0.0
  %v697 = vmax.f32 %v423, 0.0
  %v698 = vmax.f32 %v428, 0.0
  %v699 = vmax.f32 %v433, 0.0
  %v700 = vmax.f32 %v438, 0.0
  %v701 = vmax.f32 %v443, 0.0
  %v702 = vmax.f32 %v448, 0.0
  %v703 = vmax.f32 %v453, 0.0
  %v704 = vmax.f32 %v458, 0.0
  %v705 = vmax.f32 %v463, 0.0
  %v706 = vmax.f32 %v468, 0.0
  %v707 = vmax.f32 %v473, 0.0
  %v708 = vmax.f32 %v478, 0.0
  %v709 = vmax.f32 %v483, 0.0
  %v710 = vmax.f32 %v488, 0.0
  %v711 = vmax.f32 %v493, 0.0
  %v712 = vmax.f32 %v498, 0.0
  %v713 = vmax.f32 %v503, 0.0
  %v714 = vmax.f32 %v508, 0.0
  %v715 = vmax.f32 %v513, 0.0
  %v716 = vmax.f32 %v518, 0.0
  %v717 = vmax.f32 %v523, 0.0
  %v718 = vmax.f32 %v528, 0.0
  %v719 = vmax.f32 %v533, 0.0
  %v720 = vmax.f32 %v538, 0.0
  %v721 = vmax.f32 %v543, 0.0
  %v722 = vmax.f32 %v548, 0.0
  %v723 = vmax.f32 %v553, 0.0
  %v724 = vmax.f32 %v558, 0.0
  %v725 = vmax.f32 %v563, 0.0
  %v726 = vmax.f32 %v568, 0.0
  %v727 = vmax.f32 %v573, 0.0
  %v728 = vmax.f32 %v578, 0.0
  %v729 = vmax.f32 %v583, 0.0
  %v730 = vmax.f32 %v588, 0.0
  %v731 = vmax.f32 %v593, 0.0
  %v732 = vmax.f32 %v598, 0.0
  %v733 = vmax.f32 %v603, 0.0
  %v734 = vmax.f32 %v608, 0.0
  %v735 = vmax.f32 %v613, 0.0
  %v736 = vmax.f32 %v618, 0.0
  %v737 = vmax.f32 %v623, 0.0
  %v738 = vmax.f32 %v628, 0.0
  %v739 = vmax.f32 %v633, 0.0
  %v740 = vmax.f32 %v638, 0.0
  %v741 = vmax.f32 %v643, 0.0
  %v742 = vmax.f32 %v648, 0.0
  %v743 = vmax.f32 %v653, 0.0
  %v744 = vmax.f32 %v658, 0.0
  %v745 = vmax.f32 %v663, 0.0
  %v746 = vmax.f32 %v668, 0.0
  %v747 = vmax.f32 %v673, 0.0
  %v748 = vmax.f32 %v678, 0.0
  %v749 = vmax.f32 %v683, 0.0
  %vm750 = vcmask 261120
  %751 = vst.msk [vmem:[#allocation2] sm:$0xff] %vm750, 0.0
  %752 = vst.msk [vmem:[#allocation2 + $0x8] sm:$0xff] %vm750, 0.0
  %753 = vst.msk [vmem:[#allocation2 + $0x10] sm:$0xff] %vm750, 0.0
  %754 = vst.msk [vmem:[#allocation2 + $0x18] sm:$0xff] %vm750, 0.0
  %755 = vst.msk [vmem:[#allocation2 + $0x20] sm:$0xff] %vm750, 0.0
  %756 = vst.msk [vmem:[#allocation2 + $0x28] sm:$0xff] %vm750, 0.0
  %757 = vst.msk [vmem:[#allocation2 + $0x30] sm:$0xff] %vm750, 0.0
  %758 = vst.msk [vmem:[#allocation2 + $0x38] sm:$0xff] %vm750, 0.0
  %759 = vst.msk [vmem:[#allocation2 + $0x40] sm:$0xff] %vm750, 0.0
  %760 = vst.msk [vmem:[#allocation2 + $0x48] sm:$0xff] %vm750, 0.0
  %s761 = scalar_lea.vmem [#allocation2], 720
  %762 = vst.msk [vmem:[%s761] sm:$0xff] %vm750, 0.0
  %763 = vst.msk [vmem:[%s761 + $0x8] sm:$0xff] %vm750, 0.0
  %764 = vst.msk [vmem:[%s761 + $0x10] sm:$0xff] %vm750, 0.0
  %765 = vst.msk [vmem:[%s761 + $0x18] sm:$0xff] %vm750, 0.0
  %766 = vst.msk [vmem:[%s761 + $0x20] sm:$0xff] %vm750, 0.0
  %767 = vst.msk [vmem:[%s761 + $0x28] sm:$0xff] %vm750, 0.0
  %768 = vst.msk [vmem:[%s761 + $0x30] sm:$0xff] %vm750, 0.0
  %769 = vst.msk [vmem:[%s761 + $0x38] sm:$0xff] %vm750, 0.0
  %770 = vst.msk [vmem:[%s761 + $0x40] sm:$0xff] %vm750, 0.0
  %771 = vst.msk [vmem:[%s761 + $0x48] sm:$0xff] %vm750, 0.0
  %s772 = scalar_lea.vmem [#allocation2], 80
  %773 = vst.msk [vmem:[%s772] sm:$0xff] %vm750, 0.0
  %774 = vst.msk [vmem:[%s772 + $0x50] sm:$0xff] %vm750, 0.0
  %775 = vst.msk [vmem:[%s772 + $0xa0] sm:$0xff] %vm750, 0.0
  %776 = vst.msk [vmem:[%s772 + $0xf0] sm:$0xff] %vm750, 0.0
  %777 = vst.msk [vmem:[%s772 + $0x140] sm:$0xff] %vm750, 0.0
  %778 = vst.msk [vmem:[%s772 + $0x190] sm:$0xff] %vm750, 0.0
  %779 = vst.msk [vmem:[%s772 + $0x1e0] sm:$0xff] %vm750, 0.0
  %780 = vst.msk [vmem:[%s772 + $0x230] sm:$0xff] %vm750, 0.0
  %s781 = scalar_lea.vmem [#allocation2], 152
  %782 = vst.msk [vmem:[%s781] sm:$0xff] %vm750, 0.0
  %783 = vst.msk [vmem:[%s781 + $0x50] sm:$0xff] %vm750, 0.0
  %784 = vst.msk [vmem:[%s781 + $0xa0] sm:$0xff] %vm750, 0.0
  %785 = vst.msk [vmem:[%s781 + $0xf0] sm:$0xff] %vm750, 0.0
  %786 = vst.msk [vmem:[%s781 + $0x140] sm:$0xff] %vm750, 0.0
  %787 = vst.msk [vmem:[%s781 + $0x190] sm:$0xff] %vm750, 0.0
  %788 = vst.msk [vmem:[%s781 + $0x1e0] sm:$0xff] %vm750, 0.0
  %789 = vst.msk [vmem:[%s781 + $0x230] sm:$0xff] %vm750, 0.0
  %s790 = scalar_lea.vmem [#allocation2], 88
  %791 = vst.msk [vmem:[%s790] sm:$0xff] %vm750, %v686
  %792 = vst.msk [vmem:[%s790 + $0x8] sm:$0xff] %vm750, %v687
  %793 = vst.msk [vmem:[%s790 + $0x10] sm:$0xff] %vm750, %v688
  %794 = vst.msk [vmem:[%s790 + $0x18] sm:$0xff] %vm750, %v689
  %795 = vst.msk [vmem:[%s790 + $0x20] sm:$0xff] %vm750, %v690
  %796 = vst.msk [vmem:[%s790 + $0x28] sm:$0xff] %vm750, %v691
  %797 = vst.msk [vmem:[%s790 + $0x30] sm:$0xff] %vm750, %v692
  %798 = vst.msk [vmem:[%s790 + $0x38] sm:$0xff] %vm750, %v693
  %799 = vst.msk [vmem:[%s790 + $0x50] sm:$0xff] %vm750, %v694
  %800 = vst.msk [vmem:[%s790 + $0x58] sm:$0xff] %vm750, %v695
  %801 = vst.msk [vmem:[%s790 + $0x60] sm:$0xff] %vm750, %v696
  %802 = vst.msk [vmem:[%s790 + $0x68] sm:$0xff] %vm750, %v697
  %803 = vst.msk [vmem:[%s790 + $0x70] sm:$0xff] %vm750, %v698
  %804 = vst.msk [vmem:[%s790 + $0x78] sm:$0xff] %vm750, %v699
  %805 = vst.msk [vmem:[%s790 + $0x80] sm:$0xff] %vm750, %v700
  %806 = vst.msk [vmem:[%s790 + $0x88] sm:$0xff] %vm750, %v701
  %807 = vst.msk [vmem:[%s790 + $0xa0] sm:$0xff] %vm750, %v702
  %808 = vst.msk [vmem:[%s790 + $0xa8] sm:$0xff] %vm750, %v703
  %809 = vst.msk [vmem:[%s790 + $0xb0] sm:$0xff] %vm750, %v704
  %810 = vst.msk [vmem:[%s790 + $0xb8] sm:$0xff] %vm750, %v705
  %811 = vst.msk [vmem:[%s790 + $0xc0] sm:$0xff] %vm750, %v706
  %812 = vst.msk [vmem:[%s790 + $0xc8] sm:$0xff] %vm750, %v707
  %813 = vst.msk [vmem:[%s790 + $0xd0] sm:$0xff] %vm750, %v708
  %814 = vst.msk [vmem:[%s790 + $0xd8] sm:$0xff] %vm750, %v709
  %815 = vst.msk [vmem:[%s790 + $0xf0] sm:$0xff] %vm750, %v710
  %816 = vst.msk [vmem:[%s790 + $0xf8] sm:$0xff] %vm750, %v711
  %817 = vst.msk [vmem:[%s790 + $0x100] sm:$0xff] %vm750, %v712
  %818 = vst.msk [vmem:[%s790 + $0x108] sm:$0xff] %vm750, %v713
  %819 = vst.msk [vmem:[%s790 + $0x110] sm:$0xff] %vm750, %v714
  %820 = vst.msk [vmem:[%s790 + $0x118] sm:$0xff] %vm750, %v715
  %821 = vst.msk [vmem:[%s790 + $0x120] sm:$0xff] %vm750, %v716
  %822 = vst.msk [vmem:[%s790 + $0x128] sm:$0xff] %vm750, %v717
  %823 = vst.msk [vmem:[%s790 + $0x140] sm:$0xff] %vm750, %v718
  %824 = vst.msk [vmem:[%s790 + $0x148] sm:$0xff] %vm750, %v719
  %825 = vst.msk [vmem:[%s790 + $0x150] sm:$0xff] %vm750, %v720
  %826 = vst.msk [vmem:[%s790 + $0x158] sm:$0xff] %vm750, %v721
  %827 = vst.msk [vmem:[%s790 + $0x160] sm:$0xff] %vm750, %v722
  %828 = vst.msk [vmem:[%s790 + $0x168] sm:$0xff] %vm750, %v723
  %829 = vst.msk [vmem:[%s790 + $0x170] sm:$0xff] %vm750, %v724
  %830 = vst.msk [vmem:[%s790 + $0x178] sm:$0xff] %vm750, %v725
  %831 = vst.msk [vmem:[%s790 + $0x190] sm:$0xff] %vm750, %v726
  %832 = vst.msk [vmem:[%s790 + $0x198] sm:$0xff] %vm750, %v727
  %833 = vst.msk [vmem:[%s790 + $0x1a0] sm:$0xff] %vm750, %v728
  %834 = vst.msk [vmem:[%s790 + $0x1a8] sm:$0xff] %vm750, %v729
  %835 = vst.msk [vmem:[%s790 + $0x1b0] sm:$0xff] %vm750, %v730
  %836 = vst.msk [vmem:[%s790 + $0x1b8] sm:$0xff] %vm750, %v731
  %837 = vst.msk [vmem:[%s790 + $0x1c0] sm:$0xff] %vm750, %v732
  %838 = vst.msk [vmem:[%s790 + $0x1c8] sm:$0xff] %vm750, %v733
  %839 = vst.msk [vmem:[%s790 + $0x1e0] sm:$0xff] %vm750, %v734
  %840 = vst.msk [vmem:[%s790 + $0x1e8] sm:$0xff] %vm750, %v735
  %841 = vst.msk [vmem:[%s790 + $0x1f0] sm:$0xff] %vm750, %v736
  %842 = vst.msk [vmem:[%s790 + $0x1f8] sm:$0xff] %vm750, %v737
  %843 = vst.msk [vmem:[%s790 + $0x200] sm:$0xff] %vm750, %v738
  %844 = vst.msk [vmem:[%s790 + $0x208] sm:$0xff] %vm750, %v739
  %845 = vst.msk [vmem:[%s790 + $0x210] sm:$0xff] %vm750, %v740
  %846 = vst.msk [vmem:[%s790 + $0x218] sm:$0xff] %vm750, %v741
  %847 = vst.msk [vmem:[%s790 + $0x230] sm:$0xff] %vm750, %v742
  %848 = vst.msk [vmem:[%s790 + $0x238] sm:$0xff] %vm750, %v743
  %849 = vst.msk [vmem:[%s790 + $0x240] sm:$0xff] %vm750, %v744
  %850 = vst.msk [vmem:[%s790 + $0x248] sm:$0xff] %vm750, %v745
  %851 = vst.msk [vmem:[%s790 + $0x250] sm:$0xff] %vm750, %v746
  %852 = vst.msk [vmem:[%s790 + $0x258] sm:$0xff] %vm750, %v747
  %853 = vst.msk [vmem:[%s790 + $0x260] sm:$0xff] %vm750, %v748
  %854 = vst.msk [vmem:[%s790 + $0x268] sm:$0xff] %vm750, %v749
  %v855 = vld [vmem:[#allocation2] sm:$0xff]
  %v856 = vld [vmem:[#allocation2 + $0x8] sm:$0xff]
  %v857 = vld [vmem:[#allocation2 + $0x10] sm:$0xff]
  %v858 = vld [vmem:[#allocation2 + $0x18] sm:$0xff]
  %v859 = vld [vmem:[#allocation2 + $0x20] sm:$0xff]
  %v860 = vld [vmem:[#allocation2 + $0x28] sm:$0xff]
  %v861 = vld [vmem:[#allocation2 + $0x30] sm:$0xff]
  %v862 = vld [vmem:[#allocation2 + $0x38] sm:$0xff]
  %v863 = vld [vmem:[#allocation2 + $0x50] sm:$0xff]
  %v864 = vld [vmem:[#allocation2 + $0x58] sm:$0xff]
  %v865 = vld [vmem:[#allocation2 + $0x60] sm:$0xff]
  %v866 = vld [vmem:[#allocation2 + $0x68] sm:$0xff]
  %v867 = vld [vmem:[#allocation2 + $0x70] sm:$0xff]
  %v868 = vld [vmem:[#allocation2 + $0x78] sm:$0xff]
  %v869 = vld [vmem:[#allocation2 + $0x80] sm:$0xff]
  %v870 = vld [vmem:[#allocation2 + $0x88] sm:$0xff]
  %v871 = vld [vmem:[#allocation2 + $0xa0] sm:$0xff]
  %v872 = vld [vmem:[#allocation2 + $0xa8] sm:$0xff]
  %v873 = vld [vmem:[#allocation2 + $0xb0] sm:$0xff]
  %v874 = vld [vmem:[#allocation2 + $0xb8] sm:$0xff]
  %v875 = vld [vmem:[#allocation2 + $0xc0] sm:$0xff]
  %v876 = vld [vmem:[#allocation2 + $0xc8] sm:$0xff]
  %v877 = vld [vmem:[#allocation2 + $0xd0] sm:$0xff]
  %v878 = vld [vmem:[#allocation2 + $0xd8] sm:$0xff]
  %v879 = vld [vmem:[#allocation2 + $0xf0] sm:$0xff]
  %v880 = vld [vmem:[#allocation2 + $0xf8] sm:$0xff]
  %v881 = vld [vmem:[#allocation2 + $0x100] sm:$0xff]
  %v882 = vld [vmem:[#allocation2 + $0x108] sm:$0xff]
  %v883 = vld [vmem:[#allocation2 + $0x110] sm:$0xff]
  %v884 = vld [vmem:[#allocation2 + $0x118] sm:$0xff]
  %v885 = vld [vmem:[#allocation2 + $0x120] sm:$0xff]
  %v886 = vld [vmem:[#allocation2 + $0x128] sm:$0xff]
  %v887 = vld [vmem:[#allocation2 + $0x140] sm:$0xff]
  %v888 = vld [vmem:[#allocation2 + $0x148] sm:$0xff]
  %v889 = vld [vmem:[#allocation2 + $0x150] sm:$0xff]
  %v890 = vld [vmem:[#allocation2 + $0x158] sm:$0xff]
  %v891 = vld [vmem:[#allocation2 + $0x160] sm:$0xff]
  %v892 = vld [vmem:[#allocation2 + $0x168] sm:$0xff]
  %v893 = vld [vmem:[#allocation2 + $0x170] sm:$0xff]
  %v894 = vld [vmem:[#allocation2 + $0x178] sm:$0xff]
  %v895 = vld [vmem:[#allocation2 + $0x190] sm:$0xff]
  %v896 = vld [vmem:[#allocation2 + $0x198] sm:$0xff]
  %v897 = vld [vmem:[#allocation2 + $0x1a0] sm:$0xff]
  %v898 = vld [vmem:[#allocation2 + $0x1a8] sm:$0xff]
  %v899 = vld [vmem:[#allocation2 + $0x1b0] sm:$0xff]
  %v900 = vld [vmem:[#allocation2 + $0x1b8] sm:$0xff]
  %v901 = vld [vmem:[#allocation2 + $0x1c0] sm:$0xff]
  %v902 = vld [vmem:[#allocation2 + $0x1c8] sm:$0xff]
  %v903 = vld [vmem:[#allocation2 + $0x1e0] sm:$0xff]
  %v904 = vld [vmem:[#allocation2 + $0x1e8] sm:$0xff]
  %v905 = vld [vmem:[#allocation2 + $0x1f0] sm:$0xff]
  %v906 = vld [vmem:[#allocation2 + $0x1f8] sm:$0xff]
  %v907 = vld [vmem:[#allocation2 + $0x200] sm:$0xff]
  %v908 = vld [vmem:[#allocation2 + $0x208] sm:$0xff]
  %v909 = vld [vmem:[#allocation2 + $0x210] sm:$0xff]
  %v910 = vld [vmem:[#allocation2 + $0x218] sm:$0xff]
  %v911 = vld [vmem:[#allocation2 + $0x230] sm:$0xff]
  %v912 = vld [vmem:[#allocation2 + $0x238] sm:$0xff]
  %v913 = vld [vmem:[#allocation2 + $0x240] sm:$0xff]
  %v914 = vld [vmem:[#allocation2 + $0x248] sm:$0xff]
  %v915 = vld [vmem:[#allocation2 + $0x250] sm:$0xff]
  %v916 = vld [vmem:[#allocation2 + $0x258] sm:$0xff]
  %v917 = vld [vmem:[#allocation2 + $0x260] sm:$0xff]
  %v918 = vld [vmem:[#allocation2 + $0x268] sm:$0xff]
  %v919 = vld [vmem:[%s4] sm:$0xff]
  %v920 = vld [vmem:[%s4 + $0x8] sm:$0xff]
  %v921 = vld [vmem:[%s4 + $0x10] sm:$0xff]
  %v922 = vld [vmem:[%s4 + $0x18] sm:$0xff]
  %s923 = scalar_lea.vmem [#allocation2], 8
  %v924 = vld [vmem:[%s923] sm:$0xff]
  %v925 = vld [vmem:[%s923 + $0x8] sm:$0xff]
  %v926 = vld [vmem:[%s923 + $0x10] sm:$0xff]
  %v927 = vld [vmem:[%s923 + $0x18] sm:$0xff]
  %v928 = vld [vmem:[%s923 + $0x20] sm:$0xff]
  %v929 = vld [vmem:[%s923 + $0x28] sm:$0xff]
  %v930 = vld [vmem:[%s923 + $0x30] sm:$0xff]
  %v931 = vld [vmem:[%s923 + $0x38] sm:$0xff]
  %v932 = vld [vmem:[%s923 + $0x50] sm:$0xff]
  %v933 = vld [vmem:[%s923 + $0x58] sm:$0xff]
  %v934 = vld [vmem:[%s923 + $0x60] sm:$0xff]
  %v935 = vld [vmem:[%s923 + $0x68] sm:$0xff]
  %v936 = vld [vmem:[%s923 + $0x70] sm:$0xff]
  %v937 = vld [vmem:[%s923 + $0x78] sm:$0xff]
  %v938 = vld [vmem:[%s923 + $0x80] sm:$0xff]
  %v939 = vld [vmem:[%s923 + $0x88] sm:$0xff]
  %v940 = vld [vmem:[%s923 + $0xa0] sm:$0xff]
  %v941 = vld [vmem:[%s923 + $0xa8] sm:$0xff]
  %v942 = vld [vmem:[%s923 + $0xb0] sm:$0xff]
  %v943 = vld [vmem:[%s923 + $0xb8] sm:$0xff]
  %v944 = vld [vmem:[%s923 + $0xc0] sm:$0xff]
  %v945 = vld [vmem:[%s923 + $0xc8] sm:$0xff]
  %v946 = vld [vmem:[%s923 + $0xd0] sm:$0xff]
  %v947 = vld [vmem:[%s923 + $0xd8] sm:$0xff]
  %v948 = vld [vmem:[%s923 + $0xf0] sm:$0xff]
  %v949 = vld [vmem:[%s923 + $0xf8] sm:$0xff]
  %v950 = vld [vmem:[%s923 + $0x100] sm:$0xff]
  %v951 = vld [vmem:[%s923 + $0x108] sm:$0xff]
  %v952 = vld [vmem:[%s923 + $0x110] sm:$0xff]
  %v953 = vld [vmem:[%s923 + $0x118] sm:$0xff]
  %v954 = vld [vmem:[%s923 + $0x120] sm:$0xff]
  %v955 = vld [vmem:[%s923 + $0x128] sm:$0xff]
  %v956 = vld [vmem:[%s923 + $0x140] sm:$0xff]
  %v957 = vld [vmem:[%s923 + $0x148] sm:$0xff]
  %v958 = vld [vmem:[%s923 + $0x150] sm:$0xff]
  %v959 = vld [vmem:[%s923 + $0x158] sm:$0xff]
  %v960 = vld [vmem:[%s923 + $0x160] sm:$0xff]
  %v961 = vld [vmem:[%s923 + $0x168] sm:$0xff]
  %v962 = vld [vmem:[%s923 + $0x170] sm:$0xff]
  %v963 = vld [vmem:[%s923 + $0x178] sm:$0xff]
  %v964 = vld [vmem:[%s923 + $0x190] sm:$0xff]
  %v965 = vld [vmem:[%s923 + $0x198] sm:$0xff]
  %v966 = vld [vmem:[%s923 + $0x1a0] sm:$0xff]
  %v967 = vld [vmem:[%s923 + $0x1a8] sm:$0xff]
  %v968 = vld [vmem:[%s923 + $0x1b0] sm:$0xff]
  %v969 = vld [vmem:[%s923 + $0x1b8] sm:$0xff]
  %v970 = vld [vmem:[%s923 + $0x1c0] sm:$0xff]
  %v971 = vld [vmem:[%s923 + $0x1c8] sm:$0xff]
  %v972 = vld [vmem:[%s923 + $0x1e0] sm:$0xff]
  %v973 = vld [vmem:[%s923 + $0x1e8] sm:$0xff]
  %v974 = vld [vmem:[%s923 + $0x1f0] sm:$0xff]
  %v975 = vld [vmem:[%s923 + $0x1f8] sm:$0xff]
  %v976 = vld [vmem:[%s923 + $0x200] sm:$0xff]
  %v977 = vld [vmem:[%s923 + $0x208] sm:$0xff]
  %v978 = vld [vmem:[%s923 + $0x210] sm:$0xff]
  %v979 = vld [vmem:[%s923 + $0x218] sm:$0xff]
  %v980 = vld [vmem:[%s923 + $0x230] sm:$0xff]
  %v981 = vld [vmem:[%s923 + $0x238] sm:$0xff]
  %v982 = vld [vmem:[%s923 + $0x240] sm:$0xff]
  %v983 = vld [vmem:[%s923 + $0x248] sm:$0xff]
  %v984 = vld [vmem:[%s923 + $0x250] sm:$0xff]
  %v985 = vld [vmem:[%s923 + $0x258] sm:$0xff]
  %v986 = vld [vmem:[%s923 + $0x260] sm:$0xff]
  %v987 = vld [vmem:[%s923 + $0x268] sm:$0xff]
  %v988 = vld [vmem:[%s4 + $0x20] sm:$0xff]
  %v989 = vld [vmem:[%s4 + $0x28] sm:$0xff]
  %v990 = vld [vmem:[%s4 + $0x30] sm:$0xff]
  %v991 = vld [vmem:[%s4 + $0x38] sm:$0xff]
  %v993 = vsel %vm750, %v924, 0
  %v996 = vsel %vm750, %v925, 0
  %v999 = vsel %vm750, %v926, 0
  %v1002 = vsel %vm750, %v927, 0
  %v1005 = vsel %vm750, %v928, 0
  %v1008 = vsel %vm750, %v929, 0
  %v1011 = vsel %vm750, %v930, 0
  %v1014 = vsel %vm750, %v931, 0
  %v1017 = vsel %vm750, %v932, 0
  %v1020 = vsel %vm750, %v933, 0
  %v1023 = vsel %vm750, %v934, 0
  %v1026 = vsel %vm750, %v935, 0
  %v1029 = vsel %vm750, %v936, 0
  %v1032 = vsel %vm750, %v937, 0
  %v1035 = vsel %vm750, %v938, 0
  %v1038 = vsel %vm750, %v939, 0
  %v1041 = vsel %vm750, %v940, 0
  %v1044 = vsel %vm750, %v941, 0
  %v1047 = vsel %vm750, %v942, 0
  %v1050 = vsel %vm750, %v943, 0
  %v1053 = vsel %vm750, %v944, 0
  %v1056 = vsel %vm750, %v945, 0
  %v1059 = vsel %vm750, %v946, 0
  %v1062 = vsel %vm750, %v947, 0
  %v1065 = vsel %vm750, %v948, 0
  %v1068 = vsel %vm750, %v949, 0
  %v1071 = vsel %vm750, %v950, 0
  %v1074 = vsel %vm750, %v951, 0
  %v1077 = vsel %vm750, %v952, 0
  %v1080 = vsel %vm750, %v953, 0
  %v1083 = vsel %vm750, %v954, 0
  %v1086 = vsel %vm750, %v955, 0
  %v1089 = vsel %vm750, %v956, 0
  %v1092 = vsel %vm750, %v957, 0
  %v1095 = vsel %vm750, %v958, 0
  %v1098 = vsel %vm750, %v959, 0
  %v1101 = vsel %vm750, %v960, 0
  %v1104 = vsel %vm750, %v961, 0
  %v1107 = vsel %vm750, %v962, 0
  %v1110 = vsel %vm750, %v963, 0
  %v1113 = vsel %vm750, %v964, 0
  %v1116 = vsel %vm750, %v965, 0
  %v1119 = vsel %vm750, %v966, 0
  %v1122 = vsel %vm750, %v967, 0
  %v1125 = vsel %vm750, %v968, 0
  %v1128 = vsel %vm750, %v969, 0
  %v1131 = vsel %vm750, %v970, 0
  %v1134 = vsel %vm750, %v971, 0
  %v1137 = vsel %vm750, %v972, 0
  %v1140 = vsel %vm750, %v973, 0
  %v1143 = vsel %vm750, %v974, 0
  %v1146 = vsel %vm750, %v975, 0
  %v1149 = vsel %vm750, %v976, 0
  %v1152 = vsel %vm750, %v977, 0
  %v1155 = vsel %vm750, %v978, 0
  %v1158 = vsel %vm750, %v979, 0
  %v1161 = vsel %vm750, %v980, 0
  %v1164 = vsel %vm750, %v981, 0
  %v1167 = vsel %vm750, %v982, 0
  %v1170 = vsel %vm750, %v983, 0
  %v1173 = vsel %vm750, %v984, 0
  %v1176 = vsel %vm750, %v985, 0
  %v1179 = vsel %vm750, %v986, 0
  %v1182 = vsel %vm750, %v987, 0
  %1184 = vmatprep.subr.mxu0 0.0
  %1185 = vmatpush1.msra.mxu0 0.0
  %1186 = vmatprep.subr.mxu0 0.0
  %1187 = vmatpush1.msra.mxu0 0.0
  %1188 = vmatprep.subr.mxu0 0.0
  %1189 = vmatpush1.msra.mxu0 0.0
  %1190 = vmatprep.subr.mxu0 0.0
  %1191 = vmatpush1.msra.mxu0 0.0
  %1192 = vmatprep.subr.mxu0 0.0
  %1193 = vmatpush1.msra.mxu0 0.0
  %1194 = vmatprep.subr.mxu0 0.0
  %1195 = vmatpush1.msra.mxu0 0.0
  %1196 = vmatprep.subr.mxu0 0.0
  %1197 = vmatpush1.msra.mxu0 0.0
  %1198 = vmatprep.subr.mxu0 0.0
  %1199 = vmatpush1.msra.mxu0 0.0
  %1200 = vmatprep.subr.mxu0 0.0
  %1201 = vmatpush1.msra.mxu0 0.0
  %1202 = vmatprep.subr.mxu0 0.0
  %1203 = vmatpush1.msra.mxu0 0.0
  %1204 = vmatprep.subr.mxu0 0.0
  %1205 = vmatpush1.msra.mxu0 0.0
  %1206 = vmatprep.subr.mxu0 0.0
  %1207 = vmatpush1.msra.mxu0 0.0
  %1208 = vmatprep.subr.mxu0 0.0
  %1209 = vmatpush1.msra.mxu0 %v991
  %1210 = vmatprep.subr.mxu0 0.0
  %1211 = vmatpush1.msra.mxu0 %v990
  %1212 = vmatprep.subr.mxu0 0.0
  %1213 = vmatpush1.msra.mxu0 %v989
  %1214 = vmatprep.subr.mxu0 0.0
  %1215 = vmatpush1.msra.mxu0 %v988
  %1216 = vmatprep.subr.mxu0 0.0
  %1217 = vmatpush2.msra.mxu0 0.0
  %1218 = vmatprep.subr.mxu0 0.0
  %1219 = vmatpush2.msra.mxu0 0.0
  %1220 = vmatprep.subr.mxu0 0.0
  %1221 = vmatpush2.msra.mxu0 0.0
  %1222 = vmatprep.subr.mxu0 0.0
  %1223 = vmatpush2.msra.mxu0 0.0
  %1224 = vmatprep.subr.mxu0 0.0
  %1225 = vmatpush2.msra.mxu0 0.0
  %1226 = vmatprep.subr.mxu0 0.0
  %1227 = vmatpush2.msra.mxu0 0.0
  %1228 = vmatprep.subr.mxu0 0.0
  %1229 = vmatpush2.msra.mxu0 0.0
  %1230 = vmatprep.subr.mxu0 0.0
  %1231 = vmatpush2.msra.mxu0 0.0
  %1232 = vmatprep.subr.mxu0 0.0
  %1233 = vmatpush2.msra.mxu0 0.0
  %1234 = vmatprep.subr.mxu0 0.0
  %1235 = vmatpush2.msra.mxu0 0.0
  %1236 = vmatprep.subr.mxu0 0.0
  %1237 = vmatpush2.msra.mxu0 0.0
  %1238 = vmatprep.subr.mxu0 0.0
  %1239 = vmatpush2.msra.mxu0 0.0
  %1240 = vmatprep.subr.mxu0 0.0
  %1241 = vmatpush2.msra.mxu0 0.0
  %1242 = vmatprep.subr.mxu0 0.0
  %1243 = vmatpush2.msra.mxu0 0.0
  %1244 = vmatprep.subr.mxu0 0.0
  %1245 = vmatpush2.msra.mxu0 0.0
  %1246 = vmatprep.subr.mxu0 0.0
  %1247 = vmatpush2.msra.mxu0 0.0
  %1248 = vmatprep.mubr.f32.mxu0 0.0
  %1249 = vmatmul.mubr.f32.gmra.mxu0 %v993
  %v1250 = vpop.f32.mrf.mxu0
  %v1251 = vadd.f32 0.0, %v1250
  %v1252 = vpop.f32.mrf.mxu0
  %1253 = vmatprep.mubr.f32.mxu0 0.0
  %1254 = vmatmul.mubr.f32.gmra.mxu0 %v996
  %v1255 = vpop.f32.mrf.mxu0
  %v1256 = vadd.f32 0.0, %v1255
  %v1257 = vpop.f32.mrf.mxu0
  %1258 = vmatprep.mubr.f32.mxu0 0.0
  %1259 = vmatmul.mubr.f32.gmra.mxu0 %v999
  %v1260 = vpop.f32.mrf.mxu0
  %v1261 = vadd.f32 0.0, %v1260
  %v1262 = vpop.f32.mrf.mxu0
  %1263 = vmatprep.mubr.f32.mxu0 0.0
  %1264 = vmatmul.mubr.f32.gmra.mxu0 %v1002
  %v1265 = vpop.f32.mrf.mxu0
  %v1266 = vadd.f32 0.0, %v1265
  %v1267 = vpop.f32.mrf.mxu0
  %1268 = vmatprep.mubr.f32.mxu0 0.0
  %1269 = vmatmul.mubr.f32.gmra.mxu0 %v1005
  %v1270 = vpop.f32.mrf.mxu0
  %v1271 = vadd.f32 0.0, %v1270
  %v1272 = vpop.f32.mrf.mxu0
  %1273 = vmatprep.mubr.f32.mxu0 0.0
  %1274 = vmatmul.mubr.f32.gmra.mxu0 %v1008
  %v1275 = vpop.f32.mrf.mxu0
  %v1276 = vadd.f32 0.0, %v1275
  %v1277 = vpop.f32.mrf.mxu0
  %1278 = vmatprep.mubr.f32.mxu0 0.0
  %1279 = vmatmul.mubr.f32.gmra.mxu0 %v1011
  %v1280 = vpop.f32.mrf.mxu0
  %v1281 = vadd.f32 0.0, %v1280
  %v1282 = vpop.f32.mrf.mxu0
  %1283 = vmatprep.mubr.f32.mxu0 0.0
  %1284 = vmatmul.mubr.f32.gmra.mxu0 %v1014
  %v1285 = vpop.f32.mrf.mxu0
  %v1286 = vadd.f32 0.0, %v1285
  %v1287 = vpop.f32.mrf.mxu0
  %1288 = vmatprep.mubr.f32.mxu0 0.0
  %1289 = vmatmul.mubr.f32.gmra.mxu0 %v1017
  %v1290 = vpop.f32.mrf.mxu0
  %v1291 = vadd.f32 0.0, %v1290
  %v1292 = vpop.f32.mrf.mxu0
  %1293 = vmatprep.mubr.f32.mxu0 0.0
  %1294 = vmatmul.mubr.f32.gmra.mxu0 %v1020
  %v1295 = vpop.f32.mrf.mxu0
  %v1296 = vadd.f32 0.0, %v1295
  %v1297 = vpop.f32.mrf.mxu0
  %1298 = vmatprep.mubr.f32.mxu0 0.0
  %1299 = vmatmul.mubr.f32.gmra.mxu0 %v1023
  %v1300 = vpop.f32.mrf.mxu0
  %v1301 = vadd.f32 0.0, %v1300
  %v1302 = vpop.f32.mrf.mxu0
  %1303 = vmatprep.mubr.f32.mxu0 0.0
  %1304 = vmatmul.mubr.f32.gmra.mxu0 %v1026
  %v1305 = vpop.f32.mrf.mxu0
  %v1306 = vadd.f32 0.0, %v1305
  %v1307 = vpop.f32.mrf.mxu0
  %1308 = vmatprep.mubr.f32.mxu0 0.0
  %1309 = vmatmul.mubr.f32.gmra.mxu0 %v1029
  %v1310 = vpop.f32.mrf.mxu0
  %v1311 = vadd.f32 0.0, %v1310
  %v1312 = vpop.f32.mrf.mxu0
  %1313 = vmatprep.mubr.f32.mxu0 0.0
  %1314 = vmatmul.mubr.f32.gmra.mxu0 %v1032
  %v1315 = vpop.f32.mrf.mxu0
  %v1316 = vadd.f32 0.0, %v1315
  %v1317 = vpop.f32.mrf.mxu0
  %1318 = vmatprep.mubr.f32.mxu0 0.0
  %1319 = vmatmul.mubr.f32.gmra.mxu0 %v1035
  %v1320 = vpop.f32.mrf.mxu0
  %v1321 = vadd.f32 0.0, %v1320
  %v1322 = vpop.f32.mrf.mxu0
  %1323 = vmatprep.mubr.f32.mxu0 0.0
  %1324 = vmatmul.mubr.f32.gmra.mxu0 %v1038
  %v1325 = vpop.f32.mrf.mxu0
  %v1326 = vadd.f32 0.0, %v1325
  %v1327 = vpop.f32.mrf.mxu0
  %1328 = vmatprep.mubr.f32.mxu0 0.0
  %1329 = vmatmul.mubr.f32.gmra.mxu0 %v1041
  %v1330 = vpop.f32.mrf.mxu0
  %v1331 = vadd.f32 0.0, %v1330
  %v1332 = vpop.f32.mrf.mxu0
  %1333 = vmatprep.mubr.f32.mxu0 0.0
  %1334 = vmatmul.mubr.f32.gmra.mxu0 %v1044
  %v1335 = vpop.f32.mrf.mxu0
  %v1336 = vadd.f32 0.0, %v1335
  %v1337 = vpop.f32.mrf.mxu0
  %1338 = vmatprep.mubr.f32.mxu0 0.0
  %1339 = vmatmul.mubr.f32.gmra.mxu0 %v1047
  %v1340 = vpop.f32.mrf.mxu0
  %v1341 = vadd.f32 0.0, %v1340
  %v1342 = vpop.f32.mrf.mxu0
  %1343 = vmatprep.mubr.f32.mxu0 0.0
  %1344 = vmatmul.mubr.f32.gmra.mxu0 %v1050
  %v1345 = vpop.f32.mrf.mxu0
  %v1346 = vadd.f32 0.0, %v1345
  %v1347 = vpop.f32.mrf.mxu0
  %1348 = vmatprep.mubr.f32.mxu0 0.0
  %1349 = vmatmul.mubr.f32.gmra.mxu0 %v1053
  %v1350 = vpop.f32.mrf.mxu0
  %v1351 = vadd.f32 0.0, %v1350
  %v1352 = vpop.f32.mrf.mxu0
  %1353 = vmatprep.mubr.f32.mxu0 0.0
  %1354 = vmatmul.mubr.f32.gmra.mxu0 %v1056
  %v1355 = vpop.f32.mrf.mxu0
  %v1356 = vadd.f32 0.0, %v1355
  %v1357 = vpop.f32.mrf.mxu0
  %1358 = vmatprep.mubr.f32.mxu0 0.0
  %1359 = vmatmul.mubr.f32.gmra.mxu0 %v1059
  %v1360 = vpop.f32.mrf.mxu0
  %v1361 = vadd.f32 0.0, %v1360
  %v1362 = vpop.f32.mrf.mxu0
  %1363 = vmatprep.mubr.f32.mxu0 0.0
  %1364 = vmatmul.mubr.f32.gmra.mxu0 %v1062
  %v1365 = vpop.f32.mrf.mxu0
  %v1366 = vadd.f32 0.0, %v1365
  %v1367 = vpop.f32.mrf.mxu0
  %1368 = vmatprep.mubr.f32.mxu0 0.0
  %1369 = vmatmul.mubr.f32.gmra.mxu0 %v1065
  %v1370 = vpop.f32.mrf.mxu0
  %v1371 = vadd.f32 0.0, %v1370
  %v1372 = vpop.f32.mrf.mxu0
  %1373 = vmatprep.mubr.f32.mxu0 0.0
  %1374 = vmatmul.mubr.f32.gmra.mxu0 %v1068
  %v1375 = vpop.f32.mrf.mxu0
  %v1376 = vadd.f32 0.0, %v1375
  %v1377 = vpop.f32.mrf.mxu0
  %1378 = vmatprep.mubr.f32.mxu0 0.0
  %1379 = vmatmul.mubr.f32.gmra.mxu0 %v1071
  %v1380 = vpop.f32.mrf.mxu0
  %v1381 = vadd.f32 0.0, %v1380
  %v1382 = vpop.f32.mrf.mxu0
  %1383 = vmatprep.mubr.f32.mxu0 0.0
  %1384 = vmatmul.mubr.f32.gmra.mxu0 %v1074
  %v1385 = vpop.f32.mrf.mxu0
  %v1386 = vadd.f32 0.0, %v1385
  %v1387 = vpop.f32.mrf.mxu0
  %1388 = vmatprep.mubr.f32.mxu0 0.0
  %1389 = vmatmul.mubr.f32.gmra.mxu0 %v1077
  %v1390 = vpop.f32.mrf.mxu0
  %v1391 = vadd.f32 0.0, %v1390
  %v1392 = vpop.f32.mrf.mxu0
  %1393 = vmatprep.mubr.f32.mxu0 0.0
  %1394 = vmatmul.mubr.f32.gmra.mxu0 %v1080
  %v1395 = vpop.f32.mrf.mxu0
  %v1396 = vadd.f32 0.0, %v1395
  %v1397 = vpop.f32.mrf.mxu0
  %1398 = vmatprep.mubr.f32.mxu0 0.0
  %1399 = vmatmul.mubr.f32.gmra.mxu0 %v1083
  %v1400 = vpop.f32.mrf.mxu0
  %v1401 = vadd.f32 0.0, %v1400
  %v1402 = vpop.f32.mrf.mxu0
  %1403 = vmatprep.mubr.f32.mxu0 0.0
  %1404 = vmatmul.mubr.f32.gmra.mxu0 %v1086
  %v1405 = vpop.f32.mrf.mxu0
  %v1406 = vadd.f32 0.0, %v1405
  %v1407 = vpop.f32.mrf.mxu0
  %1408 = vmatprep.mubr.f32.mxu0 0.0
  %1409 = vmatmul.mubr.f32.gmra.mxu0 %v1089
  %v1410 = vpop.f32.mrf.mxu0
  %v1411 = vadd.f32 0.0, %v1410
  %v1412 = vpop.f32.mrf.mxu0
  %1413 = vmatprep.mubr.f32.mxu0 0.0
  %1414 = vmatmul.mubr.f32.gmra.mxu0 %v1092
  %v1415 = vpop.f32.mrf.mxu0
  %v1416 = vadd.f32 0.0, %v1415
  %v1417 = vpop.f32.mrf.mxu0
  %1418 = vmatprep.mubr.f32.mxu0 0.0
  %1419 = vmatmul.mubr.f32.gmra.mxu0 %v1095
  %v1420 = vpop.f32.mrf.mxu0
  %v1421 = vadd.f32 0.0, %v1420
  %v1422 = vpop.f32.mrf.mxu0
  %1423 = vmatprep.mubr.f32.mxu0 0.0
  %1424 = vmatmul.mubr.f32.gmra.mxu0 %v1098
  %v1425 = vpop.f32.mrf.mxu0
  %v1426 = vadd.f32 0.0, %v1425
  %v1427 = vpop.f32.mrf.mxu0
  %1428 = vmatprep.mubr.f32.mxu0 0.0
  %1429 = vmatmul.mubr.f32.gmra.mxu0 %v1101
  %v1430 = vpop.f32.mrf.mxu0
  %v1431 = vadd.f32 0.0, %v1430
  %v1432 = vpop.f32.mrf.mxu0
  %1433 = vmatprep.mubr.f32.mxu0 0.0
  %1434 = vmatmul.mubr.f32.gmra.mxu0 %v1104
  %v1435 = vpop.f32.mrf.mxu0
  %v1436 = vadd.f32 0.0, %v1435
  %v1437 = vpop.f32.mrf.mxu0
  %1438 = vmatprep.mubr.f32.mxu0 0.0
  %1439 = vmatmul.mubr.f32.gmra.mxu0 %v1107
  %v1440 = vpop.f32.mrf.mxu0
  %v1441 = vadd.f32 0.0, %v1440
  %v1442 = vpop.f32.mrf.mxu0
  %1443 = vmatprep.mubr.f32.mxu0 0.0
  %1444 = vmatmul.mubr.f32.gmra.mxu0 %v1110
  %v1445 = vpop.f32.mrf.mxu0
  %v1446 = vadd.f32 0.0, %v1445
  %v1447 = vpop.f32.mrf.mxu0
  %1448 = vmatprep.mubr.f32.mxu0 0.0
  %1449 = vmatmul.mubr.f32.gmra.mxu0 %v1113
  %v1450 = vpop.f32.mrf.mxu0
  %v1451 = vadd.f32 0.0, %v1450
  %v1452 = vpop.f32.mrf.mxu0
  %1453 = vmatprep.mubr.f32.mxu0 0.0
  %1454 = vmatmul.mubr.f32.gmra.mxu0 %v1116
  %v1455 = vpop.f32.mrf.mxu0
  %v1456 = vadd.f32 0.0, %v1455
  %v1457 = vpop.f32.mrf.mxu0
  %1458 = vmatprep.mubr.f32.mxu0 0.0
  %1459 = vmatmul.mubr.f32.gmra.mxu0 %v1119
  %v1460 = vpop.f32.mrf.mxu0
  %v1461 = vadd.f32 0.0, %v1460
  %v1462 = vpop.f32.mrf.mxu0
  %1463 = vmatprep.mubr.f32.mxu0 0.0
  %1464 = vmatmul.mubr.f32.gmra.mxu0 %v1122
  %v1465 = vpop.f32.mrf.mxu0
  %v1466 = vadd.f32 0.0, %v1465
  %v1467 = vpop.f32.mrf.mxu0
  %1468 = vmatprep.mubr.f32.mxu0 0.0
  %1469 = vmatmul.mubr.f32.gmra.mxu0 %v1125
  %v1470 = vpop.f32.mrf.mxu0
  %v1471 = vadd.f32 0.0, %v1470
  %v1472 = vpop.f32.mrf.mxu0
  %1473 = vmatprep.mubr.f32.mxu0 0.0
  %1474 = vmatmul.mubr.f32.gmra.mxu0 %v1128
  %v1475 = vpop.f32.mrf.mxu0
  %v1476 = vadd.f32 0.0, %v1475
  %v1477 = vpop.f32.mrf.mxu0
  %1478 = vmatprep.mubr.f32.mxu0 0.0
  %1479 = vmatmul.mubr.f32.gmra.mxu0 %v1131
  %v1480 = vpop.f32.mrf.mxu0
  %v1481 = vadd.f32 0.0, %v1480
  %v1482 = vpop.f32.mrf.mxu0
  %1483 = vmatprep.mubr.f32.mxu0 0.0
  %1484 = vmatmul.mubr.f32.gmra.mxu0 %v1134
  %v1485 = vpop.f32.mrf.mxu0
  %v1486 = vadd.f32 0.0, %v1485
  %v1487 = vpop.f32.mrf.mxu0
  %1488 = vmatprep.mubr.f32.mxu0 0.0
  %1489 = vmatmul.mubr.f32.gmra.mxu0 %v1137
  %v1490 = vpop.f32.mrf.mxu0
  %v1491 = vadd.f32 0.0, %v1490
  %v1492 = vpop.f32.mrf.mxu0
  %1493 = vmatprep.mubr.f32.mxu0 0.0
  %1494 = vmatmul.mubr.f32.gmra.mxu0 %v1140
  %v1495 = vpop.f32.mrf.mxu0
  %v1496 = vadd.f32 0.0, %v1495
  %v1497 = vpop.f32.mrf.mxu0
  %1498 = vmatprep.mubr.f32.mxu0 0.0
  %1499 = vmatmul.mubr.f32.gmra.mxu0 %v1143
  %v1500 = vpop.f32.mrf.mxu0
  %v1501 = vadd.f32 0.0, %v1500
  %v1502 = vpop.f32.mrf.mxu0
  %1503 = vmatprep.mubr.f32.mxu0 0.0
  %1504 = vmatmul.mubr.f32.gmra.mxu0 %v1146
  %v1505 = vpop.f32.mrf.mxu0
  %v1506 = vadd.f32 0.0, %v1505
  %v1507 = vpop.f32.mrf.mxu0
  %1508 = vmatprep.mubr.f32.mxu0 0.0
  %1509 = vmatmul.mubr.f32.gmra.mxu0 %v1149
  %v1510 = vpop.f32.mrf.mxu0
  %v1511 = vadd.f32 0.0, %v1510
  %v1512 = vpop.f32.mrf.mxu0
  %1513 = vmatprep.mubr.f32.mxu0 0.0
  %1514 = vmatmul.mubr.f32.gmra.mxu0 %v1152
  %v1515 = vpop.f32.mrf.mxu0
  %v1516 = vadd.f32 0.0, %v1515
  %v1517 = vpop.f32.mrf.mxu0
  %1518 = vmatprep.mubr.f32.mxu0 0.0
  %1519 = vmatmul.mubr.f32.gmra.mxu0 %v1155
  %v1520 = vpop.f32.mrf.mxu0
  %v1521 = vadd.f32 0.0, %v1520
  %v1522 = vpop.f32.mrf.mxu0
  %1523 = vmatprep.mubr.f32.mxu0 0.0
  %1524 = vmatmul.mubr.f32.gmra.mxu0 %v1158
  %v1525 = vpop.f32.mrf.mxu0
  %v1526 = vadd.f32 0.0, %v1525
  %v1527 = vpop.f32.mrf.mxu0
  %1528 = vmatprep.mubr.f32.mxu0 0.0
  %1529 = vmatmul.mubr.f32.gmra.mxu0 %v1161
  %v1530 = vpop.f32.mrf.mxu0
  %v1531 = vadd.f32 0.0, %v1530
  %v1532 = vpop.f32.mrf.mxu0
  %1533 = vmatprep.mubr.f32.mxu0 0.0
  %1534 = vmatmul.mubr.f32.gmra.mxu0 %v1164
  %v1535 = vpop.f32.mrf.mxu0
  %v1536 = vadd.f32 0.0, %v1535
  %v1537 = vpop.f32.mrf.mxu0
  %1538 = vmatprep.mubr.f32.mxu0 0.0
  %1539 = vmatmul.mubr.f32.gmra.mxu0 %v1167
  %v1540 = vpop.f32.mrf.mxu0
  %v1541 = vadd.f32 0.0, %v1540
  %v1542 = vpop.f32.mrf.mxu0
  %1543 = vmatprep.mubr.f32.mxu0 0.0
  %1544 = vmatmul.mubr.f32.gmra.mxu0 %v1170
  %v1545 = vpop.f32.mrf.mxu0
  %v1546 = vadd.f32 0.0, %v1545
  %v1547 = vpop.f32.mrf.mxu0
  %1548 = vmatprep.mubr.f32.mxu0 0.0
  %1549 = vmatmul.mubr.f32.gmra.mxu0 %v1173
  %v1550 = vpop.f32.mrf.mxu0
  %v1551 = vadd.f32 0.0, %v1550
  %v1552 = vpop.f32.mrf.mxu0
  %1553 = vmatprep.mubr.f32.mxu0 0.0
  %1554 = vmatmul.mubr.f32.gmra.mxu0 %v1176
  %v1555 = vpop.f32.mrf.mxu0
  %v1556 = vadd.f32 0.0, %v1555
  %v1557 = vpop.f32.mrf.mxu0
  %1558 = vmatprep.mubr.f32.mxu0 0.0
  %1559 = vmatmul.mubr.f32.gmra.mxu0 %v1179
  %v1560 = vpop.f32.mrf.mxu0
  %v1561 = vadd.f32 0.0, %v1560
  %v1562 = vpop.f32.mrf.mxu0
  %1563 = vmatprep.mubr.f32.mxu0 0.0
  %1564 = vmatmul.mubr.f32.gmra.mxu0 %v1182
  %v1565 = vpop.f32.mrf.mxu0
  %v1566 = vadd.f32 0.0, %v1565
  %v1567 = vpop.f32.mrf.mxu0
  %1568 = vdwg.mxu0
  %v1570 = vsel %vm750, %v855, 0
  %v1573 = vsel %vm750, %v856, 0
  %v1576 = vsel %vm750, %v857, 0
  %v1579 = vsel %vm750, %v858, 0
  %v1582 = vsel %vm750, %v859, 0
  %v1585 = vsel %vm750, %v860, 0
  %v1588 = vsel %vm750, %v861, 0
  %v1591 = vsel %vm750, %v862, 0
  %v1594 = vsel %vm750, %v863, 0
  %v1597 = vsel %vm750, %v864, 0
  %v1600 = vsel %vm750, %v865, 0
  %v1603 = vsel %vm750, %v866, 0
  %v1606 = vsel %vm750, %v867, 0
  %v1609 = vsel %vm750, %v868, 0
  %v1612 = vsel %vm750, %v869, 0
  %v1615 = vsel %vm750, %v870, 0
  %v1618 = vsel %vm750, %v871, 0
  %v1621 = vsel %vm750, %v872, 0
  %v1624 = vsel %vm750, %v873, 0
  %v1627 = vsel %vm750, %v874, 0
  %v1630 = vsel %vm750, %v875, 0
  %v1633 = vsel %vm750, %v876, 0
  %v1636 = vsel %vm750, %v877, 0
  %v1639 = vsel %vm750, %v878, 0
  %v1642 = vsel %vm750, %v879, 0
  %v1645 = vsel %vm750, %v880, 0
  %v1648 = vsel %vm750, %v881, 0
  %v1651 = vsel %vm750, %v882, 0
  %v1654 = vsel %vm750, %v883, 0
  %v1657 = vsel %vm750, %v884, 0
  %v1660 = vsel %vm750, %v885, 0
  %v1663 = vsel %vm750, %v886, 0
  %v1666 = vsel %vm750, %v887, 0
  %v1669 = vsel %vm750, %v888, 0
  %v1672 = vsel %vm750, %v889, 0
  %v1675 = vsel %vm750, %v890, 0
  %v1678 = vsel %vm750, %v891, 0
  %v1681 = vsel %vm750, %v892, 0
  %v1684 = vsel %vm750, %v893, 0
  %v1687 = vsel %vm750, %v894, 0
  %v1690 = vsel %vm750, %v895, 0
  %v1693 = vsel %vm750, %v896, 0
  %v1696 = vsel %vm750, %v897, 0
  %v1699 = vsel %vm750, %v898, 0
  %v1702 = vsel %vm750, %v899, 0
  %v1705 = vsel %vm750, %v900, 0
  %v1708 = vsel %vm750, %v901, 0
  %v1711 = vsel %vm750, %v902, 0
  %v1714 = vsel %vm750, %v903, 0
  %v1717 = vsel %vm750, %v904, 0
  %v1720 = vsel %vm750, %v905, 0
  %v1723 = vsel %vm750, %v906, 0
  %v1726 = vsel %vm750, %v907, 0
  %v1729 = vsel %vm750, %v908, 0
  %v1732 = vsel %vm750, %v909, 0
  %v1735 = vsel %vm750, %v910, 0
  %v1738 = vsel %vm750, %v911, 0
  %v1741 = vsel %vm750, %v912, 0
  %v1744 = vsel %vm750, %v913, 0
  %v1747 = vsel %vm750, %v914, 0
  %v1750 = vsel %vm750, %v915, 0
  %v1753 = vsel %vm750, %v916, 0
  %v1756 = vsel %vm750, %v917, 0
  %v1759 = vsel %vm750, %v918, 0
  %1761 = vmatprep.subr.mxu0 0.0
  %1762 = vmatpush1.msra.mxu0 0.0
  %1763 = vmatprep.subr.mxu0 0.0
  %1764 = vmatpush1.msra.mxu0 0.0
  %1765 = vmatprep.subr.mxu0 0.0
  %1766 = vmatpush1.msra.mxu0 0.0
  %1767 = vmatprep.subr.mxu0 0.0
  %1768 = vmatpush1.msra.mxu0 0.0
  %1769 = vmatprep.subr.mxu0 0.0
  %1770 = vmatpush1.msra.mxu0 0.0
  %1771 = vmatprep.subr.mxu0 0.0
  %1772 = vmatpush1.msra.mxu0 0.0
  %1773 = vmatprep.subr.mxu0 0.0
  %1774 = vmatpush1.msra.mxu0 0.0
  %1775 = vmatprep.subr.mxu0 0.0
  %1776 = vmatpush1.msra.mxu0 0.0
  %1777 = vmatprep.subr.mxu0 0.0
  %1778 = vmatpush1.msra.mxu0 0.0
  %1779 = vmatprep.subr.mxu0 0.0
  %1780 = vmatpush1.msra.mxu0 0.0
  %1781 = vmatprep.subr.mxu0 0.0
  %1782 = vmatpush1.msra.mxu0 0.0
  %1783 = vmatprep.subr.mxu0 0.0
  %1784 = vmatpush1.msra.mxu0 0.0
  %1785 = vmatprep.subr.mxu0 0.0
  %1786 = vmatpush1.msra.mxu0 %v922
  %1787 = vmatprep.subr.mxu0 0.0
  %1788 = vmatpush1.msra.mxu0 %v921
  %1789 = vmatprep.subr.mxu0 0.0
  %1790 = vmatpush1.msra.mxu0 %v920
  %1791 = vmatprep.subr.mxu0 0.0
  %1792 = vmatpush1.msra.mxu0 %v919
  %1793 = vmatprep.subr.mxu0 0.0
  %1794 = vmatpush2.msra.mxu0 0.0
  %1795 = vmatprep.subr.mxu0 0.0
  %1796 = vmatpush2.msra.mxu0 0.0
  %1797 = vmatprep.subr.mxu0 0.0
  %1798 = vmatpush2.msra.mxu0 0.0
  %1799 = vmatprep.subr.mxu0 0.0
  %1800 = vmatpush2.msra.mxu0 0.0
  %1801 = vmatprep.subr.mxu0 0.0
  %1802 = vmatpush2.msra.mxu0 0.0
  %1803 = vmatprep.subr.mxu0 0.0
  %1804 = vmatpush2.msra.mxu0 0.0
  %1805 = vmatprep.subr.mxu0 0.0
  %1806 = vmatpush2.msra.mxu0 0.0
  %1807 = vmatprep.subr.mxu0 0.0
  %1808 = vmatpush2.msra.mxu0 0.0
  %1809 = vmatprep.subr.mxu0 0.0
  %1810 = vmatpush2.msra.mxu0 0.0
  %1811 = vmatprep.subr.mxu0 0.0
  %1812 = vmatpush2.msra.mxu0 0.0
  %1813 = vmatprep.subr.mxu0 0.0
  %1814 = vmatpush2.msra.mxu0 0.0
  %1815 = vmatprep.subr.mxu0 0.0
  %1816 = vmatpush2.msra.mxu0 0.0
  %1817 = vmatprep.subr.mxu0 0.0
  %1818 = vmatpush2.msra.mxu0 0.0
  %1819 = vmatprep.subr.mxu0 0.0
  %1820 = vmatpush2.msra.mxu0 0.0
  %1821 = vmatprep.subr.mxu0 0.0
  %1822 = vmatpush2.msra.mxu0 0.0
  %1823 = vmatprep.subr.mxu0 0.0
  %1824 = vmatpush2.msra.mxu0 0.0
  %1825 = vmatprep.mubr.f32.mxu0 0.0
  %1826 = vmatmul.mubr.f32.gmra.mxu0 %v1570
  %v1827 = vpop.f32.mrf.mxu0
  %v1828 = vadd.f32 %v1251, %v1827
  %v1829 = vpop.f32.mrf.mxu0
  %1830 = vmatprep.mubr.f32.mxu0 0.0
  %1831 = vmatmul.mubr.f32.gmra.mxu0 %v1573
  %v1832 = vpop.f32.mrf.mxu0
  %v1833 = vadd.f32 %v1256, %v1832
  %v1834 = vpop.f32.mrf.mxu0
  %1835 = vmatprep.mubr.f32.mxu0 0.0
  %1836 = vmatmul.mubr.f32.gmra.mxu0 %v1576
  %v1837 = vpop.f32.mrf.mxu0
  %v1838 = vadd.f32 %v1261, %v1837
  %v1839 = vpop.f32.mrf.mxu0
  %1840 = vmatprep.mubr.f32.mxu0 0.0
  %1841 = vmatmul.mubr.f32.gmra.mxu0 %v1579
  %v1842 = vpop.f32.mrf.mxu0
  %v1843 = vadd.f32 %v1266, %v1842
  %v1844 = vpop.f32.mrf.mxu0
  %1845 = vmatprep.mubr.f32.mxu0 0.0
  %1846 = vmatmul.mubr.f32.gmra.mxu0 %v1582
  %v1847 = vpop.f32.mrf.mxu0
  %v1848 = vadd.f32 %v1271, %v1847
  %v1849 = vpop.f32.mrf.mxu0
  %1850 = vmatprep.mubr.f32.mxu0 0.0
  %1851 = vmatmul.mubr.f32.gmra.mxu0 %v1585
  %v1852 = vpop.f32.mrf.mxu0
  %v1853 = vadd.f32 %v1276, %v1852
  %v1854 = vpop.f32.mrf.mxu0
  %1855 = vmatprep.mubr.f32.mxu0 0.0
  %1856 = vmatmul.mubr.f32.gmra.mxu0 %v1588
  %v1857 = vpop.f32.mrf.mxu0
  %v1858 = vadd.f32 %v1281, %v1857
  %v1859 = vpop.f32.mrf.mxu0
  %1860 = vmatprep.mubr.f32.mxu0 0.0
  %1861 = vmatmul.mubr.f32.gmra.mxu0 %v1591
  %v1862 = vpop.f32.mrf.mxu0
  %v1863 = vadd.f32 %v1286, %v1862
  %v1864 = vpop.f32.mrf.mxu0
  %1865 = vmatprep.mubr.f32.mxu0 0.0
  %1866 = vmatmul.mubr.f32.gmra.mxu0 %v1594
  %v1867 = vpop.f32.mrf.mxu0
  %v1868 = vadd.f32 %v1291, %v1867
  %v1869 = vpop.f32.mrf.mxu0
  %1870 = vmatprep.mubr.f32.mxu0 0.0
  %1871 = vmatmul.mubr.f32.gmra.mxu0 %v1597
  %v1872 = vpop.f32.mrf.mxu0
  %v1873 = vadd.f32 %v1296, %v1872
  %v1874 = vpop.f32.mrf.mxu0
  %1875 = vmatprep.mubr.f32.mxu0 0.0
  %1876 = vmatmul.mubr.f32.gmra.mxu0 %v1600
  %v1877 = vpop.f32.mrf.mxu0
  %v1878 = vadd.f32 %v1301, %v1877
  %v1879 = vpop.f32.mrf.mxu0
  %1880 = vmatprep.mubr.f32.mxu0 0.0
  %1881 = vmatmul.mubr.f32.gmra.mxu0 %v1603
  %v1882 = vpop.f32.mrf.mxu0
  %v1883 = vadd.f32 %v1306, %v1882
  %v1884 = vpop.f32.mrf.mxu0
  %1885 = vmatprep.mubr.f32.mxu0 0.0
  %1886 = vmatmul.mubr.f32.gmra.mxu0 %v1606
  %v1887 = vpop.f32.mrf.mxu0
  %v1888 = vadd.f32 %v1311, %v1887
  %v1889 = vpop.f32.mrf.mxu0
  %1890 = vmatprep.mubr.f32.mxu0 0.0
  %1891 = vmatmul.mubr.f32.gmra.mxu0 %v1609
  %v1892 = vpop.f32.mrf.mxu0
  %v1893 = vadd.f32 %v1316, %v1892
  %v1894 = vpop.f32.mrf.mxu0
  %1895 = vmatprep.mubr.f32.mxu0 0.0
  %1896 = vmatmul.mubr.f32.gmra.mxu0 %v1612
  %v1897 = vpop.f32.mrf.mxu0
  %v1898 = vadd.f32 %v1321, %v1897
  %v1899 = vpop.f32.mrf.mxu0
  %1900 = vmatprep.mubr.f32.mxu0 0.0
  %1901 = vmatmul.mubr.f32.gmra.mxu0 %v1615
  %v1902 = vpop.f32.mrf.mxu0
  %v1903 = vadd.f32 %v1326, %v1902
  %v1904 = vpop.f32.mrf.mxu0
  %1905 = vmatprep.mubr.f32.mxu0 0.0
  %1906 = vmatmul.mubr.f32.gmra.mxu0 %v1618
  %v1907 = vpop.f32.mrf.mxu0
  %v1908 = vadd.f32 %v1331, %v1907
  %v1909 = vpop.f32.mrf.mxu0
  %1910 = vmatprep.mubr.f32.mxu0 0.0
  %1911 = vmatmul.mubr.f32.gmra.mxu0 %v1621
  %v1912 = vpop.f32.mrf.mxu0
  %v1913 = vadd.f32 %v1336, %v1912
  %v1914 = vpop.f32.mrf.mxu0
  %1915 = vmatprep.mubr.f32.mxu0 0.0
  %1916 = vmatmul.mubr.f32.gmra.mxu0 %v1624
  %v1917 = vpop.f32.mrf.mxu0
  %v1918 = vadd.f32 %v1341, %v1917
  %v1919 = vpop.f32.mrf.mxu0
  %1920 = vmatprep.mubr.f32.mxu0 0.0
  %1921 = vmatmul.mubr.f32.gmra.mxu0 %v1627
  %v1922 = vpop.f32.mrf.mxu0
  %v1923 = vadd.f32 %v1346, %v1922
  %v1924 = vpop.f32.mrf.mxu0
  %1925 = vmatprep.mubr.f32.mxu0 0.0
  %1926 = vmatmul.mubr.f32.gmra.mxu0 %v1630
  %v1927 = vpop.f32.mrf.mxu0
  %v1928 = vadd.f32 %v1351, %v1927
  %v1929 = vpop.f32.mrf.mxu0
  %1930 = vmatprep.mubr.f32.mxu0 0.0
  %1931 = vmatmul.mubr.f32.gmra.mxu0 %v1633
  %v1932 = vpop.f32.mrf.mxu0
  %v1933 = vadd.f32 %v1356, %v1932
  %v1934 = vpop.f32.mrf.mxu0
  %1935 = vmatprep.mubr.f32.mxu0 0.0
  %1936 = vmatmul.mubr.f32.gmra.mxu0 %v1636
  %v1937 = vpop.f32.mrf.mxu0
  %v1938 = vadd.f32 %v1361, %v1937
  %v1939 = vpop.f32.mrf.mxu0
  %1940 = vmatprep.mubr.f32.mxu0 0.0
  %1941 = vmatmul.mubr.f32.gmra.mxu0 %v1639
  %v1942 = vpop.f32.mrf.mxu0
  %v1943 = vadd.f32 %v1366, %v1942
  %v1944 = vpop.f32.mrf.mxu0
  %1945 = vmatprep.mubr.f32.mxu0 0.0
  %1946 = vmatmul.mubr.f32.gmra.mxu0 %v1642
  %v1947 = vpop.f32.mrf.mxu0
  %v1948 = vadd.f32 %v1371, %v1947
  %v1949 = vpop.f32.mrf.mxu0
  %1950 = vmatprep.mubr.f32.mxu0 0.0
  %1951 = vmatmul.mubr.f32.gmra.mxu0 %v1645
  %v1952 = vpop.f32.mrf.mxu0
  %v1953 = vadd.f32 %v1376, %v1952
  %v1954 = vpop.f32.mrf.mxu0
  %1955 = vmatprep.mubr.f32.mxu0 0.0
  %1956 = vmatmul.mubr.f32.gmra.mxu0 %v1648
  %v1957 = vpop.f32.mrf.mxu0
  %v1958 = vadd.f32 %v1381, %v1957
  %v1959 = vpop.f32.mrf.mxu0
  %1960 = vmatprep.mubr.f32.mxu0 0.0
  %1961 = vmatmul.mubr.f32.gmra.mxu0 %v1651
  %v1962 = vpop.f32.mrf.mxu0
  %v1963 = vadd.f32 %v1386, %v1962
  %v1964 = vpop.f32.mrf.mxu0
  %1965 = vmatprep.mubr.f32.mxu0 0.0
  %1966 = vmatmul.mubr.f32.gmra.mxu0 %v1654
  %v1967 = vpop.f32.mrf.mxu0
  %v1968 = vadd.f32 %v1391, %v1967
  %v1969 = vpop.f32.mrf.mxu0
  %1970 = vmatprep.mubr.f32.mxu0 0.0
  %1971 = vmatmul.mubr.f32.gmra.mxu0 %v1657
  %v1972 = vpop.f32.mrf.mxu0
  %v1973 = vadd.f32 %v1396, %v1972
  %v1974 = vpop.f32.mrf.mxu0
  %1975 = vmatprep.mubr.f32.mxu0 0.0
  %1976 = vmatmul.mubr.f32.gmra.mxu0 %v1660
  %v1977 = vpop.f32.mrf.mxu0
  %v1978 = vadd.f32 %v1401, %v1977
  %v1979 = vpop.f32.mrf.mxu0
  %1980 = vmatprep.mubr.f32.mxu0 0.0
  %1981 = vmatmul.mubr.f32.gmra.mxu0 %v1663
  %v1982 = vpop.f32.mrf.mxu0
  %v1983 = vadd.f32 %v1406, %v1982
  %v1984 = vpop.f32.mrf.mxu0
  %1985 = vmatprep.mubr.f32.mxu0 0.0
  %1986 = vmatmul.mubr.f32.gmra.mxu0 %v1666
  %v1987 = vpop.f32.mrf.mxu0
  %v1988 = vadd.f32 %v1411, %v1987
  %v1989 = vpop.f32.mrf.mxu0
  %1990 = vmatprep.mubr.f32.mxu0 0.0
  %1991 = vmatmul.mubr.f32.gmra.mxu0 %v1669
  %v1992 = vpop.f32.mrf.mxu0
  %v1993 = vadd.f32 %v1416, %v1992
  %v1994 = vpop.f32.mrf.mxu0
  %1995 = vmatprep.mubr.f32.mxu0 0.0
  %1996 = vmatmul.mubr.f32.gmra.mxu0 %v1672
  %v1997 = vpop.f32.mrf.mxu0
  %v1998 = vadd.f32 %v1421, %v1997
  %v1999 = vpop.f32.mrf.mxu0
  %2000 = vmatprep.mubr.f32.mxu0 0.0
  %2001 = vmatmul.mubr.f32.gmra.mxu0 %v1675
  %v2002 = vpop.f32.mrf.mxu0
  %v2003 = vadd.f32 %v1426, %v2002
  %v2004 = vpop.f32.mrf.mxu0
  %2005 = vmatprep.mubr.f32.mxu0 0.0
  %2006 = vmatmul.mubr.f32.gmra.mxu0 %v1678
  %v2007 = vpop.f32.mrf.mxu0
  %v2008 = vadd.f32 %v1431, %v2007
  %v2009 = vpop.f32.mrf.mxu0
  %2010 = vmatprep.mubr.f32.mxu0 0.0
  %2011 = vmatmul.mubr.f32.gmra.mxu0 %v1681
  %v2012 = vpop.f32.mrf.mxu0
  %v2013 = vadd.f32 %v1436, %v2012
  %v2014 = vpop.f32.mrf.mxu0
  %2015 = vmatprep.mubr.f32.mxu0 0.0
  %2016 = vmatmul.mubr.f32.gmra.mxu0 %v1684
  %v2017 = vpop.f32.mrf.mxu0
  %v2018 = vadd.f32 %v1441, %v2017
  %v2019 = vpop.f32.mrf.mxu0
  %2020 = vmatprep.mubr.f32.mxu0 0.0
  %2021 = vmatmul.mubr.f32.gmra.mxu0 %v1687
  %v2022 = vpop.f32.mrf.mxu0
  %v2023 = vadd.f32 %v1446, %v2022
  %v2024 = vpop.f32.mrf.mxu0
  %2025 = vmatprep.mubr.f32.mxu0 0.0
  %2026 = vmatmul.mubr.f32.gmra.mxu0 %v1690
  %v2027 = vpop.f32.mrf.mxu0
  %v2028 = vadd.f32 %v1451, %v2027
  %v2029 = vpop.f32.mrf.mxu0
  %2030 = vmatprep.mubr.f32.mxu0 0.0
  %2031 = vmatmul.mubr.f32.gmra.mxu0 %v1693
  %v2032 = vpop.f32.mrf.mxu0
  %v2033 = vadd.f32 %v1456, %v2032
  %v2034 = vpop.f32.mrf.mxu0
  %2035 = vmatprep.mubr.f32.mxu0 0.0
  %2036 = vmatmul.mubr.f32.gmra.mxu0 %v1696
  %v2037 = vpop.f32.mrf.mxu0
  %v2038 = vadd.f32 %v1461, %v2037
  %v2039 = vpop.f32.mrf.mxu0
  %2040 = vmatprep.mubr.f32.mxu0 0.0
  %2041 = vmatmul.mubr.f32.gmra.mxu0 %v1699
  %v2042 = vpop.f32.mrf.mxu0
  %v2043 = vadd.f32 %v1466, %v2042
  %v2044 = vpop.f32.mrf.mxu0
  %2045 = vmatprep.mubr.f32.mxu0 0.0
  %2046 = vmatmul.mubr.f32.gmra.mxu0 %v1702
  %v2047 = vpop.f32.mrf.mxu0
  %v2048 = vadd.f32 %v1471, %v2047
  %v2049 = vpop.f32.mrf.mxu0
  %2050 = vmatprep.mubr.f32.mxu0 0.0
  %2051 = vmatmul.mubr.f32.gmra.mxu0 %v1705
  %v2052 = vpop.f32.mrf.mxu0
  %v2053 = vadd.f32 %v1476, %v2052
  %v2054 = vpop.f32.mrf.mxu0
  %2055 = vmatprep.mubr.f32.mxu0 0.0
  %2056 = vmatmul.mubr.f32.gmra.mxu0 %v1708
  %v2057 = vpop.f32.mrf.mxu0
  %v2058 = vadd.f32 %v1481, %v2057
  %v2059 = vpop.f32.mrf.mxu0
  %2060 = vmatprep.mubr.f32.mxu0 0.0
  %2061 = vmatmul.mubr.f32.gmra.mxu0 %v1711
  %v2062 = vpop.f32.mrf.mxu0
  %v2063 = vadd.f32 %v1486, %v2062
  %v2064 = vpop.f32.mrf.mxu0
  %2065 = vmatprep.mubr.f32.mxu0 0.0
  %2066 = vmatmul.mubr.f32.gmra.mxu0 %v1714
  %v2067 = vpop.f32.mrf.mxu0
  %v2068 = vadd.f32 %v1491, %v2067
  %v2069 = vpop.f32.mrf.mxu0
  %2070 = vmatprep.mubr.f32.mxu0 0.0
  %2071 = vmatmul.mubr.f32.gmra.mxu0 %v1717
  %v2072 = vpop.f32.mrf.mxu0
  %v2073 = vadd.f32 %v1496, %v2072
  %v2074 = vpop.f32.mrf.mxu0
  %2075 = vmatprep.mubr.f32.mxu0 0.0
  %2076 = vmatmul.mubr.f32.gmra.mxu0 %v1720
  %v2077 = vpop.f32.mrf.mxu0
  %v2078 = vadd.f32 %v1501, %v2077
  %v2079 = vpop.f32.mrf.mxu0
  %2080 = vmatprep.mubr.f32.mxu0 0.0
  %2081 = vmatmul.mubr.f32.gmra.mxu0 %v1723
  %v2082 = vpop.f32.mrf.mxu0
  %v2083 = vadd.f32 %v1506, %v2082
  %v2084 = vpop.f32.mrf.mxu0
  %2085 = vmatprep.mubr.f32.mxu0 0.0
  %2086 = vmatmul.mubr.f32.gmra.mxu0 %v1726
  %v2087 = vpop.f32.mrf.mxu0
  %v2088 = vadd.f32 %v1511, %v2087
  %v2089 = vpop.f32.mrf.mxu0
  %2090 = vmatprep.mubr.f32.mxu0 0.0
  %2091 = vmatmul.mubr.f32.gmra.mxu0 %v1729
  %v2092 = vpop.f32.mrf.mxu0
  %v2093 = vadd.f32 %v1516, %v2092
  %v2094 = vpop.f32.mrf.mxu0
  %2095 = vmatprep.mubr.f32.mxu0 0.0
  %2096 = vmatmul.mubr.f32.gmra.mxu0 %v1732
  %v2097 = vpop.f32.mrf.mxu0
  %v2098 = vadd.f32 %v1521, %v2097
  %v2099 = vpop.f32.mrf.mxu0
  %2100 = vmatprep.mubr.f32.mxu0 0.0
  %2101 = vmatmul.mubr.f32.gmra.mxu0 %v1735
  %v2102 = vpop.f32.mrf.mxu0
  %v2103 = vadd.f32 %v1526, %v2102
  %v2104 = vpop.f32.mrf.mxu0
  %2105 = vmatprep.mubr.f32.mxu0 0.0
  %2106 = vmatmul.mubr.f32.gmra.mxu0 %v1738
  %v2107 = vpop.f32.mrf.mxu0
  %v2108 = vadd.f32 %v1531, %v2107
  %v2109 = vpop.f32.mrf.mxu0
  %2110 = vmatprep.mubr.f32.mxu0 0.0
  %2111 = vmatmul.mubr.f32.gmra.mxu0 %v1741
  %v2112 = vpop.f32.mrf.mxu0
  %v2113 = vadd.f32 %v1536, %v2112
  %v2114 = vpop.f32.mrf.mxu0
  %2115 = vmatprep.mubr.f32.mxu0 0.0
  %2116 = vmatmul.mubr.f32.gmra.mxu0 %v1744
  %v2117 = vpop.f32.mrf.mxu0
  %v2118 = vadd.f32 %v1541, %v2117
  %v2119 = vpop.f32.mrf.mxu0
  %2120 = vmatprep.mubr.f32.mxu0 0.0
  %2121 = vmatmul.mubr.f32.gmra.mxu0 %v1747
  %v2122 = vpop.f32.mrf.mxu0
  %v2123 = vadd.f32 %v1546, %v2122
  %v2124 = vpop.f32.mrf.mxu0
  %2125 = vmatprep.mubr.f32.mxu0 0.0
  %2126 = vmatmul.mubr.f32.gmra.mxu0 %v1750
  %v2127 = vpop.f32.mrf.mxu0
  %v2128 = vadd.f32 %v1551, %v2127
  %v2129 = vpop.f32.mrf.mxu0
  %2130 = vmatprep.mubr.f32.mxu0 0.0
  %2131 = vmatmul.mubr.f32.gmra.mxu0 %v1753
  %v2132 = vpop.f32.mrf.mxu0
  %v2133 = vadd.f32 %v1556, %v2132
  %v2134 = vpop.f32.mrf.mxu0
  %2135 = vmatprep.mubr.f32.mxu0 0.0
  %2136 = vmatmul.mubr.f32.gmra.mxu0 %v1756
  %v2137 = vpop.f32.mrf.mxu0
  %v2138 = vadd.f32 %v1561, %v2137
  %v2139 = vpop.f32.mrf.mxu0
  %2140 = vmatprep.mubr.f32.mxu0 0.0
  %2141 = vmatmul.mubr.f32.gmra.mxu0 %v1759
  %v2142 = vpop.f32.mrf.mxu0
  %v2143 = vadd.f32 %v1566, %v2142
  %v2144 = vpop.f32.mrf.mxu0
  %2145 = vdwg.mxu0
  %s2146 = scalar_lea.vmem [#allocation2], 16
  %v2147 = vld [vmem:[%s2146] sm:$0xff]
  %v2148 = vld [vmem:[%s2146 + $0x8] sm:$0xff]
  %v2149 = vld [vmem:[%s2146 + $0x10] sm:$0xff]
  %v2150 = vld [vmem:[%s2146 + $0x18] sm:$0xff]
  %v2151 = vld [vmem:[%s2146 + $0x20] sm:$0xff]
  %v2152 = vld [vmem:[%s2146 + $0x28] sm:$0xff]
  %v2153 = vld [vmem:[%s2146 + $0x30] sm:$0xff]
  %v2154 = vld [vmem:[%s2146 + $0x38] sm:$0xff]
  %v2155 = vld [vmem:[%s2146 + $0x50] sm:$0xff]
  %v2156 = vld [vmem:[%s2146 + $0x58] sm:$0xff]
  %v2157 = vld [vmem:[%s2146 + $0x60] sm:$0xff]
  %v2158 = vld [vmem:[%s2146 + $0x68] sm:$0xff]
  %v2159 = vld [vmem:[%s2146 + $0x70] sm:$0xff]
  %v2160 = vld [vmem:[%s2146 + $0x78] sm:$0xff]
  %v2161 = vld [vmem:[%s2146 + $0x80] sm:$0xff]
  %v2162 = vld [vmem:[%s2146 + $0x88] sm:$0xff]
  %v2163 = vld [vmem:[%s2146 + $0xa0] sm:$0xff]
  %v2164 = vld [vmem:[%s2146 + $0xa8] sm:$0xff]
  %v2165 = vld [vmem:[%s2146 + $0xb0] sm:$0xff]
  %v2166 = vld [vmem:[%s2146 + $0xb8] sm:$0xff]
  %v2167 = vld [vmem:[%s2146 + $0xc0] sm:$0xff]
  %v2168 = vld [vmem:[%s2146 + $0xc8] sm:$0xff]
  %v2169 = vld [vmem:[%s2146 + $0xd0] sm:$0xff]
  %v2170 = vld [vmem:[%s2146 + $0xd8] sm:$0xff]
  %v2171 = vld [vmem:[%s2146 + $0xf0] sm:$0xff]
  %v2172 = vld [vmem:[%s2146 + $0xf8] sm:$0xff]
  %v2173 = vld [vmem:[%s2146 + $0x100] sm:$0xff]
  %v2174 = vld [vmem:[%s2146 + $0x108] sm:$0xff]
  %v2175 = vld [vmem:[%s2146 + $0x110] sm:$0xff]
  %v2176 = vld [vmem:[%s2146 + $0x118] sm:$0xff]
  %v2177 = vld [vmem:[%s2146 + $0x120] sm:$0xff]
  %v2178 = vld [vmem:[%s2146 + $0x128] sm:$0xff]
  %v2179 = vld [vmem:[%s2146 + $0x140] sm:$0xff]
  %v2180 = vld [vmem:[%s2146 + $0x148] sm:$0xff]
  %v2181 = vld [vmem:[%s2146 + $0x150] sm:$0xff]
  %v2182 = vld [vmem:[%s2146 + $0x158] sm:$0xff]
  %v2183 = vld [vmem:[%s2146 + $0x160] sm:$0xff]
  %v2184 = vld [vmem:[%s2146 + $0x168] sm:$0xff]
  %v2185 = vld [vmem:[%s2146 + $0x170] sm:$0xff]
  %v2186 = vld [vmem:[%s2146 + $0x178] sm:$0xff]
  %v2187 = vld [vmem:[%s2146 + $0x190] sm:$0xff]
  %v2188 = vld [vmem:[%s2146 + $0x198] sm:$0xff]
  %v2189 = vld [vmem:[%s2146 + $0x1a0] sm:$0xff]
  %v2190 = vld [vmem:[%s2146 + $0x1a8] sm:$0xff]
  %v2191 = vld [vmem:[%s2146 + $0x1b0] sm:$0xff]
  %v2192 = vld [vmem:[%s2146 + $0x1b8] sm:$0xff]
  %v2193 = vld [vmem:[%s2146 + $0x1c0] sm:$0xff]
  %v2194 = vld [vmem:[%s2146 + $0x1c8] sm:$0xff]
  %v2195 = vld [vmem:[%s2146 + $0x1e0] sm:$0xff]
  %v2196 = vld [vmem:[%s2146 + $0x1e8] sm:$0xff]
  %v2197 = vld [vmem:[%s2146 + $0x1f0] sm:$0xff]
  %v2198 = vld [vmem:[%s2146 + $0x1f8] sm:$0xff]
  %v2199 = vld [vmem:[%s2146 + $0x200] sm:$0xff]
  %v2200 = vld [vmem:[%s2146 + $0x208] sm:$0xff]
  %v2201 = vld [vmem:[%s2146 + $0x210] sm:$0xff]
  %v2202 = vld [vmem:[%s2146 + $0x218] sm:$0xff]
  %v2203 = vld [vmem:[%s2146 + $0x230] sm:$0xff]
  %v2204 = vld [vmem:[%s2146 + $0x238] sm:$0xff]
  %v2205 = vld [vmem:[%s2146 + $0x240] sm:$0xff]
  %v2206 = vld [vmem:[%s2146 + $0x248] sm:$0xff]
  %v2207 = vld [vmem:[%s2146 + $0x250] sm:$0xff]
  %v2208 = vld [vmem:[%s2146 + $0x258] sm:$0xff]
  %v2209 = vld [vmem:[%s2146 + $0x260] sm:$0xff]
  %v2210 = vld [vmem:[%s2146 + $0x268] sm:$0xff]
  %v2211 = vld [vmem:[%s4 + $0x40] sm:$0xff]
  %v2212 = vld [vmem:[%s4 + $0x48] sm:$0xff]
  %v2213 = vld [vmem:[%s4 + $0x50] sm:$0xff]
  %v2214 = vld [vmem:[%s4 + $0x58] sm:$0xff]
  %v2216 = vsel %vm750, %v2147, 0
  %v2219 = vsel %vm750, %v2148, 0
  %v2222 = vsel %vm750, %v2149, 0
  %v2225 = vsel %vm750, %v2150, 0
  %v2228 = vsel %vm750, %v2151, 0
  %v2231 = vsel %vm750, %v2152, 0
  %v2234 = vsel %vm750, %v2153, 0
  %v2237 = vsel %vm750, %v2154, 0
  %v2240 = vsel %vm750, %v2155, 0
  %v2243 = vsel %vm750, %v2156, 0
  %v2246 = vsel %vm750, %v2157, 0
  %v2249 = vsel %vm750, %v2158, 0
  %v2252 = vsel %vm750, %v2159, 0
  %v2255 = vsel %vm750, %v2160, 0
  %v2258 = vsel %vm750, %v2161, 0
  %v2261 = vsel %vm750, %v2162, 0
  %v2264 = vsel %vm750, %v2163, 0
  %v2267 = vsel %vm750, %v2164, 0
  %v2270 = vsel %vm750, %v2165, 0
  %v2273 = vsel %vm750, %v2166, 0
  %v2276 = vsel %vm750, %v2167, 0
  %v2279 = vsel %vm750, %v2168, 0
  %v2282 = vsel %vm750, %v2169, 0
  %v2285 = vsel %vm750, %v2170, 0
  %v2288 = vsel %vm750, %v2171, 0
  %v2291 = vsel %vm750, %v2172, 0
  %v2294 = vsel %vm750, %v2173, 0
  %v2297 = vsel %vm750, %v2174, 0
  %v2300 = vsel %vm750, %v2175, 0
  %v2303 = vsel %vm750, %v2176, 0
  %v2306 = vsel %vm750, %v2177, 0
  %v2309 = vsel %vm750, %v2178, 0
  %v2312 = vsel %vm750, %v2179, 0
  %v2315 = vsel %vm750, %v2180, 0
  %v2318 = vsel %vm750, %v2181, 0
  %v2321 = vsel %vm750, %v2182, 0
  %v2324 = vsel %vm750, %v2183, 0
  %v2327 = vsel %vm750, %v2184, 0
  %v2330 = vsel %vm750, %v2185, 0
  %v2333 = vsel %vm750, %v2186, 0
  %v2336 = vsel %vm750, %v2187, 0
  %v2339 = vsel %vm750, %v2188, 0
  %v2342 = vsel %vm750, %v2189, 0
  %v2345 = vsel %vm750, %v2190, 0
  %v2348 = vsel %vm750, %v2191, 0
  %v2351 = vsel %vm750, %v2192, 0
  %v2354 = vsel %vm750, %v2193, 0
  %v2357 = vsel %vm750, %v2194, 0
  %v2360 = vsel %vm750, %v2195, 0
  %v2363 = vsel %vm750, %v2196, 0
  %v2366 = vsel %vm750, %v2197, 0
  %v2369 = vsel %vm750, %v2198, 0
  %v2372 = vsel %vm750, %v2199, 0
  %v2375 = vsel %vm750, %v2200, 0
  %v2378 = vsel %vm750, %v2201, 0
  %v2381 = vsel %vm750, %v2202, 0
  %v2384 = vsel %vm750, %v2203, 0
  %v2387 = vsel %vm750, %v2204, 0
  %v2390 = vsel %vm750, %v2205, 0
  %v2393 = vsel %vm750, %v2206, 0
  %v2396 = vsel %vm750, %v2207, 0
  %v2399 = vsel %vm750, %v2208, 0
  %v2402 = vsel %vm750, %v2209, 0
  %v2405 = vsel %vm750, %v2210, 0
  %2407 = vmatprep.subr.mxu0 0.0
  %2408 = vmatpush1.msra.mxu0 0.0
  %2409 = vmatprep.subr.mxu0 0.0
  %2410 = vmatpush1.msra.mxu0 0.0
  %2411 = vmatprep.subr.mxu0 0.0
  %2412 = vmatpush1.msra.mxu0 0.0
  %2413 = vmatprep.subr.mxu0 0.0
  %2414 = vmatpush1.msra.mxu0 0.0
  %2415 = vmatprep.subr.mxu0 0.0
  %2416 = vmatpush1.msra.mxu0 0.0
  %2417 = vmatprep.subr.mxu0 0.0
  %2418 = vmatpush1.msra.mxu0 0.0
  %2419 = vmatprep.subr.mxu0 0.0
  %2420 = vmatpush1.msra.mxu0 0.0
  %2421 = vmatprep.subr.mxu0 0.0
  %2422 = vmatpush1.msra.mxu0 0.0
  %2423 = vmatprep.subr.mxu0 0.0
  %2424 = vmatpush1.msra.mxu0 0.0
  %2425 = vmatprep.subr.mxu0 0.0
  %2426 = vmatpush1.msra.mxu0 0.0
  %2427 = vmatprep.subr.mxu0 0.0
  %2428 = vmatpush1.msra.mxu0 0.0
  %2429 = vmatprep.subr.mxu0 0.0
  %2430 = vmatpush1.msra.mxu0 0.0
  %2431 = vmatprep.subr.mxu0 0.0
  %2432 = vmatpush1.msra.mxu0 %v2214
  %2433 = vmatprep.subr.mxu0 0.0
  %2434 = vmatpush1.msra.mxu0 %v2213
  %2435 = vmatprep.subr.mxu0 0.0
  %2436 = vmatpush1.msra.mxu0 %v2212
  %2437 = vmatprep.subr.mxu0 0.0
  %2438 = vmatpush1.msra.mxu0 %v2211
  %2439 = vmatprep.subr.mxu0 0.0
  %2440 = vmatpush2.msra.mxu0 0.0
  %2441 = vmatprep.subr.mxu0 0.0
  %2442 = vmatpush2.msra.mxu0 0.0
  %2443 = vmatprep.subr.mxu0 0.0
  %2444 = vmatpush2.msra.mxu0 0.0
  %2445 = vmatprep.subr.mxu0 0.0
  %2446 = vmatpush2.msra.mxu0 0.0
  %2447 = vmatprep.subr.mxu0 0.0
  %2448 = vmatpush2.msra.mxu0 0.0
  %2449 = vmatprep.subr.mxu0 0.0
  %2450 = vmatpush2.msra.mxu0 0.0
  %2451 = vmatprep.subr.mxu0 0.0
  %2452 = vmatpush2.msra.mxu0 0.0
  %2453 = vmatprep.subr.mxu0 0.0
  %2454 = vmatpush2.msra.mxu0 0.0
  %2455 = vmatprep.subr.mxu0 0.0
  %2456 = vmatpush2.msra.mxu0 0.0
  %2457 = vmatprep.subr.mxu0 0.0
  %2458 = vmatpush2.msra.mxu0 0.0
  %2459 = vmatprep.subr.mxu0 0.0
  %2460 = vmatpush2.msra.mxu0 0.0
  %2461 = vmatprep.subr.mxu0 0.0
  %2462 = vmatpush2.msra.mxu0 0.0
  %2463 = vmatprep.subr.mxu0 0.0
  %2464 = vmatpush2.msra.mxu0 0.0
  %2465 = vmatprep.subr.mxu0 0.0
  %2466 = vmatpush2.msra.mxu0 0.0
  %2467 = vmatprep.subr.mxu0 0.0
  %2468 = vmatpush2.msra.mxu0 0.0
  %2469 = vmatprep.subr.mxu0 0.0
  %2470 = vmatpush2.msra.mxu0 0.0
  %2471 = vmatprep.mubr.f32.mxu0 0.0
  %2472 = vmatmul.mubr.f32.gmra.mxu0 %v2216
  %v2473 = vpop.f32.mrf.mxu0
  %v2474 = vadd.f32 0.0, %v2473
  %v2475 = vpop.f32.mrf.mxu0
  %2476 = vmatprep.mubr.f32.mxu0 0.0
  %2477 = vmatmul.mubr.f32.gmra.mxu0 %v2219
  %v2478 = vpop.f32.mrf.mxu0
  %v2479 = vadd.f32 0.0, %v2478
  %v2480 = vpop.f32.mrf.mxu0
  %2481 = vmatprep.mubr.f32.mxu0 0.0
  %2482 = vmatmul.mubr.f32.gmra.mxu0 %v2222
  %v2483 = vpop.f32.mrf.mxu0
  %v2484 = vadd.f32 0.0, %v2483
  %v2485 = vpop.f32.mrf.mxu0
  %2486 = vmatprep.mubr.f32.mxu0 0.0
  %2487 = vmatmul.mubr.f32.gmra.mxu0 %v2225
  %v2488 = vpop.f32.mrf.mxu0
  %v2489 = vadd.f32 0.0, %v2488
  %v2490 = vpop.f32.mrf.mxu0
  %2491 = vmatprep.mubr.f32.mxu0 0.0
  %2492 = vmatmul.mubr.f32.gmra.mxu0 %v2228
  %v2493 = vpop.f32.mrf.mxu0
  %v2494 = vadd.f32 0.0, %v2493
  %v2495 = vpop.f32.mrf.mxu0
  %2496 = vmatprep.mubr.f32.mxu0 0.0
  %2497 = vmatmul.mubr.f32.gmra.mxu0 %v2231
  %v2498 = vpop.f32.mrf.mxu0
  %v2499 = vadd.f32 0.0, %v2498
  %v2500 = vpop.f32.mrf.mxu0
  %2501 = vmatprep.mubr.f32.mxu0 0.0
  %2502 = vmatmul.mubr.f32.gmra.mxu0 %v2234
  %v2503 = vpop.f32.mrf.mxu0
  %v2504 = vadd.f32 0.0, %v2503
  %v2505 = vpop.f32.mrf.mxu0
  %2506 = vmatprep.mubr.f32.mxu0 0.0
  %2507 = vmatmul.mubr.f32.gmra.mxu0 %v2237
  %v2508 = vpop.f32.mrf.mxu0
  %v2509 = vadd.f32 0.0, %v2508
  %v2510 = vpop.f32.mrf.mxu0
  %2511 = vmatprep.mubr.f32.mxu0 0.0
  %2512 = vmatmul.mubr.f32.gmra.mxu0 %v2240
  %v2513 = vpop.f32.mrf.mxu0
  %v2514 = vadd.f32 0.0, %v2513
  %v2515 = vpop.f32.mrf.mxu0
  %2516 = vmatprep.mubr.f32.mxu0 0.0
  %2517 = vmatmul.mubr.f32.gmra.mxu0 %v2243
  %v2518 = vpop.f32.mrf.mxu0
  %v2519 = vadd.f32 0.0, %v2518
  %v2520 = vpop.f32.mrf.mxu0
  %2521 = vmatprep.mubr.f32.mxu0 0.0
  %2522 = vmatmul.mubr.f32.gmra.mxu0 %v2246
  %v2523 = vpop.f32.mrf.mxu0
  %v2524 = vadd.f32 0.0, %v2523
  %v2525 = vpop.f32.mrf.mxu0
  %2526 = vmatprep.mubr.f32.mxu0 0.0
  %2527 = vmatmul.mubr.f32.gmra.mxu0 %v2249
  %v2528 = vpop.f32.mrf.mxu0
  %v2529 = vadd.f32 0.0, %v2528
  %v2530 = vpop.f32.mrf.mxu0
  %2531 = vmatprep.mubr.f32.mxu0 0.0
  %2532 = vmatmul.mubr.f32.gmra.mxu0 %v2252
  %v2533 = vpop.f32.mrf.mxu0
  %v2534 = vadd.f32 0.0, %v2533
  %v2535 = vpop.f32.mrf.mxu0
  %2536 = vmatprep.mubr.f32.mxu0 0.0
  %2537 = vmatmul.mubr.f32.gmra.mxu0 %v2255
  %v2538 = vpop.f32.mrf.mxu0
  %v2539 = vadd.f32 0.0, %v2538
  %v2540 = vpop.f32.mrf.mxu0
  %2541 = vmatprep.mubr.f32.mxu0 0.0
  %2542 = vmatmul.mubr.f32.gmra.mxu0 %v2258
  %v2543 = vpop.f32.mrf.mxu0
  %v2544 = vadd.f32 0.0, %v2543
  %v2545 = vpop.f32.mrf.mxu0
  %2546 = vmatprep.mubr.f32.mxu0 0.0
  %2547 = vmatmul.mubr.f32.gmra.mxu0 %v2261
  %v2548 = vpop.f32.mrf.mxu0
  %v2549 = vadd.f32 0.0, %v2548
  %v2550 = vpop.f32.mrf.mxu0
  %2551 = vmatprep.mubr.f32.mxu0 0.0
  %2552 = vmatmul.mubr.f32.gmra.mxu0 %v2264
  %v2553 = vpop.f32.mrf.mxu0
  %v2554 = vadd.f32 0.0, %v2553
  %v2555 = vpop.f32.mrf.mxu0
  %2556 = vmatprep.mubr.f32.mxu0 0.0
  %2557 = vmatmul.mubr.f32.gmra.mxu0 %v2267
  %v2558 = vpop.f32.mrf.mxu0
  %v2559 = vadd.f32 0.0, %v2558
  %v2560 = vpop.f32.mrf.mxu0
  %2561 = vmatprep.mubr.f32.mxu0 0.0
  %2562 = vmatmul.mubr.f32.gmra.mxu0 %v2270
  %v2563 = vpop.f32.mrf.mxu0
  %v2564 = vadd.f32 0.0, %v2563
  %v2565 = vpop.f32.mrf.mxu0
  %2566 = vmatprep.mubr.f32.mxu0 0.0
  %2567 = vmatmul.mubr.f32.gmra.mxu0 %v2273
  %v2568 = vpop.f32.mrf.mxu0
  %v2569 = vadd.f32 0.0, %v2568
  %v2570 = vpop.f32.mrf.mxu0
  %2571 = vmatprep.mubr.f32.mxu0 0.0
  %2572 = vmatmul.mubr.f32.gmra.mxu0 %v2276
  %v2573 = vpop.f32.mrf.mxu0
  %v2574 = vadd.f32 0.0, %v2573
  %v2575 = vpop.f32.mrf.mxu0
  %2576 = vmatprep.mubr.f32.mxu0 0.0
  %2577 = vmatmul.mubr.f32.gmra.mxu0 %v2279
  %v2578 = vpop.f32.mrf.mxu0
  %v2579 = vadd.f32 0.0, %v2578
  %v2580 = vpop.f32.mrf.mxu0
  %2581 = vmatprep.mubr.f32.mxu0 0.0
  %2582 = vmatmul.mubr.f32.gmra.mxu0 %v2282
  %v2583 = vpop.f32.mrf.mxu0
  %v2584 = vadd.f32 0.0, %v2583
  %v2585 = vpop.f32.mrf.mxu0
  %2586 = vmatprep.mubr.f32.mxu0 0.0
  %2587 = vmatmul.mubr.f32.gmra.mxu0 %v2285
  %v2588 = vpop.f32.mrf.mxu0
  %v2589 = vadd.f32 0.0, %v2588
  %v2590 = vpop.f32.mrf.mxu0
  %2591 = vmatprep.mubr.f32.mxu0 0.0
  %2592 = vmatmul.mubr.f32.gmra.mxu0 %v2288
  %v2593 = vpop.f32.mrf.mxu0
  %v2594 = vadd.f32 0.0, %v2593
  %v2595 = vpop.f32.mrf.mxu0
  %2596 = vmatprep.mubr.f32.mxu0 0.0
  %2597 = vmatmul.mubr.f32.gmra.mxu0 %v2291
  %v2598 = vpop.f32.mrf.mxu0
  %v2599 = vadd.f32 0.0, %v2598
  %v2600 = vpop.f32.mrf.mxu0
  %2601 = vmatprep.mubr.f32.mxu0 0.0
  %2602 = vmatmul.mubr.f32.gmra.mxu0 %v2294
  %v2603 = vpop.f32.mrf.mxu0
  %v2604 = vadd.f32 0.0, %v2603
  %v2605 = vpop.f32.mrf.mxu0
  %2606 = vmatprep.mubr.f32.mxu0 0.0
  %2607 = vmatmul.mubr.f32.gmra.mxu0 %v2297
  %v2608 = vpop.f32.mrf.mxu0
  %v2609 = vadd.f32 0.0, %v2608
  %v2610 = vpop.f32.mrf.mxu0
  %2611 = vmatprep.mubr.f32.mxu0 0.0
  %2612 = vmatmul.mubr.f32.gmra.mxu0 %v2300
  %v2613 = vpop.f32.mrf.mxu0
  %v2614 = vadd.f32 0.0, %v2613
  %v2615 = vpop.f32.mrf.mxu0
  %2616 = vmatprep.mubr.f32.mxu0 0.0
  %2617 = vmatmul.mubr.f32.gmra.mxu0 %v2303
  %v2618 = vpop.f32.mrf.mxu0
  %v2619 = vadd.f32 0.0, %v2618
  %v2620 = vpop.f32.mrf.mxu0
  %2621 = vmatprep.mubr.f32.mxu0 0.0
  %2622 = vmatmul.mubr.f32.gmra.mxu0 %v2306
  %v2623 = vpop.f32.mrf.mxu0
  %v2624 = vadd.f32 0.0, %v2623
  %v2625 = vpop.f32.mrf.mxu0
  %2626 = vmatprep.mubr.f32.mxu0 0.0
  %2627 = vmatmul.mubr.f32.gmra.mxu0 %v2309
  %v2628 = vpop.f32.mrf.mxu0
  %v2629 = vadd.f32 0.0, %v2628
  %v2630 = vpop.f32.mrf.mxu0
  %2631 = vmatprep.mubr.f32.mxu0 0.0
  %2632 = vmatmul.mubr.f32.gmra.mxu0 %v2312
  %v2633 = vpop.f32.mrf.mxu0
  %v2634 = vadd.f32 0.0, %v2633
  %v2635 = vpop.f32.mrf.mxu0
  %2636 = vmatprep.mubr.f32.mxu0 0.0
  %2637 = vmatmul.mubr.f32.gmra.mxu0 %v2315
  %v2638 = vpop.f32.mrf.mxu0
  %v2639 = vadd.f32 0.0, %v2638
  %v2640 = vpop.f32.mrf.mxu0
  %2641 = vmatprep.mubr.f32.mxu0 0.0
  %2642 = vmatmul.mubr.f32.gmra.mxu0 %v2318
  %v2643 = vpop.f32.mrf.mxu0
  %v2644 = vadd.f32 0.0, %v2643
  %v2645 = vpop.f32.mrf.mxu0
  %2646 = vmatprep.mubr.f32.mxu0 0.0
  %2647 = vmatmul.mubr.f32.gmra.mxu0 %v2321
  %v2648 = vpop.f32.mrf.mxu0
  %v2649 = vadd.f32 0.0, %v2648
  %v2650 = vpop.f32.mrf.mxu0
  %2651 = vmatprep.mubr.f32.mxu0 0.0
  %2652 = vmatmul.mubr.f32.gmra.mxu0 %v2324
  %v2653 = vpop.f32.mrf.mxu0
  %v2654 = vadd.f32 0.0, %v2653
  %v2655 = vpop.f32.mrf.mxu0
  %2656 = vmatprep.mubr.f32.mxu0 0.0
  %2657 = vmatmul.mubr.f32.gmra.mxu0 %v2327
  %v2658 = vpop.f32.mrf.mxu0
  %v2659 = vadd.f32 0.0, %v2658
  %v2660 = vpop.f32.mrf.mxu0
  %2661 = vmatprep.mubr.f32.mxu0 0.0
  %2662 = vmatmul.mubr.f32.gmra.mxu0 %v2330
  %v2663 = vpop.f32.mrf.mxu0
  %v2664 = vadd.f32 0.0, %v2663
  %v2665 = vpop.f32.mrf.mxu0
  %2666 = vmatprep.mubr.f32.mxu0 0.0
  %2667 = vmatmul.mubr.f32.gmra.mxu0 %v2333
  %v2668 = vpop.f32.mrf.mxu0
  %v2669 = vadd.f32 0.0, %v2668
  %v2670 = vpop.f32.mrf.mxu0
  %2671 = vmatprep.mubr.f32.mxu0 0.0
  %2672 = vmatmul.mubr.f32.gmra.mxu0 %v2336
  %v2673 = vpop.f32.mrf.mxu0
  %v2674 = vadd.f32 0.0, %v2673
  %v2675 = vpop.f32.mrf.mxu0
  %2676 = vmatprep.mubr.f32.mxu0 0.0
  %2677 = vmatmul.mubr.f32.gmra.mxu0 %v2339
  %v2678 = vpop.f32.mrf.mxu0
  %v2679 = vadd.f32 0.0, %v2678
  %v2680 = vpop.f32.mrf.mxu0
  %2681 = vmatprep.mubr.f32.mxu0 0.0
  %2682 = vmatmul.mubr.f32.gmra.mxu0 %v2342
  %v2683 = vpop.f32.mrf.mxu0
  %v2684 = vadd.f32 0.0, %v2683
  %v2685 = vpop.f32.mrf.mxu0
  %2686 = vmatprep.mubr.f32.mxu0 0.0
  %2687 = vmatmul.mubr.f32.gmra.mxu0 %v2345
  %v2688 = vpop.f32.mrf.mxu0
  %v2689 = vadd.f32 0.0, %v2688
  %v2690 = vpop.f32.mrf.mxu0
  %2691 = vmatprep.mubr.f32.mxu0 0.0
  %2692 = vmatmul.mubr.f32.gmra.mxu0 %v2348
  %v2693 = vpop.f32.mrf.mxu0
  %v2694 = vadd.f32 0.0, %v2693
  %v2695 = vpop.f32.mrf.mxu0
  %2696 = vmatprep.mubr.f32.mxu0 0.0
  %2697 = vmatmul.mubr.f32.gmra.mxu0 %v2351
  %v2698 = vpop.f32.mrf.mxu0
  %v2699 = vadd.f32 0.0, %v2698
  %v2700 = vpop.f32.mrf.mxu0
  %2701 = vmatprep.mubr.f32.mxu0 0.0
  %2702 = vmatmul.mubr.f32.gmra.mxu0 %v2354
  %v2703 = vpop.f32.mrf.mxu0
  %v2704 = vadd.f32 0.0, %v2703
  %v2705 = vpop.f32.mrf.mxu0
  %2706 = vmatprep.mubr.f32.mxu0 0.0
  %2707 = vmatmul.mubr.f32.gmra.mxu0 %v2357
  %v2708 = vpop.f32.mrf.mxu0
  %v2709 = vadd.f32 0.0, %v2708
  %v2710 = vpop.f32.mrf.mxu0
  %2711 = vmatprep.mubr.f32.mxu0 0.0
  %2712 = vmatmul.mubr.f32.gmra.mxu0 %v2360
  %v2713 = vpop.f32.mrf.mxu0
  %v2714 = vadd.f32 0.0, %v2713
  %v2715 = vpop.f32.mrf.mxu0
  %2716 = vmatprep.mubr.f32.mxu0 0.0
  %2717 = vmatmul.mubr.f32.gmra.mxu0 %v2363
  %v2718 = vpop.f32.mrf.mxu0
  %v2719 = vadd.f32 0.0, %v2718
  %v2720 = vpop.f32.mrf.mxu0
  %2721 = vmatprep.mubr.f32.mxu0 0.0
  %2722 = vmatmul.mubr.f32.gmra.mxu0 %v2366
  %v2723 = vpop.f32.mrf.mxu0
  %v2724 = vadd.f32 0.0, %v2723
  %v2725 = vpop.f32.mrf.mxu0
  %2726 = vmatprep.mubr.f32.mxu0 0.0
  %2727 = vmatmul.mubr.f32.gmra.mxu0 %v2369
  %v2728 = vpop.f32.mrf.mxu0
  %v2729 = vadd.f32 0.0, %v2728
  %v2730 = vpop.f32.mrf.mxu0
  %2731 = vmatprep.mubr.f32.mxu0 0.0
  %2732 = vmatmul.mubr.f32.gmra.mxu0 %v2372
  %v2733 = vpop.f32.mrf.mxu0
  %v2734 = vadd.f32 0.0, %v2733
  %v2735 = vpop.f32.mrf.mxu0
  %2736 = vmatprep.mubr.f32.mxu0 0.0
  %2737 = vmatmul.mubr.f32.gmra.mxu0 %v2375
  %v2738 = vpop.f32.mrf.mxu0
  %v2739 = vadd.f32 0.0, %v2738
  %v2740 = vpop.f32.mrf.mxu0
  %2741 = vmatprep.mubr.f32.mxu0 0.0
  %2742 = vmatmul.mubr.f32.gmra.mxu0 %v2378
  %v2743 = vpop.f32.mrf.mxu0
  %v2744 = vadd.f32 0.0, %v2743
  %v2745 = vpop.f32.mrf.mxu0
  %2746 = vmatprep.mubr.f32.mxu0 0.0
  %2747 = vmatmul.mubr.f32.gmra.mxu0 %v2381
  %v2748 = vpop.f32.mrf.mxu0
  %v2749 = vadd.f32 0.0, %v2748
  %v2750 = vpop.f32.mrf.mxu0
  %2751 = vmatprep.mubr.f32.mxu0 0.0
  %2752 = vmatmul.mubr.f32.gmra.mxu0 %v2384
  %v2753 = vpop.f32.mrf.mxu0
  %v2754 = vadd.f32 0.0, %v2753
  %v2755 = vpop.f32.mrf.mxu0
  %2756 = vmatprep.mubr.f32.mxu0 0.0
  %2757 = vmatmul.mubr.f32.gmra.mxu0 %v2387
  %v2758 = vpop.f32.mrf.mxu0
  %v2759 = vadd.f32 0.0, %v2758
  %v2760 = vpop.f32.mrf.mxu0
  %2761 = vmatprep.mubr.f32.mxu0 0.0
  %2762 = vmatmul.mubr.f32.gmra.mxu0 %v2390
  %v2763 = vpop.f32.mrf.mxu0
  %v2764 = vadd.f32 0.0, %v2763
  %v2765 = vpop.f32.mrf.mxu0
  %2766 = vmatprep.mubr.f32.mxu0 0.0
  %2767 = vmatmul.mubr.f32.gmra.mxu0 %v2393
  %v2768 = vpop.f32.mrf.mxu0
  %v2769 = vadd.f32 0.0, %v2768
  %v2770 = vpop.f32.mrf.mxu0
  %2771 = vmatprep.mubr.f32.mxu0 0.0
  %2772 = vmatmul.mubr.f32.gmra.mxu0 %v2396
  %v2773 = vpop.f32.mrf.mxu0
  %v2774 = vadd.f32 0.0, %v2773
  %v2775 = vpop.f32.mrf.mxu0
  %2776 = vmatprep.mubr.f32.mxu0 0.0
  %2777 = vmatmul.mubr.f32.gmra.mxu0 %v2399
  %v2778 = vpop.f32.mrf.mxu0
  %v2779 = vadd.f32 0.0, %v2778
  %v2780 = vpop.f32.mrf.mxu0
  %2781 = vmatprep.mubr.f32.mxu0 0.0
  %2782 = vmatmul.mubr.f32.gmra.mxu0 %v2402
  %v2783 = vpop.f32.mrf.mxu0
  %v2784 = vadd.f32 0.0, %v2783
  %v2785 = vpop.f32.mrf.mxu0
  %2786 = vmatprep.mubr.f32.mxu0 0.0
  %2787 = vmatmul.mubr.f32.gmra.mxu0 %v2405
  %v2788 = vpop.f32.mrf.mxu0
  %v2789 = vadd.f32 0.0, %v2788
  %v2790 = vpop.f32.mrf.mxu0
  %2791 = vdwg.mxu0
  %v2792 = vadd.f32 %v1828, %v2474
  %v2793 = vadd.f32 %v1833, %v2479
  %v2794 = vadd.f32 %v1838, %v2484
  %v2795 = vadd.f32 %v1843, %v2489
  %v2796 = vadd.f32 %v1848, %v2494
  %v2797 = vadd.f32 %v1853, %v2499
  %v2798 = vadd.f32 %v1858, %v2504
  %v2799 = vadd.f32 %v1863, %v2509
  %v2800 = vadd.f32 %v1868, %v2514
  %v2801 = vadd.f32 %v1873, %v2519
  %v2802 = vadd.f32 %v1878, %v2524
  %v2803 = vadd.f32 %v1883, %v2529
  %v2804 = vadd.f32 %v1888, %v2534
  %v2805 = vadd.f32 %v1893, %v2539
  %v2806 = vadd.f32 %v1898, %v2544
  %v2807 = vadd.f32 %v1903, %v2549
  %v2808 = vadd.f32 %v1908, %v2554
  %v2809 = vadd.f32 %v1913, %v2559
  %v2810 = vadd.f32 %v1918, %v2564
  %v2811 = vadd.f32 %v1923, %v2569
  %v2812 = vadd.f32 %v1928, %v2574
  %v2813 = vadd.f32 %v1933, %v2579
  %v2814 = vadd.f32 %v1938, %v2584
  %v2815 = vadd.f32 %v1943, %v2589
  %v2816 = vadd.f32 %v1948, %v2594
  %v2817 = vadd.f32 %v1953, %v2599
  %v2818 = vadd.f32 %v1958, %v2604
  %v2819 = vadd.f32 %v1963, %v2609
  %v2820 = vadd.f32 %v1968, %v2614
  %v2821 = vadd.f32 %v1973, %v2619
  %v2822 = vadd.f32 %v1978, %v2624
  %v2823 = vadd.f32 %v1983, %v2629
  %v2824 = vadd.f32 %v1988, %v2634
  %v2825 = vadd.f32 %v1993, %v2639
  %v2826 = vadd.f32 %v1998, %v2644
  %v2827 = vadd.f32 %v2003, %v2649
  %v2828 = vadd.f32 %v2008, %v2654
  %v2829 = vadd.f32 %v2013, %v2659
  %v2830 = vadd.f32 %v2018, %v2664
  %v2831 = vadd.f32 %v2023, %v2669
  %v2832 = vadd.f32 %v2028, %v2674
  %v2833 = vadd.f32 %v2033, %v2679
  %v2834 = vadd.f32 %v2038, %v2684
  %v2835 = vadd.f32 %v2043, %v2689
  %v2836 = vadd.f32 %v2048, %v2694
  %v2837 = vadd.f32 %v2053, %v2699
  %v2838 = vadd.f32 %v2058, %v2704
  %v2839 = vadd.f32 %v2063, %v2709
  %v2840 = vadd.f32 %v2068, %v2714
  %v2841 = vadd.f32 %v2073, %v2719
  %v2842 = vadd.f32 %v2078, %v2724
  %v2843 = vadd.f32 %v2083, %v2729
  %v2844 = vadd.f32 %v2088, %v2734
  %v2845 = vadd.f32 %v2093, %v2739
  %v2846 = vadd.f32 %v2098, %v2744
  %v2847 = vadd.f32 %v2103, %v2749
  %v2848 = vadd.f32 %v2108, %v2754
  %v2849 = vadd.f32 %v2113, %v2759
  %v2850 = vadd.f32 %v2118, %v2764
  %v2851 = vadd.f32 %v2123, %v2769
  %v2852 = vadd.f32 %v2128, %v2774
  %v2853 = vadd.f32 %v2133, %v2779
  %v2854 = vadd.f32 %v2138, %v2784
  %v2855 = vadd.f32 %v2143, %v2789
  %v2856 = vld [vmem:[%s772] sm:$0xff]
  %v2857 = vld [vmem:[%s772 + $0x8] sm:$0xff]
  %v2858 = vld [vmem:[%s772 + $0x10] sm:$0xff]
  %v2859 = vld [vmem:[%s772 + $0x18] sm:$0xff]
  %v2860 = vld [vmem:[%s772 + $0x20] sm:$0xff]
  %v2861 = vld [vmem:[%s772 + $0x28] sm:$0xff]
  %v2862 = vld [vmem:[%s772 + $0x30] sm:$0xff]
  %v2863 = vld [vmem:[%s772 + $0x38] sm:$0xff]
  %v2864 = vld [vmem:[%s772 + $0x50] sm:$0xff]
  %v2865 = vld [vmem:[%s772 + $0x58] sm:$0xff]
  %v2866 = vld [vmem:[%s772 + $0x60] sm:$0xff]
  %v2867 = vld [vmem:[%s772 + $0x68] sm:$0xff]
  %v2868 = vld [vmem:[%s772 + $0x70] sm:$0xff]
  %v2869 = vld [vmem:[%s772 + $0x78] sm:$0xff]
  %v2870 = vld [vmem:[%s772 + $0x80] sm:$0xff]
  %v2871 = vld [vmem:[%s772 + $0x88] sm:$0xff]
  %v2872 = vld [vmem:[%s772 + $0xa0] sm:$0xff]
  %v2873 = vld [vmem:[%s772 + $0xa8] sm:$0xff]
  %v2874 = vld [vmem:[%s772 + $0xb0] sm:$0xff]
  %v2875 = vld [vmem:[%s772 + $0xb8] sm:$0xff]
  %v2876 = vld [vmem:[%s772 + $0xc0] sm:$0xff]
  %v2877 = vld [vmem:[%s772 + $0xc8] sm:$0xff]
  %v2878 = vld [vmem:[%s772 + $0xd0] sm:$0xff]
  %v2879 = vld [vmem:[%s772 + $0xd8] sm:$0xff]
  %v2880 = vld [vmem:[%s772 + $0xf0] sm:$0xff]
  %v2881 = vld [vmem:[%s772 + $0xf8] sm:$0xff]
  %v2882 = vld [vmem:[%s772 + $0x100] sm:$0xff]
  %v2883 = vld [vmem:[%s772 + $0x108] sm:$0xff]
  %v2884 = vld [vmem:[%s772 + $0x110] sm:$0xff]
  %v2885 = vld [vmem:[%s772 + $0x118] sm:$0xff]
  %v2886 = vld [vmem:[%s772 + $0x120] sm:$0xff]
  %v2887 = vld [vmem:[%s772 + $0x128] sm:$0xff]
  %v2888 = vld [vmem:[%s772 + $0x140] sm:$0xff]
  %v2889 = vld [vmem:[%s772 + $0x148] sm:$0xff]
  %v2890 = vld [vmem:[%s772 + $0x150] sm:$0xff]
  %v2891 = vld [vmem:[%s772 + $0x158] sm:$0xff]
  %v2892 = vld [vmem:[%s772 + $0x160] sm:$0xff]
  %v2893 = vld [vmem:[%s772 + $0x168] sm:$0xff]
  %v2894 = vld [vmem:[%s772 + $0x170] sm:$0xff]
  %v2895 = vld [vmem:[%s772 + $0x178] sm:$0xff]
  %v2896 = vld [vmem:[%s772 + $0x190] sm:$0xff]
  %v2897 = vld [vmem:[%s772 + $0x198] sm:$0xff]
  %v2898 = vld [vmem:[%s772 + $0x1a0] sm:$0xff]
  %v2899 = vld [vmem:[%s772 + $0x1a8] sm:$0xff]
  %v2900 = vld [vmem:[%s772 + $0x1b0] sm:$0xff]
  %v2901 = vld [vmem:[%s772 + $0x1b8] sm:$0xff]
  %v2902 = vld [vmem:[%s772 + $0x1c0] sm:$0xff]
  %v2903 = vld [vmem:[%s772 + $0x1c8] sm:$0xff]
  %v2904 = vld [vmem:[%s772 + $0x1e0] sm:$0xff]
  %v2905 = vld [vmem:[%s772 + $0x1e8] sm:$0xff]
  %v2906 = vld [vmem:[%s772 + $0x1f0] sm:$0xff]
  %v2907 = vld [vmem:[%s772 + $0x1f8] sm:$0xff]
  %v2908 = vld [vmem:[%s772 + $0x200] sm:$0xff]
  %v2909 = vld [vmem:[%s772 + $0x208] sm:$0xff]
  %v2910 = vld [vmem:[%s772 + $0x210] sm:$0xff]
  %v2911 = vld [vmem:[%s772 + $0x218] sm:$0xff]
  %v2912 = vld [vmem:[%s772 + $0x230] sm:$0xff]
  %v2913 = vld [vmem:[%s772 + $0x238] sm:$0xff]
  %v2914 = vld [vmem:[%s772 + $0x240] sm:$0xff]
  %v2915 = vld [vmem:[%s772 + $0x248] sm:$0xff]
  %v2916 = vld [vmem:[%s772 + $0x250] sm:$0xff]
  %v2917 = vld [vmem:[%s772 + $0x258] sm:$0xff]
  %v2918 = vld [vmem:[%s772 + $0x260] sm:$0xff]
  %v2919 = vld [vmem:[%s772 + $0x268] sm:$0xff]
  %v2920 = vld [vmem:[%s4 + $0x60] sm:$0xff]
  %v2921 = vld [vmem:[%s4 + $0x68] sm:$0xff]
  %v2922 = vld [vmem:[%s4 + $0x70] sm:$0xff]
  %v2923 = vld [vmem:[%s4 + $0x78] sm:$0xff]
  %v2925 = vsel %vm750, %v2856, 0
  %v2928 = vsel %vm750, %v2857, 0
  %v2931 = vsel %vm750, %v2858, 0
  %v2934 = vsel %vm750, %v2859, 0
  %v2937 = vsel %vm750, %v2860, 0
  %v2940 = vsel %vm750, %v2861, 0
  %v2943 = vsel %vm750, %v2862, 0
  %v2946 = vsel %vm750, %v2863, 0
  %v2949 = vsel %vm750, %v2864, 0
  %v2952 = vsel %vm750, %v2865, 0
  %v2955 = vsel %vm750, %v2866, 0
  %v2958 = vsel %vm750, %v2867, 0
  %v2961 = vsel %vm750, %v2868, 0
  %v2964 = vsel %vm750, %v2869, 0
  %v2967 = vsel %vm750, %v2870, 0
  %v2970 = vsel %vm750, %v2871, 0
  %v2973 = vsel %vm750, %v2872, 0
  %v2976 = vsel %vm750, %v2873, 0
  %v2979 = vsel %vm750, %v2874, 0
  %v2982 = vsel %vm750, %v2875, 0
  %v2985 = vsel %vm750, %v2876, 0
  %v2988 = vsel %vm750, %v2877, 0
  %v2991 = vsel %vm750, %v2878, 0
  %v2994 = vsel %vm750, %v2879, 0
  %v2997 = vsel %vm750, %v2880, 0
  %v3000 = vsel %vm750, %v2881, 0
  %v3003 = vsel %vm750, %v2882, 0
  %v3006 = vsel %vm750, %v2883, 0
  %v3009 = vsel %vm750, %v2884, 0
  %v3012 = vsel %vm750, %v2885, 0
  %v3015 = vsel %vm750, %v2886, 0
  %v3018 = vsel %vm750, %v2887, 0
  %v3021 = vsel %vm750, %v2888, 0
  %v3024 = vsel %vm750, %v2889, 0
  %v3027 = vsel %vm750, %v2890, 0
  %v3030 = vsel %vm750, %v2891, 0
  %v3033 = vsel %vm750, %v2892, 0
  %v3036 = vsel %vm750, %v2893, 0
  %v3039 = vsel %vm750, %v2894, 0
  %v3042 = vsel %vm750, %v2895, 0
  %v3045 = vsel %vm750, %v2896, 0
  %v3048 = vsel %vm750, %v2897, 0
  %v3051 = vsel %vm750, %v2898, 0
  %v3054 = vsel %vm750, %v2899, 0
  %v3057 = vsel %vm750, %v2900, 0
  %v3060 = vsel %vm750, %v2901, 0
  %v3063 = vsel %vm750, %v2902, 0
  %v3066 = vsel %vm750, %v2903, 0
  %v3069 = vsel %vm750, %v2904, 0
  %v3072 = vsel %vm750, %v2905, 0
  %v3075 = vsel %vm750, %v2906, 0
  %v3078 = vsel %vm750, %v2907, 0
  %v3081 = vsel %vm750, %v2908, 0
  %v3084 = vsel %vm750, %v2909, 0
  %v3087 = vsel %vm750, %v2910, 0
  %v3090 = vsel %vm750, %v2911, 0
  %v3093 = vsel %vm750, %v2912, 0
  %v3096 = vsel %vm750, %v2913, 0
  %v3099 = vsel %vm750, %v2914, 0
  %v3102 = vsel %vm750, %v2915, 0
  %v3105 = vsel %vm750, %v2916, 0
  %v3108 = vsel %vm750, %v2917, 0
  %v3111 = vsel %vm750, %v2918, 0
  %v3114 = vsel %vm750, %v2919, 0
  %3116 = vmatprep.subr.mxu0 0.0
  %3117 = vmatpush1.msra.mxu0 0.0
  %3118 = vmatprep.subr.mxu0 0.0
  %3119 = vmatpush1.msra.mxu0 0.0
  %3120 = vmatprep.subr.mxu0 0.0
  %3121 = vmatpush1.msra.mxu0 0.0
  %3122 = vmatprep.subr.mxu0 0.0
  %3123 = vmatpush1.msra.mxu0 0.0
  %3124 = vmatprep.subr.mxu0 0.0
  %3125 = vmatpush1.msra.mxu0 0.0
  %3126 = vmatprep.subr.mxu0 0.0
  %3127 = vmatpush1.msra.mxu0 0.0
  %3128 = vmatprep.subr.mxu0 0.0
  %3129 = vmatpush1.msra.mxu0 0.0
  %3130 = vmatprep.subr.mxu0 0.0
  %3131 = vmatpush1.msra.mxu0 0.0
  %3132 = vmatprep.subr.mxu0 0.0
  %3133 = vmatpush1.msra.mxu0 0.0
  %3134 = vmatprep.subr.mxu0 0.0
  %3135 = vmatpush1.msra.mxu0 0.0
  %3136 = vmatprep.subr.mxu0 0.0
  %3137 = vmatpush1.msra.mxu0 0.0
  %3138 = vmatprep.subr.mxu0 0.0
  %3139 = vmatpush1.msra.mxu0 0.0
  %3140 = vmatprep.subr.mxu0 0.0
  %3141 = vmatpush1.msra.mxu0 %v2923
  %3142 = vmatprep.subr.mxu0 0.0
  %3143 = vmatpush1.msra.mxu0 %v2922
  %3144 = vmatprep.subr.mxu0 0.0
  %3145 = vmatpush1.msra.mxu0 %v2921
  %3146 = vmatprep.subr.mxu0 0.0
  %3147 = vmatpush1.msra.mxu0 %v2920
  %3148 = vmatprep.subr.mxu0 0.0
  %3149 = vmatpush2.msra.mxu0 0.0
  %3150 = vmatprep.subr.mxu0 0.0
  %3151 = vmatpush2.msra.mxu0 0.0
  %3152 = vmatprep.subr.mxu0 0.0
  %3153 = vmatpush2.msra.mxu0 0.0
  %3154 = vmatprep.subr.mxu0 0.0
  %3155 = vmatpush2.msra.mxu0 0.0
  %3156 = vmatprep.subr.mxu0 0.0
  %3157 = vmatpush2.msra.mxu0 0.0
  %3158 = vmatprep.subr.mxu0 0.0
  %3159 = vmatpush2.msra.mxu0 0.0
  %3160 = vmatprep.subr.mxu0 0.0
  %3161 = vmatpush2.msra.mxu0 0.0
  %3162 = vmatprep.subr.mxu0 0.0
  %3163 = vmatpush2.msra.mxu0 0.0
  %3164 = vmatprep.subr.mxu0 0.0
  %3165 = vmatpush2.msra.mxu0 0.0
  %3166 = vmatprep.subr.mxu0 0.0
  %3167 = vmatpush2.msra.mxu0 0.0
  %3168 = vmatprep.subr.mxu0 0.0
  %3169 = vmatpush2.msra.mxu0 0.0
  %3170 = vmatprep.subr.mxu0 0.0
  %3171 = vmatpush2.msra.mxu0 0.0
  %3172 = vmatprep.subr.mxu0 0.0
  %3173 = vmatpush2.msra.mxu0 0.0
  %3174 = vmatprep.subr.mxu0 0.0
  %3175 = vmatpush2.msra.mxu0 0.0
  %3176 = vmatprep.subr.mxu0 0.0
  %3177 = vmatpush2.msra.mxu0 0.0
  %3178 = vmatprep.subr.mxu0 0.0
  %3179 = vmatpush2.msra.mxu0 0.0
  %3180 = vmatprep.mubr.f32.mxu0 0.0
  %3181 = vmatmul.mubr.f32.gmra.mxu0 %v2925
  %v3182 = vpop.f32.mrf.mxu0
  %v3183 = vadd.f32 0.0, %v3182
  %v3184 = vpop.f32.mrf.mxu0
  %3185 = vmatprep.mubr.f32.mxu0 0.0
  %3186 = vmatmul.mubr.f32.gmra.mxu0 %v2928
  %v3187 = vpop.f32.mrf.mxu0
  %v3188 = vadd.f32 0.0, %v3187
  %v3189 = vpop.f32.mrf.mxu0
  %3190 = vmatprep.mubr.f32.mxu0 0.0
  %3191 = vmatmul.mubr.f32.gmra.mxu0 %v2931
  %v3192 = vpop.f32.mrf.mxu0
  %v3193 = vadd.f32 0.0, %v3192
  %v3194 = vpop.f32.mrf.mxu0
  %3195 = vmatprep.mubr.f32.mxu0 0.0
  %3196 = vmatmul.mubr.f32.gmra.mxu0 %v2934
  %v3197 = vpop.f32.mrf.mxu0
  %v3198 = vadd.f32 0.0, %v3197
  %v3199 = vpop.f32.mrf.mxu0
  %3200 = vmatprep.mubr.f32.mxu0 0.0
  %3201 = vmatmul.mubr.f32.gmra.mxu0 %v2937
  %v3202 = vpop.f32.mrf.mxu0
  %v3203 = vadd.f32 0.0, %v3202
  %v3204 = vpop.f32.mrf.mxu0
  %3205 = vmatprep.mubr.f32.mxu0 0.0
  %3206 = vmatmul.mubr.f32.gmra.mxu0 %v2940
  %v3207 = vpop.f32.mrf.mxu0
  %v3208 = vadd.f32 0.0, %v3207
  %v3209 = vpop.f32.mrf.mxu0
  %3210 = vmatprep.mubr.f32.mxu0 0.0
  %3211 = vmatmul.mubr.f32.gmra.mxu0 %v2943
  %v3212 = vpop.f32.mrf.mxu0
  %v3213 = vadd.f32 0.0, %v3212
  %v3214 = vpop.f32.mrf.mxu0
  %3215 = vmatprep.mubr.f32.mxu0 0.0
  %3216 = vmatmul.mubr.f32.gmra.mxu0 %v2946
  %v3217 = vpop.f32.mrf.mxu0
  %v3218 = vadd.f32 0.0, %v3217
  %v3219 = vpop.f32.mrf.mxu0
  %3220 = vmatprep.mubr.f32.mxu0 0.0
  %3221 = vmatmul.mubr.f32.gmra.mxu0 %v2949
  %v3222 = vpop.f32.mrf.mxu0
  %v3223 = vadd.f32 0.0, %v3222
  %v3224 = vpop.f32.mrf.mxu0
  %3225 = vmatprep.mubr.f32.mxu0 0.0
  %3226 = vmatmul.mubr.f32.gmra.mxu0 %v2952
  %v3227 = vpop.f32.mrf.mxu0
  %v3228 = vadd.f32 0.0, %v3227
  %v3229 = vpop.f32.mrf.mxu0
  %3230 = vmatprep.mubr.f32.mxu0 0.0
  %3231 = vmatmul.mubr.f32.gmra.mxu0 %v2955
  %v3232 = vpop.f32.mrf.mxu0
  %v3233 = vadd.f32 0.0, %v3232
  %v3234 = vpop.f32.mrf.mxu0
  %3235 = vmatprep.mubr.f32.mxu0 0.0
  %3236 = vmatmul.mubr.f32.gmra.mxu0 %v2958
  %v3237 = vpop.f32.mrf.mxu0
  %v3238 = vadd.f32 0.0, %v3237
  %v3239 = vpop.f32.mrf.mxu0
  %3240 = vmatprep.mubr.f32.mxu0 0.0
  %3241 = vmatmul.mubr.f32.gmra.mxu0 %v2961
  %v3242 = vpop.f32.mrf.mxu0
  %v3243 = vadd.f32 0.0, %v3242
  %v3244 = vpop.f32.mrf.mxu0
  %3245 = vmatprep.mubr.f32.mxu0 0.0
  %3246 = vmatmul.mubr.f32.gmra.mxu0 %v2964
  %v3247 = vpop.f32.mrf.mxu0
  %v3248 = vadd.f32 0.0, %v3247
  %v3249 = vpop.f32.mrf.mxu0
  %3250 = vmatprep.mubr.f32.mxu0 0.0
  %3251 = vmatmul.mubr.f32.gmra.mxu0 %v2967
  %v3252 = vpop.f32.mrf.mxu0
  %v3253 = vadd.f32 0.0, %v3252
  %v3254 = vpop.f32.mrf.mxu0
  %3255 = vmatprep.mubr.f32.mxu0 0.0
  %3256 = vmatmul.mubr.f32.gmra.mxu0 %v2970
  %v3257 = vpop.f32.mrf.mxu0
  %v3258 = vadd.f32 0.0, %v3257
  %v3259 = vpop.f32.mrf.mxu0
  %3260 = vmatprep.mubr.f32.mxu0 0.0
  %3261 = vmatmul.mubr.f32.gmra.mxu0 %v2973
  %v3262 = vpop.f32.mrf.mxu0
  %v3263 = vadd.f32 0.0, %v3262
  %v3264 = vpop.f32.mrf.mxu0
  %3265 = vmatprep.mubr.f32.mxu0 0.0
  %3266 = vmatmul.mubr.f32.gmra.mxu0 %v2976
  %v3267 = vpop.f32.mrf.mxu0
  %v3268 = vadd.f32 0.0, %v3267
  %v3269 = vpop.f32.mrf.mxu0
  %3270 = vmatprep.mubr.f32.mxu0 0.0
  %3271 = vmatmul.mubr.f32.gmra.mxu0 %v2979
  %v3272 = vpop.f32.mrf.mxu0
  %v3273 = vadd.f32 0.0, %v3272
  %v3274 = vpop.f32.mrf.mxu0
  %3275 = vmatprep.mubr.f32.mxu0 0.0
  %3276 = vmatmul.mubr.f32.gmra.mxu0 %v2982
  %v3277 = vpop.f32.mrf.mxu0
  %v3278 = vadd.f32 0.0, %v3277
  %v3279 = vpop.f32.mrf.mxu0
  %3280 = vmatprep.mubr.f32.mxu0 0.0
  %3281 = vmatmul.mubr.f32.gmra.mxu0 %v2985
  %v3282 = vpop.f32.mrf.mxu0
  %v3283 = vadd.f32 0.0, %v3282
  %v3284 = vpop.f32.mrf.mxu0
  %3285 = vmatprep.mubr.f32.mxu0 0.0
  %3286 = vmatmul.mubr.f32.gmra.mxu0 %v2988
  %v3287 = vpop.f32.mrf.mxu0
  %v3288 = vadd.f32 0.0, %v3287
  %v3289 = vpop.f32.mrf.mxu0
  %3290 = vmatprep.mubr.f32.mxu0 0.0
  %3291 = vmatmul.mubr.f32.gmra.mxu0 %v2991
  %v3292 = vpop.f32.mrf.mxu0
  %v3293 = vadd.f32 0.0, %v3292
  %v3294 = vpop.f32.mrf.mxu0
  %3295 = vmatprep.mubr.f32.mxu0 0.0
  %3296 = vmatmul.mubr.f32.gmra.mxu0 %v2994
  %v3297 = vpop.f32.mrf.mxu0
  %v3298 = vadd.f32 0.0, %v3297
  %v3299 = vpop.f32.mrf.mxu0
  %3300 = vmatprep.mubr.f32.mxu0 0.0
  %3301 = vmatmul.mubr.f32.gmra.mxu0 %v2997
  %v3302 = vpop.f32.mrf.mxu0
  %v3303 = vadd.f32 0.0, %v3302
  %v3304 = vpop.f32.mrf.mxu0
  %3305 = vmatprep.mubr.f32.mxu0 0.0
  %3306 = vmatmul.mubr.f32.gmra.mxu0 %v3000
  %v3307 = vpop.f32.mrf.mxu0
  %v3308 = vadd.f32 0.0, %v3307
  %v3309 = vpop.f32.mrf.mxu0
  %3310 = vmatprep.mubr.f32.mxu0 0.0
  %3311 = vmatmul.mubr.f32.gmra.mxu0 %v3003
  %v3312 = vpop.f32.mrf.mxu0
  %v3313 = vadd.f32 0.0, %v3312
  %v3314 = vpop.f32.mrf.mxu0
  %3315 = vmatprep.mubr.f32.mxu0 0.0
  %3316 = vmatmul.mubr.f32.gmra.mxu0 %v3006
  %v3317 = vpop.f32.mrf.mxu0
  %v3318 = vadd.f32 0.0, %v3317
  %v3319 = vpop.f32.mrf.mxu0
  %3320 = vmatprep.mubr.f32.mxu0 0.0
  %3321 = vmatmul.mubr.f32.gmra.mxu0 %v3009
  %v3322 = vpop.f32.mrf.mxu0
  %v3323 = vadd.f32 0.0, %v3322
  %v3324 = vpop.f32.mrf.mxu0
  %3325 = vmatprep.mubr.f32.mxu0 0.0
  %3326 = vmatmul.mubr.f32.gmra.mxu0 %v3012
  %v3327 = vpop.f32.mrf.mxu0
  %v3328 = vadd.f32 0.0, %v3327
  %v3329 = vpop.f32.mrf.mxu0
  %3330 = vmatprep.mubr.f32.mxu0 0.0
  %3331 = vmatmul.mubr.f32.gmra.mxu0 %v3015
  %v3332 = vpop.f32.mrf.mxu0
  %v3333 = vadd.f32 0.0, %v3332
  %v3334 = vpop.f32.mrf.mxu0
  %3335 = vmatprep.mubr.f32.mxu0 0.0
  %3336 = vmatmul.mubr.f32.gmra.mxu0 %v3018
  %v3337 = vpop.f32.mrf.mxu0
  %v3338 = vadd.f32 0.0, %v3337
  %v3339 = vpop.f32.mrf.mxu0
  %3340 = vmatprep.mubr.f32.mxu0 0.0
  %3341 = vmatmul.mubr.f32.gmra.mxu0 %v3021
  %v3342 = vpop.f32.mrf.mxu0
  %v3343 = vadd.f32 0.0, %v3342
  %v3344 = vpop.f32.mrf.mxu0
  %3345 = vmatprep.mubr.f32.mxu0 0.0
  %3346 = vmatmul.mubr.f32.gmra.mxu0 %v3024
  %v3347 = vpop.f32.mrf.mxu0
  %v3348 = vadd.f32 0.0, %v3347
  %v3349 = vpop.f32.mrf.mxu0
  %3350 = vmatprep.mubr.f32.mxu0 0.0
  %3351 = vmatmul.mubr.f32.gmra.mxu0 %v3027
  %v3352 = vpop.f32.mrf.mxu0
  %v3353 = vadd.f32 0.0, %v3352
  %v3354 = vpop.f32.mrf.mxu0
  %3355 = vmatprep.mubr.f32.mxu0 0.0
  %3356 = vmatmul.mubr.f32.gmra.mxu0 %v3030
  %v3357 = vpop.f32.mrf.mxu0
  %v3358 = vadd.f32 0.0, %v3357
  %v3359 = vpop.f32.mrf.mxu0
  %3360 = vmatprep.mubr.f32.mxu0 0.0
  %3361 = vmatmul.mubr.f32.gmra.mxu0 %v3033
  %v3362 = vpop.f32.mrf.mxu0
  %v3363 = vadd.f32 0.0, %v3362
  %v3364 = vpop.f32.mrf.mxu0
  %3365 = vmatprep.mubr.f32.mxu0 0.0
  %3366 = vmatmul.mubr.f32.gmra.mxu0 %v3036
  %v3367 = vpop.f32.mrf.mxu0
  %v3368 = vadd.f32 0.0, %v3367
  %v3369 = vpop.f32.mrf.mxu0
  %3370 = vmatprep.mubr.f32.mxu0 0.0
  %3371 = vmatmul.mubr.f32.gmra.mxu0 %v3039
  %v3372 = vpop.f32.mrf.mxu0
  %v3373 = vadd.f32 0.0, %v3372
  %v3374 = vpop.f32.mrf.mxu0
  %3375 = vmatprep.mubr.f32.mxu0 0.0
  %3376 = vmatmul.mubr.f32.gmra.mxu0 %v3042
  %v3377 = vpop.f32.mrf.mxu0
  %v3378 = vadd.f32 0.0, %v3377
  %v3379 = vpop.f32.mrf.mxu0
  %3380 = vmatprep.mubr.f32.mxu0 0.0
  %3381 = vmatmul.mubr.f32.gmra.mxu0 %v3045
  %v3382 = vpop.f32.mrf.mxu0
  %v3383 = vadd.f32 0.0, %v3382
  %v3384 = vpop.f32.mrf.mxu0
  %3385 = vmatprep.mubr.f32.mxu0 0.0
  %3386 = vmatmul.mubr.f32.gmra.mxu0 %v3048
  %v3387 = vpop.f32.mrf.mxu0
  %v3388 = vadd.f32 0.0, %v3387
  %v3389 = vpop.f32.mrf.mxu0
  %3390 = vmatprep.mubr.f32.mxu0 0.0
  %3391 = vmatmul.mubr.f32.gmra.mxu0 %v3051
  %v3392 = vpop.f32.mrf.mxu0
  %v3393 = vadd.f32 0.0, %v3392
  %v3394 = vpop.f32.mrf.mxu0
  %3395 = vmatprep.mubr.f32.mxu0 0.0
  %3396 = vmatmul.mubr.f32.gmra.mxu0 %v3054
  %v3397 = vpop.f32.mrf.mxu0
  %v3398 = vadd.f32 0.0, %v3397
  %v3399 = vpop.f32.mrf.mxu0
  %3400 = vmatprep.mubr.f32.mxu0 0.0
  %3401 = vmatmul.mubr.f32.gmra.mxu0 %v3057
  %v3402 = vpop.f32.mrf.mxu0
  %v3403 = vadd.f32 0.0, %v3402
  %v3404 = vpop.f32.mrf.mxu0
  %3405 = vmatprep.mubr.f32.mxu0 0.0
  %3406 = vmatmul.mubr.f32.gmra.mxu0 %v3060
  %v3407 = vpop.f32.mrf.mxu0
  %v3408 = vadd.f32 0.0, %v3407
  %v3409 = vpop.f32.mrf.mxu0
  %3410 = vmatprep.mubr.f32.mxu0 0.0
  %3411 = vmatmul.mubr.f32.gmra.mxu0 %v3063
  %v3412 = vpop.f32.mrf.mxu0
  %v3413 = vadd.f32 0.0, %v3412
  %v3414 = vpop.f32.mrf.mxu0
  %3415 = vmatprep.mubr.f32.mxu0 0.0
  %3416 = vmatmul.mubr.f32.gmra.mxu0 %v3066
  %v3417 = vpop.f32.mrf.mxu0
  %v3418 = vadd.f32 0.0, %v3417
  %v3419 = vpop.f32.mrf.mxu0
  %3420 = vmatprep.mubr.f32.mxu0 0.0
  %3421 = vmatmul.mubr.f32.gmra.mxu0 %v3069
  %v3422 = vpop.f32.mrf.mxu0
  %v3423 = vadd.f32 0.0, %v3422
  %v3424 = vpop.f32.mrf.mxu0
  %3425 = vmatprep.mubr.f32.mxu0 0.0
  %3426 = vmatmul.mubr.f32.gmra.mxu0 %v3072
  %v3427 = vpop.f32.mrf.mxu0
  %v3428 = vadd.f32 0.0, %v3427
  %v3429 = vpop.f32.mrf.mxu0
  %3430 = vmatprep.mubr.f32.mxu0 0.0
  %3431 = vmatmul.mubr.f32.gmra.mxu0 %v3075
  %v3432 = vpop.f32.mrf.mxu0
  %v3433 = vadd.f32 0.0, %v3432
  %v3434 = vpop.f32.mrf.mxu0
  %3435 = vmatprep.mubr.f32.mxu0 0.0
  %3436 = vmatmul.mubr.f32.gmra.mxu0 %v3078
  %v3437 = vpop.f32.mrf.mxu0
  %v3438 = vadd.f32 0.0, %v3437
  %v3439 = vpop.f32.mrf.mxu0
  %3440 = vmatprep.mubr.f32.mxu0 0.0
  %3441 = vmatmul.mubr.f32.gmra.mxu0 %v3081
  %v3442 = vpop.f32.mrf.mxu0
  %v3443 = vadd.f32 0.0, %v3442
  %v3444 = vpop.f32.mrf.mxu0
  %3445 = vmatprep.mubr.f32.mxu0 0.0
  %3446 = vmatmul.mubr.f32.gmra.mxu0 %v3084
  %v3447 = vpop.f32.mrf.mxu0
  %v3448 = vadd.f32 0.0, %v3447
  %v3449 = vpop.f32.mrf.mxu0
  %3450 = vmatprep.mubr.f32.mxu0 0.0
  %3451 = vmatmul.mubr.f32.gmra.mxu0 %v3087
  %v3452 = vpop.f32.mrf.mxu0
  %v3453 = vadd.f32 0.0, %v3452
  %v3454 = vpop.f32.mrf.mxu0
  %3455 = vmatprep.mubr.f32.mxu0 0.0
  %3456 = vmatmul.mubr.f32.gmra.mxu0 %v3090
  %v3457 = vpop.f32.mrf.mxu0
  %v3458 = vadd.f32 0.0, %v3457
  %v3459 = vpop.f32.mrf.mxu0
  %3460 = vmatprep.mubr.f32.mxu0 0.0
  %3461 = vmatmul.mubr.f32.gmra.mxu0 %v3093
  %v3462 = vpop.f32.mrf.mxu0
  %v3463 = vadd.f32 0.0, %v3462
  %v3464 = vpop.f32.mrf.mxu0
  %3465 = vmatprep.mubr.f32.mxu0 0.0
  %3466 = vmatmul.mubr.f32.gmra.mxu0 %v3096
  %v3467 = vpop.f32.mrf.mxu0
  %v3468 = vadd.f32 0.0, %v3467
  %v3469 = vpop.f32.mrf.mxu0
  %3470 = vmatprep.mubr.f32.mxu0 0.0
  %3471 = vmatmul.mubr.f32.gmra.mxu0 %v3099
  %v3472 = vpop.f32.mrf.mxu0
  %v3473 = vadd.f32 0.0, %v3472
  %v3474 = vpop.f32.mrf.mxu0
  %3475 = vmatprep.mubr.f32.mxu0 0.0
  %3476 = vmatmul.mubr.f32.gmra.mxu0 %v3102
  %v3477 = vpop.f32.mrf.mxu0
  %v3478 = vadd.f32 0.0, %v3477
  %v3479 = vpop.f32.mrf.mxu0
  %3480 = vmatprep.mubr.f32.mxu0 0.0
  %3481 = vmatmul.mubr.f32.gmra.mxu0 %v3105
  %v3482 = vpop.f32.mrf.mxu0
  %v3483 = vadd.f32 0.0, %v3482
  %v3484 = vpop.f32.mrf.mxu0
  %3485 = vmatprep.mubr.f32.mxu0 0.0
  %3486 = vmatmul.mubr.f32.gmra.mxu0 %v3108
  %v3487 = vpop.f32.mrf.mxu0
  %v3488 = vadd.f32 0.0, %v3487
  %v3489 = vpop.f32.mrf.mxu0
  %3490 = vmatprep.mubr.f32.mxu0 0.0
  %3491 = vmatmul.mubr.f32.gmra.mxu0 %v3111
  %v3492 = vpop.f32.mrf.mxu0
  %v3493 = vadd.f32 0.0, %v3492
  %v3494 = vpop.f32.mrf.mxu0
  %3495 = vmatprep.mubr.f32.mxu0 0.0
  %3496 = vmatmul.mubr.f32.gmra.mxu0 %v3114
  %v3497 = vpop.f32.mrf.mxu0
  %v3498 = vadd.f32 0.0, %v3497
  %v3499 = vpop.f32.mrf.mxu0
  %3500 = vdwg.mxu0
  %v3501 = vadd.f32 %v2792, %v3183
  %v3502 = vadd.f32 %v2793, %v3188
  %v3503 = vadd.f32 %v2794, %v3193
  %v3504 = vadd.f32 %v2795, %v3198
  %v3505 = vadd.f32 %v2796, %v3203
  %v3506 = vadd.f32 %v2797, %v3208
  %v3507 = vadd.f32 %v2798, %v3213
  %v3508 = vadd.f32 %v2799, %v3218
  %v3509 = vadd.f32 %v2800, %v3223
  %v3510 = vadd.f32 %v2801, %v3228
  %v3511 = vadd.f32 %v2802, %v3233
  %v3512 = vadd.f32 %v2803, %v3238
  %v3513 = vadd.f32 %v2804, %v3243
  %v3514 = vadd.f32 %v2805, %v3248
  %v3515 = vadd.f32 %v2806, %v3253
  %v3516 = vadd.f32 %v2807, %v3258
  %v3517 = vadd.f32 %v2808, %v3263
  %v3518 = vadd.f32 %v2809, %v3268
  %v3519 = vadd.f32 %v2810, %v3273
  %v3520 = vadd.f32 %v2811, %v3278
  %v3521 = vadd.f32 %v2812, %v3283
  %v3522 = vadd.f32 %v2813, %v3288
  %v3523 = vadd.f32 %v2814, %v3293
  %v3524 = vadd.f32 %v2815, %v3298
  %v3525 = vadd.f32 %v2816, %v3303
  %v3526 = vadd.f32 %v2817, %v3308
  %v3527 = vadd.f32 %v2818, %v3313
  %v3528 = vadd.f32 %v2819, %v3318
  %v3529 = vadd.f32 %v2820, %v3323
  %v3530 = vadd.f32 %v2821, %v3328
  %v3531 = vadd.f32 %v2822, %v3333
  %v3532 = vadd.f32 %v2823, %v3338
  %v3533 = vadd.f32 %v2824, %v3343
  %v3534 = vadd.f32 %v2825, %v3348
  %v3535 = vadd.f32 %v2826, %v3353
  %v3536 = vadd.f32 %v2827, %v3358
  %v3537 = vadd.f32 %v2828, %v3363
  %v3538 = vadd.f32 %v2829, %v3368
  %v3539 = vadd.f32 %v2830, %v3373
  %v3540 = vadd.f32 %v2831, %v3378
  %v3541 = vadd.f32 %v2832, %v3383
  %v3542 = vadd.f32 %v2833, %v3388
  %v3543 = vadd.f32 %v2834, %v3393
  %v3544 = vadd.f32 %v2835, %v3398
  %v3545 = vadd.f32 %v2836, %v3403
  %v3546 = vadd.f32 %v2837, %v3408
  %v3547 = vadd.f32 %v2838, %v3413
  %v3548 = vadd.f32 %v2839, %v3418
  %v3549 = vadd.f32 %v2840, %v3423
  %v3550 = vadd.f32 %v2841, %v3428
  %v3551 = vadd.f32 %v2842, %v3433
  %v3552 = vadd.f32 %v2843, %v3438
  %v3553 = vadd.f32 %v2844, %v3443
  %v3554 = vadd.f32 %v2845, %v3448
  %v3555 = vadd.f32 %v2846, %v3453
  %v3556 = vadd.f32 %v2847, %v3458
  %v3557 = vadd.f32 %v2848, %v3463
  %v3558 = vadd.f32 %v2849, %v3468
  %v3559 = vadd.f32 %v2850, %v3473
  %v3560 = vadd.f32 %v2851, %v3478
  %v3561 = vadd.f32 %v2852, %v3483
  %v3562 = vadd.f32 %v2853, %v3488
  %v3563 = vadd.f32 %v2854, %v3493
  %v3564 = vadd.f32 %v2855, %v3498
  %v3565 = vld [vmem:[%s790] sm:$0xff]
  %v3566 = vld [vmem:[%s790 + $0x8] sm:$0xff]
  %v3567 = vld [vmem:[%s790 + $0x10] sm:$0xff]
  %v3568 = vld [vmem:[%s790 + $0x18] sm:$0xff]
  %v3569 = vld [vmem:[%s790 + $0x20] sm:$0xff]
  %v3570 = vld [vmem:[%s790 + $0x28] sm:$0xff]
  %v3571 = vld [vmem:[%s790 + $0x30] sm:$0xff]
  %v3572 = vld [vmem:[%s790 + $0x38] sm:$0xff]
  %v3573 = vld [vmem:[%s790 + $0x50] sm:$0xff]
  %v3574 = vld [vmem:[%s790 + $0x58] sm:$0xff]
  %v3575 = vld [vmem:[%s790 + $0x60] sm:$0xff]
  %v3576 = vld [vmem:[%s790 + $0x68] sm:$0xff]
  %v3577 = vld [vmem:[%s790 + $0x70] sm:$0xff]
  %v3578 = vld [vmem:[%s790 + $0x78] sm:$0xff]
  %v3579 = vld [vmem:[%s790 + $0x80] sm:$0xff]
  %v3580 = vld [vmem:[%s790 + $0x88] sm:$0xff]
  %v3581 = vld [vmem:[%s790 + $0xa0] sm:$0xff]
  %v3582 = vld [vmem:[%s790 + $0xa8] sm:$0xff]
  %v3583 = vld [vmem:[%s790 + $0xb0] sm:$0xff]
  %v3584 = vld [vmem:[%s790 + $0xb8] sm:$0xff]
  %v3585 = vld [vmem:[%s790 + $0xc0] sm:$0xff]
  %v3586 = vld [vmem:[%s790 + $0xc8] sm:$0xff]
  %v3587 = vld [vmem:[%s790 + $0xd0] sm:$0xff]
  %v3588 = vld [vmem:[%s790 + $0xd8] sm:$0xff]
  %v3589 = vld [vmem:[%s790 + $0xf0] sm:$0xff]
  %v3590 = vld [vmem:[%s790 + $0xf8] sm:$0xff]
  %v3591 = vld [vmem:[%s790 + $0x100] sm:$0xff]
  %v3592 = vld [vmem:[%s790 + $0x108] sm:$0xff]
  %v3593 = vld [vmem:[%s790 + $0x110] sm:$0xff]
  %v3594 = vld [vmem:[%s790 + $0x118] sm:$0xff]
  %v3595 = vld [vmem:[%s790 + $0x120] sm:$0xff]
  %v3596 = vld [vmem:[%s790 + $0x128] sm:$0xff]
  %v3597 = vld [vmem:[%s790 + $0x140] sm:$0xff]
  %v3598 = vld [vmem:[%s790 + $0x148] sm:$0xff]
  %v3599 = vld [vmem:[%s790 + $0x150] sm:$0xff]
  %v3600 = vld [vmem:[%s790 + $0x158] sm:$0xff]
  %v3601 = vld [vmem:[%s790 + $0x160] sm:$0xff]
  %v3602 = vld [vmem:[%s790 + $0x168] sm:$0xff]
  %v3603 = vld [vmem:[%s790 + $0x170] sm:$0xff]
  %v3604 = vld [vmem:[%s790 + $0x178] sm:$0xff]
  %v3605 = vld [vmem:[%s790 + $0x190] sm:$0xff]
  %v3606 = vld [vmem:[%s790 + $0x198] sm:$0xff]
  %v3607 = vld [vmem:[%s790 + $0x1a0] sm:$0xff]
  %v3608 = vld [vmem:[%s790 + $0x1a8] sm:$0xff]
  %v3609 = vld [vmem:[%s790 + $0x1b0] sm:$0xff]
  %v3610 = vld [vmem:[%s790 + $0x1b8] sm:$0xff]
  %v3611 = vld [vmem:[%s790 + $0x1c0] sm:$0xff]
  %v3612 = vld [vmem:[%s790 + $0x1c8] sm:$0xff]
  %v3613 = vld [vmem:[%s790 + $0x1e0] sm:$0xff]
  %v3614 = vld [vmem:[%s790 + $0x1e8] sm:$0xff]
  %v3615 = vld [vmem:[%s790 + $0x1f0] sm:$0xff]
  %v3616 = vld [vmem:[%s790 + $0x1f8] sm:$0xff]
  %v3617 = vld [vmem:[%s790 + $0x200] sm:$0xff]
  %v3618 = vld [vmem:[%s790 + $0x208] sm:$0xff]
  %v3619 = vld [vmem:[%s790 + $0x210] sm:$0xff]
  %v3620 = vld [vmem:[%s790 + $0x218] sm:$0xff]
  %v3621 = vld [vmem:[%s790 + $0x230] sm:$0xff]
  %v3622 = vld [vmem:[%s790 + $0x238] sm:$0xff]
  %v3623 = vld [vmem:[%s790 + $0x240] sm:$0xff]
  %v3624 = vld [vmem:[%s790 + $0x248] sm:$0xff]
  %v3625 = vld [vmem:[%s790 + $0x250] sm:$0xff]
  %v3626 = vld [vmem:[%s790 + $0x258] sm:$0xff]
  %v3627 = vld [vmem:[%s790 + $0x260] sm:$0xff]
  %v3628 = vld [vmem:[%s790 + $0x268] sm:$0xff]
  %v3629 = vld [vmem:[%s4 + $0x80] sm:$0xff]
  %v3630 = vld [vmem:[%s4 + $0x88] sm:$0xff]
  %v3631 = vld [vmem:[%s4 + $0x90] sm:$0xff]
  %v3632 = vld [vmem:[%s4 + $0x98] sm:$0xff]
  %v3634 = vsel %vm750, %v3565, 0
  %v3637 = vsel %vm750, %v3566, 0
  %v3640 = vsel %vm750, %v3567, 0
  %v3643 = vsel %vm750, %v3568, 0
  %v3646 = vsel %vm750, %v3569, 0
  %v3649 = vsel %vm750, %v3570, 0
  %v3652 = vsel %vm750, %v3571, 0
  %v3655 = vsel %vm750, %v3572, 0
  %v3658 = vsel %vm750, %v3573, 0
  %v3661 = vsel %vm750, %v3574, 0
  %v3664 = vsel %vm750, %v3575, 0
  %v3667 = vsel %vm750, %v3576, 0
  %v3670 = vsel %vm750, %v3577, 0
  %v3673 = vsel %vm750, %v3578, 0
  %v3676 = vsel %vm750, %v3579, 0
  %v3679 = vsel %vm750, %v3580, 0
  %v3682 = vsel %vm750, %v3581, 0
  %v3685 = vsel %vm750, %v3582, 0
  %v3688 = vsel %vm750, %v3583, 0
  %v3691 = vsel %vm750, %v3584, 0
  %v3694 = vsel %vm750, %v3585, 0
  %v3697 = vsel %vm750, %v3586, 0
  %v3700 = vsel %vm750, %v3587, 0
  %v3703 = vsel %vm750, %v3588, 0
  %v3706 = vsel %vm750, %v3589, 0
  %v3709 = vsel %vm750, %v3590, 0
  %v3712 = vsel %vm750, %v3591, 0
  %v3715 = vsel %vm750, %v3592, 0
  %v3718 = vsel %vm750, %v3593, 0
  %v3721 = vsel %vm750, %v3594, 0
  %v3724 = vsel %vm750, %v3595, 0
  %v3727 = vsel %vm750, %v3596, 0
  %v3730 = vsel %vm750, %v3597, 0
  %v3733 = vsel %vm750, %v3598, 0
  %v3736 = vsel %vm750, %v3599, 0
  %v3739 = vsel %vm750, %v3600, 0
  %v3742 = vsel %vm750, %v3601, 0
  %v3745 = vsel %vm750, %v3602, 0
  %v3748 = vsel %vm750, %v3603, 0
  %v3751 = vsel %vm750, %v3604, 0
  %v3754 = vsel %vm750, %v3605, 0
  %v3757 = vsel %vm750, %v3606, 0
  %v3760 = vsel %vm750, %v3607, 0
  %v3763 = vsel %vm750, %v3608, 0
  %v3766 = vsel %vm750, %v3609, 0
  %v3769 = vsel %vm750, %v3610, 0
  %v3772 = vsel %vm750, %v3611, 0
  %v3775 = vsel %vm750, %v3612, 0
  %v3778 = vsel %vm750, %v3613, 0
  %v3781 = vsel %vm750, %v3614, 0
  %v3784 = vsel %vm750, %v3615, 0
  %v3787 = vsel %vm750, %v3616, 0
  %v3790 = vsel %vm750, %v3617, 0
  %v3793 = vsel %vm750, %v3618, 0
  %v3796 = vsel %vm750, %v3619, 0
  %v3799 = vsel %vm750, %v3620, 0
  %v3802 = vsel %vm750, %v3621, 0
  %v3805 = vsel %vm750, %v3622, 0
  %v3808 = vsel %vm750, %v3623, 0
  %v3811 = vsel %vm750, %v3624, 0
  %v3814 = vsel %vm750, %v3625, 0
  %v3817 = vsel %vm750, %v3626, 0
  %v3820 = vsel %vm750, %v3627, 0
  %v3823 = vsel %vm750, %v3628, 0
  %3825 = vmatprep.subr.mxu0 0.0
  %3826 = vmatpush1.msra.mxu0 0.0
  %3827 = vmatprep.subr.mxu0 0.0
  %3828 = vmatpush1.msra.mxu0 0.0
  %3829 = vmatprep.subr.mxu0 0.0
  %3830 = vmatpush1.msra.mxu0 0.0
  %3831 = vmatprep.subr.mxu0 0.0
  %3832 = vmatpush1.msra.mxu0 0.0
  %3833 = vmatprep.subr.mxu0 0.0
  %3834 = vmatpush1.msra.mxu0 0.0
  %3835 = vmatprep.subr.mxu0 0.0
  %3836 = vmatpush1.msra.mxu0 0.0
  %3837 = vmatprep.subr.mxu0 0.0
  %3838 = vmatpush1.msra.mxu0 0.0
  %3839 = vmatprep.subr.mxu0 0.0
  %3840 = vmatpush1.msra.mxu0 0.0
  %3841 = vmatprep.subr.mxu0 0.0
  %3842 = vmatpush1.msra.mxu0 0.0
  %3843 = vmatprep.subr.mxu0 0.0
  %3844 = vmatpush1.msra.mxu0 0.0
  %3845 = vmatprep.subr.mxu0 0.0
  %3846 = vmatpush1.msra.mxu0 0.0
  %3847 = vmatprep.subr.mxu0 0.0
  %3848 = vmatpush1.msra.mxu0 0.0
  %3849 = vmatprep.subr.mxu0 0.0
  %3850 = vmatpush1.msra.mxu0 %v3632
  %3851 = vmatprep.subr.mxu0 0.0
  %3852 = vmatpush1.msra.mxu0 %v3631
  %3853 = vmatprep.subr.mxu0 0.0
  %3854 = vmatpush1.msra.mxu0 %v3630
  %3855 = vmatprep.subr.mxu0 0.0
  %3856 = vmatpush1.msra.mxu0 %v3629
  %3857 = vmatprep.subr.mxu0 0.0
  %3858 = vmatpush2.msra.mxu0 0.0
  %3859 = vmatprep.subr.mxu0 0.0
  %3860 = vmatpush2.msra.mxu0 0.0
  %3861 = vmatprep.subr.mxu0 0.0
  %3862 = vmatpush2.msra.mxu0 0.0
  %3863 = vmatprep.subr.mxu0 0.0
  %3864 = vmatpush2.msra.mxu0 0.0
  %3865 = vmatprep.subr.mxu0 0.0
  %3866 = vmatpush2.msra.mxu0 0.0
  %3867 = vmatprep.subr.mxu0 0.0
  %3868 = vmatpush2.msra.mxu0 0.0
  %3869 = vmatprep.subr.mxu0 0.0
  %3870 = vmatpush2.msra.mxu0 0.0
  %3871 = vmatprep.subr.mxu0 0.0
  %3872 = vmatpush2.msra.mxu0 0.0
  %3873 = vmatprep.subr.mxu0 0.0
  %3874 = vmatpush2.msra.mxu0 0.0
  %3875 = vmatprep.subr.mxu0 0.0
  %3876 = vmatpush2.msra.mxu0 0.0
  %3877 = vmatprep.subr.mxu0 0.0
  %3878 = vmatpush2.msra.mxu0 0.0
  %3879 = vmatprep.subr.mxu0 0.0
  %3880 = vmatpush2.msra.mxu0 0.0
  %3881 = vmatprep.subr.mxu0 0.0
  %3882 = vmatpush2.msra.mxu0 0.0
  %3883 = vmatprep.subr.mxu0 0.0
  %3884 = vmatpush2.msra.mxu0 0.0
  %3885 = vmatprep.subr.mxu0 0.0
  %3886 = vmatpush2.msra.mxu0 0.0
  %3887 = vmatprep.subr.mxu0 0.0
  %3888 = vmatpush2.msra.mxu0 0.0
  %3889 = vmatprep.mubr.f32.mxu0 0.0
  %3890 = vmatmul.mubr.f32.gmra.mxu0 %v3634
  %v3891 = vpop.f32.mrf.mxu0
  %v3892 = vadd.f32 0.0, %v3891
  %v3893 = vpop.f32.mrf.mxu0
  %3894 = vmatprep.mubr.f32.mxu0 0.0
  %3895 = vmatmul.mubr.f32.gmra.mxu0 %v3637
  %v3896 = vpop.f32.mrf.mxu0
  %v3897 = vadd.f32 0.0, %v3896
  %v3898 = vpop.f32.mrf.mxu0
  %3899 = vmatprep.mubr.f32.mxu0 0.0
  %3900 = vmatmul.mubr.f32.gmra.mxu0 %v3640
  %v3901 = vpop.f32.mrf.mxu0
  %v3902 = vadd.f32 0.0, %v3901
  %v3903 = vpop.f32.mrf.mxu0
  %3904 = vmatprep.mubr.f32.mxu0 0.0
  %3905 = vmatmul.mubr.f32.gmra.mxu0 %v3643
  %v3906 = vpop.f32.mrf.mxu0
  %v3907 = vadd.f32 0.0, %v3906
  %v3908 = vpop.f32.mrf.mxu0
  %3909 = vmatprep.mubr.f32.mxu0 0.0
  %3910 = vmatmul.mubr.f32.gmra.mxu0 %v3646
  %v3911 = vpop.f32.mrf.mxu0
  %v3912 = vadd.f32 0.0, %v3911
  %v3913 = vpop.f32.mrf.mxu0
  %3914 = vmatprep.mubr.f32.mxu0 0.0
  %3915 = vmatmul.mubr.f32.gmra.mxu0 %v3649
  %v3916 = vpop.f32.mrf.mxu0
  %v3917 = vadd.f32 0.0, %v3916
  %v3918 = vpop.f32.mrf.mxu0
  %3919 = vmatprep.mubr.f32.mxu0 0.0
  %3920 = vmatmul.mubr.f32.gmra.mxu0 %v3652
  %v3921 = vpop.f32.mrf.mxu0
  %v3922 = vadd.f32 0.0, %v3921
  %v3923 = vpop.f32.mrf.mxu0
  %3924 = vmatprep.mubr.f32.mxu0 0.0
  %3925 = vmatmul.mubr.f32.gmra.mxu0 %v3655
  %v3926 = vpop.f32.mrf.mxu0
  %v3927 = vadd.f32 0.0, %v3926
  %v3928 = vpop.f32.mrf.mxu0
  %3929 = vmatprep.mubr.f32.mxu0 0.0
  %3930 = vmatmul.mubr.f32.gmra.mxu0 %v3658
  %v3931 = vpop.f32.mrf.mxu0
  %v3932 = vadd.f32 0.0, %v3931
  %v3933 = vpop.f32.mrf.mxu0
  %3934 = vmatprep.mubr.f32.mxu0 0.0
  %3935 = vmatmul.mubr.f32.gmra.mxu0 %v3661
  %v3936 = vpop.f32.mrf.mxu0
  %v3937 = vadd.f32 0.0, %v3936
  %v3938 = vpop.f32.mrf.mxu0
  %3939 = vmatprep.mubr.f32.mxu0 0.0
  %3940 = vmatmul.mubr.f32.gmra.mxu0 %v3664
  %v3941 = vpop.f32.mrf.mxu0
  %v3942 = vadd.f32 0.0, %v3941
  %v3943 = vpop.f32.mrf.mxu0
  %3944 = vmatprep.mubr.f32.mxu0 0.0
  %3945 = vmatmul.mubr.f32.gmra.mxu0 %v3667
  %v3946 = vpop.f32.mrf.mxu0
  %v3947 = vadd.f32 0.0, %v3946
  %v3948 = vpop.f32.mrf.mxu0
  %3949 = vmatprep.mubr.f32.mxu0 0.0
  %3950 = vmatmul.mubr.f32.gmra.mxu0 %v3670
  %v3951 = vpop.f32.mrf.mxu0
  %v3952 = vadd.f32 0.0, %v3951
  %v3953 = vpop.f32.mrf.mxu0
  %3954 = vmatprep.mubr.f32.mxu0 0.0
  %3955 = vmatmul.mubr.f32.gmra.mxu0 %v3673
  %v3956 = vpop.f32.mrf.mxu0
  %v3957 = vadd.f32 0.0, %v3956
  %v3958 = vpop.f32.mrf.mxu0
  %3959 = vmatprep.mubr.f32.mxu0 0.0
  %3960 = vmatmul.mubr.f32.gmra.mxu0 %v3676
  %v3961 = vpop.f32.mrf.mxu0
  %v3962 = vadd.f32 0.0, %v3961
  %v3963 = vpop.f32.mrf.mxu0
  %3964 = vmatprep.mubr.f32.mxu0 0.0
  %3965 = vmatmul.mubr.f32.gmra.mxu0 %v3679
  %v3966 = vpop.f32.mrf.mxu0
  %v3967 = vadd.f32 0.0, %v3966
  %v3968 = vpop.f32.mrf.mxu0
  %3969 = vmatprep.mubr.f32.mxu0 0.0
  %3970 = vmatmul.mubr.f32.gmra.mxu0 %v3682
  %v3971 = vpop.f32.mrf.mxu0
  %v3972 = vadd.f32 0.0, %v3971
  %v3973 = vpop.f32.mrf.mxu0
  %3974 = vmatprep.mubr.f32.mxu0 0.0
  %3975 = vmatmul.mubr.f32.gmra.mxu0 %v3685
  %v3976 = vpop.f32.mrf.mxu0
  %v3977 = vadd.f32 0.0, %v3976
  %v3978 = vpop.f32.mrf.mxu0
  %3979 = vmatprep.mubr.f32.mxu0 0.0
  %3980 = vmatmul.mubr.f32.gmra.mxu0 %v3688
  %v3981 = vpop.f32.mrf.mxu0
  %v3982 = vadd.f32 0.0, %v3981
  %v3983 = vpop.f32.mrf.mxu0
  %3984 = vmatprep.mubr.f32.mxu0 0.0
  %3985 = vmatmul.mubr.f32.gmra.mxu0 %v3691
  %v3986 = vpop.f32.mrf.mxu0
  %v3987 = vadd.f32 0.0, %v3986
  %v3988 = vpop.f32.mrf.mxu0
  %3989 = vmatprep.mubr.f32.mxu0 0.0
  %3990 = vmatmul.mubr.f32.gmra.mxu0 %v3694
  %v3991 = vpop.f32.mrf.mxu0
  %v3992 = vadd.f32 0.0, %v3991
  %v3993 = vpop.f32.mrf.mxu0
  %3994 = vmatprep.mubr.f32.mxu0 0.0
  %3995 = vmatmul.mubr.f32.gmra.mxu0 %v3697
  %v3996 = vpop.f32.mrf.mxu0
  %v3997 = vadd.f32 0.0, %v3996
  %v3998 = vpop.f32.mrf.mxu0
  %3999 = vmatprep.mubr.f32.mxu0 0.0
  %4000 = vmatmul.mubr.f32.gmra.mxu0 %v3700
  %v4001 = vpop.f32.mrf.mxu0
  %v4002 = vadd.f32 0.0, %v4001
  %v4003 = vpop.f32.mrf.mxu0
  %4004 = vmatprep.mubr.f32.mxu0 0.0
  %4005 = vmatmul.mubr.f32.gmra.mxu0 %v3703
  %v4006 = vpop.f32.mrf.mxu0
  %v4007 = vadd.f32 0.0, %v4006
  %v4008 = vpop.f32.mrf.mxu0
  %4009 = vmatprep.mubr.f32.mxu0 0.0
  %4010 = vmatmul.mubr.f32.gmra.mxu0 %v3706
  %v4011 = vpop.f32.mrf.mxu0
  %v4012 = vadd.f32 0.0, %v4011
  %v4013 = vpop.f32.mrf.mxu0
  %4014 = vmatprep.mubr.f32.mxu0 0.0
  %4015 = vmatmul.mubr.f32.gmra.mxu0 %v3709
  %v4016 = vpop.f32.mrf.mxu0
  %v4017 = vadd.f32 0.0, %v4016
  %v4018 = vpop.f32.mrf.mxu0
  %4019 = vmatprep.mubr.f32.mxu0 0.0
  %4020 = vmatmul.mubr.f32.gmra.mxu0 %v3712
  %v4021 = vpop.f32.mrf.mxu0
  %v4022 = vadd.f32 0.0, %v4021
  %v4023 = vpop.f32.mrf.mxu0
  %4024 = vmatprep.mubr.f32.mxu0 0.0
  %4025 = vmatmul.mubr.f32.gmra.mxu0 %v3715
  %v4026 = vpop.f32.mrf.mxu0
  %v4027 = vadd.f32 0.0, %v4026
  %v4028 = vpop.f32.mrf.mxu0
  %4029 = vmatprep.mubr.f32.mxu0 0.0
  %4030 = vmatmul.mubr.f32.gmra.mxu0 %v3718
  %v4031 = vpop.f32.mrf.mxu0
  %v4032 = vadd.f32 0.0, %v4031
  %v4033 = vpop.f32.mrf.mxu0
  %4034 = vmatprep.mubr.f32.mxu0 0.0
  %4035 = vmatmul.mubr.f32.gmra.mxu0 %v3721
  %v4036 = vpop.f32.mrf.mxu0
  %v4037 = vadd.f32 0.0, %v4036
  %v4038 = vpop.f32.mrf.mxu0
  %4039 = vmatprep.mubr.f32.mxu0 0.0
  %4040 = vmatmul.mubr.f32.gmra.mxu0 %v3724
  %v4041 = vpop.f32.mrf.mxu0
  %v4042 = vadd.f32 0.0, %v4041
  %v4043 = vpop.f32.mrf.mxu0
  %4044 = vmatprep.mubr.f32.mxu0 0.0
  %4045 = vmatmul.mubr.f32.gmra.mxu0 %v3727
  %v4046 = vpop.f32.mrf.mxu0
  %v4047 = vadd.f32 0.0, %v4046
  %v4048 = vpop.f32.mrf.mxu0
  %4049 = vmatprep.mubr.f32.mxu0 0.0
  %4050 = vmatmul.mubr.f32.gmra.mxu0 %v3730
  %v4051 = vpop.f32.mrf.mxu0
  %v4052 = vadd.f32 0.0, %v4051
  %v4053 = vpop.f32.mrf.mxu0
  %4054 = vmatprep.mubr.f32.mxu0 0.0
  %4055 = vmatmul.mubr.f32.gmra.mxu0 %v3733
  %v4056 = vpop.f32.mrf.mxu0
  %v4057 = vadd.f32 0.0, %v4056
  %v4058 = vpop.f32.mrf.mxu0
  %4059 = vmatprep.mubr.f32.mxu0 0.0
  %4060 = vmatmul.mubr.f32.gmra.mxu0 %v3736
  %v4061 = vpop.f32.mrf.mxu0
  %v4062 = vadd.f32 0.0, %v4061
  %v4063 = vpop.f32.mrf.mxu0
  %4064 = vmatprep.mubr.f32.mxu0 0.0
  %4065 = vmatmul.mubr.f32.gmra.mxu0 %v3739
  %v4066 = vpop.f32.mrf.mxu0
  %v4067 = vadd.f32 0.0, %v4066
  %v4068 = vpop.f32.mrf.mxu0
  %4069 = vmatprep.mubr.f32.mxu0 0.0
  %4070 = vmatmul.mubr.f32.gmra.mxu0 %v3742
  %v4071 = vpop.f32.mrf.mxu0
  %v4072 = vadd.f32 0.0, %v4071
  %v4073 = vpop.f32.mrf.mxu0
  %4074 = vmatprep.mubr.f32.mxu0 0.0
  %4075 = vmatmul.mubr.f32.gmra.mxu0 %v3745
  %v4076 = vpop.f32.mrf.mxu0
  %v4077 = vadd.f32 0.0, %v4076
  %v4078 = vpop.f32.mrf.mxu0
  %4079 = vmatprep.mubr.f32.mxu0 0.0
  %4080 = vmatmul.mubr.f32.gmra.mxu0 %v3748
  %v4081 = vpop.f32.mrf.mxu0
  %v4082 = vadd.f32 0.0, %v4081
  %v4083 = vpop.f32.mrf.mxu0
  %4084 = vmatprep.mubr.f32.mxu0 0.0
  %4085 = vmatmul.mubr.f32.gmra.mxu0 %v3751
  %v4086 = vpop.f32.mrf.mxu0
  %v4087 = vadd.f32 0.0, %v4086
  %v4088 = vpop.f32.mrf.mxu0
  %4089 = vmatprep.mubr.f32.mxu0 0.0
  %4090 = vmatmul.mubr.f32.gmra.mxu0 %v3754
  %v4091 = vpop.f32.mrf.mxu0
  %v4092 = vadd.f32 0.0, %v4091
  %v4093 = vpop.f32.mrf.mxu0
  %4094 = vmatprep.mubr.f32.mxu0 0.0
  %4095 = vmatmul.mubr.f32.gmra.mxu0 %v3757
  %v4096 = vpop.f32.mrf.mxu0
  %v4097 = vadd.f32 0.0, %v4096
  %v4098 = vpop.f32.mrf.mxu0
  %4099 = vmatprep.mubr.f32.mxu0 0.0
  %4100 = vmatmul.mubr.f32.gmra.mxu0 %v3760
  %v4101 = vpop.f32.mrf.mxu0
  %v4102 = vadd.f32 0.0, %v4101
  %v4103 = vpop.f32.mrf.mxu0
  %4104 = vmatprep.mubr.f32.mxu0 0.0
  %4105 = vmatmul.mubr.f32.gmra.mxu0 %v3763
  %v4106 = vpop.f32.mrf.mxu0
  %v4107 = vadd.f32 0.0, %v4106
  %v4108 = vpop.f32.mrf.mxu0
  %4109 = vmatprep.mubr.f32.mxu0 0.0
  %4110 = vmatmul.mubr.f32.gmra.mxu0 %v3766
  %v4111 = vpop.f32.mrf.mxu0
  %v4112 = vadd.f32 0.0, %v4111
  %v4113 = vpop.f32.mrf.mxu0
  %4114 = vmatprep.mubr.f32.mxu0 0.0
  %4115 = vmatmul.mubr.f32.gmra.mxu0 %v3769
  %v4116 = vpop.f32.mrf.mxu0
  %v4117 = vadd.f32 0.0, %v4116
  %v4118 = vpop.f32.mrf.mxu0
  %4119 = vmatprep.mubr.f32.mxu0 0.0
  %4120 = vmatmul.mubr.f32.gmra.mxu0 %v3772
  %v4121 = vpop.f32.mrf.mxu0
  %v4122 = vadd.f32 0.0, %v4121
  %v4123 = vpop.f32.mrf.mxu0
  %4124 = vmatprep.mubr.f32.mxu0 0.0
  %4125 = vmatmul.mubr.f32.gmra.mxu0 %v3775
  %v4126 = vpop.f32.mrf.mxu0
  %v4127 = vadd.f32 0.0, %v4126
  %v4128 = vpop.f32.mrf.mxu0
  %4129 = vmatprep.mubr.f32.mxu0 0.0
  %4130 = vmatmul.mubr.f32.gmra.mxu0 %v3778
  %v4131 = vpop.f32.mrf.mxu0
  %v4132 = vadd.f32 0.0, %v4131
  %v4133 = vpop.f32.mrf.mxu0
  %4134 = vmatprep.mubr.f32.mxu0 0.0
  %4135 = vmatmul.mubr.f32.gmra.mxu0 %v3781
  %v4136 = vpop.f32.mrf.mxu0
  %v4137 = vadd.f32 0.0, %v4136
  %v4138 = vpop.f32.mrf.mxu0
  %4139 = vmatprep.mubr.f32.mxu0 0.0
  %4140 = vmatmul.mubr.f32.gmra.mxu0 %v3784
  %v4141 = vpop.f32.mrf.mxu0
  %v4142 = vadd.f32 0.0, %v4141
  %v4143 = vpop.f32.mrf.mxu0
  %4144 = vmatprep.mubr.f32.mxu0 0.0
  %4145 = vmatmul.mubr.f32.gmra.mxu0 %v3787
  %v4146 = vpop.f32.mrf.mxu0
  %v4147 = vadd.f32 0.0, %v4146
  %v4148 = vpop.f32.mrf.mxu0
  %4149 = vmatprep.mubr.f32.mxu0 0.0
  %4150 = vmatmul.mubr.f32.gmra.mxu0 %v3790
  %v4151 = vpop.f32.mrf.mxu0
  %v4152 = vadd.f32 0.0, %v4151
  %v4153 = vpop.f32.mrf.mxu0
  %4154 = vmatprep.mubr.f32.mxu0 0.0
  %4155 = vmatmul.mubr.f32.gmra.mxu0 %v3793
  %v4156 = vpop.f32.mrf.mxu0
  %v4157 = vadd.f32 0.0, %v4156
  %v4158 = vpop.f32.mrf.mxu0
  %4159 = vmatprep.mubr.f32.mxu0 0.0
  %4160 = vmatmul.mubr.f32.gmra.mxu0 %v3796
  %v4161 = vpop.f32.mrf.mxu0
  %v4162 = vadd.f32 0.0, %v4161
  %v4163 = vpop.f32.mrf.mxu0
  %4164 = vmatprep.mubr.f32.mxu0 0.0
  %4165 = vmatmul.mubr.f32.gmra.mxu0 %v3799
  %v4166 = vpop.f32.mrf.mxu0
  %v4167 = vadd.f32 0.0, %v4166
  %v4168 = vpop.f32.mrf.mxu0
  %4169 = vmatprep.mubr.f32.mxu0 0.0
  %4170 = vmatmul.mubr.f32.gmra.mxu0 %v3802
  %v4171 = vpop.f32.mrf.mxu0
  %v4172 = vadd.f32 0.0, %v4171
  %v4173 = vpop.f32.mrf.mxu0
  %4174 = vmatprep.mubr.f32.mxu0 0.0
  %4175 = vmatmul.mubr.f32.gmra.mxu0 %v3805
  %v4176 = vpop.f32.mrf.mxu0
  %v4177 = vadd.f32 0.0, %v4176
  %v4178 = vpop.f32.mrf.mxu0
  %4179 = vmatprep.mubr.f32.mxu0 0.0
  %4180 = vmatmul.mubr.f32.gmra.mxu0 %v3808
  %v4181 = vpop.f32.mrf.mxu0
  %v4182 = vadd.f32 0.0, %v4181
  %v4183 = vpop.f32.mrf.mxu0
  %4184 = vmatprep.mubr.f32.mxu0 0.0
  %4185 = vmatmul.mubr.f32.gmra.mxu0 %v3811
  %v4186 = vpop.f32.mrf.mxu0
  %v4187 = vadd.f32 0.0, %v4186
  %v4188 = vpop.f32.mrf.mxu0
  %4189 = vmatprep.mubr.f32.mxu0 0.0
  %4190 = vmatmul.mubr.f32.gmra.mxu0 %v3814
  %v4191 = vpop.f32.mrf.mxu0
  %v4192 = vadd.f32 0.0, %v4191
  %v4193 = vpop.f32.mrf.mxu0
  %4194 = vmatprep.mubr.f32.mxu0 0.0
  %4195 = vmatmul.mubr.f32.gmra.mxu0 %v3817
  %v4196 = vpop.f32.mrf.mxu0
  %v4197 = vadd.f32 0.0, %v4196
  %v4198 = vpop.f32.mrf.mxu0
  %4199 = vmatprep.mubr.f32.mxu0 0.0
  %4200 = vmatmul.mubr.f32.gmra.mxu0 %v3820
  %v4201 = vpop.f32.mrf.mxu0
  %v4202 = vadd.f32 0.0, %v4201
  %v4203 = vpop.f32.mrf.mxu0
  %4204 = vmatprep.mubr.f32.mxu0 0.0
  %4205 = vmatmul.mubr.f32.gmra.mxu0 %v3823
  %v4206 = vpop.f32.mrf.mxu0
  %v4207 = vadd.f32 0.0, %v4206
  %v4208 = vpop.f32.mrf.mxu0
  %4209 = vdwg.mxu0
  %v4210 = vadd.f32 %v3501, %v3892
  %v4211 = vadd.f32 %v3502, %v3897
  %v4212 = vadd.f32 %v3503, %v3902
  %v4213 = vadd.f32 %v3504, %v3907
  %v4214 = vadd.f32 %v3505, %v3912
  %v4215 = vadd.f32 %v3506, %v3917
  %v4216 = vadd.f32 %v3507, %v3922
  %v4217 = vadd.f32 %v3508, %v3927
  %v4218 = vadd.f32 %v3509, %v3932
  %v4219 = vadd.f32 %v3510, %v3937
  %v4220 = vadd.f32 %v3511, %v3942
  %v4221 = vadd.f32 %v3512, %v3947
  %v4222 = vadd.f32 %v3513, %v3952
  %v4223 = vadd.f32 %v3514, %v3957
  %v4224 = vadd.f32 %v3515, %v3962
  %v4225 = vadd.f32 %v3516, %v3967
  %v4226 = vadd.f32 %v3517, %v3972
  %v4227 = vadd.f32 %v3518, %v3977
  %v4228 = vadd.f32 %v3519, %v3982
  %v4229 = vadd.f32 %v3520, %v3987
  %v4230 = vadd.f32 %v3521, %v3992
  %v4231 = vadd.f32 %v3522, %v3997
  %v4232 = vadd.f32 %v3523, %v4002
  %v4233 = vadd.f32 %v3524, %v4007
  %v4234 = vadd.f32 %v3525, %v4012
  %v4235 = vadd.f32 %v3526, %v4017
  %v4236 = vadd.f32 %v3527, %v4022
  %v4237 = vadd.f32 %v3528, %v4027
  %v4238 = vadd.f32 %v3529, %v4032
  %v4239 = vadd.f32 %v3530, %v4037
  %v4240 = vadd.f32 %v3531, %v4042
  %v4241 = vadd.f32 %v3532, %v4047
  %v4242 = vadd.f32 %v3533, %v4052
  %v4243 = vadd.f32 %v3534, %v4057
  %v4244 = vadd.f32 %v3535, %v4062
  %v4245 = vadd.f32 %v3536, %v4067
  %v4246 = vadd.f32 %v3537, %v4072
  %v4247 = vadd.f32 %v3538, %v4077
  %v4248 = vadd.f32 %v3539, %v4082
  %v4249 = vadd.f32 %v3540, %v4087
  %v4250 = vadd.f32 %v3541, %v4092
  %v4251 = vadd.f32 %v3542, %v4097
  %v4252 = vadd.f32 %v3543, %v4102
  %v4253 = vadd.f32 %v3544, %v4107
  %v4254 = vadd.f32 %v3545, %v4112
  %v4255 = vadd.f32 %v3546, %v4117
  %v4256 = vadd.f32 %v3547, %v4122
  %v4257 = vadd.f32 %v3548, %v4127
  %v4258 = vadd.f32 %v3549, %v4132
  %v4259 = vadd.f32 %v3550, %v4137
  %v4260 = vadd.f32 %v3551, %v4142
  %v4261 = vadd.f32 %v3552, %v4147
  %v4262 = vadd.f32 %v3553, %v4152
  %v4263 = vadd.f32 %v3554, %v4157
  %v4264 = vadd.f32 %v3555, %v4162
  %v4265 = vadd.f32 %v3556, %v4167
  %v4266 = vadd.f32 %v3557, %v4172
  %v4267 = vadd.f32 %v3558, %v4177
  %v4268 = vadd.f32 %v3559, %v4182
  %v4269 = vadd.f32 %v3560, %v4187
  %v4270 = vadd.f32 %v3561, %v4192
  %v4271 = vadd.f32 %v3562, %v4197
  %v4272 = vadd.f32 %v3563, %v4202
  %v4273 = vadd.f32 %v3564, %v4207
  %s4274 = scalar_lea.vmem [#allocation2], 96
  %v4275 = vld [vmem:[%s4274] sm:$0xff]
  %v4276 = vld [vmem:[%s4274 + $0x8] sm:$0xff]
  %v4277 = vld [vmem:[%s4274 + $0x10] sm:$0xff]
  %v4278 = vld [vmem:[%s4274 + $0x18] sm:$0xff]
  %v4279 = vld [vmem:[%s4274 + $0x20] sm:$0xff]
  %v4280 = vld [vmem:[%s4274 + $0x28] sm:$0xff]
  %v4281 = vld [vmem:[%s4274 + $0x30] sm:$0xff]
  %v4282 = vld [vmem:[%s4274 + $0x38] sm:$0xff]
  %v4283 = vld [vmem:[%s4274 + $0x50] sm:$0xff]
  %v4284 = vld [vmem:[%s4274 + $0x58] sm:$0xff]
  %v4285 = vld [vmem:[%s4274 + $0x60] sm:$0xff]
  %v4286 = vld [vmem:[%s4274 + $0x68] sm:$0xff]
  %v4287 = vld [vmem:[%s4274 + $0x70] sm:$0xff]
  %v4288 = vld [vmem:[%s4274 + $0x78] sm:$0xff]
  %v4289 = vld [vmem:[%s4274 + $0x80] sm:$0xff]
  %v4290 = vld [vmem:[%s4274 + $0x88] sm:$0xff]
  %v4291 = vld [vmem:[%s4274 + $0xa0] sm:$0xff]
  %v4292 = vld [vmem:[%s4274 + $0xa8] sm:$0xff]
  %v4293 = vld [vmem:[%s4274 + $0xb0] sm:$0xff]
  %v4294 = vld [vmem:[%s4274 + $0xb8] sm:$0xff]
  %v4295 = vld [vmem:[%s4274 + $0xc0] sm:$0xff]
  %v4296 = vld [vmem:[%s4274 + $0xc8] sm:$0xff]
  %v4297 = vld [vmem:[%s4274 + $0xd0] sm:$0xff]
  %v4298 = vld [vmem:[%s4274 + $0xd8] sm:$0xff]
  %v4299 = vld [vmem:[%s4274 + $0xf0] sm:$0xff]
  %v4300 = vld [vmem:[%s4274 + $0xf8] sm:$0xff]
  %v4301 = vld [vmem:[%s4274 + $0x100] sm:$0xff]
  %v4302 = vld [vmem:[%s4274 + $0x108] sm:$0xff]
  %v4303 = vld [vmem:[%s4274 + $0x110] sm:$0xff]
  %v4304 = vld [vmem:[%s4274 + $0x118] sm:$0xff]
  %v4305 = vld [vmem:[%s4274 + $0x120] sm:$0xff]
  %v4306 = vld [vmem:[%s4274 + $0x128] sm:$0xff]
  %v4307 = vld [vmem:[%s4274 + $0x140] sm:$0xff]
  %v4308 = vld [vmem:[%s4274 + $0x148] sm:$0xff]
  %v4309 = vld [vmem:[%s4274 + $0x150] sm:$0xff]
  %v4310 = vld [vmem:[%s4274 + $0x158] sm:$0xff]
  %v4311 = vld [vmem:[%s4274 + $0x160] sm:$0xff]
  %v4312 = vld [vmem:[%s4274 + $0x168] sm:$0xff]
  %v4313 = vld [vmem:[%s4274 + $0x170] sm:$0xff]
  %v4314 = vld [vmem:[%s4274 + $0x178] sm:$0xff]
  %v4315 = vld [vmem:[%s4274 + $0x190] sm:$0xff]
  %v4316 = vld [vmem:[%s4274 + $0x198] sm:$0xff]
  %v4317 = vld [vmem:[%s4274 + $0x1a0] sm:$0xff]
  %v4318 = vld [vmem:[%s4274 + $0x1a8] sm:$0xff]
  %v4319 = vld [vmem:[%s4274 + $0x1b0] sm:$0xff]
  %v4320 = vld [vmem:[%s4274 + $0x1b8] sm:$0xff]
  %v4321 = vld [vmem:[%s4274 + $0x1c0] sm:$0xff]
  %v4322 = vld [vmem:[%s4274 + $0x1c8] sm:$0xff]
  %v4323 = vld [vmem:[%s4274 + $0x1e0] sm:$0xff]
  %v4324 = vld [vmem:[%s4274 + $0x1e8] sm:$0xff]
  %v4325 = vld [vmem:[%s4274 + $0x1f0] sm:$0xff]
  %v4326 = vld [vmem:[%s4274 + $0x1f8] sm:$0xff]
  %v4327 = vld [vmem:[%s4274 + $0x200] sm:$0xff]
  %v4328 = vld [vmem:[%s4274 + $0x208] sm:$0xff]
  %v4329 = vld [vmem:[%s4274 + $0x210] sm:$0xff]
  %v4330 = vld [vmem:[%s4274 + $0x218] sm:$0xff]
  %v4331 = vld [vmem:[%s4274 + $0x230] sm:$0xff]
  %v4332 = vld [vmem:[%s4274 + $0x238] sm:$0xff]
  %v4333 = vld [vmem:[%s4274 + $0x240] sm:$0xff]
  %v4334 = vld [vmem:[%s4274 + $0x248] sm:$0xff]
  %v4335 = vld [vmem:[%s4274 + $0x250] sm:$0xff]
  %v4336 = vld [vmem:[%s4274 + $0x258] sm:$0xff]
  %v4337 = vld [vmem:[%s4274 + $0x260] sm:$0xff]
  %v4338 = vld [vmem:[%s4274 + $0x268] sm:$0xff]
  %v4339 = vld [vmem:[%s4 + $0xa0] sm:$0xff]
  %v4340 = vld [vmem:[%s4 + $0xa8] sm:$0xff]
  %v4341 = vld [vmem:[%s4 + $0xb0] sm:$0xff]
  %v4342 = vld [vmem:[%s4 + $0xb8] sm:$0xff]
  %v4344 = vsel %vm750, %v4275, 0
  %v4347 = vsel %vm750, %v4276, 0
  %v4350 = vsel %vm750, %v4277, 0
  %v4353 = vsel %vm750, %v4278, 0
  %v4356 = vsel %vm750, %v4279, 0
  %v4359 = vsel %vm750, %v4280, 0
  %v4362 = vsel %vm750, %v4281, 0
  %v4365 = vsel %vm750, %v4282, 0
  %v4368 = vsel %vm750, %v4283, 0
  %v4371 = vsel %vm750, %v4284, 0
  %v4374 = vsel %vm750, %v4285, 0
  %v4377 = vsel %vm750, %v4286, 0
  %v4380 = vsel %vm750, %v4287, 0
  %v4383 = vsel %vm750, %v4288, 0
  %v4386 = vsel %vm750, %v4289, 0
  %v4389 = vsel %vm750, %v4290, 0
  %v4392 = vsel %vm750, %v4291, 0
  %v4395 = vsel %vm750, %v4292, 0
  %v4398 = vsel %vm750, %v4293, 0
  %v4401 = vsel %vm750, %v4294, 0
  %v4404 = vsel %vm750, %v4295, 0
  %v4407 = vsel %vm750, %v4296, 0
  %v4410 = vsel %vm750, %v4297, 0
  %v4413 = vsel %vm750, %v4298, 0
  %v4416 = vsel %vm750, %v4299, 0
  %v4419 = vsel %vm750, %v4300, 0
  %v4422 = vsel %vm750, %v4301, 0
  %v4425 = vsel %vm750, %v4302, 0
  %v4428 = vsel %vm750, %v4303, 0
  %v4431 = vsel %vm750, %v4304, 0
  %v4434 = vsel %vm750, %v4305, 0
  %v4437 = vsel %vm750, %v4306, 0
  %v4440 = vsel %vm750, %v4307, 0
  %v4443 = vsel %vm750, %v4308, 0
  %v4446 = vsel %vm750, %v4309, 0
  %v4449 = vsel %vm750, %v4310, 0
  %v4452 = vsel %vm750, %v4311, 0
  %v4455 = vsel %vm750, %v4312, 0
  %v4458 = vsel %vm750, %v4313, 0
  %v4461 = vsel %vm750, %v4314, 0
  %v4464 = vsel %vm750, %v4315, 0
  %v4467 = vsel %vm750, %v4316, 0
  %v4470 = vsel %vm750, %v4317, 0
  %v4473 = vsel %vm750, %v4318, 0
  %v4476 = vsel %vm750, %v4319, 0
  %v4479 = vsel %vm750, %v4320, 0
  %v4482 = vsel %vm750, %v4321, 0
  %v4485 = vsel %vm750, %v4322, 0
  %v4488 = vsel %vm750, %v4323, 0
  %v4491 = vsel %vm750, %v4324, 0
  %v4494 = vsel %vm750, %v4325, 0
  %v4497 = vsel %vm750, %v4326, 0
  %v4500 = vsel %vm750, %v4327, 0
  %v4503 = vsel %vm750, %v4328, 0
  %v4506 = vsel %vm750, %v4329, 0
  %v4509 = vsel %vm750, %v4330, 0
  %v4512 = vsel %vm750, %v4331, 0
  %v4515 = vsel %vm750, %v4332, 0
  %v4518 = vsel %vm750, %v4333, 0
  %v4521 = vsel %vm750, %v4334, 0
  %v4524 = vsel %vm750, %v4335, 0
  %v4527 = vsel %vm750, %v4336, 0
  %v4530 = vsel %vm750, %v4337, 0
  %v4533 = vsel %vm750, %v4338, 0
  %4535 = vmatprep.subr.mxu0 0.0
  %4536 = vmatpush1.msra.mxu0 0.0
  %4537 = vmatprep.subr.mxu0 0.0
  %4538 = vmatpush1.msra.mxu0 0.0
  %4539 = vmatprep.subr.mxu0 0.0
  %4540 = vmatpush1.msra.mxu0 0.0
  %4541 = vmatprep.subr.mxu0 0.0
  %4542 = vmatpush1.msra.mxu0 0.0
  %4543 = vmatprep.subr.mxu0 0.0
  %4544 = vmatpush1.msra.mxu0 0.0
  %4545 = vmatprep.subr.mxu0 0.0
  %4546 = vmatpush1.msra.mxu0 0.0
  %4547 = vmatprep.subr.mxu0 0.0
  %4548 = vmatpush1.msra.mxu0 0.0
  %4549 = vmatprep.subr.mxu0 0.0
  %4550 = vmatpush1.msra.mxu0 0.0
  %4551 = vmatprep.subr.mxu0 0.0
  %4552 = vmatpush1.msra.mxu0 0.0
  %4553 = vmatprep.subr.mxu0 0.0
  %4554 = vmatpush1.msra.mxu0 0.0
  %4555 = vmatprep.subr.mxu0 0.0
  %4556 = vmatpush1.msra.mxu0 0.0
  %4557 = vmatprep.subr.mxu0 0.0
  %4558 = vmatpush1.msra.mxu0 0.0
  %4559 = vmatprep.subr.mxu0 0.0
  %4560 = vmatpush1.msra.mxu0 %v4342
  %4561 = vmatprep.subr.mxu0 0.0
  %4562 = vmatpush1.msra.mxu0 %v4341
  %4563 = vmatprep.subr.mxu0 0.0
  %4564 = vmatpush1.msra.mxu0 %v4340
  %4565 = vmatprep.subr.mxu0 0.0
  %4566 = vmatpush1.msra.mxu0 %v4339
  %4567 = vmatprep.subr.mxu0 0.0
  %4568 = vmatpush2.msra.mxu0 0.0
  %4569 = vmatprep.subr.mxu0 0.0
  %4570 = vmatpush2.msra.mxu0 0.0
  %4571 = vmatprep.subr.mxu0 0.0
  %4572 = vmatpush2.msra.mxu0 0.0
  %4573 = vmatprep.subr.mxu0 0.0
  %4574 = vmatpush2.msra.mxu0 0.0
  %4575 = vmatprep.subr.mxu0 0.0
  %4576 = vmatpush2.msra.mxu0 0.0
  %4577 = vmatprep.subr.mxu0 0.0
  %4578 = vmatpush2.msra.mxu0 0.0
  %4579 = vmatprep.subr.mxu0 0.0
  %4580 = vmatpush2.msra.mxu0 0.0
  %4581 = vmatprep.subr.mxu0 0.0
  %4582 = vmatpush2.msra.mxu0 0.0
  %4583 = vmatprep.subr.mxu0 0.0
  %4584 = vmatpush2.msra.mxu0 0.0
  %4585 = vmatprep.subr.mxu0 0.0
  %4586 = vmatpush2.msra.mxu0 0.0
  %4587 = vmatprep.subr.mxu0 0.0
  %4588 = vmatpush2.msra.mxu0 0.0
  %4589 = vmatprep.subr.mxu0 0.0
  %4590 = vmatpush2.msra.mxu0 0.0
  %4591 = vmatprep.subr.mxu0 0.0
  %4592 = vmatpush2.msra.mxu0 0.0
  %4593 = vmatprep.subr.mxu0 0.0
  %4594 = vmatpush2.msra.mxu0 0.0
  %4595 = vmatprep.subr.mxu0 0.0
  %4596 = vmatpush2.msra.mxu0 0.0
  %4597 = vmatprep.subr.mxu0 0.0
  %4598 = vmatpush2.msra.mxu0 0.0
  %4599 = vmatprep.mubr.f32.mxu0 0.0
  %4600 = vmatmul.mubr.f32.gmra.mxu0 %v4344
  %v4601 = vpop.f32.mrf.mxu0
  %v4602 = vadd.f32 0.0, %v4601
  %v4603 = vpop.f32.mrf.mxu0
  %4604 = vmatprep.mubr.f32.mxu0 0.0
  %4605 = vmatmul.mubr.f32.gmra.mxu0 %v4347
  %v4606 = vpop.f32.mrf.mxu0
  %v4607 = vadd.f32 0.0, %v4606
  %v4608 = vpop.f32.mrf.mxu0
  %4609 = vmatprep.mubr.f32.mxu0 0.0
  %4610 = vmatmul.mubr.f32.gmra.mxu0 %v4350
  %v4611 = vpop.f32.mrf.mxu0
  %v4612 = vadd.f32 0.0, %v4611
  %v4613 = vpop.f32.mrf.mxu0
  %4614 = vmatprep.mubr.f32.mxu0 0.0
  %4615 = vmatmul.mubr.f32.gmra.mxu0 %v4353
  %v4616 = vpop.f32.mrf.mxu0
  %v4617 = vadd.f32 0.0, %v4616
  %v4618 = vpop.f32.mrf.mxu0
  %4619 = vmatprep.mubr.f32.mxu0 0.0
  %4620 = vmatmul.mubr.f32.gmra.mxu0 %v4356
  %v4621 = vpop.f32.mrf.mxu0
  %v4622 = vadd.f32 0.0, %v4621
  %v4623 = vpop.f32.mrf.mxu0
  %4624 = vmatprep.mubr.f32.mxu0 0.0
  %4625 = vmatmul.mubr.f32.gmra.mxu0 %v4359
  %v4626 = vpop.f32.mrf.mxu0
  %v4627 = vadd.f32 0.0, %v4626
  %v4628 = vpop.f32.mrf.mxu0
  %4629 = vmatprep.mubr.f32.mxu0 0.0
  %4630 = vmatmul.mubr.f32.gmra.mxu0 %v4362
  %v4631 = vpop.f32.mrf.mxu0
  %v4632 = vadd.f32 0.0, %v4631
  %v4633 = vpop.f32.mrf.mxu0
  %4634 = vmatprep.mubr.f32.mxu0 0.0
  %4635 = vmatmul.mubr.f32.gmra.mxu0 %v4365
  %v4636 = vpop.f32.mrf.mxu0
  %v4637 = vadd.f32 0.0, %v4636
  %v4638 = vpop.f32.mrf.mxu0
  %4639 = vmatprep.mubr.f32.mxu0 0.0
  %4640 = vmatmul.mubr.f32.gmra.mxu0 %v4368
  %v4641 = vpop.f32.mrf.mxu0
  %v4642 = vadd.f32 0.0, %v4641
  %v4643 = vpop.f32.mrf.mxu0
  %4644 = vmatprep.mubr.f32.mxu0 0.0
  %4645 = vmatmul.mubr.f32.gmra.mxu0 %v4371
  %v4646 = vpop.f32.mrf.mxu0
  %v4647 = vadd.f32 0.0, %v4646
  %v4648 = vpop.f32.mrf.mxu0
  %4649 = vmatprep.mubr.f32.mxu0 0.0
  %4650 = vmatmul.mubr.f32.gmra.mxu0 %v4374
  %v4651 = vpop.f32.mrf.mxu0
  %v4652 = vadd.f32 0.0, %v4651
  %v4653 = vpop.f32.mrf.mxu0
  %4654 = vmatprep.mubr.f32.mxu0 0.0
  %4655 = vmatmul.mubr.f32.gmra.mxu0 %v4377
  %v4656 = vpop.f32.mrf.mxu0
  %v4657 = vadd.f32 0.0, %v4656
  %v4658 = vpop.f32.mrf.mxu0
  %4659 = vmatprep.mubr.f32.mxu0 0.0
  %4660 = vmatmul.mubr.f32.gmra.mxu0 %v4380
  %v4661 = vpop.f32.mrf.mxu0
  %v4662 = vadd.f32 0.0, %v4661
  %v4663 = vpop.f32.mrf.mxu0
  %4664 = vmatprep.mubr.f32.mxu0 0.0
  %4665 = vmatmul.mubr.f32.gmra.mxu0 %v4383
  %v4666 = vpop.f32.mrf.mxu0
  %v4667 = vadd.f32 0.0, %v4666
  %v4668 = vpop.f32.mrf.mxu0
  %4669 = vmatprep.mubr.f32.mxu0 0.0
  %4670 = vmatmul.mubr.f32.gmra.mxu0 %v4386
  %v4671 = vpop.f32.mrf.mxu0
  %v4672 = vadd.f32 0.0, %v4671
  %v4673 = vpop.f32.mrf.mxu0
  %4674 = vmatprep.mubr.f32.mxu0 0.0
  %4675 = vmatmul.mubr.f32.gmra.mxu0 %v4389
  %v4676 = vpop.f32.mrf.mxu0
  %v4677 = vadd.f32 0.0, %v4676
  %v4678 = vpop.f32.mrf.mxu0
  %4679 = vmatprep.mubr.f32.mxu0 0.0
  %4680 = vmatmul.mubr.f32.gmra.mxu0 %v4392
  %v4681 = vpop.f32.mrf.mxu0
  %v4682 = vadd.f32 0.0, %v4681
  %v4683 = vpop.f32.mrf.mxu0
  %4684 = vmatprep.mubr.f32.mxu0 0.0
  %4685 = vmatmul.mubr.f32.gmra.mxu0 %v4395
  %v4686 = vpop.f32.mrf.mxu0
  %v4687 = vadd.f32 0.0, %v4686
  %v4688 = vpop.f32.mrf.mxu0
  %4689 = vmatprep.mubr.f32.mxu0 0.0
  %4690 = vmatmul.mubr.f32.gmra.mxu0 %v4398
  %v4691 = vpop.f32.mrf.mxu0
  %v4692 = vadd.f32 0.0, %v4691
  %v4693 = vpop.f32.mrf.mxu0
  %4694 = vmatprep.mubr.f32.mxu0 0.0
  %4695 = vmatmul.mubr.f32.gmra.mxu0 %v4401
  %v4696 = vpop.f32.mrf.mxu0
  %v4697 = vadd.f32 0.0, %v4696
  %v4698 = vpop.f32.mrf.mxu0
  %4699 = vmatprep.mubr.f32.mxu0 0.0
  %4700 = vmatmul.mubr.f32.gmra.mxu0 %v4404
  %v4701 = vpop.f32.mrf.mxu0
  %v4702 = vadd.f32 0.0, %v4701
  %v4703 = vpop.f32.mrf.mxu0
  %4704 = vmatprep.mubr.f32.mxu0 0.0
  %4705 = vmatmul.mubr.f32.gmra.mxu0 %v4407
  %v4706 = vpop.f32.mrf.mxu0
  %v4707 = vadd.f32 0.0, %v4706
  %v4708 = vpop.f32.mrf.mxu0
  %4709 = vmatprep.mubr.f32.mxu0 0.0
  %4710 = vmatmul.mubr.f32.gmra.mxu0 %v4410
  %v4711 = vpop.f32.mrf.mxu0
  %v4712 = vadd.f32 0.0, %v4711
  %v4713 = vpop.f32.mrf.mxu0
  %4714 = vmatprep.mubr.f32.mxu0 0.0
  %4715 = vmatmul.mubr.f32.gmra.mxu0 %v4413
  %v4716 = vpop.f32.mrf.mxu0
  %v4717 = vadd.f32 0.0, %v4716
  %v4718 = vpop.f32.mrf.mxu0
  %4719 = vmatprep.mubr.f32.mxu0 0.0
  %4720 = vmatmul.mubr.f32.gmra.mxu0 %v4416
  %v4721 = vpop.f32.mrf.mxu0
  %v4722 = vadd.f32 0.0, %v4721
  %v4723 = vpop.f32.mrf.mxu0
  %4724 = vmatprep.mubr.f32.mxu0 0.0
  %4725 = vmatmul.mubr.f32.gmra.mxu0 %v4419
  %v4726 = vpop.f32.mrf.mxu0
  %v4727 = vadd.f32 0.0, %v4726
  %v4728 = vpop.f32.mrf.mxu0
  %4729 = vmatprep.mubr.f32.mxu0 0.0
  %4730 = vmatmul.mubr.f32.gmra.mxu0 %v4422
  %v4731 = vpop.f32.mrf.mxu0
  %v4732 = vadd.f32 0.0, %v4731
  %v4733 = vpop.f32.mrf.mxu0
  %4734 = vmatprep.mubr.f32.mxu0 0.0
  %4735 = vmatmul.mubr.f32.gmra.mxu0 %v4425
  %v4736 = vpop.f32.mrf.mxu0
  %v4737 = vadd.f32 0.0, %v4736
  %v4738 = vpop.f32.mrf.mxu0
  %4739 = vmatprep.mubr.f32.mxu0 0.0
  %4740 = vmatmul.mubr.f32.gmra.mxu0 %v4428
  %v4741 = vpop.f32.mrf.mxu0
  %v4742 = vadd.f32 0.0, %v4741
  %v4743 = vpop.f32.mrf.mxu0
  %4744 = vmatprep.mubr.f32.mxu0 0.0
  %4745 = vmatmul.mubr.f32.gmra.mxu0 %v4431
  %v4746 = vpop.f32.mrf.mxu0
  %v4747 = vadd.f32 0.0, %v4746
  %v4748 = vpop.f32.mrf.mxu0
  %4749 = vmatprep.mubr.f32.mxu0 0.0
  %4750 = vmatmul.mubr.f32.gmra.mxu0 %v4434
  %v4751 = vpop.f32.mrf.mxu0
  %v4752 = vadd.f32 0.0, %v4751
  %v4753 = vpop.f32.mrf.mxu0
  %4754 = vmatprep.mubr.f32.mxu0 0.0
  %4755 = vmatmul.mubr.f32.gmra.mxu0 %v4437
  %v4756 = vpop.f32.mrf.mxu0
  %v4757 = vadd.f32 0.0, %v4756
  %v4758 = vpop.f32.mrf.mxu0
  %4759 = vmatprep.mubr.f32.mxu0 0.0
  %4760 = vmatmul.mubr.f32.gmra.mxu0 %v4440
  %v4761 = vpop.f32.mrf.mxu0
  %v4762 = vadd.f32 0.0, %v4761
  %v4763 = vpop.f32.mrf.mxu0
  %4764 = vmatprep.mubr.f32.mxu0 0.0
  %4765 = vmatmul.mubr.f32.gmra.mxu0 %v4443
  %v4766 = vpop.f32.mrf.mxu0
  %v4767 = vadd.f32 0.0, %v4766
  %v4768 = vpop.f32.mrf.mxu0
  %4769 = vmatprep.mubr.f32.mxu0 0.0
  %4770 = vmatmul.mubr.f32.gmra.mxu0 %v4446
  %v4771 = vpop.f32.mrf.mxu0
  %v4772 = vadd.f32 0.0, %v4771
  %v4773 = vpop.f32.mrf.mxu0
  %4774 = vmatprep.mubr.f32.mxu0 0.0
  %4775 = vmatmul.mubr.f32.gmra.mxu0 %v4449
  %v4776 = vpop.f32.mrf.mxu0
  %v4777 = vadd.f32 0.0, %v4776
  %v4778 = vpop.f32.mrf.mxu0
  %4779 = vmatprep.mubr.f32.mxu0 0.0
  %4780 = vmatmul.mubr.f32.gmra.mxu0 %v4452
  %v4781 = vpop.f32.mrf.mxu0
  %v4782 = vadd.f32 0.0, %v4781
  %v4783 = vpop.f32.mrf.mxu0
  %4784 = vmatprep.mubr.f32.mxu0 0.0
  %4785 = vmatmul.mubr.f32.gmra.mxu0 %v4455
  %v4786 = vpop.f32.mrf.mxu0
  %v4787 = vadd.f32 0.0, %v4786
  %v4788 = vpop.f32.mrf.mxu0
  %4789 = vmatprep.mubr.f32.mxu0 0.0
  %4790 = vmatmul.mubr.f32.gmra.mxu0 %v4458
  %v4791 = vpop.f32.mrf.mxu0
  %v4792 = vadd.f32 0.0, %v4791
  %v4793 = vpop.f32.mrf.mxu0
  %4794 = vmatprep.mubr.f32.mxu0 0.0
  %4795 = vmatmul.mubr.f32.gmra.mxu0 %v4461
  %v4796 = vpop.f32.mrf.mxu0
  %v4797 = vadd.f32 0.0, %v4796
  %v4798 = vpop.f32.mrf.mxu0
  %4799 = vmatprep.mubr.f32.mxu0 0.0
  %4800 = vmatmul.mubr.f32.gmra.mxu0 %v4464
  %v4801 = vpop.f32.mrf.mxu0
  %v4802 = vadd.f32 0.0, %v4801
  %v4803 = vpop.f32.mrf.mxu0
  %4804 = vmatprep.mubr.f32.mxu0 0.0
  %4805 = vmatmul.mubr.f32.gmra.mxu0 %v4467
  %v4806 = vpop.f32.mrf.mxu0
  %v4807 = vadd.f32 0.0, %v4806
  %v4808 = vpop.f32.mrf.mxu0
  %4809 = vmatprep.mubr.f32.mxu0 0.0
  %4810 = vmatmul.mubr.f32.gmra.mxu0 %v4470
  %v4811 = vpop.f32.mrf.mxu0
  %v4812 = vadd.f32 0.0, %v4811
  %v4813 = vpop.f32.mrf.mxu0
  %4814 = vmatprep.mubr.f32.mxu0 0.0
  %4815 = vmatmul.mubr.f32.gmra.mxu0 %v4473
  %v4816 = vpop.f32.mrf.mxu0
  %v4817 = vadd.f32 0.0, %v4816
  %v4818 = vpop.f32.mrf.mxu0
  %4819 = vmatprep.mubr.f32.mxu0 0.0
  %4820 = vmatmul.mubr.f32.gmra.mxu0 %v4476
  %v4821 = vpop.f32.mrf.mxu0
  %v4822 = vadd.f32 0.0, %v4821
  %v4823 = vpop.f32.mrf.mxu0
  %4824 = vmatprep.mubr.f32.mxu0 0.0
  %4825 = vmatmul.mubr.f32.gmra.mxu0 %v4479
  %v4826 = vpop.f32.mrf.mxu0
  %v4827 = vadd.f32 0.0, %v4826
  %v4828 = vpop.f32.mrf.mxu0
  %4829 = vmatprep.mubr.f32.mxu0 0.0
  %4830 = vmatmul.mubr.f32.gmra.mxu0 %v4482
  %v4831 = vpop.f32.mrf.mxu0
  %v4832 = vadd.f32 0.0, %v4831
  %v4833 = vpop.f32.mrf.mxu0
  %4834 = vmatprep.mubr.f32.mxu0 0.0
  %4835 = vmatmul.mubr.f32.gmra.mxu0 %v4485
  %v4836 = vpop.f32.mrf.mxu0
  %v4837 = vadd.f32 0.0, %v4836
  %v4838 = vpop.f32.mrf.mxu0
  %4839 = vmatprep.mubr.f32.mxu0 0.0
  %4840 = vmatmul.mubr.f32.gmra.mxu0 %v4488
  %v4841 = vpop.f32.mrf.mxu0
  %v4842 = vadd.f32 0.0, %v4841
  %v4843 = vpop.f32.mrf.mxu0
  %4844 = vmatprep.mubr.f32.mxu0 0.0
  %4845 = vmatmul.mubr.f32.gmra.mxu0 %v4491
  %v4846 = vpop.f32.mrf.mxu0
  %v4847 = vadd.f32 0.0, %v4846
  %v4848 = vpop.f32.mrf.mxu0
  %4849 = vmatprep.mubr.f32.mxu0 0.0
  %4850 = vmatmul.mubr.f32.gmra.mxu0 %v4494
  %v4851 = vpop.f32.mrf.mxu0
  %v4852 = vadd.f32 0.0, %v4851
  %v4853 = vpop.f32.mrf.mxu0
  %4854 = vmatprep.mubr.f32.mxu0 0.0
  %4855 = vmatmul.mubr.f32.gmra.mxu0 %v4497
  %v4856 = vpop.f32.mrf.mxu0
  %v4857 = vadd.f32 0.0, %v4856
  %v4858 = vpop.f32.mrf.mxu0
  %4859 = vmatprep.mubr.f32.mxu0 0.0
  %4860 = vmatmul.mubr.f32.gmra.mxu0 %v4500
  %v4861 = vpop.f32.mrf.mxu0
  %v4862 = vadd.f32 0.0, %v4861
  %v4863 = vpop.f32.mrf.mxu0
  %4864 = vmatprep.mubr.f32.mxu0 0.0
  %4865 = vmatmul.mubr.f32.gmra.mxu0 %v4503
  %v4866 = vpop.f32.mrf.mxu0
  %v4867 = vadd.f32 0.0, %v4866
  %v4868 = vpop.f32.mrf.mxu0
  %4869 = vmatprep.mubr.f32.mxu0 0.0
  %4870 = vmatmul.mubr.f32.gmra.mxu0 %v4506
  %v4871 = vpop.f32.mrf.mxu0
  %v4872 = vadd.f32 0.0, %v4871
  %v4873 = vpop.f32.mrf.mxu0
  %4874 = vmatprep.mubr.f32.mxu0 0.0
  %4875 = vmatmul.mubr.f32.gmra.mxu0 %v4509
  %v4876 = vpop.f32.mrf.mxu0
  %v4877 = vadd.f32 0.0, %v4876
  %v4878 = vpop.f32.mrf.mxu0
  %4879 = vmatprep.mubr.f32.mxu0 0.0
  %4880 = vmatmul.mubr.f32.gmra.mxu0 %v4512
  %v4881 = vpop.f32.mrf.mxu0
  %v4882 = vadd.f32 0.0, %v4881
  %v4883 = vpop.f32.mrf.mxu0
  %4884 = vmatprep.mubr.f32.mxu0 0.0
  %4885 = vmatmul.mubr.f32.gmra.mxu0 %v4515
  %v4886 = vpop.f32.mrf.mxu0
  %v4887 = vadd.f32 0.0, %v4886
  %v4888 = vpop.f32.mrf.mxu0
  %4889 = vmatprep.mubr.f32.mxu0 0.0
  %4890 = vmatmul.mubr.f32.gmra.mxu0 %v4518
  %v4891 = vpop.f32.mrf.mxu0
  %v4892 = vadd.f32 0.0, %v4891
  %v4893 = vpop.f32.mrf.mxu0
  %4894 = vmatprep.mubr.f32.mxu0 0.0
  %4895 = vmatmul.mubr.f32.gmra.mxu0 %v4521
  %v4896 = vpop.f32.mrf.mxu0
  %v4897 = vadd.f32 0.0, %v4896
  %v4898 = vpop.f32.mrf.mxu0
  %4899 = vmatprep.mubr.f32.mxu0 0.0
  %4900 = vmatmul.mubr.f32.gmra.mxu0 %v4524
  %v4901 = vpop.f32.mrf.mxu0
  %v4902 = vadd.f32 0.0, %v4901
  %v4903 = vpop.f32.mrf.mxu0
  %4904 = vmatprep.mubr.f32.mxu0 0.0
  %4905 = vmatmul.mubr.f32.gmra.mxu0 %v4527
  %v4906 = vpop.f32.mrf.mxu0
  %v4907 = vadd.f32 0.0, %v4906
  %v4908 = vpop.f32.mrf.mxu0
  %4909 = vmatprep.mubr.f32.mxu0 0.0
  %4910 = vmatmul.mubr.f32.gmra.mxu0 %v4530
  %v4911 = vpop.f32.mrf.mxu0
  %v4912 = vadd.f32 0.0, %v4911
  %v4913 = vpop.f32.mrf.mxu0
  %4914 = vmatprep.mubr.f32.mxu0 0.0
  %4915 = vmatmul.mubr.f32.gmra.mxu0 %v4533
  %v4916 = vpop.f32.mrf.mxu0
  %v4917 = vadd.f32 0.0, %v4916
  %v4918 = vpop.f32.mrf.mxu0
  %4919 = vdwg.mxu0
  %v4920 = vadd.f32 %v4210, %v4602
  %v4921 = vadd.f32 %v4211, %v4607
  %v4922 = vadd.f32 %v4212, %v4612
  %v4923 = vadd.f32 %v4213, %v4617
  %v4924 = vadd.f32 %v4214, %v4622
  %v4925 = vadd.f32 %v4215, %v4627
  %v4926 = vadd.f32 %v4216, %v4632
  %v4927 = vadd.f32 %v4217, %v4637
  %v4928 = vadd.f32 %v4218, %v4642
  %v4929 = vadd.f32 %v4219, %v4647
  %v4930 = vadd.f32 %v4220, %v4652
  %v4931 = vadd.f32 %v4221, %v4657
  %v4932 = vadd.f32 %v4222, %v4662
  %v4933 = vadd.f32 %v4223, %v4667
  %v4934 = vadd.f32 %v4224, %v4672
  %v4935 = vadd.f32 %v4225, %v4677
  %v4936 = vadd.f32 %v4226, %v4682
  %v4937 = vadd.f32 %v4227, %v4687
  %v4938 = vadd.f32 %v4228, %v4692
  %v4939 = vadd.f32 %v4229, %v4697
  %v4940 = vadd.f32 %v4230, %v4702
  %v4941 = vadd.f32 %v4231, %v4707
  %v4942 = vadd.f32 %v4232, %v4712
  %v4943 = vadd.f32 %v4233, %v4717
  %v4944 = vadd.f32 %v4234, %v4722
  %v4945 = vadd.f32 %v4235, %v4727
  %v4946 = vadd.f32 %v4236, %v4732
  %v4947 = vadd.f32 %v4237, %v4737
  %v4948 = vadd.f32 %v4238, %v4742
  %v4949 = vadd.f32 %v4239, %v4747
  %v4950 = vadd.f32 %v4240, %v4752
  %v4951 = vadd.f32 %v4241, %v4757
  %v4952 = vadd.f32 %v4242, %v4762
  %v4953 = vadd.f32 %v4243, %v4767
  %v4954 = vadd.f32 %v4244, %v4772
  %v4955 = vadd.f32 %v4245, %v4777
  %v4956 = vadd.f32 %v4246, %v4782
  %v4957 = vadd.f32 %v4247, %v4787
  %v4958 = vadd.f32 %v4248, %v4792
  %v4959 = vadd.f32 %v4249, %v4797
  %v4960 = vadd.f32 %v4250, %v4802
  %v4961 = vadd.f32 %v4251, %v4807
  %v4962 = vadd.f32 %v4252, %v4812
  %v4963 = vadd.f32 %v4253, %v4817
  %v4964 = vadd.f32 %v4254, %v4822
  %v4965 = vadd.f32 %v4255, %v4827
  %v4966 = vadd.f32 %v4256, %v4832
  %v4967 = vadd.f32 %v4257, %v4837
  %v4968 = vadd.f32 %v4258, %v4842
  %v4969 = vadd.f32 %v4259, %v4847
  %v4970 = vadd.f32 %v4260, %v4852
  %v4971 = vadd.f32 %v4261, %v4857
  %v4972 = vadd.f32 %v4262, %v4862
  %v4973 = vadd.f32 %v4263, %v4867
  %v4974 = vadd.f32 %v4264, %v4872
  %v4975 = vadd.f32 %v4265, %v4877
  %v4976 = vadd.f32 %v4266, %v4882
  %v4977 = vadd.f32 %v4267, %v4887
  %v4978 = vadd.f32 %v4268, %v4892
  %v4979 = vadd.f32 %v4269, %v4897
  %v4980 = vadd.f32 %v4270, %v4902
  %v4981 = vadd.f32 %v4271, %v4907
  %v4982 = vadd.f32 %v4272, %v4912
  %v4983 = vadd.f32 %v4273, %v4917
  %s4984 = scalar_lea.vmem [#allocation2], 160
  %v4985 = vld [vmem:[%s4984] sm:$0xff]
  %v4986 = vld [vmem:[%s4984 + $0x8] sm:$0xff]
  %v4987 = vld [vmem:[%s4984 + $0x10] sm:$0xff]
  %v4988 = vld [vmem:[%s4984 + $0x18] sm:$0xff]
  %v4989 = vld [vmem:[%s4984 + $0x20] sm:$0xff]
  %v4990 = vld [vmem:[%s4984 + $0x28] sm:$0xff]
  %v4991 = vld [vmem:[%s4984 + $0x30] sm:$0xff]
  %v4992 = vld [vmem:[%s4984 + $0x38] sm:$0xff]
  %v4993 = vld [vmem:[%s4984 + $0x50] sm:$0xff]
  %v4994 = vld [vmem:[%s4984 + $0x58] sm:$0xff]
  %v4995 = vld [vmem:[%s4984 + $0x60] sm:$0xff]
  %v4996 = vld [vmem:[%s4984 + $0x68] sm:$0xff]
  %v4997 = vld [vmem:[%s4984 + $0x70] sm:$0xff]
  %v4998 = vld [vmem:[%s4984 + $0x78] sm:$0xff]
  %v4999 = vld [vmem:[%s4984 + $0x80] sm:$0xff]
  %v5000 = vld [vmem:[%s4984 + $0x88] sm:$0xff]
  %v5001 = vld [vmem:[%s4984 + $0xa0] sm:$0xff]
  %v5002 = vld [vmem:[%s4984 + $0xa8] sm:$0xff]
  %v5003 = vld [vmem:[%s4984 + $0xb0] sm:$0xff]
  %v5004 = vld [vmem:[%s4984 + $0xb8] sm:$0xff]
  %v5005 = vld [vmem:[%s4984 + $0xc0] sm:$0xff]
  %v5006 = vld [vmem:[%s4984 + $0xc8] sm:$0xff]
  %v5007 = vld [vmem:[%s4984 + $0xd0] sm:$0xff]
  %v5008 = vld [vmem:[%s4984 + $0xd8] sm:$0xff]
  %v5009 = vld [vmem:[%s4984 + $0xf0] sm:$0xff]
  %v5010 = vld [vmem:[%s4984 + $0xf8] sm:$0xff]
  %v5011 = vld [vmem:[%s4984 + $0x100] sm:$0xff]
  %v5012 = vld [vmem:[%s4984 + $0x108] sm:$0xff]
  %v5013 = vld [vmem:[%s4984 + $0x110] sm:$0xff]
  %v5014 = vld [vmem:[%s4984 + $0x118] sm:$0xff]
  %v5015 = vld [vmem:[%s4984 + $0x120] sm:$0xff]
  %v5016 = vld [vmem:[%s4984 + $0x128] sm:$0xff]
  %v5017 = vld [vmem:[%s4984 + $0x140] sm:$0xff]
  %v5018 = vld [vmem:[%s4984 + $0x148] sm:$0xff]
  %v5019 = vld [vmem:[%s4984 + $0x150] sm:$0xff]
  %v5020 = vld [vmem:[%s4984 + $0x158] sm:$0xff]
  %v5021 = vld [vmem:[%s4984 + $0x160] sm:$0xff]
  %v5022 = vld [vmem:[%s4984 + $0x168] sm:$0xff]
  %v5023 = vld [vmem:[%s4984 + $0x170] sm:$0xff]
  %v5024 = vld [vmem:[%s4984 + $0x178] sm:$0xff]
  %v5025 = vld [vmem:[%s4984 + $0x190] sm:$0xff]
  %v5026 = vld [vmem:[%s4984 + $0x198] sm:$0xff]
  %v5027 = vld [vmem:[%s4984 + $0x1a0] sm:$0xff]
  %v5028 = vld [vmem:[%s4984 + $0x1a8] sm:$0xff]
  %v5029 = vld [vmem:[%s4984 + $0x1b0] sm:$0xff]
  %v5030 = vld [vmem:[%s4984 + $0x1b8] sm:$0xff]
  %v5031 = vld [vmem:[%s4984 + $0x1c0] sm:$0xff]
  %v5032 = vld [vmem:[%s4984 + $0x1c8] sm:$0xff]
  %v5033 = vld [vmem:[%s4984 + $0x1e0] sm:$0xff]
  %v5034 = vld [vmem:[%s4984 + $0x1e8] sm:$0xff]
  %v5035 = vld [vmem:[%s4984 + $0x1f0] sm:$0xff]
  %v5036 = vld [vmem:[%s4984 + $0x1f8] sm:$0xff]
  %v5037 = vld [vmem:[%s4984 + $0x200] sm:$0xff]
  %v5038 = vld [vmem:[%s4984 + $0x208] sm:$0xff]
  %v5039 = vld [vmem:[%s4984 + $0x210] sm:$0xff]
  %v5040 = vld [vmem:[%s4984 + $0x218] sm:$0xff]
  %v5041 = vld [vmem:[%s4984 + $0x230] sm:$0xff]
  %v5042 = vld [vmem:[%s4984 + $0x238] sm:$0xff]
  %v5043 = vld [vmem:[%s4984 + $0x240] sm:$0xff]
  %v5044 = vld [vmem:[%s4984 + $0x248] sm:$0xff]
  %v5045 = vld [vmem:[%s4984 + $0x250] sm:$0xff]
  %v5046 = vld [vmem:[%s4984 + $0x258] sm:$0xff]
  %v5047 = vld [vmem:[%s4984 + $0x260] sm:$0xff]
  %v5048 = vld [vmem:[%s4984 + $0x268] sm:$0xff]
  %v5049 = vld [vmem:[%s4 + $0xc0] sm:$0xff]
  %v5050 = vld [vmem:[%s4 + $0xc8] sm:$0xff]
  %v5051 = vld [vmem:[%s4 + $0xd0] sm:$0xff]
  %v5052 = vld [vmem:[%s4 + $0xd8] sm:$0xff]
  %v5054 = vsel %vm750, %v4985, 0
  %v5057 = vsel %vm750, %v4986, 0
  %v5060 = vsel %vm750, %v4987, 0
  %v5063 = vsel %vm750, %v4988, 0
  %v5066 = vsel %vm750, %v4989, 0
  %v5069 = vsel %vm750, %v4990, 0
  %v5072 = vsel %vm750, %v4991, 0
  %v5075 = vsel %vm750, %v4992, 0
  %v5078 = vsel %vm750, %v4993, 0
  %v5081 = vsel %vm750, %v4994, 0
  %v5084 = vsel %vm750, %v4995, 0
  %v5087 = vsel %vm750, %v4996, 0
  %v5090 = vsel %vm750, %v4997, 0
  %v5093 = vsel %vm750, %v4998, 0
  %v5096 = vsel %vm750, %v4999, 0
  %v5099 = vsel %vm750, %v5000, 0
  %v5102 = vsel %vm750, %v5001, 0
  %v5105 = vsel %vm750, %v5002, 0
  %v5108 = vsel %vm750, %v5003, 0
  %v5111 = vsel %vm750, %v5004, 0
  %v5114 = vsel %vm750, %v5005, 0
  %v5117 = vsel %vm750, %v5006, 0
  %v5120 = vsel %vm750, %v5007, 0
  %v5123 = vsel %vm750, %v5008, 0
  %v5126 = vsel %vm750, %v5009, 0
  %v5129 = vsel %vm750, %v5010, 0
  %v5132 = vsel %vm750, %v5011, 0
  %v5135 = vsel %vm750, %v5012, 0
  %v5138 = vsel %vm750, %v5013, 0
  %v5141 = vsel %vm750, %v5014, 0
  %v5144 = vsel %vm750, %v5015, 0
  %v5147 = vsel %vm750, %v5016, 0
  %v5150 = vsel %vm750, %v5017, 0
  %v5153 = vsel %vm750, %v5018, 0
  %v5156 = vsel %vm750, %v5019, 0
  %v5159 = vsel %vm750, %v5020, 0
  %v5162 = vsel %vm750, %v5021, 0
  %v5165 = vsel %vm750, %v5022, 0
  %v5168 = vsel %vm750, %v5023, 0
  %v5171 = vsel %vm750, %v5024, 0
  %v5174 = vsel %vm750, %v5025, 0
  %v5177 = vsel %vm750, %v5026, 0
  %v5180 = vsel %vm750, %v5027, 0
  %v5183 = vsel %vm750, %v5028, 0
  %v5186 = vsel %vm750, %v5029, 0
  %v5189 = vsel %vm750, %v5030, 0
  %v5192 = vsel %vm750, %v5031, 0
  %v5195 = vsel %vm750, %v5032, 0
  %v5198 = vsel %vm750, %v5033, 0
  %v5201 = vsel %vm750, %v5034, 0
  %v5204 = vsel %vm750, %v5035, 0
  %v5207 = vsel %vm750, %v5036, 0
  %v5210 = vsel %vm750, %v5037, 0
  %v5213 = vsel %vm750, %v5038, 0
  %v5216 = vsel %vm750, %v5039, 0
  %v5219 = vsel %vm750, %v5040, 0
  %v5222 = vsel %vm750, %v5041, 0
  %v5225 = vsel %vm750, %v5042, 0
  %v5228 = vsel %vm750, %v5043, 0
  %v5231 = vsel %vm750, %v5044, 0
  %v5234 = vsel %vm750, %v5045, 0
  %v5237 = vsel %vm750, %v5046, 0
  %v5240 = vsel %vm750, %v5047, 0
  %v5243 = vsel %vm750, %v5048, 0
  %5245 = vmatprep.subr.mxu0 0.0
  %5246 = vmatpush1.msra.mxu0 0.0
  %5247 = vmatprep.subr.mxu0 0.0
  %5248 = vmatpush1.msra.mxu0 0.0
  %5249 = vmatprep.subr.mxu0 0.0
  %5250 = vmatpush1.msra.mxu0 0.0
  %5251 = vmatprep.subr.mxu0 0.0
  %5252 = vmatpush1.msra.mxu0 0.0
  %5253 = vmatprep.subr.mxu0 0.0
  %5254 = vmatpush1.msra.mxu0 0.0
  %5255 = vmatprep.subr.mxu0 0.0
  %5256 = vmatpush1.msra.mxu0 0.0
  %5257 = vmatprep.subr.mxu0 0.0
  %5258 = vmatpush1.msra.mxu0 0.0
  %5259 = vmatprep.subr.mxu0 0.0
  %5260 = vmatpush1.msra.mxu0 0.0
  %5261 = vmatprep.subr.mxu0 0.0
  %5262 = vmatpush1.msra.mxu0 0.0
  %5263 = vmatprep.subr.mxu0 0.0
  %5264 = vmatpush1.msra.mxu0 0.0
  %5265 = vmatprep.subr.mxu0 0.0
  %5266 = vmatpush1.msra.mxu0 0.0
  %5267 = vmatprep.subr.mxu0 0.0
  %5268 = vmatpush1.msra.mxu0 0.0
  %5269 = vmatprep.subr.mxu0 0.0
  %5270 = vmatpush1.msra.mxu0 %v5052
  %5271 = vmatprep.subr.mxu0 0.0
  %5272 = vmatpush1.msra.mxu0 %v5051
  %5273 = vmatprep.subr.mxu0 0.0
  %5274 = vmatpush1.msra.mxu0 %v5050
  %5275 = vmatprep.subr.mxu0 0.0
  %5276 = vmatpush1.msra.mxu0 %v5049
  %5277 = vmatprep.subr.mxu0 0.0
  %5278 = vmatpush2.msra.mxu0 0.0
  %5279 = vmatprep.subr.mxu0 0.0
  %5280 = vmatpush2.msra.mxu0 0.0
  %5281 = vmatprep.subr.mxu0 0.0
  %5282 = vmatpush2.msra.mxu0 0.0
  %5283 = vmatprep.subr.mxu0 0.0
  %5284 = vmatpush2.msra.mxu0 0.0
  %5285 = vmatprep.subr.mxu0 0.0
  %5286 = vmatpush2.msra.mxu0 0.0
  %5287 = vmatprep.subr.mxu0 0.0
  %5288 = vmatpush2.msra.mxu0 0.0
  %5289 = vmatprep.subr.mxu0 0.0
  %5290 = vmatpush2.msra.mxu0 0.0
  %5291 = vmatprep.subr.mxu0 0.0
  %5292 = vmatpush2.msra.mxu0 0.0
  %5293 = vmatprep.subr.mxu0 0.0
  %5294 = vmatpush2.msra.mxu0 0.0
  %5295 = vmatprep.subr.mxu0 0.0
  %5296 = vmatpush2.msra.mxu0 0.0
  %5297 = vmatprep.subr.mxu0 0.0
  %5298 = vmatpush2.msra.mxu0 0.0
  %5299 = vmatprep.subr.mxu0 0.0
  %5300 = vmatpush2.msra.mxu0 0.0
  %5301 = vmatprep.subr.mxu0 0.0
  %5302 = vmatpush2.msra.mxu0 0.0
  %5303 = vmatprep.subr.mxu0 0.0
  %5304 = vmatpush2.msra.mxu0 0.0
  %5305 = vmatprep.subr.mxu0 0.0
  %5306 = vmatpush2.msra.mxu0 0.0
  %5307 = vmatprep.subr.mxu0 0.0
  %5308 = vmatpush2.msra.mxu0 0.0
  %5309 = vmatprep.mubr.f32.mxu0 0.0
  %5310 = vmatmul.mubr.f32.gmra.mxu0 %v5054
  %v5311 = vpop.f32.mrf.mxu0
  %v5312 = vadd.f32 0.0, %v5311
  %v5313 = vpop.f32.mrf.mxu0
  %5314 = vmatprep.mubr.f32.mxu0 0.0
  %5315 = vmatmul.mubr.f32.gmra.mxu0 %v5057
  %v5316 = vpop.f32.mrf.mxu0
  %v5317 = vadd.f32 0.0, %v5316
  %v5318 = vpop.f32.mrf.mxu0
  %5319 = vmatprep.mubr.f32.mxu0 0.0
  %5320 = vmatmul.mubr.f32.gmra.mxu0 %v5060
  %v5321 = vpop.f32.mrf.mxu0
  %v5322 = vadd.f32 0.0, %v5321
  %v5323 = vpop.f32.mrf.mxu0
  %5324 = vmatprep.mubr.f32.mxu0 0.0
  %5325 = vmatmul.mubr.f32.gmra.mxu0 %v5063
  %v5326 = vpop.f32.mrf.mxu0
  %v5327 = vadd.f32 0.0, %v5326
  %v5328 = vpop.f32.mrf.mxu0
  %5329 = vmatprep.mubr.f32.mxu0 0.0
  %5330 = vmatmul.mubr.f32.gmra.mxu0 %v5066
  %v5331 = vpop.f32.mrf.mxu0
  %v5332 = vadd.f32 0.0, %v5331
  %v5333 = vpop.f32.mrf.mxu0
  %5334 = vmatprep.mubr.f32.mxu0 0.0
  %5335 = vmatmul.mubr.f32.gmra.mxu0 %v5069
  %v5336 = vpop.f32.mrf.mxu0
  %v5337 = vadd.f32 0.0, %v5336
  %v5338 = vpop.f32.mrf.mxu0
  %5339 = vmatprep.mubr.f32.mxu0 0.0
  %5340 = vmatmul.mubr.f32.gmra.mxu0 %v5072
  %v5341 = vpop.f32.mrf.mxu0
  %v5342 = vadd.f32 0.0, %v5341
  %v5343 = vpop.f32.mrf.mxu0
  %5344 = vmatprep.mubr.f32.mxu0 0.0
  %5345 = vmatmul.mubr.f32.gmra.mxu0 %v5075
  %v5346 = vpop.f32.mrf.mxu0
  %v5347 = vadd.f32 0.0, %v5346
  %v5348 = vpop.f32.mrf.mxu0
  %5349 = vmatprep.mubr.f32.mxu0 0.0
  %5350 = vmatmul.mubr.f32.gmra.mxu0 %v5078
  %v5351 = vpop.f32.mrf.mxu0
  %v5352 = vadd.f32 0.0, %v5351
  %v5353 = vpop.f32.mrf.mxu0
  %5354 = vmatprep.mubr.f32.mxu0 0.0
  %5355 = vmatmul.mubr.f32.gmra.mxu0 %v5081
  %v5356 = vpop.f32.mrf.mxu0
  %v5357 = vadd.f32 0.0, %v5356
  %v5358 = vpop.f32.mrf.mxu0
  %5359 = vmatprep.mubr.f32.mxu0 0.0
  %5360 = vmatmul.mubr.f32.gmra.mxu0 %v5084
  %v5361 = vpop.f32.mrf.mxu0
  %v5362 = vadd.f32 0.0, %v5361
  %v5363 = vpop.f32.mrf.mxu0
  %5364 = vmatprep.mubr.f32.mxu0 0.0
  %5365 = vmatmul.mubr.f32.gmra.mxu0 %v5087
  %v5366 = vpop.f32.mrf.mxu0
  %v5367 = vadd.f32 0.0, %v5366
  %v5368 = vpop.f32.mrf.mxu0
  %5369 = vmatprep.mubr.f32.mxu0 0.0
  %5370 = vmatmul.mubr.f32.gmra.mxu0 %v5090
  %v5371 = vpop.f32.mrf.mxu0
  %v5372 = vadd.f32 0.0, %v5371
  %v5373 = vpop.f32.mrf.mxu0
  %5374 = vmatprep.mubr.f32.mxu0 0.0
  %5375 = vmatmul.mubr.f32.gmra.mxu0 %v5093
  %v5376 = vpop.f32.mrf.mxu0
  %v5377 = vadd.f32 0.0, %v5376
  %v5378 = vpop.f32.mrf.mxu0
  %5379 = vmatprep.mubr.f32.mxu0 0.0
  %5380 = vmatmul.mubr.f32.gmra.mxu0 %v5096
  %v5381 = vpop.f32.mrf.mxu0
  %v5382 = vadd.f32 0.0, %v5381
  %v5383 = vpop.f32.mrf.mxu0
  %5384 = vmatprep.mubr.f32.mxu0 0.0
  %5385 = vmatmul.mubr.f32.gmra.mxu0 %v5099
  %v5386 = vpop.f32.mrf.mxu0
  %v5387 = vadd.f32 0.0, %v5386
  %v5388 = vpop.f32.mrf.mxu0
  %5389 = vmatprep.mubr.f32.mxu0 0.0
  %5390 = vmatmul.mubr.f32.gmra.mxu0 %v5102
  %v5391 = vpop.f32.mrf.mxu0
  %v5392 = vadd.f32 0.0, %v5391
  %v5393 = vpop.f32.mrf.mxu0
  %5394 = vmatprep.mubr.f32.mxu0 0.0
  %5395 = vmatmul.mubr.f32.gmra.mxu0 %v5105
  %v5396 = vpop.f32.mrf.mxu0
  %v5397 = vadd.f32 0.0, %v5396
  %v5398 = vpop.f32.mrf.mxu0
  %5399 = vmatprep.mubr.f32.mxu0 0.0
  %5400 = vmatmul.mubr.f32.gmra.mxu0 %v5108
  %v5401 = vpop.f32.mrf.mxu0
  %v5402 = vadd.f32 0.0, %v5401
  %v5403 = vpop.f32.mrf.mxu0
  %5404 = vmatprep.mubr.f32.mxu0 0.0
  %5405 = vmatmul.mubr.f32.gmra.mxu0 %v5111
  %v5406 = vpop.f32.mrf.mxu0
  %v5407 = vadd.f32 0.0, %v5406
  %v5408 = vpop.f32.mrf.mxu0
  %5409 = vmatprep.mubr.f32.mxu0 0.0
  %5410 = vmatmul.mubr.f32.gmra.mxu0 %v5114
  %v5411 = vpop.f32.mrf.mxu0
  %v5412 = vadd.f32 0.0, %v5411
  %v5413 = vpop.f32.mrf.mxu0
  %5414 = vmatprep.mubr.f32.mxu0 0.0
  %5415 = vmatmul.mubr.f32.gmra.mxu0 %v5117
  %v5416 = vpop.f32.mrf.mxu0
  %v5417 = vadd.f32 0.0, %v5416
  %v5418 = vpop.f32.mrf.mxu0
  %5419 = vmatprep.mubr.f32.mxu0 0.0
  %5420 = vmatmul.mubr.f32.gmra.mxu0 %v5120
  %v5421 = vpop.f32.mrf.mxu0
  %v5422 = vadd.f32 0.0, %v5421
  %v5423 = vpop.f32.mrf.mxu0
  %5424 = vmatprep.mubr.f32.mxu0 0.0
  %5425 = vmatmul.mubr.f32.gmra.mxu0 %v5123
  %v5426 = vpop.f32.mrf.mxu0
  %v5427 = vadd.f32 0.0, %v5426
  %v5428 = vpop.f32.mrf.mxu0
  %5429 = vmatprep.mubr.f32.mxu0 0.0
  %5430 = vmatmul.mubr.f32.gmra.mxu0 %v5126
  %v5431 = vpop.f32.mrf.mxu0
  %v5432 = vadd.f32 0.0, %v5431
  %v5433 = vpop.f32.mrf.mxu0
  %5434 = vmatprep.mubr.f32.mxu0 0.0
  %5435 = vmatmul.mubr.f32.gmra.mxu0 %v5129
  %v5436 = vpop.f32.mrf.mxu0
  %v5437 = vadd.f32 0.0, %v5436
  %v5438 = vpop.f32.mrf.mxu0
  %5439 = vmatprep.mubr.f32.mxu0 0.0
  %5440 = vmatmul.mubr.f32.gmra.mxu0 %v5132
  %v5441 = vpop.f32.mrf.mxu0
  %v5442 = vadd.f32 0.0, %v5441
  %v5443 = vpop.f32.mrf.mxu0
  %5444 = vmatprep.mubr.f32.mxu0 0.0
  %5445 = vmatmul.mubr.f32.gmra.mxu0 %v5135
  %v5446 = vpop.f32.mrf.mxu0
  %v5447 = vadd.f32 0.0, %v5446
  %v5448 = vpop.f32.mrf.mxu0
  %5449 = vmatprep.mubr.f32.mxu0 0.0
  %5450 = vmatmul.mubr.f32.gmra.mxu0 %v5138
  %v5451 = vpop.f32.mrf.mxu0
  %v5452 = vadd.f32 0.0, %v5451
  %v5453 = vpop.f32.mrf.mxu0
  %5454 = vmatprep.mubr.f32.mxu0 0.0
  %5455 = vmatmul.mubr.f32.gmra.mxu0 %v5141
  %v5456 = vpop.f32.mrf.mxu0
  %v5457 = vadd.f32 0.0, %v5456
  %v5458 = vpop.f32.mrf.mxu0
  %5459 = vmatprep.mubr.f32.mxu0 0.0
  %5460 = vmatmul.mubr.f32.gmra.mxu0 %v5144
  %v5461 = vpop.f32.mrf.mxu0
  %v5462 = vadd.f32 0.0, %v5461
  %v5463 = vpop.f32.mrf.mxu0
  %5464 = vmatprep.mubr.f32.mxu0 0.0
  %5465 = vmatmul.mubr.f32.gmra.mxu0 %v5147
  %v5466 = vpop.f32.mrf.mxu0
  %v5467 = vadd.f32 0.0, %v5466
  %v5468 = vpop.f32.mrf.mxu0
  %5469 = vmatprep.mubr.f32.mxu0 0.0
  %5470 = vmatmul.mubr.f32.gmra.mxu0 %v5150
  %v5471 = vpop.f32.mrf.mxu0
  %v5472 = vadd.f32 0.0, %v5471
  %v5473 = vpop.f32.mrf.mxu0
  %5474 = vmatprep.mubr.f32.mxu0 0.0
  %5475 = vmatmul.mubr.f32.gmra.mxu0 %v5153
  %v5476 = vpop.f32.mrf.mxu0
  %v5477 = vadd.f32 0.0, %v5476
  %v5478 = vpop.f32.mrf.mxu0
  %5479 = vmatprep.mubr.f32.mxu0 0.0
  %5480 = vmatmul.mubr.f32.gmra.mxu0 %v5156
  %v5481 = vpop.f32.mrf.mxu0
  %v5482 = vadd.f32 0.0, %v5481
  %v5483 = vpop.f32.mrf.mxu0
  %5484 = vmatprep.mubr.f32.mxu0 0.0
  %5485 = vmatmul.mubr.f32.gmra.mxu0 %v5159
  %v5486 = vpop.f32.mrf.mxu0
  %v5487 = vadd.f32 0.0, %v5486
  %v5488 = vpop.f32.mrf.mxu0
  %5489 = vmatprep.mubr.f32.mxu0 0.0
  %5490 = vmatmul.mubr.f32.gmra.mxu0 %v5162
  %v5491 = vpop.f32.mrf.mxu0
  %v5492 = vadd.f32 0.0, %v5491
  %v5493 = vpop.f32.mrf.mxu0
  %5494 = vmatprep.mubr.f32.mxu0 0.0
  %5495 = vmatmul.mubr.f32.gmra.mxu0 %v5165
  %v5496 = vpop.f32.mrf.mxu0
  %v5497 = vadd.f32 0.0, %v5496
  %v5498 = vpop.f32.mrf.mxu0
  %5499 = vmatprep.mubr.f32.mxu0 0.0
  %5500 = vmatmul.mubr.f32.gmra.mxu0 %v5168
  %v5501 = vpop.f32.mrf.mxu0
  %v5502 = vadd.f32 0.0, %v5501
  %v5503 = vpop.f32.mrf.mxu0
  %5504 = vmatprep.mubr.f32.mxu0 0.0
  %5505 = vmatmul.mubr.f32.gmra.mxu0 %v5171
  %v5506 = vpop.f32.mrf.mxu0
  %v5507 = vadd.f32 0.0, %v5506
  %v5508 = vpop.f32.mrf.mxu0
  %5509 = vmatprep.mubr.f32.mxu0 0.0
  %5510 = vmatmul.mubr.f32.gmra.mxu0 %v5174
  %v5511 = vpop.f32.mrf.mxu0
  %v5512 = vadd.f32 0.0, %v5511
  %v5513 = vpop.f32.mrf.mxu0
  %5514 = vmatprep.mubr.f32.mxu0 0.0
  %5515 = vmatmul.mubr.f32.gmra.mxu0 %v5177
  %v5516 = vpop.f32.mrf.mxu0
  %v5517 = vadd.f32 0.0, %v5516
  %v5518 = vpop.f32.mrf.mxu0
  %5519 = vmatprep.mubr.f32.mxu0 0.0
  %5520 = vmatmul.mubr.f32.gmra.mxu0 %v5180
  %v5521 = vpop.f32.mrf.mxu0
  %v5522 = vadd.f32 0.0, %v5521
  %v5523 = vpop.f32.mrf.mxu0
  %5524 = vmatprep.mubr.f32.mxu0 0.0
  %5525 = vmatmul.mubr.f32.gmra.mxu0 %v5183
  %v5526 = vpop.f32.mrf.mxu0
  %v5527 = vadd.f32 0.0, %v5526
  %v5528 = vpop.f32.mrf.mxu0
  %5529 = vmatprep.mubr.f32.mxu0 0.0
  %5530 = vmatmul.mubr.f32.gmra.mxu0 %v5186
  %v5531 = vpop.f32.mrf.mxu0
  %v5532 = vadd.f32 0.0, %v5531
  %v5533 = vpop.f32.mrf.mxu0
  %5534 = vmatprep.mubr.f32.mxu0 0.0
  %5535 = vmatmul.mubr.f32.gmra.mxu0 %v5189
  %v5536 = vpop.f32.mrf.mxu0
  %v5537 = vadd.f32 0.0, %v5536
  %v5538 = vpop.f32.mrf.mxu0
  %5539 = vmatprep.mubr.f32.mxu0 0.0
  %5540 = vmatmul.mubr.f32.gmra.mxu0 %v5192
  %v5541 = vpop.f32.mrf.mxu0
  %v5542 = vadd.f32 0.0, %v5541
  %v5543 = vpop.f32.mrf.mxu0
  %5544 = vmatprep.mubr.f32.mxu0 0.0
  %5545 = vmatmul.mubr.f32.gmra.mxu0 %v5195
  %v5546 = vpop.f32.mrf.mxu0
  %v5547 = vadd.f32 0.0, %v5546
  %v5548 = vpop.f32.mrf.mxu0
  %5549 = vmatprep.mubr.f32.mxu0 0.0
  %5550 = vmatmul.mubr.f32.gmra.mxu0 %v5198
  %v5551 = vpop.f32.mrf.mxu0
  %v5552 = vadd.f32 0.0, %v5551
  %v5553 = vpop.f32.mrf.mxu0
  %5554 = vmatprep.mubr.f32.mxu0 0.0
  %5555 = vmatmul.mubr.f32.gmra.mxu0 %v5201
  %v5556 = vpop.f32.mrf.mxu0
  %v5557 = vadd.f32 0.0, %v5556
  %v5558 = vpop.f32.mrf.mxu0
  %5559 = vmatprep.mubr.f32.mxu0 0.0
  %5560 = vmatmul.mubr.f32.gmra.mxu0 %v5204
  %v5561 = vpop.f32.mrf.mxu0
  %v5562 = vadd.f32 0.0, %v5561
  %v5563 = vpop.f32.mrf.mxu0
  %5564 = vmatprep.mubr.f32.mxu0 0.0
  %5565 = vmatmul.mubr.f32.gmra.mxu0 %v5207
  %v5566 = vpop.f32.mrf.mxu0
  %v5567 = vadd.f32 0.0, %v5566
  %v5568 = vpop.f32.mrf.mxu0
  %5569 = vmatprep.mubr.f32.mxu0 0.0
  %5570 = vmatmul.mubr.f32.gmra.mxu0 %v5210
  %v5571 = vpop.f32.mrf.mxu0
  %v5572 = vadd.f32 0.0, %v5571
  %v5573 = vpop.f32.mrf.mxu0
  %5574 = vmatprep.mubr.f32.mxu0 0.0
  %5575 = vmatmul.mubr.f32.gmra.mxu0 %v5213
  %v5576 = vpop.f32.mrf.mxu0
  %v5577 = vadd.f32 0.0, %v5576
  %v5578 = vpop.f32.mrf.mxu0
  %5579 = vmatprep.mubr.f32.mxu0 0.0
  %5580 = vmatmul.mubr.f32.gmra.mxu0 %v5216
  %v5581 = vpop.f32.mrf.mxu0
  %v5582 = vadd.f32 0.0, %v5581
  %v5583 = vpop.f32.mrf.mxu0
  %5584 = vmatprep.mubr.f32.mxu0 0.0
  %5585 = vmatmul.mubr.f32.gmra.mxu0 %v5219
  %v5586 = vpop.f32.mrf.mxu0
  %v5587 = vadd.f32 0.0, %v5586
  %v5588 = vpop.f32.mrf.mxu0
  %5589 = vmatprep.mubr.f32.mxu0 0.0
  %5590 = vmatmul.mubr.f32.gmra.mxu0 %v5222
  %v5591 = vpop.f32.mrf.mxu0
  %v5592 = vadd.f32 0.0, %v5591
  %v5593 = vpop.f32.mrf.mxu0
  %5594 = vmatprep.mubr.f32.mxu0 0.0
  %5595 = vmatmul.mubr.f32.gmra.mxu0 %v5225
  %v5596 = vpop.f32.mrf.mxu0
  %v5597 = vadd.f32 0.0, %v5596
  %v5598 = vpop.f32.mrf.mxu0
  %5599 = vmatprep.mubr.f32.mxu0 0.0
  %5600 = vmatmul.mubr.f32.gmra.mxu0 %v5228
  %v5601 = vpop.f32.mrf.mxu0
  %v5602 = vadd.f32 0.0, %v5601
  %v5603 = vpop.f32.mrf.mxu0
  %5604 = vmatprep.mubr.f32.mxu0 0.0
  %5605 = vmatmul.mubr.f32.gmra.mxu0 %v5231
  %v5606 = vpop.f32.mrf.mxu0
  %v5607 = vadd.f32 0.0, %v5606
  %v5608 = vpop.f32.mrf.mxu0
  %5609 = vmatprep.mubr.f32.mxu0 0.0
  %5610 = vmatmul.mubr.f32.gmra.mxu0 %v5234
  %v5611 = vpop.f32.mrf.mxu0
  %v5612 = vadd.f32 0.0, %v5611
  %v5613 = vpop.f32.mrf.mxu0
  %5614 = vmatprep.mubr.f32.mxu0 0.0
  %5615 = vmatmul.mubr.f32.gmra.mxu0 %v5237
  %v5616 = vpop.f32.mrf.mxu0
  %v5617 = vadd.f32 0.0, %v5616
  %v5618 = vpop.f32.mrf.mxu0
  %5619 = vmatprep.mubr.f32.mxu0 0.0
  %5620 = vmatmul.mubr.f32.gmra.mxu0 %v5240
  %v5621 = vpop.f32.mrf.mxu0
  %v5622 = vadd.f32 0.0, %v5621
  %v5623 = vpop.f32.mrf.mxu0
  %5624 = vmatprep.mubr.f32.mxu0 0.0
  %5625 = vmatmul.mubr.f32.gmra.mxu0 %v5243
  %v5626 = vpop.f32.mrf.mxu0
  %v5627 = vadd.f32 0.0, %v5626
  %v5628 = vpop.f32.mrf.mxu0
  %5629 = vdwg.mxu0
  %v5630 = vadd.f32 %v4920, %v5312
  %v5631 = vadd.f32 %v4921, %v5317
  %v5632 = vadd.f32 %v4922, %v5322
  %v5633 = vadd.f32 %v4923, %v5327
  %v5634 = vadd.f32 %v4924, %v5332
  %v5635 = vadd.f32 %v4925, %v5337
  %v5636 = vadd.f32 %v4926, %v5342
  %v5637 = vadd.f32 %v4927, %v5347
  %v5638 = vadd.f32 %v4928, %v5352
  %v5639 = vadd.f32 %v4929, %v5357
  %v5640 = vadd.f32 %v4930, %v5362
  %v5641 = vadd.f32 %v4931, %v5367
  %v5642 = vadd.f32 %v4932, %v5372
  %v5643 = vadd.f32 %v4933, %v5377
  %v5644 = vadd.f32 %v4934, %v5382
  %v5645 = vadd.f32 %v4935, %v5387
  %v5646 = vadd.f32 %v4936, %v5392
  %v5647 = vadd.f32 %v4937, %v5397
  %v5648 = vadd.f32 %v4938, %v5402
  %v5649 = vadd.f32 %v4939, %v5407
  %v5650 = vadd.f32 %v4940, %v5412
  %v5651 = vadd.f32 %v4941, %v5417
  %v5652 = vadd.f32 %v4942, %v5422
  %v5653 = vadd.f32 %v4943, %v5427
  %v5654 = vadd.f32 %v4944, %v5432
  %v5655 = vadd.f32 %v4945, %v5437
  %v5656 = vadd.f32 %v4946, %v5442
  %v5657 = vadd.f32 %v4947, %v5447
  %v5658 = vadd.f32 %v4948, %v5452
  %v5659 = vadd.f32 %v4949, %v5457
  %v5660 = vadd.f32 %v4950, %v5462
  %v5661 = vadd.f32 %v4951, %v5467
  %v5662 = vadd.f32 %v4952, %v5472
  %v5663 = vadd.f32 %v4953, %v5477
  %v5664 = vadd.f32 %v4954, %v5482
  %v5665 = vadd.f32 %v4955, %v5487
  %v5666 = vadd.f32 %v4956, %v5492
  %v5667 = vadd.f32 %v4957, %v5497
  %v5668 = vadd.f32 %v4958, %v5502
  %v5669 = vadd.f32 %v4959, %v5507
  %v5670 = vadd.f32 %v4960, %v5512
  %v5671 = vadd.f32 %v4961, %v5517
  %v5672 = vadd.f32 %v4962, %v5522
  %v5673 = vadd.f32 %v4963, %v5527
  %v5674 = vadd.f32 %v4964, %v5532
  %v5675 = vadd.f32 %v4965, %v5537
  %v5676 = vadd.f32 %v4966, %v5542
  %v5677 = vadd.f32 %v4967, %v5547
  %v5678 = vadd.f32 %v4968, %v5552
  %v5679 = vadd.f32 %v4969, %v5557
  %v5680 = vadd.f32 %v4970, %v5562
  %v5681 = vadd.f32 %v4971, %v5567
  %v5682 = vadd.f32 %v4972, %v5572
  %v5683 = vadd.f32 %v4973, %v5577
  %v5684 = vadd.f32 %v4974, %v5582
  %v5685 = vadd.f32 %v4975, %v5587
  %v5686 = vadd.f32 %v4976, %v5592
  %v5687 = vadd.f32 %v4977, %v5597
  %v5688 = vadd.f32 %v4978, %v5602
  %v5689 = vadd.f32 %v4979, %v5607
  %v5690 = vadd.f32 %v4980, %v5612
  %v5691 = vadd.f32 %v4981, %v5617
  %v5692 = vadd.f32 %v4982, %v5622
  %v5693 = vadd.f32 %v4983, %v5627
  %s5694 = scalar_lea.vmem [#allocation2], 168
  %v5695 = vld [vmem:[%s5694] sm:$0xff]
  %v5696 = vld [vmem:[%s5694 + $0x8] sm:$0xff]
  %v5697 = vld [vmem:[%s5694 + $0x10] sm:$0xff]
  %v5698 = vld [vmem:[%s5694 + $0x18] sm:$0xff]
  %v5699 = vld [vmem:[%s5694 + $0x20] sm:$0xff]
  %v5700 = vld [vmem:[%s5694 + $0x28] sm:$0xff]
  %v5701 = vld [vmem:[%s5694 + $0x30] sm:$0xff]
  %v5702 = vld [vmem:[%s5694 + $0x38] sm:$0xff]
  %v5703 = vld [vmem:[%s5694 + $0x50] sm:$0xff]
  %v5704 = vld [vmem:[%s5694 + $0x58] sm:$0xff]
  %v5705 = vld [vmem:[%s5694 + $0x60] sm:$0xff]
  %v5706 = vld [vmem:[%s5694 + $0x68] sm:$0xff]
  %v5707 = vld [vmem:[%s5694 + $0x70] sm:$0xff]
  %v5708 = vld [vmem:[%s5694 + $0x78] sm:$0xff]
  %v5709 = vld [vmem:[%s5694 + $0x80] sm:$0xff]
  %v5710 = vld [vmem:[%s5694 + $0x88] sm:$0xff]
  %v5711 = vld [vmem:[%s5694 + $0xa0] sm:$0xff]
  %v5712 = vld [vmem:[%s5694 + $0xa8] sm:$0xff]
  %v5713 = vld [vmem:[%s5694 + $0xb0] sm:$0xff]
  %v5714 = vld [vmem:[%s5694 + $0xb8] sm:$0xff]
  %v5715 = vld [vmem:[%s5694 + $0xc0] sm:$0xff]
  %v5716 = vld [vmem:[%s5694 + $0xc8] sm:$0xff]
  %v5717 = vld [vmem:[%s5694 + $0xd0] sm:$0xff]
  %v5718 = vld [vmem:[%s5694 + $0xd8] sm:$0xff]
  %v5719 = vld [vmem:[%s5694 + $0xf0] sm:$0xff]
  %v5720 = vld [vmem:[%s5694 + $0xf8] sm:$0xff]
  %v5721 = vld [vmem:[%s5694 + $0x100] sm:$0xff]
  %v5722 = vld [vmem:[%s5694 + $0x108] sm:$0xff]
  %v5723 = vld [vmem:[%s5694 + $0x110] sm:$0xff]
  %v5724 = vld [vmem:[%s5694 + $0x118] sm:$0xff]
  %v5725 = vld [vmem:[%s5694 + $0x120] sm:$0xff]
  %v5726 = vld [vmem:[%s5694 + $0x128] sm:$0xff]
  %v5727 = vld [vmem:[%s5694 + $0x140] sm:$0xff]
  %v5728 = vld [vmem:[%s5694 + $0x148] sm:$0xff]
  %v5729 = vld [vmem:[%s5694 + $0x150] sm:$0xff]
  %v5730 = vld [vmem:[%s5694 + $0x158] sm:$0xff]
  %v5731 = vld [vmem:[%s5694 + $0x160] sm:$0xff]
  %v5732 = vld [vmem:[%s5694 + $0x168] sm:$0xff]
  %v5733 = vld [vmem:[%s5694 + $0x170] sm:$0xff]
  %v5734 = vld [vmem:[%s5694 + $0x178] sm:$0xff]
  %v5735 = vld [vmem:[%s5694 + $0x190] sm:$0xff]
  %v5736 = vld [vmem:[%s5694 + $0x198] sm:$0xff]
  %v5737 = vld [vmem:[%s5694 + $0x1a0] sm:$0xff]
  %v5738 = vld [vmem:[%s5694 + $0x1a8] sm:$0xff]
  %v5739 = vld [vmem:[%s5694 + $0x1b0] sm:$0xff]
  %v5740 = vld [vmem:[%s5694 + $0x1b8] sm:$0xff]
  %v5741 = vld [vmem:[%s5694 + $0x1c0] sm:$0xff]
  %v5742 = vld [vmem:[%s5694 + $0x1c8] sm:$0xff]
  %v5743 = vld [vmem:[%s5694 + $0x1e0] sm:$0xff]
  %v5744 = vld [vmem:[%s5694 + $0x1e8] sm:$0xff]
  %v5745 = vld [vmem:[%s5694 + $0x1f0] sm:$0xff]
  %v5746 = vld [vmem:[%s5694 + $0x1f8] sm:$0xff]
  %v5747 = vld [vmem:[%s5694 + $0x200] sm:$0xff]
  %v5748 = vld [vmem:[%s5694 + $0x208] sm:$0xff]
  %v5749 = vld [vmem:[%s5694 + $0x210] sm:$0xff]
  %v5750 = vld [vmem:[%s5694 + $0x218] sm:$0xff]
  %v5751 = vld [vmem:[%s5694 + $0x230] sm:$0xff]
  %v5752 = vld [vmem:[%s5694 + $0x238] sm:$0xff]
  %v5753 = vld [vmem:[%s5694 + $0x240] sm:$0xff]
  %v5754 = vld [vmem:[%s5694 + $0x248] sm:$0xff]
  %v5755 = vld [vmem:[%s5694 + $0x250] sm:$0xff]
  %v5756 = vld [vmem:[%s5694 + $0x258] sm:$0xff]
  %v5757 = vld [vmem:[%s5694 + $0x260] sm:$0xff]
  %v5758 = vld [vmem:[%s5694 + $0x268] sm:$0xff]
  %v5759 = vld [vmem:[%s4 + $0xe0] sm:$0xff]
  %v5760 = vld [vmem:[%s4 + $0xe8] sm:$0xff]
  %v5761 = vld [vmem:[%s4 + $0xf0] sm:$0xff]
  %v5762 = vld [vmem:[%s4 + $0xf8] sm:$0xff]
  %v5764 = vsel %vm750, %v5695, 0
  %v5767 = vsel %vm750, %v5696, 0
  %v5770 = vsel %vm750, %v5697, 0
  %v5773 = vsel %vm750, %v5698, 0
  %v5776 = vsel %vm750, %v5699, 0
  %v5779 = vsel %vm750, %v5700, 0
  %v5782 = vsel %vm750, %v5701, 0
  %v5785 = vsel %vm750, %v5702, 0
  %v5788 = vsel %vm750, %v5703, 0
  %v5791 = vsel %vm750, %v5704, 0
  %v5794 = vsel %vm750, %v5705, 0
  %v5797 = vsel %vm750, %v5706, 0
  %v5800 = vsel %vm750, %v5707, 0
  %v5803 = vsel %vm750, %v5708, 0
  %v5806 = vsel %vm750, %v5709, 0
  %v5809 = vsel %vm750, %v5710, 0
  %v5812 = vsel %vm750, %v5711, 0
  %v5815 = vsel %vm750, %v5712, 0
  %v5818 = vsel %vm750, %v5713, 0
  %v5821 = vsel %vm750, %v5714, 0
  %v5824 = vsel %vm750, %v5715, 0
  %v5827 = vsel %vm750, %v5716, 0
  %v5830 = vsel %vm750, %v5717, 0
  %v5833 = vsel %vm750, %v5718, 0
  %v5836 = vsel %vm750, %v5719, 0
  %v5839 = vsel %vm750, %v5720, 0
  %v5842 = vsel %vm750, %v5721, 0
  %v5845 = vsel %vm750, %v5722, 0
  %v5848 = vsel %vm750, %v5723, 0
  %v5851 = vsel %vm750, %v5724, 0
  %v5854 = vsel %vm750, %v5725, 0
  %v5857 = vsel %vm750, %v5726, 0
  %v5860 = vsel %vm750, %v5727, 0
  %v5863 = vsel %vm750, %v5728, 0
  %v5866 = vsel %vm750, %v5729, 0
  %v5869 = vsel %vm750, %v5730, 0
  %v5872 = vsel %vm750, %v5731, 0
  %v5875 = vsel %vm750, %v5732, 0
  %v5878 = vsel %vm750, %v5733, 0
  %v5881 = vsel %vm750, %v5734, 0
  %v5884 = vsel %vm750, %v5735, 0
  %v5887 = vsel %vm750, %v5736, 0
  %v5890 = vsel %vm750, %v5737, 0
  %v5893 = vsel %vm750, %v5738, 0
  %v5896 = vsel %vm750, %v5739, 0
  %v5899 = vsel %vm750, %v5740, 0
  %v5902 = vsel %vm750, %v5741, 0
  %v5905 = vsel %vm750, %v5742, 0
  %v5908 = vsel %vm750, %v5743, 0
  %v5911 = vsel %vm750, %v5744, 0
  %v5914 = vsel %vm750, %v5745, 0
  %v5917 = vsel %vm750, %v5746, 0
  %v5920 = vsel %vm750, %v5747, 0
  %v5923 = vsel %vm750, %v5748, 0
  %v5926 = vsel %vm750, %v5749, 0
  %v5929 = vsel %vm750, %v5750, 0
  %v5932 = vsel %vm750, %v5751, 0
  %v5935 = vsel %vm750, %v5752, 0
  %v5938 = vsel %vm750, %v5753, 0
  %v5941 = vsel %vm750, %v5754, 0
  %v5944 = vsel %vm750, %v5755, 0
  %v5947 = vsel %vm750, %v5756, 0
  %v5950 = vsel %vm750, %v5757, 0
  %v5953 = vsel %vm750, %v5758, 0
  %5955 = vmatprep.subr.mxu0 0.0
  %5956 = vmatpush1.msra.mxu0 0.0
  %5957 = vmatprep.subr.mxu0 0.0
  %5958 = vmatpush1.msra.mxu0 0.0
  %5959 = vmatprep.subr.mxu0 0.0
  %5960 = vmatpush1.msra.mxu0 0.0
  %5961 = vmatprep.subr.mxu0 0.0
  %5962 = vmatpush1.msra.mxu0 0.0
  %5963 = vmatprep.subr.mxu0 0.0
  %5964 = vmatpush1.msra.mxu0 0.0
  %5965 = vmatprep.subr.mxu0 0.0
  %5966 = vmatpush1.msra.mxu0 0.0
  %5967 = vmatprep.subr.mxu0 0.0
  %5968 = vmatpush1.msra.mxu0 0.0
  %5969 = vmatprep.subr.mxu0 0.0
  %5970 = vmatpush1.msra.mxu0 0.0
  %5971 = vmatprep.subr.mxu0 0.0
  %5972 = vmatpush1.msra.mxu0 0.0
  %5973 = vmatprep.subr.mxu0 0.0
  %5974 = vmatpush1.msra.mxu0 0.0
  %5975 = vmatprep.subr.mxu0 0.0
  %5976 = vmatpush1.msra.mxu0 0.0
  %5977 = vmatprep.subr.mxu0 0.0
  %5978 = vmatpush1.msra.mxu0 0.0
  %5979 = vmatprep.subr.mxu0 0.0
  %5980 = vmatpush1.msra.mxu0 %v5762
  %5981 = vmatprep.subr.mxu0 0.0
  %5982 = vmatpush1.msra.mxu0 %v5761
  %5983 = vmatprep.subr.mxu0 0.0
  %5984 = vmatpush1.msra.mxu0 %v5760
  %5985 = vmatprep.subr.mxu0 0.0
  %5986 = vmatpush1.msra.mxu0 %v5759
  %5987 = vmatprep.subr.mxu0 0.0
  %5988 = vmatpush2.msra.mxu0 0.0
  %5989 = vmatprep.subr.mxu0 0.0
  %5990 = vmatpush2.msra.mxu0 0.0
  %5991 = vmatprep.subr.mxu0 0.0
  %5992 = vmatpush2.msra.mxu0 0.0
  %5993 = vmatprep.subr.mxu0 0.0
  %5994 = vmatpush2.msra.mxu0 0.0
  %5995 = vmatprep.subr.mxu0 0.0
  %5996 = vmatpush2.msra.mxu0 0.0
  %5997 = vmatprep.subr.mxu0 0.0
  %5998 = vmatpush2.msra.mxu0 0.0
  %5999 = vmatprep.subr.mxu0 0.0
  %6000 = vmatpush2.msra.mxu0 0.0
  %6001 = vmatprep.subr.mxu0 0.0
  %6002 = vmatpush2.msra.mxu0 0.0
  %6003 = vmatprep.subr.mxu0 0.0
  %6004 = vmatpush2.msra.mxu0 0.0
  %6005 = vmatprep.subr.mxu0 0.0
  %6006 = vmatpush2.msra.mxu0 0.0
  %6007 = vmatprep.subr.mxu0 0.0
  %6008 = vmatpush2.msra.mxu0 0.0
  %6009 = vmatprep.subr.mxu0 0.0
  %6010 = vmatpush2.msra.mxu0 0.0
  %6011 = vmatprep.subr.mxu0 0.0
  %6012 = vmatpush2.msra.mxu0 0.0
  %6013 = vmatprep.subr.mxu0 0.0
  %6014 = vmatpush2.msra.mxu0 0.0
  %6015 = vmatprep.subr.mxu0 0.0
  %6016 = vmatpush2.msra.mxu0 0.0
  %6017 = vmatprep.subr.mxu0 0.0
  %6018 = vmatpush2.msra.mxu0 0.0
  %6019 = vmatprep.mubr.f32.mxu0 0.0
  %6020 = vmatmul.mubr.f32.gmra.mxu0 %v5764
  %v6021 = vpop.f32.mrf.mxu0
  %v6022 = vadd.f32 0.0, %v6021
  %v6023 = vpop.f32.mrf.mxu0
  %6024 = vmatprep.mubr.f32.mxu0 0.0
  %6025 = vmatmul.mubr.f32.gmra.mxu0 %v5767
  %v6026 = vpop.f32.mrf.mxu0
  %v6027 = vadd.f32 0.0, %v6026
  %v6028 = vpop.f32.mrf.mxu0
  %6029 = vmatprep.mubr.f32.mxu0 0.0
  %6030 = vmatmul.mubr.f32.gmra.mxu0 %v5770
  %v6031 = vpop.f32.mrf.mxu0
  %v6032 = vadd.f32 0.0, %v6031
  %v6033 = vpop.f32.mrf.mxu0
  %6034 = vmatprep.mubr.f32.mxu0 0.0
  %6035 = vmatmul.mubr.f32.gmra.mxu0 %v5773
  %v6036 = vpop.f32.mrf.mxu0
  %v6037 = vadd.f32 0.0, %v6036
  %v6038 = vpop.f32.mrf.mxu0
  %6039 = vmatprep.mubr.f32.mxu0 0.0
  %6040 = vmatmul.mubr.f32.gmra.mxu0 %v5776
  %v6041 = vpop.f32.mrf.mxu0
  %v6042 = vadd.f32 0.0, %v6041
  %v6043 = vpop.f32.mrf.mxu0
  %6044 = vmatprep.mubr.f32.mxu0 0.0
  %6045 = vmatmul.mubr.f32.gmra.mxu0 %v5779
  %v6046 = vpop.f32.mrf.mxu0
  %v6047 = vadd.f32 0.0, %v6046
  %v6048 = vpop.f32.mrf.mxu0
  %6049 = vmatprep.mubr.f32.mxu0 0.0
  %6050 = vmatmul.mubr.f32.gmra.mxu0 %v5782
  %v6051 = vpop.f32.mrf.mxu0
  %v6052 = vadd.f32 0.0, %v6051
  %v6053 = vpop.f32.mrf.mxu0
  %6054 = vmatprep.mubr.f32.mxu0 0.0
  %6055 = vmatmul.mubr.f32.gmra.mxu0 %v5785
  %v6056 = vpop.f32.mrf.mxu0
  %v6057 = vadd.f32 0.0, %v6056
  %v6058 = vpop.f32.mrf.mxu0
  %6059 = vmatprep.mubr.f32.mxu0 0.0
  %6060 = vmatmul.mubr.f32.gmra.mxu0 %v5788
  %v6061 = vpop.f32.mrf.mxu0
  %v6062 = vadd.f32 0.0, %v6061
  %v6063 = vpop.f32.mrf.mxu0
  %6064 = vmatprep.mubr.f32.mxu0 0.0
  %6065 = vmatmul.mubr.f32.gmra.mxu0 %v5791
  %v6066 = vpop.f32.mrf.mxu0
  %v6067 = vadd.f32 0.0, %v6066
  %v6068 = vpop.f32.mrf.mxu0
  %6069 = vmatprep.mubr.f32.mxu0 0.0
  %6070 = vmatmul.mubr.f32.gmra.mxu0 %v5794
  %v6071 = vpop.f32.mrf.mxu0
  %v6072 = vadd.f32 0.0, %v6071
  %v6073 = vpop.f32.mrf.mxu0
  %6074 = vmatprep.mubr.f32.mxu0 0.0
  %6075 = vmatmul.mubr.f32.gmra.mxu0 %v5797
  %v6076 = vpop.f32.mrf.mxu0
  %v6077 = vadd.f32 0.0, %v6076
  %v6078 = vpop.f32.mrf.mxu0
  %6079 = vmatprep.mubr.f32.mxu0 0.0
  %6080 = vmatmul.mubr.f32.gmra.mxu0 %v5800
  %v6081 = vpop.f32.mrf.mxu0
  %v6082 = vadd.f32 0.0, %v6081
  %v6083 = vpop.f32.mrf.mxu0
  %6084 = vmatprep.mubr.f32.mxu0 0.0
  %6085 = vmatmul.mubr.f32.gmra.mxu0 %v5803
  %v6086 = vpop.f32.mrf.mxu0
  %v6087 = vadd.f32 0.0, %v6086
  %v6088 = vpop.f32.mrf.mxu0
  %6089 = vmatprep.mubr.f32.mxu0 0.0
  %6090 = vmatmul.mubr.f32.gmra.mxu0 %v5806
  %v6091 = vpop.f32.mrf.mxu0
  %v6092 = vadd.f32 0.0, %v6091
  %v6093 = vpop.f32.mrf.mxu0
  %6094 = vmatprep.mubr.f32.mxu0 0.0
  %6095 = vmatmul.mubr.f32.gmra.mxu0 %v5809
  %v6096 = vpop.f32.mrf.mxu0
  %v6097 = vadd.f32 0.0, %v6096
  %v6098 = vpop.f32.mrf.mxu0
  %6099 = vmatprep.mubr.f32.mxu0 0.0
  %6100 = vmatmul.mubr.f32.gmra.mxu0 %v5812
  %v6101 = vpop.f32.mrf.mxu0
  %v6102 = vadd.f32 0.0, %v6101
  %v6103 = vpop.f32.mrf.mxu0
  %6104 = vmatprep.mubr.f32.mxu0 0.0
  %6105 = vmatmul.mubr.f32.gmra.mxu0 %v5815
  %v6106 = vpop.f32.mrf.mxu0
  %v6107 = vadd.f32 0.0, %v6106
  %v6108 = vpop.f32.mrf.mxu0
  %6109 = vmatprep.mubr.f32.mxu0 0.0
  %6110 = vmatmul.mubr.f32.gmra.mxu0 %v5818
  %v6111 = vpop.f32.mrf.mxu0
  %v6112 = vadd.f32 0.0, %v6111
  %v6113 = vpop.f32.mrf.mxu0
  %6114 = vmatprep.mubr.f32.mxu0 0.0
  %6115 = vmatmul.mubr.f32.gmra.mxu0 %v5821
  %v6116 = vpop.f32.mrf.mxu0
  %v6117 = vadd.f32 0.0, %v6116
  %v6118 = vpop.f32.mrf.mxu0
  %6119 = vmatprep.mubr.f32.mxu0 0.0
  %6120 = vmatmul.mubr.f32.gmra.mxu0 %v5824
  %v6121 = vpop.f32.mrf.mxu0
  %v6122 = vadd.f32 0.0, %v6121
  %v6123 = vpop.f32.mrf.mxu0
  %6124 = vmatprep.mubr.f32.mxu0 0.0
  %6125 = vmatmul.mubr.f32.gmra.mxu0 %v5827
  %v6126 = vpop.f32.mrf.mxu0
  %v6127 = vadd.f32 0.0, %v6126
  %v6128 = vpop.f32.mrf.mxu0
  %6129 = vmatprep.mubr.f32.mxu0 0.0
  %6130 = vmatmul.mubr.f32.gmra.mxu0 %v5830
  %v6131 = vpop.f32.mrf.mxu0
  %v6132 = vadd.f32 0.0, %v6131
  %v6133 = vpop.f32.mrf.mxu0
  %6134 = vmatprep.mubr.f32.mxu0 0.0
  %6135 = vmatmul.mubr.f32.gmra.mxu0 %v5833
  %v6136 = vpop.f32.mrf.mxu0
  %v6137 = vadd.f32 0.0, %v6136
  %v6138 = vpop.f32.mrf.mxu0
  %6139 = vmatprep.mubr.f32.mxu0 0.0
  %6140 = vmatmul.mubr.f32.gmra.mxu0 %v5836
  %v6141 = vpop.f32.mrf.mxu0
  %v6142 = vadd.f32 0.0, %v6141
  %v6143 = vpop.f32.mrf.mxu0
  %6144 = vmatprep.mubr.f32.mxu0 0.0
  %6145 = vmatmul.mubr.f32.gmra.mxu0 %v5839
  %v6146 = vpop.f32.mrf.mxu0
  %v6147 = vadd.f32 0.0, %v6146
  %v6148 = vpop.f32.mrf.mxu0
  %6149 = vmatprep.mubr.f32.mxu0 0.0
  %6150 = vmatmul.mubr.f32.gmra.mxu0 %v5842
  %v6151 = vpop.f32.mrf.mxu0
  %v6152 = vadd.f32 0.0, %v6151
  %v6153 = vpop.f32.mrf.mxu0
  %6154 = vmatprep.mubr.f32.mxu0 0.0
  %6155 = vmatmul.mubr.f32.gmra.mxu0 %v5845
  %v6156 = vpop.f32.mrf.mxu0
  %v6157 = vadd.f32 0.0, %v6156
  %v6158 = vpop.f32.mrf.mxu0
  %6159 = vmatprep.mubr.f32.mxu0 0.0
  %6160 = vmatmul.mubr.f32.gmra.mxu0 %v5848
  %v6161 = vpop.f32.mrf.mxu0
  %v6162 = vadd.f32 0.0, %v6161
  %v6163 = vpop.f32.mrf.mxu0
  %6164 = vmatprep.mubr.f32.mxu0 0.0
  %6165 = vmatmul.mubr.f32.gmra.mxu0 %v5851
  %v6166 = vpop.f32.mrf.mxu0
  %v6167 = vadd.f32 0.0, %v6166
  %v6168 = vpop.f32.mrf.mxu0
  %6169 = vmatprep.mubr.f32.mxu0 0.0
  %6170 = vmatmul.mubr.f32.gmra.mxu0 %v5854
  %v6171 = vpop.f32.mrf.mxu0
  %v6172 = vadd.f32 0.0, %v6171
  %v6173 = vpop.f32.mrf.mxu0
  %6174 = vmatprep.mubr.f32.mxu0 0.0
  %6175 = vmatmul.mubr.f32.gmra.mxu0 %v5857
  %v6176 = vpop.f32.mrf.mxu0
  %v6177 = vadd.f32 0.0, %v6176
  %v6178 = vpop.f32.mrf.mxu0
  %6179 = vmatprep.mubr.f32.mxu0 0.0
  %6180 = vmatmul.mubr.f32.gmra.mxu0 %v5860
  %v6181 = vpop.f32.mrf.mxu0
  %v6182 = vadd.f32 0.0, %v6181
  %v6183 = vpop.f32.mrf.mxu0
  %6184 = vmatprep.mubr.f32.mxu0 0.0
  %6185 = vmatmul.mubr.f32.gmra.mxu0 %v5863
  %v6186 = vpop.f32.mrf.mxu0
  %v6187 = vadd.f32 0.0, %v6186
  %v6188 = vpop.f32.mrf.mxu0
  %6189 = vmatprep.mubr.f32.mxu0 0.0
  %6190 = vmatmul.mubr.f32.gmra.mxu0 %v5866
  %v6191 = vpop.f32.mrf.mxu0
  %v6192 = vadd.f32 0.0, %v6191
  %v6193 = vpop.f32.mrf.mxu0
  %6194 = vmatprep.mubr.f32.mxu0 0.0
  %6195 = vmatmul.mubr.f32.gmra.mxu0 %v5869
  %v6196 = vpop.f32.mrf.mxu0
  %v6197 = vadd.f32 0.0, %v6196
  %v6198 = vpop.f32.mrf.mxu0
  %6199 = vmatprep.mubr.f32.mxu0 0.0
  %6200 = vmatmul.mubr.f32.gmra.mxu0 %v5872
  %v6201 = vpop.f32.mrf.mxu0
  %v6202 = vadd.f32 0.0, %v6201
  %v6203 = vpop.f32.mrf.mxu0
  %6204 = vmatprep.mubr.f32.mxu0 0.0
  %6205 = vmatmul.mubr.f32.gmra.mxu0 %v5875
  %v6206 = vpop.f32.mrf.mxu0
  %v6207 = vadd.f32 0.0, %v6206
  %v6208 = vpop.f32.mrf.mxu0
  %6209 = vmatprep.mubr.f32.mxu0 0.0
  %6210 = vmatmul.mubr.f32.gmra.mxu0 %v5878
  %v6211 = vpop.f32.mrf.mxu0
  %v6212 = vadd.f32 0.0, %v6211
  %v6213 = vpop.f32.mrf.mxu0
  %6214 = vmatprep.mubr.f32.mxu0 0.0
  %6215 = vmatmul.mubr.f32.gmra.mxu0 %v5881
  %v6216 = vpop.f32.mrf.mxu0
  %v6217 = vadd.f32 0.0, %v6216
  %v6218 = vpop.f32.mrf.mxu0
  %6219 = vmatprep.mubr.f32.mxu0 0.0
  %6220 = vmatmul.mubr.f32.gmra.mxu0 %v5884
  %v6221 = vpop.f32.mrf.mxu0
  %v6222 = vadd.f32 0.0, %v6221
  %v6223 = vpop.f32.mrf.mxu0
  %6224 = vmatprep.mubr.f32.mxu0 0.0
  %6225 = vmatmul.mubr.f32.gmra.mxu0 %v5887
  %v6226 = vpop.f32.mrf.mxu0
  %v6227 = vadd.f32 0.0, %v6226
  %v6228 = vpop.f32.mrf.mxu0
  %6229 = vmatprep.mubr.f32.mxu0 0.0
  %6230 = vmatmul.mubr.f32.gmra.mxu0 %v5890
  %v6231 = vpop.f32.mrf.mxu0
  %v6232 = vadd.f32 0.0, %v6231
  %v6233 = vpop.f32.mrf.mxu0
  %6234 = vmatprep.mubr.f32.mxu0 0.0
  %6235 = vmatmul.mubr.f32.gmra.mxu0 %v5893
  %v6236 = vpop.f32.mrf.mxu0
  %v6237 = vadd.f32 0.0, %v6236
  %v6238 = vpop.f32.mrf.mxu0
  %6239 = vmatprep.mubr.f32.mxu0 0.0
  %6240 = vmatmul.mubr.f32.gmra.mxu0 %v5896
  %v6241 = vpop.f32.mrf.mxu0
  %v6242 = vadd.f32 0.0, %v6241
  %v6243 = vpop.f32.mrf.mxu0
  %6244 = vmatprep.mubr.f32.mxu0 0.0
  %6245 = vmatmul.mubr.f32.gmra.mxu0 %v5899
  %v6246 = vpop.f32.mrf.mxu0
  %v6247 = vadd.f32 0.0, %v6246
  %v6248 = vpop.f32.mrf.mxu0
  %6249 = vmatprep.mubr.f32.mxu0 0.0
  %6250 = vmatmul.mubr.f32.gmra.mxu0 %v5902
  %v6251 = vpop.f32.mrf.mxu0
  %v6252 = vadd.f32 0.0, %v6251
  %v6253 = vpop.f32.mrf.mxu0
  %6254 = vmatprep.mubr.f32.mxu0 0.0
  %6255 = vmatmul.mubr.f32.gmra.mxu0 %v5905
  %v6256 = vpop.f32.mrf.mxu0
  %v6257 = vadd.f32 0.0, %v6256
  %v6258 = vpop.f32.mrf.mxu0
  %6259 = vmatprep.mubr.f32.mxu0 0.0
  %6260 = vmatmul.mubr.f32.gmra.mxu0 %v5908
  %v6261 = vpop.f32.mrf.mxu0
  %v6262 = vadd.f32 0.0, %v6261
  %v6263 = vpop.f32.mrf.mxu0
  %6264 = vmatprep.mubr.f32.mxu0 0.0
  %6265 = vmatmul.mubr.f32.gmra.mxu0 %v5911
  %v6266 = vpop.f32.mrf.mxu0
  %v6267 = vadd.f32 0.0, %v6266
  %v6268 = vpop.f32.mrf.mxu0
  %6269 = vmatprep.mubr.f32.mxu0 0.0
  %6270 = vmatmul.mubr.f32.gmra.mxu0 %v5914
  %v6271 = vpop.f32.mrf.mxu0
  %v6272 = vadd.f32 0.0, %v6271
  %v6273 = vpop.f32.mrf.mxu0
  %6274 = vmatprep.mubr.f32.mxu0 0.0
  %6275 = vmatmul.mubr.f32.gmra.mxu0 %v5917
  %v6276 = vpop.f32.mrf.mxu0
  %v6277 = vadd.f32 0.0, %v6276
  %v6278 = vpop.f32.mrf.mxu0
  %6279 = vmatprep.mubr.f32.mxu0 0.0
  %6280 = vmatmul.mubr.f32.gmra.mxu0 %v5920
  %v6281 = vpop.f32.mrf.mxu0
  %v6282 = vadd.f32 0.0, %v6281
  %v6283 = vpop.f32.mrf.mxu0
  %6284 = vmatprep.mubr.f32.mxu0 0.0
  %6285 = vmatmul.mubr.f32.gmra.mxu0 %v5923
  %v6286 = vpop.f32.mrf.mxu0
  %v6287 = vadd.f32 0.0, %v6286
  %v6288 = vpop.f32.mrf.mxu0
  %6289 = vmatprep.mubr.f32.mxu0 0.0
  %6290 = vmatmul.mubr.f32.gmra.mxu0 %v5926
  %v6291 = vpop.f32.mrf.mxu0
  %v6292 = vadd.f32 0.0, %v6291
  %v6293 = vpop.f32.mrf.mxu0
  %6294 = vmatprep.mubr.f32.mxu0 0.0
  %6295 = vmatmul.mubr.f32.gmra.mxu0 %v5929
  %v6296 = vpop.f32.mrf.mxu0
  %v6297 = vadd.f32 0.0, %v6296
  %v6298 = vpop.f32.mrf.mxu0
  %6299 = vmatprep.mubr.f32.mxu0 0.0
  %6300 = vmatmul.mubr.f32.gmra.mxu0 %v5932
  %v6301 = vpop.f32.mrf.mxu0
  %v6302 = vadd.f32 0.0, %v6301
  %v6303 = vpop.f32.mrf.mxu0
  %6304 = vmatprep.mubr.f32.mxu0 0.0
  %6305 = vmatmul.mubr.f32.gmra.mxu0 %v5935
  %v6306 = vpop.f32.mrf.mxu0
  %v6307 = vadd.f32 0.0, %v6306
  %v6308 = vpop.f32.mrf.mxu0
  %6309 = vmatprep.mubr.f32.mxu0 0.0
  %6310 = vmatmul.mubr.f32.gmra.mxu0 %v5938
  %v6311 = vpop.f32.mrf.mxu0
  %v6312 = vadd.f32 0.0, %v6311
  %v6313 = vpop.f32.mrf.mxu0
  %6314 = vmatprep.mubr.f32.mxu0 0.0
  %6315 = vmatmul.mubr.f32.gmra.mxu0 %v5941
  %v6316 = vpop.f32.mrf.mxu0
  %v6317 = vadd.f32 0.0, %v6316
  %v6318 = vpop.f32.mrf.mxu0
  %6319 = vmatprep.mubr.f32.mxu0 0.0
  %6320 = vmatmul.mubr.f32.gmra.mxu0 %v5944
  %v6321 = vpop.f32.mrf.mxu0
  %v6322 = vadd.f32 0.0, %v6321
  %v6323 = vpop.f32.mrf.mxu0
  %6324 = vmatprep.mubr.f32.mxu0 0.0
  %6325 = vmatmul.mubr.f32.gmra.mxu0 %v5947
  %v6326 = vpop.f32.mrf.mxu0
  %v6327 = vadd.f32 0.0, %v6326
  %v6328 = vpop.f32.mrf.mxu0
  %6329 = vmatprep.mubr.f32.mxu0 0.0
  %6330 = vmatmul.mubr.f32.gmra.mxu0 %v5950
  %v6331 = vpop.f32.mrf.mxu0
  %v6332 = vadd.f32 0.0, %v6331
  %v6333 = vpop.f32.mrf.mxu0
  %6334 = vmatprep.mubr.f32.mxu0 0.0
  %6335 = vmatmul.mubr.f32.gmra.mxu0 %v5953
  %v6336 = vpop.f32.mrf.mxu0
  %v6337 = vadd.f32 0.0, %v6336
  %v6338 = vpop.f32.mrf.mxu0
  %6339 = vdwg.mxu0
  %v6340 = vadd.f32 %v5630, %v6022
  %v6341 = vadd.f32 %v5631, %v6027
  %v6342 = vadd.f32 %v5632, %v6032
  %v6343 = vadd.f32 %v5633, %v6037
  %v6344 = vadd.f32 %v5634, %v6042
  %v6345 = vadd.f32 %v5635, %v6047
  %v6346 = vadd.f32 %v5636, %v6052
  %v6347 = vadd.f32 %v5637, %v6057
  %v6348 = vadd.f32 %v5638, %v6062
  %v6349 = vadd.f32 %v5639, %v6067
  %v6350 = vadd.f32 %v5640, %v6072
  %v6351 = vadd.f32 %v5641, %v6077
  %v6352 = vadd.f32 %v5642, %v6082
  %v6353 = vadd.f32 %v5643, %v6087
  %v6354 = vadd.f32 %v5644, %v6092
  %v6355 = vadd.f32 %v5645, %v6097
  %v6356 = vadd.f32 %v5646, %v6102
  %v6357 = vadd.f32 %v5647, %v6107
  %v6358 = vadd.f32 %v5648, %v6112
  %v6359 = vadd.f32 %v5649, %v6117
  %v6360 = vadd.f32 %v5650, %v6122
  %v6361 = vadd.f32 %v5651, %v6127
  %v6362 = vadd.f32 %v5652, %v6132
  %v6363 = vadd.f32 %v5653, %v6137
  %v6364 = vadd.f32 %v5654, %v6142
  %v6365 = vadd.f32 %v5655, %v6147
  %v6366 = vadd.f32 %v5656, %v6152
  %v6367 = vadd.f32 %v5657, %v6157
  %v6368 = vadd.f32 %v5658, %v6162
  %v6369 = vadd.f32 %v5659, %v6167
  %v6370 = vadd.f32 %v5660, %v6172
  %v6371 = vadd.f32 %v5661, %v6177
  %v6372 = vadd.f32 %v5662, %v6182
  %v6373 = vadd.f32 %v5663, %v6187
  %v6374 = vadd.f32 %v5664, %v6192
  %v6375 = vadd.f32 %v5665, %v6197
  %v6376 = vadd.f32 %v5666, %v6202
  %v6377 = vadd.f32 %v5667, %v6207
  %v6378 = vadd.f32 %v5668, %v6212
  %v6379 = vadd.f32 %v5669, %v6217
  %v6380 = vadd.f32 %v5670, %v6222
  %v6381 = vadd.f32 %v5671, %v6227
  %v6382 = vadd.f32 %v5672, %v6232
  %v6383 = vadd.f32 %v5673, %v6237
  %v6384 = vadd.f32 %v5674, %v6242
  %v6385 = vadd.f32 %v5675, %v6247
  %v6386 = vadd.f32 %v5676, %v6252
  %v6387 = vadd.f32 %v5677, %v6257
  %v6388 = vadd.f32 %v5678, %v6262
  %v6389 = vadd.f32 %v5679, %v6267
  %v6390 = vadd.f32 %v5680, %v6272
  %v6391 = vadd.f32 %v5681, %v6277
  %v6392 = vadd.f32 %v5682, %v6282
  %v6393 = vadd.f32 %v5683, %v6287
  %v6394 = vadd.f32 %v5684, %v6292
  %v6395 = vadd.f32 %v5685, %v6297
  %v6396 = vadd.f32 %v5686, %v6302
  %v6397 = vadd.f32 %v5687, %v6307
  %v6398 = vadd.f32 %v5688, %v6312
  %v6399 = vadd.f32 %v5689, %v6317
  %v6400 = vadd.f32 %v5690, %v6322
  %v6401 = vadd.f32 %v5691, %v6327
  %v6402 = vadd.f32 %v5692, %v6332
  %v6403 = vadd.f32 %v5693, %v6337
  %s6404 = scalar_lea.vmem [#allocation2], 176
  %v6405 = vld [vmem:[%s6404] sm:$0xff]
  %v6406 = vld [vmem:[%s6404 + $0x8] sm:$0xff]
  %v6407 = vld [vmem:[%s6404 + $0x10] sm:$0xff]
  %v6408 = vld [vmem:[%s6404 + $0x18] sm:$0xff]
  %v6409 = vld [vmem:[%s6404 + $0x20] sm:$0xff]
  %v6410 = vld [vmem:[%s6404 + $0x28] sm:$0xff]
  %v6411 = vld [vmem:[%s6404 + $0x30] sm:$0xff]
  %v6412 = vld [vmem:[%s6404 + $0x38] sm:$0xff]
  %v6413 = vld [vmem:[%s6404 + $0x50] sm:$0xff]
  %v6414 = vld [vmem:[%s6404 + $0x58] sm:$0xff]
  %v6415 = vld [vmem:[%s6404 + $0x60] sm:$0xff]
  %v6416 = vld [vmem:[%s6404 + $0x68] sm:$0xff]
  %v6417 = vld [vmem:[%s6404 + $0x70] sm:$0xff]
  %v6418 = vld [vmem:[%s6404 + $0x78] sm:$0xff]
  %v6419 = vld [vmem:[%s6404 + $0x80] sm:$0xff]
  %v6420 = vld [vmem:[%s6404 + $0x88] sm:$0xff]
  %v6421 = vld [vmem:[%s6404 + $0xa0] sm:$0xff]
  %v6422 = vld [vmem:[%s6404 + $0xa8] sm:$0xff]
  %v6423 = vld [vmem:[%s6404 + $0xb0] sm:$0xff]
  %v6424 = vld [vmem:[%s6404 + $0xb8] sm:$0xff]
  %v6425 = vld [vmem:[%s6404 + $0xc0] sm:$0xff]
  %v6426 = vld [vmem:[%s6404 + $0xc8] sm:$0xff]
  %v6427 = vld [vmem:[%s6404 + $0xd0] sm:$0xff]
  %v6428 = vld [vmem:[%s6404 + $0xd8] sm:$0xff]
  %v6429 = vld [vmem:[%s6404 + $0xf0] sm:$0xff]
  %v6430 = vld [vmem:[%s6404 + $0xf8] sm:$0xff]
  %v6431 = vld [vmem:[%s6404 + $0x100] sm:$0xff]
  %v6432 = vld [vmem:[%s6404 + $0x108] sm:$0xff]
  %v6433 = vld [vmem:[%s6404 + $0x110] sm:$0xff]
  %v6434 = vld [vmem:[%s6404 + $0x118] sm:$0xff]
  %v6435 = vld [vmem:[%s6404 + $0x120] sm:$0xff]
  %v6436 = vld [vmem:[%s6404 + $0x128] sm:$0xff]
  %v6437 = vld [vmem:[%s6404 + $0x140] sm:$0xff]
  %v6438 = vld [vmem:[%s6404 + $0x148] sm:$0xff]
  %v6439 = vld [vmem:[%s6404 + $0x150] sm:$0xff]
  %v6440 = vld [vmem:[%s6404 + $0x158] sm:$0xff]
  %v6441 = vld [vmem:[%s6404 + $0x160] sm:$0xff]
  %v6442 = vld [vmem:[%s6404 + $0x168] sm:$0xff]
  %v6443 = vld [vmem:[%s6404 + $0x170] sm:$0xff]
  %v6444 = vld [vmem:[%s6404 + $0x178] sm:$0xff]
  %v6445 = vld [vmem:[%s6404 + $0x190] sm:$0xff]
  %v6446 = vld [vmem:[%s6404 + $0x198] sm:$0xff]
  %v6447 = vld [vmem:[%s6404 + $0x1a0] sm:$0xff]
  %v6448 = vld [vmem:[%s6404 + $0x1a8] sm:$0xff]
  %v6449 = vld [vmem:[%s6404 + $0x1b0] sm:$0xff]
  %v6450 = vld [vmem:[%s6404 + $0x1b8] sm:$0xff]
  %v6451 = vld [vmem:[%s6404 + $0x1c0] sm:$0xff]
  %v6452 = vld [vmem:[%s6404 + $0x1c8] sm:$0xff]
  %v6453 = vld [vmem:[%s6404 + $0x1e0] sm:$0xff]
  %v6454 = vld [vmem:[%s6404 + $0x1e8] sm:$0xff]
  %v6455 = vld [vmem:[%s6404 + $0x1f0] sm:$0xff]
  %v6456 = vld [vmem:[%s6404 + $0x1f8] sm:$0xff]
  %v6457 = vld [vmem:[%s6404 + $0x200] sm:$0xff]
  %v6458 = vld [vmem:[%s6404 + $0x208] sm:$0xff]
  %v6459 = vld [vmem:[%s6404 + $0x210] sm:$0xff]
  %v6460 = vld [vmem:[%s6404 + $0x218] sm:$0xff]
  %v6461 = vld [vmem:[%s6404 + $0x230] sm:$0xff]
  %v6462 = vld [vmem:[%s6404 + $0x238] sm:$0xff]
  %v6463 = vld [vmem:[%s6404 + $0x240] sm:$0xff]
  %v6464 = vld [vmem:[%s6404 + $0x248] sm:$0xff]
  %v6465 = vld [vmem:[%s6404 + $0x250] sm:$0xff]
  %v6466 = vld [vmem:[%s6404 + $0x258] sm:$0xff]
  %v6467 = vld [vmem:[%s6404 + $0x260] sm:$0xff]
  %v6468 = vld [vmem:[%s6404 + $0x268] sm:$0xff]
  %v6469 = vld [vmem:[%s4 + $0x100] sm:$0xff]
  %v6470 = vld [vmem:[%s4 + $0x108] sm:$0xff]
  %v6471 = vld [vmem:[%s4 + $0x110] sm:$0xff]
  %v6472 = vld [vmem:[%s4 + $0x118] sm:$0xff]
  %v6474 = vsel %vm750, %v6405, 0
  %v6477 = vsel %vm750, %v6406, 0
  %v6480 = vsel %vm750, %v6407, 0
  %v6483 = vsel %vm750, %v6408, 0
  %v6486 = vsel %vm750, %v6409, 0
  %v6489 = vsel %vm750, %v6410, 0
  %v6492 = vsel %vm750, %v6411, 0
  %v6495 = vsel %vm750, %v6412, 0
  %v6498 = vsel %vm750, %v6413, 0
  %v6501 = vsel %vm750, %v6414, 0
  %v6504 = vsel %vm750, %v6415, 0
  %v6507 = vsel %vm750, %v6416, 0
  %v6510 = vsel %vm750, %v6417, 0
  %v6513 = vsel %vm750, %v6418, 0
  %v6516 = vsel %vm750, %v6419, 0
  %v6519 = vsel %vm750, %v6420, 0
  %v6522 = vsel %vm750, %v6421, 0
  %v6525 = vsel %vm750, %v6422, 0
  %v6528 = vsel %vm750, %v6423, 0
  %v6531 = vsel %vm750, %v6424, 0
  %v6534 = vsel %vm750, %v6425, 0
  %v6537 = vsel %vm750, %v6426, 0
  %v6540 = vsel %vm750, %v6427, 0
  %v6543 = vsel %vm750, %v6428, 0
  %v6546 = vsel %vm750, %v6429, 0
  %v6549 = vsel %vm750, %v6430, 0
  %v6552 = vsel %vm750, %v6431, 0
  %v6555 = vsel %vm750, %v6432, 0
  %v6558 = vsel %vm750, %v6433, 0
  %v6561 = vsel %vm750, %v6434, 0
  %v6564 = vsel %vm750, %v6435, 0
  %v6567 = vsel %vm750, %v6436, 0
  %v6570 = vsel %vm750, %v6437, 0
  %v6573 = vsel %vm750, %v6438, 0
  %v6576 = vsel %vm750, %v6439, 0
  %v6579 = vsel %vm750, %v6440, 0
  %v6582 = vsel %vm750, %v6441, 0
  %v6585 = vsel %vm750, %v6442, 0
  %v6588 = vsel %vm750, %v6443, 0
  %v6591 = vsel %vm750, %v6444, 0
  %v6594 = vsel %vm750, %v6445, 0
  %v6597 = vsel %vm750, %v6446, 0
  %v6600 = vsel %vm750, %v6447, 0
  %v6603 = vsel %vm750, %v6448, 0
  %v6606 = vsel %vm750, %v6449, 0
  %v6609 = vsel %vm750, %v6450, 0
  %v6612 = vsel %vm750, %v6451, 0
  %v6615 = vsel %vm750, %v6452, 0
  %v6618 = vsel %vm750, %v6453, 0
  %v6621 = vsel %vm750, %v6454, 0
  %v6624 = vsel %vm750, %v6455, 0
  %v6627 = vsel %vm750, %v6456, 0
  %v6630 = vsel %vm750, %v6457, 0
  %v6633 = vsel %vm750, %v6458, 0
  %v6636 = vsel %vm750, %v6459, 0
  %v6639 = vsel %vm750, %v6460, 0
  %v6642 = vsel %vm750, %v6461, 0
  %v6645 = vsel %vm750, %v6462, 0
  %v6648 = vsel %vm750, %v6463, 0
  %v6651 = vsel %vm750, %v6464, 0
  %v6654 = vsel %vm750, %v6465, 0
  %v6657 = vsel %vm750, %v6466, 0
  %v6660 = vsel %vm750, %v6467, 0
  %v6663 = vsel %vm750, %v6468, 0
  %6665 = vmatprep.subr.mxu0 0.0
  %6666 = vmatpush1.msra.mxu0 0.0
  %6667 = vmatprep.subr.mxu0 0.0
  %6668 = vmatpush1.msra.mxu0 0.0
  %6669 = vmatprep.subr.mxu0 0.0
  %6670 = vmatpush1.msra.mxu0 0.0
  %6671 = vmatprep.subr.mxu0 0.0
  %6672 = vmatpush1.msra.mxu0 0.0
  %6673 = vmatprep.subr.mxu0 0.0
  %6674 = vmatpush1.msra.mxu0 0.0
  %6675 = vmatprep.subr.mxu0 0.0
  %6676 = vmatpush1.msra.mxu0 0.0
  %6677 = vmatprep.subr.mxu0 0.0
  %6678 = vmatpush1.msra.mxu0 0.0
  %6679 = vmatprep.subr.mxu0 0.0
  %6680 = vmatpush1.msra.mxu0 0.0
  %6681 = vmatprep.subr.mxu0 0.0
  %6682 = vmatpush1.msra.mxu0 0.0
  %6683 = vmatprep.subr.mxu0 0.0
  %6684 = vmatpush1.msra.mxu0 0.0
  %6685 = vmatprep.subr.mxu0 0.0
  %6686 = vmatpush1.msra.mxu0 0.0
  %6687 = vmatprep.subr.mxu0 0.0
  %6688 = vmatpush1.msra.mxu0 0.0
  %6689 = vmatprep.subr.mxu0 0.0
  %6690 = vmatpush1.msra.mxu0 %v6472
  %6691 = vmatprep.subr.mxu0 0.0
  %6692 = vmatpush1.msra.mxu0 %v6471
  %6693 = vmatprep.subr.mxu0 0.0
  %6694 = vmatpush1.msra.mxu0 %v6470
  %6695 = vmatprep.subr.mxu0 0.0
  %6696 = vmatpush1.msra.mxu0 %v6469
  %6697 = vmatprep.subr.mxu0 0.0
  %6698 = vmatpush2.msra.mxu0 0.0
  %6699 = vmatprep.subr.mxu0 0.0
  %6700 = vmatpush2.msra.mxu0 0.0
  %6701 = vmatprep.subr.mxu0 0.0
  %6702 = vmatpush2.msra.mxu0 0.0
  %6703 = vmatprep.subr.mxu0 0.0
  %6704 = vmatpush2.msra.mxu0 0.0
  %6705 = vmatprep.subr.mxu0 0.0
  %6706 = vmatpush2.msra.mxu0 0.0
  %6707 = vmatprep.subr.mxu0 0.0
  %6708 = vmatpush2.msra.mxu0 0.0
  %6709 = vmatprep.subr.mxu0 0.0
  %6710 = vmatpush2.msra.mxu0 0.0
  %6711 = vmatprep.subr.mxu0 0.0
  %6712 = vmatpush2.msra.mxu0 0.0
  %6713 = vmatprep.subr.mxu0 0.0
  %6714 = vmatpush2.msra.mxu0 0.0
  %6715 = vmatprep.subr.mxu0 0.0
  %6716 = vmatpush2.msra.mxu0 0.0
  %6717 = vmatprep.subr.mxu0 0.0
  %6718 = vmatpush2.msra.mxu0 0.0
  %6719 = vmatprep.subr.mxu0 0.0
  %6720 = vmatpush2.msra.mxu0 0.0
  %6721 = vmatprep.subr.mxu0 0.0
  %6722 = vmatpush2.msra.mxu0 0.0
  %6723 = vmatprep.subr.mxu0 0.0
  %6724 = vmatpush2.msra.mxu0 0.0
  %6725 = vmatprep.subr.mxu0 0.0
  %6726 = vmatpush2.msra.mxu0 0.0
  %6727 = vmatprep.subr.mxu0 0.0
  %6728 = vmatpush2.msra.mxu0 0.0
  %6729 = vmatprep.mubr.f32.mxu0 0.0
  %6730 = vmatmul.mubr.f32.gmra.mxu0 %v6474
  %v6731 = vpop.f32.mrf.mxu0
  %v6732 = vadd.f32 0.0, %v6731
  %v6733 = vpop.f32.mrf.mxu0
  %6734 = vmatprep.mubr.f32.mxu0 0.0
  %6735 = vmatmul.mubr.f32.gmra.mxu0 %v6477
  %v6736 = vpop.f32.mrf.mxu0
  %v6737 = vadd.f32 0.0, %v6736
  %v6738 = vpop.f32.mrf.mxu0
  %6739 = vmatprep.mubr.f32.mxu0 0.0
  %6740 = vmatmul.mubr.f32.gmra.mxu0 %v6480
  %v6741 = vpop.f32.mrf.mxu0
  %v6742 = vadd.f32 0.0, %v6741
  %v6743 = vpop.f32.mrf.mxu0
  %6744 = vmatprep.mubr.f32.mxu0 0.0
  %6745 = vmatmul.mubr.f32.gmra.mxu0 %v6483
  %v6746 = vpop.f32.mrf.mxu0
  %v6747 = vadd.f32 0.0, %v6746
  %v6748 = vpop.f32.mrf.mxu0
  %6749 = vmatprep.mubr.f32.mxu0 0.0
  %6750 = vmatmul.mubr.f32.gmra.mxu0 %v6486
  %v6751 = vpop.f32.mrf.mxu0
  %v6752 = vadd.f32 0.0, %v6751
  %v6753 = vpop.f32.mrf.mxu0
  %6754 = vmatprep.mubr.f32.mxu0 0.0
  %6755 = vmatmul.mubr.f32.gmra.mxu0 %v6489
  %v6756 = vpop.f32.mrf.mxu0
  %v6757 = vadd.f32 0.0, %v6756
  %v6758 = vpop.f32.mrf.mxu0
  %6759 = vmatprep.mubr.f32.mxu0 0.0
  %6760 = vmatmul.mubr.f32.gmra.mxu0 %v6492
  %v6761 = vpop.f32.mrf.mxu0
  %v6762 = vadd.f32 0.0, %v6761
  %v6763 = vpop.f32.mrf.mxu0
  %6764 = vmatprep.mubr.f32.mxu0 0.0
  %6765 = vmatmul.mubr.f32.gmra.mxu0 %v6495
  %v6766 = vpop.f32.mrf.mxu0
  %v6767 = vadd.f32 0.0, %v6766
  %v6768 = vpop.f32.mrf.mxu0
  %6769 = vmatprep.mubr.f32.mxu0 0.0
  %6770 = vmatmul.mubr.f32.gmra.mxu0 %v6498
  %v6771 = vpop.f32.mrf.mxu0
  %v6772 = vadd.f32 0.0, %v6771
  %v6773 = vpop.f32.mrf.mxu0
  %6774 = vmatprep.mubr.f32.mxu0 0.0
  %6775 = vmatmul.mubr.f32.gmra.mxu0 %v6501
  %v6776 = vpop.f32.mrf.mxu0
  %v6777 = vadd.f32 0.0, %v6776
  %v6778 = vpop.f32.mrf.mxu0
  %6779 = vmatprep.mubr.f32.mxu0 0.0
  %6780 = vmatmul.mubr.f32.gmra.mxu0 %v6504
  %v6781 = vpop.f32.mrf.mxu0
  %v6782 = vadd.f32 0.0, %v6781
  %v6783 = vpop.f32.mrf.mxu0
  %6784 = vmatprep.mubr.f32.mxu0 0.0
  %6785 = vmatmul.mubr.f32.gmra.mxu0 %v6507
  %v6786 = vpop.f32.mrf.mxu0
  %v6787 = vadd.f32 0.0, %v6786
  %v6788 = vpop.f32.mrf.mxu0
  %6789 = vmatprep.mubr.f32.mxu0 0.0
  %6790 = vmatmul.mubr.f32.gmra.mxu0 %v6510
  %v6791 = vpop.f32.mrf.mxu0
  %v6792 = vadd.f32 0.0, %v6791
  %v6793 = vpop.f32.mrf.mxu0
  %6794 = vmatprep.mubr.f32.mxu0 0.0
  %6795 = vmatmul.mubr.f32.gmra.mxu0 %v6513
  %v6796 = vpop.f32.mrf.mxu0
  %v6797 = vadd.f32 0.0, %v6796
  %v6798 = vpop.f32.mrf.mxu0
  %6799 = vmatprep.mubr.f32.mxu0 0.0
  %6800 = vmatmul.mubr.f32.gmra.mxu0 %v6516
  %v6801 = vpop.f32.mrf.mxu0
  %v6802 = vadd.f32 0.0, %v6801
  %v6803 = vpop.f32.mrf.mxu0
  %6804 = vmatprep.mubr.f32.mxu0 0.0
  %6805 = vmatmul.mubr.f32.gmra.mxu0 %v6519
  %v6806 = vpop.f32.mrf.mxu0
  %v6807 = vadd.f32 0.0, %v6806
  %v6808 = vpop.f32.mrf.mxu0
  %6809 = vmatprep.mubr.f32.mxu0 0.0
  %6810 = vmatmul.mubr.f32.gmra.mxu0 %v6522
  %v6811 = vpop.f32.mrf.mxu0
  %v6812 = vadd.f32 0.0, %v6811
  %v6813 = vpop.f32.mrf.mxu0
  %6814 = vmatprep.mubr.f32.mxu0 0.0
  %6815 = vmatmul.mubr.f32.gmra.mxu0 %v6525
  %v6816 = vpop.f32.mrf.mxu0
  %v6817 = vadd.f32 0.0, %v6816
  %v6818 = vpop.f32.mrf.mxu0
  %6819 = vmatprep.mubr.f32.mxu0 0.0
  %6820 = vmatmul.mubr.f32.gmra.mxu0 %v6528
  %v6821 = vpop.f32.mrf.mxu0
  %v6822 = vadd.f32 0.0, %v6821
  %v6823 = vpop.f32.mrf.mxu0
  %6824 = vmatprep.mubr.f32.mxu0 0.0
  %6825 = vmatmul.mubr.f32.gmra.mxu0 %v6531
  %v6826 = vpop.f32.mrf.mxu0
  %v6827 = vadd.f32 0.0, %v6826
  %v6828 = vpop.f32.mrf.mxu0
  %6829 = vmatprep.mubr.f32.mxu0 0.0
  %6830 = vmatmul.mubr.f32.gmra.mxu0 %v6534
  %v6831 = vpop.f32.mrf.mxu0
  %v6832 = vadd.f32 0.0, %v6831
  %v6833 = vpop.f32.mrf.mxu0
  %6834 = vmatprep.mubr.f32.mxu0 0.0
  %6835 = vmatmul.mubr.f32.gmra.mxu0 %v6537
  %v6836 = vpop.f32.mrf.mxu0
  %v6837 = vadd.f32 0.0, %v6836
  %v6838 = vpop.f32.mrf.mxu0
  %6839 = vmatprep.mubr.f32.mxu0 0.0
  %6840 = vmatmul.mubr.f32.gmra.mxu0 %v6540
  %v6841 = vpop.f32.mrf.mxu0
  %v6842 = vadd.f32 0.0, %v6841
  %v6843 = vpop.f32.mrf.mxu0
  %6844 = vmatprep.mubr.f32.mxu0 0.0
  %6845 = vmatmul.mubr.f32.gmra.mxu0 %v6543
  %v6846 = vpop.f32.mrf.mxu0
  %v6847 = vadd.f32 0.0, %v6846
  %v6848 = vpop.f32.mrf.mxu0
  %6849 = vmatprep.mubr.f32.mxu0 0.0
  %6850 = vmatmul.mubr.f32.gmra.mxu0 %v6546
  %v6851 = vpop.f32.mrf.mxu0
  %v6852 = vadd.f32 0.0, %v6851
  %v6853 = vpop.f32.mrf.mxu0
  %6854 = vmatprep.mubr.f32.mxu0 0.0
  %6855 = vmatmul.mubr.f32.gmra.mxu0 %v6549
  %v6856 = vpop.f32.mrf.mxu0
  %v6857 = vadd.f32 0.0, %v6856
  %v6858 = vpop.f32.mrf.mxu0
  %6859 = vmatprep.mubr.f32.mxu0 0.0
  %6860 = vmatmul.mubr.f32.gmra.mxu0 %v6552
  %v6861 = vpop.f32.mrf.mxu0
  %v6862 = vadd.f32 0.0, %v6861
  %v6863 = vpop.f32.mrf.mxu0
  %6864 = vmatprep.mubr.f32.mxu0 0.0
  %6865 = vmatmul.mubr.f32.gmra.mxu0 %v6555
  %v6866 = vpop.f32.mrf.mxu0
  %v6867 = vadd.f32 0.0, %v6866
  %v6868 = vpop.f32.mrf.mxu0
  %6869 = vmatprep.mubr.f32.mxu0 0.0
  %6870 = vmatmul.mubr.f32.gmra.mxu0 %v6558
  %v6871 = vpop.f32.mrf.mxu0
  %v6872 = vadd.f32 0.0, %v6871
  %v6873 = vpop.f32.mrf.mxu0
  %6874 = vmatprep.mubr.f32.mxu0 0.0
  %6875 = vmatmul.mubr.f32.gmra.mxu0 %v6561
  %v6876 = vpop.f32.mrf.mxu0
  %v6877 = vadd.f32 0.0, %v6876
  %v6878 = vpop.f32.mrf.mxu0
  %6879 = vmatprep.mubr.f32.mxu0 0.0
  %6880 = vmatmul.mubr.f32.gmra.mxu0 %v6564
  %v6881 = vpop.f32.mrf.mxu0
  %v6882 = vadd.f32 0.0, %v6881
  %v6883 = vpop.f32.mrf.mxu0
  %6884 = vmatprep.mubr.f32.mxu0 0.0
  %6885 = vmatmul.mubr.f32.gmra.mxu0 %v6567
  %v6886 = vpop.f32.mrf.mxu0
  %v6887 = vadd.f32 0.0, %v6886
  %v6888 = vpop.f32.mrf.mxu0
  %6889 = vmatprep.mubr.f32.mxu0 0.0
  %6890 = vmatmul.mubr.f32.gmra.mxu0 %v6570
  %v6891 = vpop.f32.mrf.mxu0
  %v6892 = vadd.f32 0.0, %v6891
  %v6893 = vpop.f32.mrf.mxu0
  %6894 = vmatprep.mubr.f32.mxu0 0.0
  %6895 = vmatmul.mubr.f32.gmra.mxu0 %v6573
  %v6896 = vpop.f32.mrf.mxu0
  %v6897 = vadd.f32 0.0, %v6896
  %v6898 = vpop.f32.mrf.mxu0
  %6899 = vmatprep.mubr.f32.mxu0 0.0
  %6900 = vmatmul.mubr.f32.gmra.mxu0 %v6576
  %v6901 = vpop.f32.mrf.mxu0
  %v6902 = vadd.f32 0.0, %v6901
  %v6903 = vpop.f32.mrf.mxu0
  %6904 = vmatprep.mubr.f32.mxu0 0.0
  %6905 = vmatmul.mubr.f32.gmra.mxu0 %v6579
  %v6906 = vpop.f32.mrf.mxu0
  %v6907 = vadd.f32 0.0, %v6906
  %v6908 = vpop.f32.mrf.mxu0
  %6909 = vmatprep.mubr.f32.mxu0 0.0
  %6910 = vmatmul.mubr.f32.gmra.mxu0 %v6582
  %v6911 = vpop.f32.mrf.mxu0
  %v6912 = vadd.f32 0.0, %v6911
  %v6913 = vpop.f32.mrf.mxu0
  %6914 = vmatprep.mubr.f32.mxu0 0.0
  %6915 = vmatmul.mubr.f32.gmra.mxu0 %v6585
  %v6916 = vpop.f32.mrf.mxu0
  %v6917 = vadd.f32 0.0, %v6916
  %v6918 = vpop.f32.mrf.mxu0
  %6919 = vmatprep.mubr.f32.mxu0 0.0
  %6920 = vmatmul.mubr.f32.gmra.mxu0 %v6588
  %v6921 = vpop.f32.mrf.mxu0
  %v6922 = vadd.f32 0.0, %v6921
  %v6923 = vpop.f32.mrf.mxu0
  %6924 = vmatprep.mubr.f32.mxu0 0.0
  %6925 = vmatmul.mubr.f32.gmra.mxu0 %v6591
  %v6926 = vpop.f32.mrf.mxu0
  %v6927 = vadd.f32 0.0, %v6926
  %v6928 = vpop.f32.mrf.mxu0
  %6929 = vmatprep.mubr.f32.mxu0 0.0
  %6930 = vmatmul.mubr.f32.gmra.mxu0 %v6594
  %v6931 = vpop.f32.mrf.mxu0
  %v6932 = vadd.f32 0.0, %v6931
  %v6933 = vpop.f32.mrf.mxu0
  %6934 = vmatprep.mubr.f32.mxu0 0.0
  %6935 = vmatmul.mubr.f32.gmra.mxu0 %v6597
  %v6936 = vpop.f32.mrf.mxu0
  %v6937 = vadd.f32 0.0, %v6936
  %v6938 = vpop.f32.mrf.mxu0
  %6939 = vmatprep.mubr.f32.mxu0 0.0
  %6940 = vmatmul.mubr.f32.gmra.mxu0 %v6600
  %v6941 = vpop.f32.mrf.mxu0
  %v6942 = vadd.f32 0.0, %v6941
  %v6943 = vpop.f32.mrf.mxu0
  %6944 = vmatprep.mubr.f32.mxu0 0.0
  %6945 = vmatmul.mubr.f32.gmra.mxu0 %v6603
  %v6946 = vpop.f32.mrf.mxu0
  %v6947 = vadd.f32 0.0, %v6946
  %v6948 = vpop.f32.mrf.mxu0
  %6949 = vmatprep.mubr.f32.mxu0 0.0
  %6950 = vmatmul.mubr.f32.gmra.mxu0 %v6606
  %v6951 = vpop.f32.mrf.mxu0
  %v6952 = vadd.f32 0.0, %v6951
  %v6953 = vpop.f32.mrf.mxu0
  %6954 = vmatprep.mubr.f32.mxu0 0.0
  %6955 = vmatmul.mubr.f32.gmra.mxu0 %v6609
  %v6956 = vpop.f32.mrf.mxu0
  %v6957 = vadd.f32 0.0, %v6956
  %v6958 = vpop.f32.mrf.mxu0
  %6959 = vmatprep.mubr.f32.mxu0 0.0
  %6960 = vmatmul.mubr.f32.gmra.mxu0 %v6612
  %v6961 = vpop.f32.mrf.mxu0
  %v6962 = vadd.f32 0.0, %v6961
  %v6963 = vpop.f32.mrf.mxu0
  %6964 = vmatprep.mubr.f32.mxu0 0.0
  %6965 = vmatmul.mubr.f32.gmra.mxu0 %v6615
  %v6966 = vpop.f32.mrf.mxu0
  %v6967 = vadd.f32 0.0, %v6966
  %v6968 = vpop.f32.mrf.mxu0
  %6969 = vmatprep.mubr.f32.mxu0 0.0
  %6970 = vmatmul.mubr.f32.gmra.mxu0 %v6618
  %v6971 = vpop.f32.mrf.mxu0
  %v6972 = vadd.f32 0.0, %v6971
  %v6973 = vpop.f32.mrf.mxu0
  %6974 = vmatprep.mubr.f32.mxu0 0.0
  %6975 = vmatmul.mubr.f32.gmra.mxu0 %v6621
  %v6976 = vpop.f32.mrf.mxu0
  %v6977 = vadd.f32 0.0, %v6976
  %v6978 = vpop.f32.mrf.mxu0
  %6979 = vmatprep.mubr.f32.mxu0 0.0
  %6980 = vmatmul.mubr.f32.gmra.mxu0 %v6624
  %v6981 = vpop.f32.mrf.mxu0
  %v6982 = vadd.f32 0.0, %v6981
  %v6983 = vpop.f32.mrf.mxu0
  %6984 = vmatprep.mubr.f32.mxu0 0.0
  %6985 = vmatmul.mubr.f32.gmra.mxu0 %v6627
  %v6986 = vpop.f32.mrf.mxu0
  %v6987 = vadd.f32 0.0, %v6986
  %v6988 = vpop.f32.mrf.mxu0
  %6989 = vmatprep.mubr.f32.mxu0 0.0
  %6990 = vmatmul.mubr.f32.gmra.mxu0 %v6630
  %v6991 = vpop.f32.mrf.mxu0
  %v6992 = vadd.f32 0.0, %v6991
  %v6993 = vpop.f32.mrf.mxu0
  %6994 = vmatprep.mubr.f32.mxu0 0.0
  %6995 = vmatmul.mubr.f32.gmra.mxu0 %v6633
  %v6996 = vpop.f32.mrf.mxu0
  %v6997 = vadd.f32 0.0, %v6996
  %v6998 = vpop.f32.mrf.mxu0
  %6999 = vmatprep.mubr.f32.mxu0 0.0
  %7000 = vmatmul.mubr.f32.gmra.mxu0 %v6636
  %v7001 = vpop.f32.mrf.mxu0
  %v7002 = vadd.f32 0.0, %v7001
  %v7003 = vpop.f32.mrf.mxu0
  %7004 = vmatprep.mubr.f32.mxu0 0.0
  %7005 = vmatmul.mubr.f32.gmra.mxu0 %v6639
  %v7006 = vpop.f32.mrf.mxu0
  %v7007 = vadd.f32 0.0, %v7006
  %v7008 = vpop.f32.mrf.mxu0
  %7009 = vmatprep.mubr.f32.mxu0 0.0
  %7010 = vmatmul.mubr.f32.gmra.mxu0 %v6642
  %v7011 = vpop.f32.mrf.mxu0
  %v7012 = vadd.f32 0.0, %v7011
  %v7013 = vpop.f32.mrf.mxu0
  %7014 = vmatprep.mubr.f32.mxu0 0.0
  %7015 = vmatmul.mubr.f32.gmra.mxu0 %v6645
  %v7016 = vpop.f32.mrf.mxu0
  %v7017 = vadd.f32 0.0, %v7016
  %v7018 = vpop.f32.mrf.mxu0
  %7019 = vmatprep.mubr.f32.mxu0 0.0
  %7020 = vmatmul.mubr.f32.gmra.mxu0 %v6648
  %v7021 = vpop.f32.mrf.mxu0
  %v7022 = vadd.f32 0.0, %v7021
  %v7023 = vpop.f32.mrf.mxu0
  %7024 = vmatprep.mubr.f32.mxu0 0.0
  %7025 = vmatmul.mubr.f32.gmra.mxu0 %v6651
  %v7026 = vpop.f32.mrf.mxu0
  %v7027 = vadd.f32 0.0, %v7026
  %v7028 = vpop.f32.mrf.mxu0
  %7029 = vmatprep.mubr.f32.mxu0 0.0
  %7030 = vmatmul.mubr.f32.gmra.mxu0 %v6654
  %v7031 = vpop.f32.mrf.mxu0
  %v7032 = vadd.f32 0.0, %v7031
  %v7033 = vpop.f32.mrf.mxu0
  %7034 = vmatprep.mubr.f32.mxu0 0.0
  %7035 = vmatmul.mubr.f32.gmra.mxu0 %v6657
  %v7036 = vpop.f32.mrf.mxu0
  %v7037 = vadd.f32 0.0, %v7036
  %v7038 = vpop.f32.mrf.mxu0
  %7039 = vmatprep.mubr.f32.mxu0 0.0
  %7040 = vmatmul.mubr.f32.gmra.mxu0 %v6660
  %v7041 = vpop.f32.mrf.mxu0
  %v7042 = vadd.f32 0.0, %v7041
  %v7043 = vpop.f32.mrf.mxu0
  %7044 = vmatprep.mubr.f32.mxu0 0.0
  %7045 = vmatmul.mubr.f32.gmra.mxu0 %v6663
  %v7046 = vpop.f32.mrf.mxu0
  %v7047 = vadd.f32 0.0, %v7046
  %v7048 = vpop.f32.mrf.mxu0
  %7049 = vdwg.mxu0
  %v7050 = vadd.f32 %v6340, %v6732
  %v7051 = vadd.f32 %v6341, %v6737
  %v7052 = vadd.f32 %v6342, %v6742
  %v7053 = vadd.f32 %v6343, %v6747
  %v7054 = vadd.f32 %v6344, %v6752
  %v7055 = vadd.f32 %v6345, %v6757
  %v7056 = vadd.f32 %v6346, %v6762
  %v7057 = vadd.f32 %v6347, %v6767
  %v7058 = vadd.f32 %v6348, %v6772
  %v7059 = vadd.f32 %v6349, %v6777
  %v7060 = vadd.f32 %v6350, %v6782
  %v7061 = vadd.f32 %v6351, %v6787
  %v7062 = vadd.f32 %v6352, %v6792
  %v7063 = vadd.f32 %v6353, %v6797
  %v7064 = vadd.f32 %v6354, %v6802
  %v7065 = vadd.f32 %v6355, %v6807
  %v7066 = vadd.f32 %v6356, %v6812
  %v7067 = vadd.f32 %v6357, %v6817
  %v7068 = vadd.f32 %v6358, %v6822
  %v7069 = vadd.f32 %v6359, %v6827
  %v7070 = vadd.f32 %v6360, %v6832
  %v7071 = vadd.f32 %v6361, %v6837
  %v7072 = vadd.f32 %v6362, %v6842
  %v7073 = vadd.f32 %v6363, %v6847
  %v7074 = vadd.f32 %v6364, %v6852
  %v7075 = vadd.f32 %v6365, %v6857
  %v7076 = vadd.f32 %v6366, %v6862
  %v7077 = vadd.f32 %v6367, %v6867
  %v7078 = vadd.f32 %v6368, %v6872
  %v7079 = vadd.f32 %v6369, %v6877
  %v7080 = vadd.f32 %v6370, %v6882
  %v7081 = vadd.f32 %v6371, %v6887
  %v7082 = vadd.f32 %v6372, %v6892
  %v7083 = vadd.f32 %v6373, %v6897
  %v7084 = vadd.f32 %v6374, %v6902
  %v7085 = vadd.f32 %v6375, %v6907
  %v7086 = vadd.f32 %v6376, %v6912
  %v7087 = vadd.f32 %v6377, %v6917
  %v7088 = vadd.f32 %v6378, %v6922
  %v7089 = vadd.f32 %v6379, %v6927
  %v7090 = vadd.f32 %v6380, %v6932
  %v7091 = vadd.f32 %v6381, %v6937
  %v7092 = vadd.f32 %v6382, %v6942
  %v7093 = vadd.f32 %v6383, %v6947
  %v7094 = vadd.f32 %v6384, %v6952
  %v7095 = vadd.f32 %v6385, %v6957
  %v7096 = vadd.f32 %v6386, %v6962
  %v7097 = vadd.f32 %v6387, %v6967
  %v7098 = vadd.f32 %v6388, %v6972
  %v7099 = vadd.f32 %v6389, %v6977
  %v7100 = vadd.f32 %v6390, %v6982
  %v7101 = vadd.f32 %v6391, %v6987
  %v7102 = vadd.f32 %v6392, %v6992
  %v7103 = vadd.f32 %v6393, %v6997
  %v7104 = vadd.f32 %v6394, %v7002
  %v7105 = vadd.f32 %v6395, %v7007
  %v7106 = vadd.f32 %v6396, %v7012
  %v7107 = vadd.f32 %v6397, %v7017
  %v7108 = vadd.f32 %v6398, %v7022
  %v7109 = vadd.f32 %v6399, %v7027
  %v7110 = vadd.f32 %v6400, %v7032
  %v7111 = vadd.f32 %v6401, %v7037
  %v7112 = vadd.f32 %v6402, %v7042
  %v7113 = vadd.f32 %v6403, %v7047
  %v7114 = vld [vmem:[%s5] sm:$0x1]
  %v7116 = vlaneseq
  %v7117 = vshrl.u32 %v7116, 7
  %v7118 = vsub.s32 0, %v7117
  %v7119 = vrot.slane %v7114, %v7118
  %v7121 = vadd.f32 %v7050, %v7119
  %v7122 = vadd.f32 %v7051, %v7119
  %v7123 = vadd.f32 %v7052, %v7119
  %v7124 = vadd.f32 %v7053, %v7119
  %v7125 = vadd.f32 %v7054, %v7119
  %v7126 = vadd.f32 %v7055, %v7119
  %v7127 = vadd.f32 %v7056, %v7119
  %v7128 = vadd.f32 %v7057, %v7119
  %v7129 = vadd.f32 %v7058, %v7119
  %v7130 = vadd.f32 %v7059, %v7119
  %v7131 = vadd.f32 %v7060, %v7119
  %v7132 = vadd.f32 %v7061, %v7119
  %v7133 = vadd.f32 %v7062, %v7119
  %v7134 = vadd.f32 %v7063, %v7119
  %v7135 = vadd.f32 %v7064, %v7119
  %v7136 = vadd.f32 %v7065, %v7119
  %v7137 = vadd.f32 %v7066, %v7119
  %v7138 = vadd.f32 %v7067, %v7119
  %v7139 = vadd.f32 %v7068, %v7119
  %v7140 = vadd.f32 %v7069, %v7119
  %v7141 = vadd.f32 %v7070, %v7119
  %v7142 = vadd.f32 %v7071, %v7119
  %v7143 = vadd.f32 %v7072, %v7119
  %v7144 = vadd.f32 %v7073, %v7119
  %v7145 = vadd.f32 %v7074, %v7119
  %v7146 = vadd.f32 %v7075, %v7119
  %v7147 = vadd.f32 %v7076, %v7119
  %v7148 = vadd.f32 %v7077, %v7119
  %v7149 = vadd.f32 %v7078, %v7119
  %v7150 = vadd.f32 %v7079, %v7119
  %v7151 = vadd.f32 %v7080, %v7119
  %v7152 = vadd.f32 %v7081, %v7119
  %v7153 = vadd.f32 %v7082, %v7119
  %v7154 = vadd.f32 %v7083, %v7119
  %v7155 = vadd.f32 %v7084, %v7119
  %v7156 = vadd.f32 %v7085, %v7119
  %v7157 = vadd.f32 %v7086, %v7119
  %v7158 = vadd.f32 %v7087, %v7119
  %v7159 = vadd.f32 %v7088, %v7119
  %v7160 = vadd.f32 %v7089, %v7119
  %v7161 = vadd.f32 %v7090, %v7119
  %v7162 = vadd.f32 %v7091, %v7119
  %v7163 = vadd.f32 %v7092, %v7119
  %v7164 = vadd.f32 %v7093, %v7119
  %v7165 = vadd.f32 %v7094, %v7119
  %v7166 = vadd.f32 %v7095, %v7119
  %v7167 = vadd.f32 %v7096, %v7119
  %v7168 = vadd.f32 %v7097, %v7119
  %v7169 = vadd.f32 %v7098, %v7119
  %v7170 = vadd.f32 %v7099, %v7119
  %v7171 = vadd.f32 %v7100, %v7119
  %v7172 = vadd.f32 %v7101, %v7119
  %v7173 = vadd.f32 %v7102, %v7119
  %v7174 = vadd.f32 %v7103, %v7119
  %v7175 = vadd.f32 %v7104, %v7119
  %v7176 = vadd.f32 %v7105, %v7119
  %v7177 = vadd.f32 %v7106, %v7119
  %v7178 = vadd.f32 %v7107, %v7119
  %v7179 = vadd.f32 %v7108, %v7119
  %v7180 = vadd.f32 %v7109, %v7119
  %v7181 = vadd.f32 %v7110, %v7119
  %v7182 = vadd.f32 %v7111, %v7119
  %v7183 = vadd.f32 %v7112, %v7119
  %v7184 = vadd.f32 %v7113, %v7119
  %v7185 = vmax.f32 %v7121, 0.0
  %v7186 = vmax.f32 %v7122, 0.0
  %v7187 = vmax.f32 %v7123, 0.0
  %v7188 = vmax.f32 %v7124, 0.0
  %v7189 = vmax.f32 %v7125, 0.0
  %v7190 = vmax.f32 %v7126, 0.0
  %v7191 = vmax.f32 %v7127, 0.0
  %v7192 = vmax.f32 %v7128, 0.0
  %v7193 = vmax.f32 %v7129, 0.0
  %v7194 = vmax.f32 %v7130, 0.0
  %v7195 = vmax.f32 %v7131, 0.0
  %v7196 = vmax.f32 %v7132, 0.0
  %v7197 = vmax.f32 %v7133, 0.0
  %v7198 = vmax.f32 %v7134, 0.0
  %v7199 = vmax.f32 %v7135, 0.0
  %v7200 = vmax.f32 %v7136, 0.0
  %v7201 = vmax.f32 %v7137, 0.0
  %v7202 = vmax.f32 %v7138, 0.0
  %v7203 = vmax.f32 %v7139, 0.0
  %v7204 = vmax.f32 %v7140, 0.0
  %v7205 = vmax.f32 %v7141, 0.0
  %v7206 = vmax.f32 %v7142, 0.0
  %v7207 = vmax.f32 %v7143, 0.0
  %v7208 = vmax.f32 %v7144, 0.0
  %v7209 = vmax.f32 %v7145, 0.0
  %v7210 = vmax.f32 %v7146, 0.0
  %v7211 = vmax.f32 %v7147, 0.0
  %v7212 = vmax.f32 %v7148, 0.0
  %v7213 = vmax.f32 %v7149, 0.0
  %v7214 = vmax.f32 %v7150, 0.0
  %v7215 = vmax.f32 %v7151, 0.0
  %v7216 = vmax.f32 %v7152, 0.0
  %v7217 = vmax.f32 %v7153, 0.0
  %v7218 = vmax.f32 %v7154, 0.0
  %v7219 = vmax.f32 %v7155, 0.0
  %v7220 = vmax.f32 %v7156, 0.0
  %v7221 = vmax.f32 %v7157, 0.0
  %v7222 = vmax.f32 %v7158, 0.0
  %v7223 = vmax.f32 %v7159, 0.0
  %v7224 = vmax.f32 %v7160, 0.0
  %v7225 = vmax.f32 %v7161, 0.0
  %v7226 = vmax.f32 %v7162, 0.0
  %v7227 = vmax.f32 %v7163, 0.0
  %v7228 = vmax.f32 %v7164, 0.0
  %v7229 = vmax.f32 %v7165, 0.0
  %v7230 = vmax.f32 %v7166, 0.0
  %v7231 = vmax.f32 %v7167, 0.0
  %v7232 = vmax.f32 %v7168, 0.0
  %v7233 = vmax.f32 %v7169, 0.0
  %v7234 = vmax.f32 %v7170, 0.0
  %v7235 = vmax.f32 %v7171, 0.0
  %v7236 = vmax.f32 %v7172, 0.0
  %v7237 = vmax.f32 %v7173, 0.0
  %v7238 = vmax.f32 %v7174, 0.0
  %v7239 = vmax.f32 %v7175, 0.0
  %v7240 = vmax.f32 %v7176, 0.0
  %v7241 = vmax.f32 %v7177, 0.0
  %v7242 = vmax.f32 %v7178, 0.0
  %v7243 = vmax.f32 %v7179, 0.0
  %v7244 = vmax.f32 %v7180, 0.0
  %v7245 = vmax.f32 %v7181, 0.0
  %v7246 = vmax.f32 %v7182, 0.0
  %v7247 = vmax.f32 %v7183, 0.0
  %v7248 = vmax.f32 %v7184, 0.0
  %7250 = vrot.lane.b32.xlu0 %v7186, 64
  %v7251 = vpop.permute.xlu0 %7250
  %7254 = vrot.lane.b32.xlu0 %v7188, 64
  %v7255 = vpop.permute.xlu0 %7254
  %vm7257 = vcmask 523264
  %v7258 = vsel %vm7257, %v7185, %v7251
  %v7259 = vsel %vm7257, %v7187, %v7255
  %v7260 = vpack.c.bf16 %v7258, %v7258
  %v7261 = vpack.c.bf16 %v7259, %v7259
  %v7262 = vld [vmem:[%s6] sm:$0xf]
  %v7263 = vld [vmem:[%s6 + $0x4] sm:$0xf]
  %v7264 = vld [vmem:[%s6 + $0x8] sm:$0xf]
  %v7265 = vld [vmem:[%s6 + $0xc] sm:$0xf]
  %v7266 = vld [vmem:[%s6 + $0x10] sm:$0xf]
  %v7267 = vld [vmem:[%s6 + $0x14] sm:$0xf]
  %v7268 = vld [vmem:[%s6 + $0x18] sm:$0xf]
  %v7269 = vld [vmem:[%s6 + $0x1c] sm:$0xf]
  %v7270 = vld [vmem:[%s6 + $0x20] sm:$0xf]
  %v7271 = vld [vmem:[%s6 + $0x24] sm:$0xf]
  %v7272 = vld [vmem:[%s6 + $0x28] sm:$0xf]
  %v7273 = vld [vmem:[%s6 + $0x2c] sm:$0xf]
  %v7274 = vld [vmem:[%s6 + $0x30] sm:$0xf]
  %v7275 = vld [vmem:[%s6 + $0x34] sm:$0xf]
  %v7276 = vld [vmem:[%s6 + $0x38] sm:$0xf]
  %v7277 = vld [vmem:[%s6 + $0x3c] sm:$0xf]
  %v7278 = vld [vmem:[%s6 + $0x40] sm:$0xf]
  %v7279 = vld [vmem:[%s6 + $0x44] sm:$0xf]
  %v7280 = vld [vmem:[%s6 + $0x48] sm:$0xf]
  %v7281 = vld [vmem:[%s6 + $0x4c] sm:$0xf]
  %v7282 = vld [vmem:[%s6 + $0x50] sm:$0xf]
  %v7283 = vld [vmem:[%s6 + $0x54] sm:$0xf]
  %v7284 = vld [vmem:[%s6 + $0x58] sm:$0xf]
  %v7285 = vld [vmem:[%s6 + $0x5c] sm:$0xf]
  %v7286 = vld [vmem:[%s6 + $0x60] sm:$0xf]
  %v7287 = vld [vmem:[%s6 + $0x64] sm:$0xf]
  %v7288 = vld [vmem:[%s6 + $0x68] sm:$0xf]
  %v7289 = vld [vmem:[%s6 + $0x6c] sm:$0xf]
  %v7290 = vld [vmem:[%s6 + $0x70] sm:$0xf]
  %v7291 = vld [vmem:[%s6 + $0x74] sm:$0xf]
  %v7292 = vld [vmem:[%s6 + $0x78] sm:$0xf]
  %v7293 = vld [vmem:[%s6 + $0x7c] sm:$0xf]
  %7295 = vrot.lane.b32.xlu0 %v7190, 64
  %v7296 = vpop.permute.xlu0 %7295
  %7299 = vrot.lane.b32.xlu0 %v7192, 64
  %v7300 = vpop.permute.xlu0 %7299
  %v7302 = vsel %vm7257, %v7189, %v7296
  %v7303 = vsel %vm7257, %v7191, %v7300
  %v7304 = vpack.c.bf16 %v7302, %v7302
  %v7305 = vpack.c.bf16 %v7303, %v7303
  %s7306 = scalar_lea.vmem %s6, 128
  %v7307 = vld [vmem:[%s7306] sm:$0xf]
  %v7308 = vld [vmem:[%s7306 + $0x4] sm:$0xf]
  %v7309 = vld [vmem:[%s7306 + $0x8] sm:$0xf]
  %v7310 = vld [vmem:[%s7306 + $0xc] sm:$0xf]
  %v7311 = vld [vmem:[%s7306 + $0x10] sm:$0xf]
  %v7312 = vld [vmem:[%s7306 + $0x14] sm:$0xf]
  %v7313 = vld [vmem:[%s7306 + $0x18] sm:$0xf]
  %v7314 = vld [vmem:[%s7306 + $0x1c] sm:$0xf]
  %v7315 = vld [vmem:[%s7306 + $0x20] sm:$0xf]
  %v7316 = vld [vmem:[%s7306 + $0x24] sm:$0xf]
  %v7317 = vld [vmem:[%s7306 + $0x28] sm:$0xf]
  %v7318 = vld [vmem:[%s7306 + $0x2c] sm:$0xf]
  %v7319 = vld [vmem:[%s7306 + $0x30] sm:$0xf]
  %v7320 = vld [vmem:[%s7306 + $0x34] sm:$0xf]
  %v7321 = vld [vmem:[%s7306 + $0x38] sm:$0xf]
  %v7322 = vld [vmem:[%s7306 + $0x3c] sm:$0xf]
  %v7323 = vld [vmem:[%s7306 + $0x40] sm:$0xf]
  %v7324 = vld [vmem:[%s7306 + $0x44] sm:$0xf]
  %v7325 = vld [vmem:[%s7306 + $0x48] sm:$0xf]
  %v7326 = vld [vmem:[%s7306 + $0x4c] sm:$0xf]
  %v7327 = vld [vmem:[%s7306 + $0x50] sm:$0xf]
  %v7328 = vld [vmem:[%s7306 + $0x54] sm:$0xf]
  %v7329 = vld [vmem:[%s7306 + $0x58] sm:$0xf]
  %v7330 = vld [vmem:[%s7306 + $0x5c] sm:$0xf]
  %v7331 = vld [vmem:[%s7306 + $0x60] sm:$0xf]
  %v7332 = vld [vmem:[%s7306 + $0x64] sm:$0xf]
  %v7333 = vld [vmem:[%s7306 + $0x68] sm:$0xf]
  %v7334 = vld [vmem:[%s7306 + $0x6c] sm:$0xf]
  %v7335 = vld [vmem:[%s7306 + $0x70] sm:$0xf]
  %v7336 = vld [vmem:[%s7306 + $0x74] sm:$0xf]
  %v7337 = vld [vmem:[%s7306 + $0x78] sm:$0xf]
  %v7338 = vld [vmem:[%s7306 + $0x7c] sm:$0xf]
  %v7371 = vunpack.c.l.b16 %v7307
  %v7372 = vunpack.c.l.b16 %v7308
  %v7373 = vunpack.c.l.b16 %v7309
  %v7374 = vunpack.c.l.b16 %v7310
  %v7375 = vunpack.c.l.b16 %v7311
  %v7376 = vunpack.c.l.b16 %v7312
  %v7377 = vunpack.c.l.b16 %v7313
  %v7378 = vunpack.c.l.b16 %v7314
  %v7379 = vunpack.c.l.b16 %v7315
  %v7380 = vunpack.c.l.b16 %v7316
  %v7381 = vunpack.c.l.b16 %v7317
  %v7382 = vunpack.c.l.b16 %v7318
  %v7383 = vunpack.c.l.b16 %v7319
  %v7384 = vunpack.c.l.b16 %v7320
  %v7385 = vunpack.c.l.b16 %v7321
  %v7386 = vunpack.c.l.b16 %v7322
  %v7387 = vunpack.c.l.b16 %v7323
  %v7388 = vunpack.c.l.b16 %v7324
  %v7389 = vunpack.c.l.b16 %v7325
  %v7390 = vunpack.c.l.b16 %v7326
  %v7391 = vunpack.c.l.b16 %v7327
  %v7392 = vunpack.c.l.b16 %v7328
  %v7393 = vunpack.c.l.b16 %v7329
  %v7394 = vunpack.c.l.b16 %v7330
  %v7395 = vunpack.c.l.b16 %v7331
  %v7396 = vunpack.c.l.b16 %v7332
  %v7397 = vunpack.c.l.b16 %v7333
  %v7398 = vunpack.c.l.b16 %v7334
  %v7399 = vunpack.c.l.b16 %v7335
  %v7400 = vunpack.c.l.b16 %v7336
  %v7401 = vunpack.c.l.b16 %v7337
  %v7402 = vunpack.c.l.b16 %v7338
  %v7403 = vpack.c.b16 %v7372, %v7371
  %v7404 = vpack.c.b16 %v7374, %v7373
  %v7405 = vpack.c.b16 %v7376, %v7375
  %v7406 = vpack.c.b16 %v7378, %v7377
  %v7407 = vpack.c.b16 %v7380, %v7379
  %v7408 = vpack.c.b16 %v7382, %v7381
  %v7409 = vpack.c.b16 %v7384, %v7383
  %v7410 = vpack.c.b16 %v7386, %v7385
  %v7411 = vpack.c.b16 %v7388, %v7387
  %v7412 = vpack.c.b16 %v7390, %v7389
  %v7413 = vpack.c.b16 %v7392, %v7391
  %v7414 = vpack.c.b16 %v7394, %v7393
  %v7415 = vpack.c.b16 %v7396, %v7395
  %v7416 = vpack.c.b16 %v7398, %v7397
  %v7417 = vpack.c.b16 %v7400, %v7399
  %v7418 = vpack.c.b16 %v7402, %v7401
  %7435 = vmatprep.subr.bf16.mxu0 0
  %7436 = vmatpush1.bf16.msra.mxu0 %v7410
  %7437 = vmatprep.subr.bf16.mxu0 0
  %7438 = vmatpush1.bf16.msra.mxu0 %v7409
  %7439 = vmatprep.subr.bf16.mxu0 0
  %7440 = vmatpush1.bf16.msra.mxu0 %v7408
  %7441 = vmatprep.subr.bf16.mxu0 0
  %7442 = vmatpush1.bf16.msra.mxu0 %v7407
  %7443 = vmatprep.subr.bf16.mxu0 0
  %7444 = vmatpush1.bf16.msra.mxu0 %v7406
  %7445 = vmatprep.subr.bf16.mxu0 0
  %7446 = vmatpush1.bf16.msra.mxu0 %v7405
  %7447 = vmatprep.subr.bf16.mxu0 0
  %7448 = vmatpush1.bf16.msra.mxu0 %v7404
  %7449 = vmatprep.subr.bf16.mxu0 0
  %7450 = vmatpush1.bf16.msra.mxu0 %v7403
  %7451 = vmatprep.subr.bf16.mxu0 0
  %7452 = vmatpush2.bf16.msra.mxu0 %v7418
  %7453 = vmatprep.subr.bf16.mxu0 0
  %7454 = vmatpush2.bf16.msra.mxu0 %v7417
  %7455 = vmatprep.subr.bf16.mxu0 0
  %7456 = vmatpush2.bf16.msra.mxu0 %v7416
  %7457 = vmatprep.subr.bf16.mxu0 0
  %7458 = vmatpush2.bf16.msra.mxu0 %v7415
  %7459 = vmatprep.subr.bf16.mxu0 0
  %7460 = vmatpush2.bf16.msra.mxu0 %v7414
  %7461 = vmatprep.subr.bf16.mxu0 0
  %7462 = vmatpush2.bf16.msra.mxu0 %v7413
  %7463 = vmatprep.subr.bf16.mxu0 0
  %7464 = vmatpush2.bf16.msra.mxu0 %v7412
  %7465 = vmatprep.subr.bf16.mxu0 0
  %7466 = vmatpush2.bf16.msra.mxu0 %v7411
  %7467 = vmatprep.mubr.bf16.mxu0 %v7305
  %7468 = vmatmul.mubr.bf16.gmra.mxu0 %v7304
  %v7469 = vpop.f32.mrf.mxu0
  %v7470 = vadd.f32 0.0, %v7469
  %v7471 = vpop.f32.mrf.mxu0
  %v7472 = vpop.f32.mrf.mxu0
  %v7473 = vpop.f32.mrf.mxu0
  %7474 = vdwg.mxu0
  %v7507 = vunpack.c.l.b16 %v7262
  %v7508 = vunpack.c.l.b16 %v7263
  %v7509 = vunpack.c.l.b16 %v7264
  %v7510 = vunpack.c.l.b16 %v7265
  %v7511 = vunpack.c.l.b16 %v7266
  %v7512 = vunpack.c.l.b16 %v7267
  %v7513 = vunpack.c.l.b16 %v7268
  %v7514 = vunpack.c.l.b16 %v7269
  %v7515 = vunpack.c.l.b16 %v7270
  %v7516 = vunpack.c.l.b16 %v7271
  %v7517 = vunpack.c.l.b16 %v7272
  %v7518 = vunpack.c.l.b16 %v7273
  %v7519 = vunpack.c.l.b16 %v7274
  %v7520 = vunpack.c.l.b16 %v7275
  %v7521 = vunpack.c.l.b16 %v7276
  %v7522 = vunpack.c.l.b16 %v7277
  %v7523 = vunpack.c.l.b16 %v7278
  %v7524 = vunpack.c.l.b16 %v7279
  %v7525 = vunpack.c.l.b16 %v7280
  %v7526 = vunpack.c.l.b16 %v7281
  %v7527 = vunpack.c.l.b16 %v7282
  %v7528 = vunpack.c.l.b16 %v7283
  %v7529 = vunpack.c.l.b16 %v7284
  %v7530 = vunpack.c.l.b16 %v7285
  %v7531 = vunpack.c.l.b16 %v7286
  %v7532 = vunpack.c.l.b16 %v7287
  %v7533 = vunpack.c.l.b16 %v7288
  %v7534 = vunpack.c.l.b16 %v7289
  %v7535 = vunpack.c.l.b16 %v7290
  %v7536 = vunpack.c.l.b16 %v7291
  %v7537 = vunpack.c.l.b16 %v7292
  %v7538 = vunpack.c.l.b16 %v7293
  %v7539 = vpack.c.b16 %v7508, %v7507
  %v7540 = vpack.c.b16 %v7510, %v7509
  %v7541 = vpack.c.b16 %v7512, %v7511
  %v7542 = vpack.c.b16 %v7514, %v7513
  %v7543 = vpack.c.b16 %v7516, %v7515
  %v7544 = vpack.c.b16 %v7518, %v7517
  %v7545 = vpack.c.b16 %v7520, %v7519
  %v7546 = vpack.c.b16 %v7522, %v7521
  %v7547 = vpack.c.b16 %v7524, %v7523
  %v7548 = vpack.c.b16 %v7526, %v7525
  %v7549 = vpack.c.b16 %v7528, %v7527
  %v7550 = vpack.c.b16 %v7530, %v7529
  %v7551 = vpack.c.b16 %v7532, %v7531
  %v7552 = vpack.c.b16 %v7534, %v7533
  %v7553 = vpack.c.b16 %v7536, %v7535
  %v7554 = vpack.c.b16 %v7538, %v7537
  %7571 = vmatprep.subr.bf16.mxu0 0
  %7572 = vmatpush1.bf16.msra.mxu0 %v7546
  %7573 = vmatprep.subr.bf16.mxu0 0
  %7574 = vmatpush1.bf16.msra.mxu0 %v7545
  %7575 = vmatprep.subr.bf16.mxu0 0
  %7576 = vmatpush1.bf16.msra.mxu0 %v7544
  %7577 = vmatprep.subr.bf16.mxu0 0
  %7578 = vmatpush1.bf16.msra.mxu0 %v7543
  %7579 = vmatprep.subr.bf16.mxu0 0
  %7580 = vmatpush1.bf16.msra.mxu0 %v7542
  %7581 = vmatprep.subr.bf16.mxu0 0
  %7582 = vmatpush1.bf16.msra.mxu0 %v7541
  %7583 = vmatprep.subr.bf16.mxu0 0
  %7584 = vmatpush1.bf16.msra.mxu0 %v7540
  %7585 = vmatprep.subr.bf16.mxu0 0
  %7586 = vmatpush1.bf16.msra.mxu0 %v7539
  %7587 = vmatprep.subr.bf16.mxu0 0
  %7588 = vmatpush2.bf16.msra.mxu0 %v7554
  %7589 = vmatprep.subr.bf16.mxu0 0
  %7590 = vmatpush2.bf16.msra.mxu0 %v7553
  %7591 = vmatprep.subr.bf16.mxu0 0
  %7592 = vmatpush2.bf16.msra.mxu0 %v7552
  %7593 = vmatprep.subr.bf16.mxu0 0
  %7594 = vmatpush2.bf16.msra.mxu0 %v7551
  %7595 = vmatprep.subr.bf16.mxu0 0
  %7596 = vmatpush2.bf16.msra.mxu0 %v7550
  %7597 = vmatprep.subr.bf16.mxu0 0
  %7598 = vmatpush2.bf16.msra.mxu0 %v7549
  %7599 = vmatprep.subr.bf16.mxu0 0
  %7600 = vmatpush2.bf16.msra.mxu0 %v7548
  %7601 = vmatprep.subr.bf16.mxu0 0
  %7602 = vmatpush2.bf16.msra.mxu0 %v7547
  %7603 = vmatprep.mubr.bf16.mxu0 %v7261
  %7604 = vmatmul.mubr.bf16.gmra.mxu0 %v7260
  %v7605 = vpop.f32.mrf.mxu0
  %v7606 = vadd.f32 %v7470, %v7605
  %v7607 = vpop.f32.mrf.mxu0
  %v7608 = vpop.f32.mrf.mxu0
  %v7609 = vpop.f32.mrf.mxu0
  %7610 = vdwg.mxu0
  %7612 = vrot.lane.b32.xlu0 %v7194, 64
  %v7613 = vpop.permute.xlu0 %7612
  %7616 = vrot.lane.b32.xlu0 %v7196, 64
  %v7617 = vpop.permute.xlu0 %7616
  %v7619 = vsel %vm7257, %v7193, %v7613
  %v7620 = vsel %vm7257, %v7195, %v7617
  %v7621 = vpack.c.bf16 %v7619, %v7619
  %v7622 = vpack.c.bf16 %v7620, %v7620
  %s7623 = scalar_lea.vmem %s6, 256
  %v7624 = vld [vmem:[%s7623] sm:$0xf]
  %v7625 = vld [vmem:[%s7623 + $0x4] sm:$0xf]
  %v7626 = vld [vmem:[%s7623 + $0x8] sm:$0xf]
  %v7627 = vld [vmem:[%s7623 + $0xc] sm:$0xf]
  %v7628 = vld [vmem:[%s7623 + $0x10] sm:$0xf]
  %v7629 = vld [vmem:[%s7623 + $0x14] sm:$0xf]
  %v7630 = vld [vmem:[%s7623 + $0x18] sm:$0xf]
  %v7631 = vld [vmem:[%s7623 + $0x1c] sm:$0xf]
  %v7632 = vld [vmem:[%s7623 + $0x20] sm:$0xf]
  %v7633 = vld [vmem:[%s7623 + $0x24] sm:$0xf]
  %v7634 = vld [vmem:[%s7623 + $0x28] sm:$0xf]
  %v7635 = vld [vmem:[%s7623 + $0x2c] sm:$0xf]
  %v7636 = vld [vmem:[%s7623 + $0x30] sm:$0xf]
  %v7637 = vld [vmem:[%s7623 + $0x34] sm:$0xf]
  %v7638 = vld [vmem:[%s7623 + $0x38] sm:$0xf]
  %v7639 = vld [vmem:[%s7623 + $0x3c] sm:$0xf]
  %v7640 = vld [vmem:[%s7623 + $0x40] sm:$0xf]
  %v7641 = vld [vmem:[%s7623 + $0x44] sm:$0xf]
  %v7642 = vld [vmem:[%s7623 + $0x48] sm:$0xf]
  %v7643 = vld [vmem:[%s7623 + $0x4c] sm:$0xf]
  %v7644 = vld [vmem:[%s7623 + $0x50] sm:$0xf]
  %v7645 = vld [vmem:[%s7623 + $0x54] sm:$0xf]
  %v7646 = vld [vmem:[%s7623 + $0x58] sm:$0xf]
  %v7647 = vld [vmem:[%s7623 + $0x5c] sm:$0xf]
  %v7648 = vld [vmem:[%s7623 + $0x60] sm:$0xf]
  %v7649 = vld [vmem:[%s7623 + $0x64] sm:$0xf]
  %v7650 = vld [vmem:[%s7623 + $0x68] sm:$0xf]
  %v7651 = vld [vmem:[%s7623 + $0x6c] sm:$0xf]
  %v7652 = vld [vmem:[%s7623 + $0x70] sm:$0xf]
  %v7653 = vld [vmem:[%s7623 + $0x74] sm:$0xf]
  %v7654 = vld [vmem:[%s7623 + $0x78] sm:$0xf]
  %v7655 = vld [vmem:[%s7623 + $0x7c] sm:$0xf]
  %v7688 = vunpack.c.l.b16 %v7624
  %v7689 = vunpack.c.l.b16 %v7625
  %v7690 = vunpack.c.l.b16 %v7626
  %v7691 = vunpack.c.l.b16 %v7627
  %v7692 = vunpack.c.l.b16 %v7628
  %v7693 = vunpack.c.l.b16 %v7629
  %v7694 = vunpack.c.l.b16 %v7630
  %v7695 = vunpack.c.l.b16 %v7631
  %v7696 = vunpack.c.l.b16 %v7632
  %v7697 = vunpack.c.l.b16 %v7633
  %v7698 = vunpack.c.l.b16 %v7634
  %v7699 = vunpack.c.l.b16 %v7635
  %v7700 = vunpack.c.l.b16 %v7636
  %v7701 = vunpack.c.l.b16 %v7637
  %v7702 = vunpack.c.l.b16 %v7638
  %v7703 = vunpack.c.l.b16 %v7639
  %v7704 = vunpack.c.l.b16 %v7640
  %v7705 = vunpack.c.l.b16 %v7641
  %v7706 = vunpack.c.l.b16 %v7642
  %v7707 = vunpack.c.l.b16 %v7643
  %v7708 = vunpack.c.l.b16 %v7644
  %v7709 = vunpack.c.l.b16 %v7645
  %v7710 = vunpack.c.l.b16 %v7646
  %v7711 = vunpack.c.l.b16 %v7647
  %v7712 = vunpack.c.l.b16 %v7648
  %v7713 = vunpack.c.l.b16 %v7649
  %v7714 = vunpack.c.l.b16 %v7650
  %v7715 = vunpack.c.l.b16 %v7651
  %v7716 = vunpack.c.l.b16 %v7652
  %v7717 = vunpack.c.l.b16 %v7653
  %v7718 = vunpack.c.l.b16 %v7654
  %v7719 = vunpack.c.l.b16 %v7655
  %v7720 = vpack.c.b16 %v7689, %v7688
  %v7721 = vpack.c.b16 %v7691, %v7690
  %v7722 = vpack.c.b16 %v7693, %v7692
  %v7723 = vpack.c.b16 %v7695, %v7694
  %v7724 = vpack.c.b16 %v7697, %v7696
  %v7725 = vpack.c.b16 %v7699, %v7698
  %v7726 = vpack.c.b16 %v7701, %v7700
  %v7727 = vpack.c.b16 %v7703, %v7702
  %v7728 = vpack.c.b16 %v7705, %v7704
  %v7729 = vpack.c.b16 %v7707, %v7706
  %v7730 = vpack.c.b16 %v7709, %v7708
  %v7731 = vpack.c.b16 %v7711, %v7710
  %v7732 = vpack.c.b16 %v7713, %v7712
  %v7733 = vpack.c.b16 %v7715, %v7714
  %v7734 = vpack.c.b16 %v7717, %v7716
  %v7735 = vpack.c.b16 %v7719, %v7718
  %7752 = vmatprep.subr.bf16.mxu0 0
  %7753 = vmatpush1.bf16.msra.mxu0 %v7727
  %7754 = vmatprep.subr.bf16.mxu0 0
  %7755 = vmatpush1.bf16.msra.mxu0 %v7726
  %7756 = vmatprep.subr.bf16.mxu0 0
  %7757 = vmatpush1.bf16.msra.mxu0 %v7725
  %7758 = vmatprep.subr.bf16.mxu0 0
  %7759 = vmatpush1.bf16.msra.mxu0 %v7724
  %7760 = vmatprep.subr.bf16.mxu0 0
  %7761 = vmatpush1.bf16.msra.mxu0 %v7723
  %7762 = vmatprep.subr.bf16.mxu0 0
  %7763 = vmatpush1.bf16.msra.mxu0 %v7722
  %7764 = vmatprep.subr.bf16.mxu0 0
  %7765 = vmatpush1.bf16.msra.mxu0 %v7721
  %7766 = vmatprep.subr.bf16.mxu0 0
  %7767 = vmatpush1.bf16.msra.mxu0 %v7720
  %7768 = vmatprep.subr.bf16.mxu0 0
  %7769 = vmatpush2.bf16.msra.mxu0 %v7735
  %7770 = vmatprep.subr.bf16.mxu0 0
  %7771 = vmatpush2.bf16.msra.mxu0 %v7734
  %7772 = vmatprep.subr.bf16.mxu0 0
  %7773 = vmatpush2.bf16.msra.mxu0 %v7733
  %7774 = vmatprep.subr.bf16.mxu0 0
  %7775 = vmatpush2.bf16.msra.mxu0 %v7732
  %7776 = vmatprep.subr.bf16.mxu0 0
  %7777 = vmatpush2.bf16.msra.mxu0 %v7731
  %7778 = vmatprep.subr.bf16.mxu0 0
  %7779 = vmatpush2.bf16.msra.mxu0 %v7730
  %7780 = vmatprep.subr.bf16.mxu0 0
  %7781 = vmatpush2.bf16.msra.mxu0 %v7729
  %7782 = vmatprep.subr.bf16.mxu0 0
  %7783 = vmatpush2.bf16.msra.mxu0 %v7728
  %7784 = vmatprep.mubr.bf16.mxu0 %v7622
  %7785 = vmatmul.mubr.bf16.gmra.mxu0 %v7621
  %v7786 = vpop.f32.mrf.mxu0
  %v7787 = vadd.f32 0.0, %v7786
  %v7788 = vpop.f32.mrf.mxu0
  %v7789 = vpop.f32.mrf.mxu0
  %v7790 = vpop.f32.mrf.mxu0
  %7791 = vdwg.mxu0
  %v7792 = vadd.f32 %v7606, %v7787
  %7794 = vrot.lane.b32.xlu0 %v7198, 64
  %v7795 = vpop.permute.xlu0 %7794
  %7798 = vrot.lane.b32.xlu0 %v7200, 64
  %v7799 = vpop.permute.xlu0 %7798
  %v7801 = vsel %vm7257, %v7197, %v7795
  %v7802 = vsel %vm7257, %v7199, %v7799
  %v7803 = vpack.c.bf16 %v7801, %v7801
  %v7804 = vpack.c.bf16 %v7802, %v7802
  %s7805 = scalar_lea.vmem %s6, 384
  %v7806 = vld [vmem:[%s7805] sm:$0xf]
  %v7807 = vld [vmem:[%s7805 + $0x4] sm:$0xf]
  %v7808 = vld [vmem:[%s7805 + $0x8] sm:$0xf]
  %v7809 = vld [vmem:[%s7805 + $0xc] sm:$0xf]
  %v7810 = vld [vmem:[%s7805 + $0x10] sm:$0xf]
  %v7811 = vld [vmem:[%s7805 + $0x14] sm:$0xf]
  %v7812 = vld [vmem:[%s7805 + $0x18] sm:$0xf]
  %v7813 = vld [vmem:[%s7805 + $0x1c] sm:$0xf]
  %v7814 = vld [vmem:[%s7805 + $0x20] sm:$0xf]
  %v7815 = vld [vmem:[%s7805 + $0x24] sm:$0xf]
  %v7816 = vld [vmem:[%s7805 + $0x28] sm:$0xf]
  %v7817 = vld [vmem:[%s7805 + $0x2c] sm:$0xf]
  %v7818 = vld [vmem:[%s7805 + $0x30] sm:$0xf]
  %v7819 = vld [vmem:[%s7805 + $0x34] sm:$0xf]
  %v7820 = vld [vmem:[%s7805 + $0x38] sm:$0xf]
  %v7821 = vld [vmem:[%s7805 + $0x3c] sm:$0xf]
  %v7822 = vld [vmem:[%s7805 + $0x40] sm:$0xf]
  %v7823 = vld [vmem:[%s7805 + $0x44] sm:$0xf]
  %v7824 = vld [vmem:[%s7805 + $0x48] sm:$0xf]
  %v7825 = vld [vmem:[%s7805 + $0x4c] sm:$0xf]
  %v7826 = vld [vmem:[%s7805 + $0x50] sm:$0xf]
  %v7827 = vld [vmem:[%s7805 + $0x54] sm:$0xf]
  %v7828 = vld [vmem:[%s7805 + $0x58] sm:$0xf]
  %v7829 = vld [vmem:[%s7805 + $0x5c] sm:$0xf]
  %v7830 = vld [vmem:[%s7805 + $0x60] sm:$0xf]
  %v7831 = vld [vmem:[%s7805 + $0x64] sm:$0xf]
  %v7832 = vld [vmem:[%s7805 + $0x68] sm:$0xf]
  %v7833 = vld [vmem:[%s7805 + $0x6c] sm:$0xf]
  %v7834 = vld [vmem:[%s7805 + $0x70] sm:$0xf]
  %v7835 = vld [vmem:[%s7805 + $0x74] sm:$0xf]
  %v7836 = vld [vmem:[%s7805 + $0x78] sm:$0xf]
  %v7837 = vld [vmem:[%s7805 + $0x7c] sm:$0xf]
  %v7870 = vunpack.c.l.b16 %v7806
  %v7871 = vunpack.c.l.b16 %v7807
  %v7872 = vunpack.c.l.b16 %v7808
  %v7873 = vunpack.c.l.b16 %v7809
  %v7874 = vunpack.c.l.b16 %v7810
  %v7875 = vunpack.c.l.b16 %v7811
  %v7876 = vunpack.c.l.b16 %v7812
  %v7877 = vunpack.c.l.b16 %v7813
  %v7878 = vunpack.c.l.b16 %v7814
  %v7879 = vunpack.c.l.b16 %v7815
  %v7880 = vunpack.c.l.b16 %v7816
  %v7881 = vunpack.c.l.b16 %v7817
  %v7882 = vunpack.c.l.b16 %v7818
  %v7883 = vunpack.c.l.b16 %v7819
  %v7884 = vunpack.c.l.b16 %v7820
  %v7885 = vunpack.c.l.b16 %v7821
  %v7886 = vunpack.c.l.b16 %v7822
  %v7887 = vunpack.c.l.b16 %v7823
  %v7888 = vunpack.c.l.b16 %v7824
  %v7889 = vunpack.c.l.b16 %v7825
  %v7890 = vunpack.c.l.b16 %v7826
  %v7891 = vunpack.c.l.b16 %v7827
  %v7892 = vunpack.c.l.b16 %v7828
  %v7893 = vunpack.c.l.b16 %v7829
  %v7894 = vunpack.c.l.b16 %v7830
  %v7895 = vunpack.c.l.b16 %v7831
  %v7896 = vunpack.c.l.b16 %v7832
  %v7897 = vunpack.c.l.b16 %v7833
  %v7898 = vunpack.c.l.b16 %v7834
  %v7899 = vunpack.c.l.b16 %v7835
  %v7900 = vunpack.c.l.b16 %v7836
  %v7901 = vunpack.c.l.b16 %v7837
  %v7902 = vpack.c.b16 %v7871, %v7870
  %v7903 = vpack.c.b16 %v7873, %v7872
  %v7904 = vpack.c.b16 %v7875, %v7874
  %v7905 = vpack.c.b16 %v7877, %v7876
  %v7906 = vpack.c.b16 %v7879, %v7878
  %v7907 = vpack.c.b16 %v7881, %v7880
  %v7908 = vpack.c.b16 %v7883, %v7882
  %v7909 = vpack.c.b16 %v7885, %v7884
  %v7910 = vpack.c.b16 %v7887, %v7886
  %v7911 = vpack.c.b16 %v7889, %v7888
  %v7912 = vpack.c.b16 %v7891, %v7890
  %v7913 = vpack.c.b16 %v7893, %v7892
  %v7914 = vpack.c.b16 %v7895, %v7894
  %v7915 = vpack.c.b16 %v7897, %v7896
  %v7916 = vpack.c.b16 %v7899, %v7898
  %v7917 = vpack.c.b16 %v7901, %v7900
  %7934 = vmatprep.subr.bf16.mxu0 0
  %7935 = vmatpush1.bf16.msra.mxu0 %v7909
  %7936 = vmatprep.subr.bf16.mxu0 0
  %7937 = vmatpush1.bf16.msra.mxu0 %v7908
  %7938 = vmatprep.subr.bf16.mxu0 0
  %7939 = vmatpush1.bf16.msra.mxu0 %v7907
  %7940 = vmatprep.subr.bf16.mxu0 0
  %7941 = vmatpush1.bf16.msra.mxu0 %v7906
  %7942 = vmatprep.subr.bf16.mxu0 0
  %7943 = vmatpush1.bf16.msra.mxu0 %v7905
  %7944 = vmatprep.subr.bf16.mxu0 0
  %7945 = vmatpush1.bf16.msra.mxu0 %v7904
  %7946 = vmatprep.subr.bf16.mxu0 0
  %7947 = vmatpush1.bf16.msra.mxu0 %v7903
  %7948 = vmatprep.subr.bf16.mxu0 0
  %7949 = vmatpush1.bf16.msra.mxu0 %v7902
  %7950 = vmatprep.subr.bf16.mxu0 0
  %7951 = vmatpush2.bf16.msra.mxu0 %v7917
  %7952 = vmatprep.subr.bf16.mxu0 0
  %7953 = vmatpush2.bf16.msra.mxu0 %v7916
  %7954 = vmatprep.subr.bf16.mxu0 0
  %7955 = vmatpush2.bf16.msra.mxu0 %v7915
  %7956 = vmatprep.subr.bf16.mxu0 0
  %7957 = vmatpush2.bf16.msra.mxu0 %v7914
  %7958 = vmatprep.subr.bf16.mxu0 0
  %7959 = vmatpush2.bf16.msra.mxu0 %v7913
  %7960 = vmatprep.subr.bf16.mxu0 0
  %7961 = vmatpush2.bf16.msra.mxu0 %v7912
  %7962 = vmatprep.subr.bf16.mxu0 0
  %7963 = vmatpush2.bf16.msra.mxu0 %v7911
  %7964 = vmatprep.subr.bf16.mxu0 0
  %7965 = vmatpush2.bf16.msra.mxu0 %v7910
  %7966 = vmatprep.mubr.bf16.mxu0 %v7804
  %7967 = vmatmul.mubr.bf16.gmra.mxu0 %v7803
  %v7968 = vpop.f32.mrf.mxu0
  %v7969 = vadd.f32 0.0, %v7968
  %v7970 = vpop.f32.mrf.mxu0
  %v7971 = vpop.f32.mrf.mxu0
  %v7972 = vpop.f32.mrf.mxu0
  %7973 = vdwg.mxu0
  %v7974 = vadd.f32 %v7792, %v7969
  %7976 = vrot.lane.b32.xlu0 %v7202, 64
  %v7977 = vpop.permute.xlu0 %7976
  %7980 = vrot.lane.b32.xlu0 %v7204, 64
  %v7981 = vpop.permute.xlu0 %7980
  %v7983 = vsel %vm7257, %v7201, %v7977
  %v7984 = vsel %vm7257, %v7203, %v7981
  %v7985 = vpack.c.bf16 %v7983, %v7983
  %v7986 = vpack.c.bf16 %v7984, %v7984
  %s7987 = scalar_lea.vmem %s6, 512
  %v7988 = vld [vmem:[%s7987] sm:$0xf]
  %v7989 = vld [vmem:[%s7987 + $0x4] sm:$0xf]
  %v7990 = vld [vmem:[%s7987 + $0x8] sm:$0xf]
  %v7991 = vld [vmem:[%s7987 + $0xc] sm:$0xf]
  %v7992 = vld [vmem:[%s7987 + $0x10] sm:$0xf]
  %v7993 = vld [vmem:[%s7987 + $0x14] sm:$0xf]
  %v7994 = vld [vmem:[%s7987 + $0x18] sm:$0xf]
  %v7995 = vld [vmem:[%s7987 + $0x1c] sm:$0xf]
  %v7996 = vld [vmem:[%s7987 + $0x20] sm:$0xf]
  %v7997 = vld [vmem:[%s7987 + $0x24] sm:$0xf]
  %v7998 = vld [vmem:[%s7987 + $0x28] sm:$0xf]
  %v7999 = vld [vmem:[%s7987 + $0x2c] sm:$0xf]
  %v8000 = vld [vmem:[%s7987 + $0x30] sm:$0xf]
  %v8001 = vld [vmem:[%s7987 + $0x34] sm:$0xf]
  %v8002 = vld [vmem:[%s7987 + $0x38] sm:$0xf]
  %v8003 = vld [vmem:[%s7987 + $0x3c] sm:$0xf]
  %v8004 = vld [vmem:[%s7987 + $0x40] sm:$0xf]
  %v8005 = vld [vmem:[%s7987 + $0x44] sm:$0xf]
  %v8006 = vld [vmem:[%s7987 + $0x48] sm:$0xf]
  %v8007 = vld [vmem:[%s7987 + $0x4c] sm:$0xf]
  %v8008 = vld [vmem:[%s7987 + $0x50] sm:$0xf]
  %v8009 = vld [vmem:[%s7987 + $0x54] sm:$0xf]
  %v8010 = vld [vmem:[%s7987 + $0x58] sm:$0xf]
  %v8011 = vld [vmem:[%s7987 + $0x5c] sm:$0xf]
  %v8012 = vld [vmem:[%s7987 + $0x60] sm:$0xf]
  %v8013 = vld [vmem:[%s7987 + $0x64] sm:$0xf]
  %v8014 = vld [vmem:[%s7987 + $0x68] sm:$0xf]
  %v8015 = vld [vmem:[%s7987 + $0x6c] sm:$0xf]
  %v8016 = vld [vmem:[%s7987 + $0x70] sm:$0xf]
  %v8017 = vld [vmem:[%s7987 + $0x74] sm:$0xf]
  %v8018 = vld [vmem:[%s7987 + $0x78] sm:$0xf]
  %v8019 = vld [vmem:[%s7987 + $0x7c] sm:$0xf]
  %v8052 = vunpack.c.l.b16 %v7988
  %v8053 = vunpack.c.l.b16 %v7989
  %v8054 = vunpack.c.l.b16 %v7990
  %v8055 = vunpack.c.l.b16 %v7991
  %v8056 = vunpack.c.l.b16 %v7992
  %v8057 = vunpack.c.l.b16 %v7993
  %v8058 = vunpack.c.l.b16 %v7994
  %v8059 = vunpack.c.l.b16 %v7995
  %v8060 = vunpack.c.l.b16 %v7996
  %v8061 = vunpack.c.l.b16 %v7997
  %v8062 = vunpack.c.l.b16 %v7998
  %v8063 = vunpack.c.l.b16 %v7999
  %v8064 = vunpack.c.l.b16 %v8000
  %v8065 = vunpack.c.l.b16 %v8001
  %v8066 = vunpack.c.l.b16 %v8002
  %v8067 = vunpack.c.l.b16 %v8003
  %v8068 = vunpack.c.l.b16 %v8004
  %v8069 = vunpack.c.l.b16 %v8005
  %v8070 = vunpack.c.l.b16 %v8006
  %v8071 = vunpack.c.l.b16 %v8007
  %v8072 = vunpack.c.l.b16 %v8008
  %v8073 = vunpack.c.l.b16 %v8009
  %v8074 = vunpack.c.l.b16 %v8010
  %v8075 = vunpack.c.l.b16 %v8011
  %v8076 = vunpack.c.l.b16 %v8012
  %v8077 = vunpack.c.l.b16 %v8013
  %v8078 = vunpack.c.l.b16 %v8014
  %v8079 = vunpack.c.l.b16 %v8015
  %v8080 = vunpack.c.l.b16 %v8016
  %v8081 = vunpack.c.l.b16 %v8017
  %v8082 = vunpack.c.l.b16 %v8018
  %v8083 = vunpack.c.l.b16 %v8019
  %v8084 = vpack.c.b16 %v8053, %v8052
  %v8085 = vpack.c.b16 %v8055, %v8054
  %v8086 = vpack.c.b16 %v8057, %v8056
  %v8087 = vpack.c.b16 %v8059, %v8058
  %v8088 = vpack.c.b16 %v8061, %v8060
  %v8089 = vpack.c.b16 %v8063, %v8062
  %v8090 = vpack.c.b16 %v8065, %v8064
  %v8091 = vpack.c.b16 %v8067, %v8066
  %v8092 = vpack.c.b16 %v8069, %v8068
  %v8093 = vpack.c.b16 %v8071, %v8070
  %v8094 = vpack.c.b16 %v8073, %v8072
  %v8095 = vpack.c.b16 %v8075, %v8074
  %v8096 = vpack.c.b16 %v8077, %v8076
  %v8097 = vpack.c.b16 %v8079, %v8078
  %v8098 = vpack.c.b16 %v8081, %v8080
  %v8099 = vpack.c.b16 %v8083, %v8082
  %8116 = vmatprep.subr.bf16.mxu0 0
  %8117 = vmatpush1.bf16.msra.mxu0 %v8091
  %8118 = vmatprep.subr.bf16.mxu0 0
  %8119 = vmatpush1.bf16.msra.mxu0 %v8090
  %8120 = vmatprep.subr.bf16.mxu0 0
  %8121 = vmatpush1.bf16.msra.mxu0 %v8089
  %8122 = vmatprep.subr.bf16.mxu0 0
  %8123 = vmatpush1.bf16.msra.mxu0 %v8088
  %8124 = vmatprep.subr.bf16.mxu0 0
  %8125 = vmatpush1.bf16.msra.mxu0 %v8087
  %8126 = vmatprep.subr.bf16.mxu0 0
  %8127 = vmatpush1.bf16.msra.mxu0 %v8086
  %8128 = vmatprep.subr.bf16.mxu0 0
  %8129 = vmatpush1.bf16.msra.mxu0 %v8085
  %8130 = vmatprep.subr.bf16.mxu0 0
  %8131 = vmatpush1.bf16.msra.mxu0 %v8084
  %8132 = vmatprep.subr.bf16.mxu0 0
  %8133 = vmatpush2.bf16.msra.mxu0 %v8099
  %8134 = vmatprep.subr.bf16.mxu0 0
  %8135 = vmatpush2.bf16.msra.mxu0 %v8098
  %8136 = vmatprep.subr.bf16.mxu0 0
  %8137 = vmatpush2.bf16.msra.mxu0 %v8097
  %8138 = vmatprep.subr.bf16.mxu0 0
  %8139 = vmatpush2.bf16.msra.mxu0 %v8096
  %8140 = vmatprep.subr.bf16.mxu0 0
  %8141 = vmatpush2.bf16.msra.mxu0 %v8095
  %8142 = vmatprep.subr.bf16.mxu0 0
  %8143 = vmatpush2.bf16.msra.mxu0 %v8094
  %8144 = vmatprep.subr.bf16.mxu0 0
  %8145 = vmatpush2.bf16.msra.mxu0 %v8093
  %8146 = vmatprep.subr.bf16.mxu0 0
  %8147 = vmatpush2.bf16.msra.mxu0 %v8092
  %8148 = vmatprep.mubr.bf16.mxu0 %v7986
  %8149 = vmatmul.mubr.bf16.gmra.mxu0 %v7985
  %v8150 = vpop.f32.mrf.mxu0
  %v8151 = vadd.f32 0.0, %v8150
  %v8152 = vpop.f32.mrf.mxu0
  %v8153 = vpop.f32.mrf.mxu0
  %v8154 = vpop.f32.mrf.mxu0
  %8155 = vdwg.mxu0
  %v8156 = vadd.f32 %v7974, %v8151
  %8158 = vrot.lane.b32.xlu0 %v7206, 64
  %v8159 = vpop.permute.xlu0 %8158
  %8162 = vrot.lane.b32.xlu0 %v7208, 64
  %v8163 = vpop.permute.xlu0 %8162
  %v8165 = vsel %vm7257, %v7205, %v8159
  %v8166 = vsel %vm7257, %v7207, %v8163
  %v8167 = vpack.c.bf16 %v8165, %v8165
  %v8168 = vpack.c.bf16 %v8166, %v8166
  %s8169 = scalar_lea.vmem %s6, 640
  %v8170 = vld [vmem:[%s8169] sm:$0xf]
  %v8171 = vld [vmem:[%s8169 + $0x4] sm:$0xf]
  %v8172 = vld [vmem:[%s8169 + $0x8] sm:$0xf]
  %v8173 = vld [vmem:[%s8169 + $0xc] sm:$0xf]
  %v8174 = vld [vmem:[%s8169 + $0x10] sm:$0xf]
  %v8175 = vld [vmem:[%s8169 + $0x14] sm:$0xf]
  %v8176 = vld [vmem:[%s8169 + $0x18] sm:$0xf]
  %v8177 = vld [vmem:[%s8169 + $0x1c] sm:$0xf]
  %v8178 = vld [vmem:[%s8169 + $0x20] sm:$0xf]
  %v8179 = vld [vmem:[%s8169 + $0x24] sm:$0xf]
  %v8180 = vld [vmem:[%s8169 + $0x28] sm:$0xf]
  %v8181 = vld [vmem:[%s8169 + $0x2c] sm:$0xf]
  %v8182 = vld [vmem:[%s8169 + $0x30] sm:$0xf]
  %v8183 = vld [vmem:[%s8169 + $0x34] sm:$0xf]
  %v8184 = vld [vmem:[%s8169 + $0x38] sm:$0xf]
  %v8185 = vld [vmem:[%s8169 + $0x3c] sm:$0xf]
  %v8186 = vld [vmem:[%s8169 + $0x40] sm:$0xf]
  %v8187 = vld [vmem:[%s8169 + $0x44] sm:$0xf]
  %v8188 = vld [vmem:[%s8169 + $0x48] sm:$0xf]
  %v8189 = vld [vmem:[%s8169 + $0x4c] sm:$0xf]
  %v8190 = vld [vmem:[%s8169 + $0x50] sm:$0xf]
  %v8191 = vld [vmem:[%s8169 + $0x54] sm:$0xf]
  %v8192 = vld [vmem:[%s8169 + $0x58] sm:$0xf]
  %v8193 = vld [vmem:[%s8169 + $0x5c] sm:$0xf]
  %v8194 = vld [vmem:[%s8169 + $0x60] sm:$0xf]
  %v8195 = vld [vmem:[%s8169 + $0x64] sm:$0xf]
  %v8196 = vld [vmem:[%s8169 + $0x68] sm:$0xf]
  %v8197 = vld [vmem:[%s8169 + $0x6c] sm:$0xf]
  %v8198 = vld [vmem:[%s8169 + $0x70] sm:$0xf]
  %v8199 = vld [vmem:[%s8169 + $0x74] sm:$0xf]
  %v8200 = vld [vmem:[%s8169 + $0x78] sm:$0xf]
  %v8201 = vld [vmem:[%s8169 + $0x7c] sm:$0xf]
  %v8234 = vunpack.c.l.b16 %v8170
  %v8235 = vunpack.c.l.b16 %v8171
  %v8236 = vunpack.c.l.b16 %v8172
  %v8237 = vunpack.c.l.b16 %v8173
  %v8238 = vunpack.c.l.b16 %v8174
  %v8239 = vunpack.c.l.b16 %v8175
  %v8240 = vunpack.c.l.b16 %v8176
  %v8241 = vunpack.c.l.b16 %v8177
  %v8242 = vunpack.c.l.b16 %v8178
  %v8243 = vunpack.c.l.b16 %v8179
  %v8244 = vunpack.c.l.b16 %v8180
  %v8245 = vunpack.c.l.b16 %v8181
  %v8246 = vunpack.c.l.b16 %v8182
  %v8247 = vunpack.c.l.b16 %v8183
  %v8248 = vunpack.c.l.b16 %v8184
  %v8249 = vunpack.c.l.b16 %v8185
  %v8250 = vunpack.c.l.b16 %v8186
  %v8251 = vunpack.c.l.b16 %v8187
  %v8252 = vunpack.c.l.b16 %v8188
  %v8253 = vunpack.c.l.b16 %v8189
  %v8254 = vunpack.c.l.b16 %v8190
  %v8255 = vunpack.c.l.b16 %v8191
  %v8256 = vunpack.c.l.b16 %v8192
  %v8257 = vunpack.c.l.b16 %v8193
  %v8258 = vunpack.c.l.b16 %v8194
  %v8259 = vunpack.c.l.b16 %v8195
  %v8260 = vunpack.c.l.b16 %v8196
  %v8261 = vunpack.c.l.b16 %v8197
  %v8262 = vunpack.c.l.b16 %v8198
  %v8263 = vunpack.c.l.b16 %v8199
  %v8264 = vunpack.c.l.b16 %v8200
  %v8265 = vunpack.c.l.b16 %v8201
  %v8266 = vpack.c.b16 %v8235, %v8234
  %v8267 = vpack.c.b16 %v8237, %v8236
  %v8268 = vpack.c.b16 %v8239, %v8238
  %v8269 = vpack.c.b16 %v8241, %v8240
  %v8270 = vpack.c.b16 %v8243, %v8242
  %v8271 = vpack.c.b16 %v8245, %v8244
  %v8272 = vpack.c.b16 %v8247, %v8246
  %v8273 = vpack.c.b16 %v8249, %v8248
  %v8274 = vpack.c.b16 %v8251, %v8250
  %v8275 = vpack.c.b16 %v8253, %v8252
  %v8276 = vpack.c.b16 %v8255, %v8254
  %v8277 = vpack.c.b16 %v8257, %v8256
  %v8278 = vpack.c.b16 %v8259, %v8258
  %v8279 = vpack.c.b16 %v8261, %v8260
  %v8280 = vpack.c.b16 %v8263, %v8262
  %v8281 = vpack.c.b16 %v8265, %v8264
  %8298 = vmatprep.subr.bf16.mxu0 0
  %8299 = vmatpush1.bf16.msra.mxu0 %v8273
  %8300 = vmatprep.subr.bf16.mxu0 0
  %8301 = vmatpush1.bf16.msra.mxu0 %v8272
  %8302 = vmatprep.subr.bf16.mxu0 0
  %8303 = vmatpush1.bf16.msra.mxu0 %v8271
  %8304 = vmatprep.subr.bf16.mxu0 0
  %8305 = vmatpush1.bf16.msra.mxu0 %v8270
  %8306 = vmatprep.subr.bf16.mxu0 0
  %8307 = vmatpush1.bf16.msra.mxu0 %v8269
  %8308 = vmatprep.subr.bf16.mxu0 0
  %8309 = vmatpush1.bf16.msra.mxu0 %v8268
  %8310 = vmatprep.subr.bf16.mxu0 0
  %8311 = vmatpush1.bf16.msra.mxu0 %v8267
  %8312 = vmatprep.subr.bf16.mxu0 0
  %8313 = vmatpush1.bf16.msra.mxu0 %v8266
  %8314 = vmatprep.subr.bf16.mxu0 0
  %8315 = vmatpush2.bf16.msra.mxu0 %v8281
  %8316 = vmatprep.subr.bf16.mxu0 0
  %8317 = vmatpush2.bf16.msra.mxu0 %v8280
  %8318 = vmatprep.subr.bf16.mxu0 0
  %8319 = vmatpush2.bf16.msra.mxu0 %v8279
  %8320 = vmatprep.subr.bf16.mxu0 0
  %8321 = vmatpush2.bf16.msra.mxu0 %v8278
  %8322 = vmatprep.subr.bf16.mxu0 0
  %8323 = vmatpush2.bf16.msra.mxu0 %v8277
  %8324 = vmatprep.subr.bf16.mxu0 0
  %8325 = vmatpush2.bf16.msra.mxu0 %v8276
  %8326 = vmatprep.subr.bf16.mxu0 0
  %8327 = vmatpush2.bf16.msra.mxu0 %v8275
  %8328 = vmatprep.subr.bf16.mxu0 0
  %8329 = vmatpush2.bf16.msra.mxu0 %v8274
  %8330 = vmatprep.mubr.bf16.mxu0 %v8168
  %8331 = vmatmul.mubr.bf16.gmra.mxu0 %v8167
  %v8332 = vpop.f32.mrf.mxu0
  %v8333 = vadd.f32 0.0, %v8332
  %v8334 = vpop.f32.mrf.mxu0
  %v8335 = vpop.f32.mrf.mxu0
  %v8336 = vpop.f32.mrf.mxu0
  %8337 = vdwg.mxu0
  %v8338 = vadd.f32 %v8156, %v8333
  %8340 = vrot.lane.b32.xlu0 %v7210, 64
  %v8341 = vpop.permute.xlu0 %8340
  %8344 = vrot.lane.b32.xlu0 %v7212, 64
  %v8345 = vpop.permute.xlu0 %8344
  %v8347 = vsel %vm7257, %v7209, %v8341
  %v8348 = vsel %vm7257, %v7211, %v8345
  %v8349 = vpack.c.bf16 %v8347, %v8347
  %v8350 = vpack.c.bf16 %v8348, %v8348
  %s8351 = scalar_lea.vmem %s6, 768
  %v8352 = vld [vmem:[%s8351] sm:$0xf]
  %v8353 = vld [vmem:[%s8351 + $0x4] sm:$0xf]
  %v8354 = vld [vmem:[%s8351 + $0x8] sm:$0xf]
  %v8355 = vld [vmem:[%s8351 + $0xc] sm:$0xf]
  %v8356 = vld [vmem:[%s8351 + $0x10] sm:$0xf]
  %v8357 = vld [vmem:[%s8351 + $0x14] sm:$0xf]
  %v8358 = vld [vmem:[%s8351 + $0x18] sm:$0xf]
  %v8359 = vld [vmem:[%s8351 + $0x1c] sm:$0xf]
  %v8360 = vld [vmem:[%s8351 + $0x20] sm:$0xf]
  %v8361 = vld [vmem:[%s8351 + $0x24] sm:$0xf]
  %v8362 = vld [vmem:[%s8351 + $0x28] sm:$0xf]
  %v8363 = vld [vmem:[%s8351 + $0x2c] sm:$0xf]
  %v8364 = vld [vmem:[%s8351 + $0x30] sm:$0xf]
  %v8365 = vld [vmem:[%s8351 + $0x34] sm:$0xf]
  %v8366 = vld [vmem:[%s8351 + $0x38] sm:$0xf]
  %v8367 = vld [vmem:[%s8351 + $0x3c] sm:$0xf]
  %v8368 = vld [vmem:[%s8351 + $0x40] sm:$0xf]
  %v8369 = vld [vmem:[%s8351 + $0x44] sm:$0xf]
  %v8370 = vld [vmem:[%s8351 + $0x48] sm:$0xf]
  %v8371 = vld [vmem:[%s8351 + $0x4c] sm:$0xf]
  %v8372 = vld [vmem:[%s8351 + $0x50] sm:$0xf]
  %v8373 = vld [vmem:[%s8351 + $0x54] sm:$0xf]
  %v8374 = vld [vmem:[%s8351 + $0x58] sm:$0xf]
  %v8375 = vld [vmem:[%s8351 + $0x5c] sm:$0xf]
  %v8376 = vld [vmem:[%s8351 + $0x60] sm:$0xf]
  %v8377 = vld [vmem:[%s8351 + $0x64] sm:$0xf]
  %v8378 = vld [vmem:[%s8351 + $0x68] sm:$0xf]
  %v8379 = vld [vmem:[%s8351 + $0x6c] sm:$0xf]
  %v8380 = vld [vmem:[%s8351 + $0x70] sm:$0xf]
  %v8381 = vld [vmem:[%s8351 + $0x74] sm:$0xf]
  %v8382 = vld [vmem:[%s8351 + $0x78] sm:$0xf]
  %v8383 = vld [vmem:[%s8351 + $0x7c] sm:$0xf]
  %v8416 = vunpack.c.l.b16 %v8352
  %v8417 = vunpack.c.l.b16 %v8353
  %v8418 = vunpack.c.l.b16 %v8354
  %v8419 = vunpack.c.l.b16 %v8355
  %v8420 = vunpack.c.l.b16 %v8356
  %v8421 = vunpack.c.l.b16 %v8357
  %v8422 = vunpack.c.l.b16 %v8358
  %v8423 = vunpack.c.l.b16 %v8359
  %v8424 = vunpack.c.l.b16 %v8360
  %v8425 = vunpack.c.l.b16 %v8361
  %v8426 = vunpack.c.l.b16 %v8362
  %v8427 = vunpack.c.l.b16 %v8363
  %v8428 = vunpack.c.l.b16 %v8364
  %v8429 = vunpack.c.l.b16 %v8365
  %v8430 = vunpack.c.l.b16 %v8366
  %v8431 = vunpack.c.l.b16 %v8367
  %v8432 = vunpack.c.l.b16 %v8368
  %v8433 = vunpack.c.l.b16 %v8369
  %v8434 = vunpack.c.l.b16 %v8370
  %v8435 = vunpack.c.l.b16 %v8371
  %v8436 = vunpack.c.l.b16 %v8372
  %v8437 = vunpack.c.l.b16 %v8373
  %v8438 = vunpack.c.l.b16 %v8374
  %v8439 = vunpack.c.l.b16 %v8375
  %v8440 = vunpack.c.l.b16 %v8376
  %v8441 = vunpack.c.l.b16 %v8377
  %v8442 = vunpack.c.l.b16 %v8378
  %v8443 = vunpack.c.l.b16 %v8379
  %v8444 = vunpack.c.l.b16 %v8380
  %v8445 = vunpack.c.l.b16 %v8381
  %v8446 = vunpack.c.l.b16 %v8382
  %v8447 = vunpack.c.l.b16 %v8383
  %v8448 = vpack.c.b16 %v8417, %v8416
  %v8449 = vpack.c.b16 %v8419, %v8418
  %v8450 = vpack.c.b16 %v8421, %v8420
  %v8451 = vpack.c.b16 %v8423, %v8422
  %v8452 = vpack.c.b16 %v8425, %v8424
  %v8453 = vpack.c.b16 %v8427, %v8426
  %v8454 = vpack.c.b16 %v8429, %v8428
  %v8455 = vpack.c.b16 %v8431, %v8430
  %v8456 = vpack.c.b16 %v8433, %v8432
  %v8457 = vpack.c.b16 %v8435, %v8434
  %v8458 = vpack.c.b16 %v8437, %v8436
  %v8459 = vpack.c.b16 %v8439, %v8438
  %v8460 = vpack.c.b16 %v8441, %v8440
  %v8461 = vpack.c.b16 %v8443, %v8442
  %v8462 = vpack.c.b16 %v8445, %v8444
  %v8463 = vpack.c.b16 %v8447, %v8446
  %8480 = vmatprep.subr.bf16.mxu0 0
  %8481 = vmatpush1.bf16.msra.mxu0 %v8455
  %8482 = vmatprep.subr.bf16.mxu0 0
  %8483 = vmatpush1.bf16.msra.mxu0 %v8454
  %8484 = vmatprep.subr.bf16.mxu0 0
  %8485 = vmatpush1.bf16.msra.mxu0 %v8453
  %8486 = vmatprep.subr.bf16.mxu0 0
  %8487 = vmatpush1.bf16.msra.mxu0 %v8452
  %8488 = vmatprep.subr.bf16.mxu0 0
  %8489 = vmatpush1.bf16.msra.mxu0 %v8451
  %8490 = vmatprep.subr.bf16.mxu0 0
  %8491 = vmatpush1.bf16.msra.mxu0 %v8450
  %8492 = vmatprep.subr.bf16.mxu0 0
  %8493 = vmatpush1.bf16.msra.mxu0 %v8449
  %8494 = vmatprep.subr.bf16.mxu0 0
  %8495 = vmatpush1.bf16.msra.mxu0 %v8448
  %8496 = vmatprep.subr.bf16.mxu0 0
  %8497 = vmatpush2.bf16.msra.mxu0 %v8463
  %8498 = vmatprep.subr.bf16.mxu0 0
  %8499 = vmatpush2.bf16.msra.mxu0 %v8462
  %8500 = vmatprep.subr.bf16.mxu0 0
  %8501 = vmatpush2.bf16.msra.mxu0 %v8461
  %8502 = vmatprep.subr.bf16.mxu0 0
  %8503 = vmatpush2.bf16.msra.mxu0 %v8460
  %8504 = vmatprep.subr.bf16.mxu0 0
  %8505 = vmatpush2.bf16.msra.mxu0 %v8459
  %8506 = vmatprep.subr.bf16.mxu0 0
  %8507 = vmatpush2.bf16.msra.mxu0 %v8458
  %8508 = vmatprep.subr.bf16.mxu0 0
  %8509 = vmatpush2.bf16.msra.mxu0 %v8457
  %8510 = vmatprep.subr.bf16.mxu0 0
  %8511 = vmatpush2.bf16.msra.mxu0 %v8456
  %8512 = vmatprep.mubr.bf16.mxu0 %v8350
  %8513 = vmatmul.mubr.bf16.gmra.mxu0 %v8349
  %v8514 = vpop.f32.mrf.mxu0
  %v8515 = vadd.f32 0.0, %v8514
  %v8516 = vpop.f32.mrf.mxu0
  %v8517 = vpop.f32.mrf.mxu0
  %v8518 = vpop.f32.mrf.mxu0
  %8519 = vdwg.mxu0
  %v8520 = vadd.f32 %v8338, %v8515
  %8522 = vrot.lane.b32.xlu0 %v7214, 64
  %v8523 = vpop.permute.xlu0 %8522
  %8526 = vrot.lane.b32.xlu0 %v7216, 64
  %v8527 = vpop.permute.xlu0 %8526
  %v8529 = vsel %vm7257, %v7213, %v8523
  %v8530 = vsel %vm7257, %v7215, %v8527
  %v8531 = vpack.c.bf16 %v8529, %v8529
  %v8532 = vpack.c.bf16 %v8530, %v8530
  %s8533 = scalar_lea.vmem %s6, 896
  %v8534 = vld [vmem:[%s8533] sm:$0xf]
  %v8535 = vld [vmem:[%s8533 + $0x4] sm:$0xf]
  %v8536 = vld [vmem:[%s8533 + $0x8] sm:$0xf]
  %v8537 = vld [vmem:[%s8533 + $0xc] sm:$0xf]
  %v8538 = vld [vmem:[%s8533 + $0x10] sm:$0xf]
  %v8539 = vld [vmem:[%s8533 + $0x14] sm:$0xf]
  %v8540 = vld [vmem:[%s8533 + $0x18] sm:$0xf]
  %v8541 = vld [vmem:[%s8533 + $0x1c] sm:$0xf]
  %v8542 = vld [vmem:[%s8533 + $0x20] sm:$0xf]
  %v8543 = vld [vmem:[%s8533 + $0x24] sm:$0xf]
  %v8544 = vld [vmem:[%s8533 + $0x28] sm:$0xf]
  %v8545 = vld [vmem:[%s8533 + $0x2c] sm:$0xf]
  %v8546 = vld [vmem:[%s8533 + $0x30] sm:$0xf]
  %v8547 = vld [vmem:[%s8533 + $0x34] sm:$0xf]
  %v8548 = vld [vmem:[%s8533 + $0x38] sm:$0xf]
  %v8549 = vld [vmem:[%s8533 + $0x3c] sm:$0xf]
  %v8550 = vld [vmem:[%s8533 + $0x40] sm:$0xf]
  %v8551 = vld [vmem:[%s8533 + $0x44] sm:$0xf]
  %v8552 = vld [vmem:[%s8533 + $0x48] sm:$0xf]
  %v8553 = vld [vmem:[%s8533 + $0x4c] sm:$0xf]
  %v8554 = vld [vmem:[%s8533 + $0x50] sm:$0xf]
  %v8555 = vld [vmem:[%s8533 + $0x54] sm:$0xf]
  %v8556 = vld [vmem:[%s8533 + $0x58] sm:$0xf]
  %v8557 = vld [vmem:[%s8533 + $0x5c] sm:$0xf]
  %v8558 = vld [vmem:[%s8533 + $0x60] sm:$0xf]
  %v8559 = vld [vmem:[%s8533 + $0x64] sm:$0xf]
  %v8560 = vld [vmem:[%s8533 + $0x68] sm:$0xf]
  %v8561 = vld [vmem:[%s8533 + $0x6c] sm:$0xf]
  %v8562 = vld [vmem:[%s8533 + $0x70] sm:$0xf]
  %v8563 = vld [vmem:[%s8533 + $0x74] sm:$0xf]
  %v8564 = vld [vmem:[%s8533 + $0x78] sm:$0xf]
  %v8565 = vld [vmem:[%s8533 + $0x7c] sm:$0xf]
  %v8598 = vunpack.c.l.b16 %v8534
  %v8599 = vunpack.c.l.b16 %v8535
  %v8600 = vunpack.c.l.b16 %v8536
  %v8601 = vunpack.c.l.b16 %v8537
  %v8602 = vunpack.c.l.b16 %v8538
  %v8603 = vunpack.c.l.b16 %v8539
  %v8604 = vunpack.c.l.b16 %v8540
  %v8605 = vunpack.c.l.b16 %v8541
  %v8606 = vunpack.c.l.b16 %v8542
  %v8607 = vunpack.c.l.b16 %v8543
  %v8608 = vunpack.c.l.b16 %v8544
  %v8609 = vunpack.c.l.b16 %v8545
  %v8610 = vunpack.c.l.b16 %v8546
  %v8611 = vunpack.c.l.b16 %v8547
  %v8612 = vunpack.c.l.b16 %v8548
  %v8613 = vunpack.c.l.b16 %v8549
  %v8614 = vunpack.c.l.b16 %v8550
  %v8615 = vunpack.c.l.b16 %v8551
  %v8616 = vunpack.c.l.b16 %v8552
  %v8617 = vunpack.c.l.b16 %v8553
  %v8618 = vunpack.c.l.b16 %v8554
  %v8619 = vunpack.c.l.b16 %v8555
  %v8620 = vunpack.c.l.b16 %v8556
  %v8621 = vunpack.c.l.b16 %v8557
  %v8622 = vunpack.c.l.b16 %v8558
  %v8623 = vunpack.c.l.b16 %v8559
  %v8624 = vunpack.c.l.b16 %v8560
  %v8625 = vunpack.c.l.b16 %v8561
  %v8626 = vunpack.c.l.b16 %v8562
  %v8627 = vunpack.c.l.b16 %v8563
  %v8628 = vunpack.c.l.b16 %v8564
  %v8629 = vunpack.c.l.b16 %v8565
  %v8630 = vpack.c.b16 %v8599, %v8598
  %v8631 = vpack.c.b16 %v8601, %v8600
  %v8632 = vpack.c.b16 %v8603, %v8602
  %v8633 = vpack.c.b16 %v8605, %v8604
  %v8634 = vpack.c.b16 %v8607, %v8606
  %v8635 = vpack.c.b16 %v8609, %v8608
  %v8636 = vpack.c.b16 %v8611, %v8610
  %v8637 = vpack.c.b16 %v8613, %v8612
  %v8638 = vpack.c.b16 %v8615, %v8614
  %v8639 = vpack.c.b16 %v8617, %v8616
  %v8640 = vpack.c.b16 %v8619, %v8618
  %v8641 = vpack.c.b16 %v8621, %v8620
  %v8642 = vpack.c.b16 %v8623, %v8622
  %v8643 = vpack.c.b16 %v8625, %v8624
  %v8644 = vpack.c.b16 %v8627, %v8626
  %v8645 = vpack.c.b16 %v8629, %v8628
  %8662 = vmatprep.subr.bf16.mxu0 0
  %8663 = vmatpush1.bf16.msra.mxu0 %v8637
  %8664 = vmatprep.subr.bf16.mxu0 0
  %8665 = vmatpush1.bf16.msra.mxu0 %v8636
  %8666 = vmatprep.subr.bf16.mxu0 0
  %8667 = vmatpush1.bf16.msra.mxu0 %v8635
  %8668 = vmatprep.subr.bf16.mxu0 0
  %8669 = vmatpush1.bf16.msra.mxu0 %v8634
  %8670 = vmatprep.subr.bf16.mxu0 0
  %8671 = vmatpush1.bf16.msra.mxu0 %v8633
  %8672 = vmatprep.subr.bf16.mxu0 0
  %8673 = vmatpush1.bf16.msra.mxu0 %v8632
  %8674 = vmatprep.subr.bf16.mxu0 0
  %8675 = vmatpush1.bf16.msra.mxu0 %v8631
  %8676 = vmatprep.subr.bf16.mxu0 0
  %8677 = vmatpush1.bf16.msra.mxu0 %v8630
  %8678 = vmatprep.subr.bf16.mxu0 0
  %8679 = vmatpush2.bf16.msra.mxu0 %v8645
  %8680 = vmatprep.subr.bf16.mxu0 0
  %8681 = vmatpush2.bf16.msra.mxu0 %v8644
  %8682 = vmatprep.subr.bf16.mxu0 0
  %8683 = vmatpush2.bf16.msra.mxu0 %v8643
  %8684 = vmatprep.subr.bf16.mxu0 0
  %8685 = vmatpush2.bf16.msra.mxu0 %v8642
  %8686 = vmatprep.subr.bf16.mxu0 0
  %8687 = vmatpush2.bf16.msra.mxu0 %v8641
  %8688 = vmatprep.subr.bf16.mxu0 0
  %8689 = vmatpush2.bf16.msra.mxu0 %v8640
  %8690 = vmatprep.subr.bf16.mxu0 0
  %8691 = vmatpush2.bf16.msra.mxu0 %v8639
  %8692 = vmatprep.subr.bf16.mxu0 0
  %8693 = vmatpush2.bf16.msra.mxu0 %v8638
  %8694 = vmatprep.mubr.bf16.mxu0 %v8532
  %8695 = vmatmul.mubr.bf16.gmra.mxu0 %v8531
  %v8696 = vpop.f32.mrf.mxu0
  %v8697 = vadd.f32 0.0, %v8696
  %v8698 = vpop.f32.mrf.mxu0
  %v8699 = vpop.f32.mrf.mxu0
  %v8700 = vpop.f32.mrf.mxu0
  %8701 = vdwg.mxu0
  %v8702 = vadd.f32 %v8520, %v8697
  %8704 = vrot.lane.b32.xlu0 %v7218, 64
  %v8705 = vpop.permute.xlu0 %8704
  %8708 = vrot.lane.b32.xlu0 %v7220, 64
  %v8709 = vpop.permute.xlu0 %8708
  %v8711 = vsel %vm7257, %v7217, %v8705
  %v8712 = vsel %vm7257, %v7219, %v8709
  %v8713 = vpack.c.bf16 %v8711, %v8711
  %v8714 = vpack.c.bf16 %v8712, %v8712
  %s8715 = scalar_lea.vmem %s6, 1024
  %v8716 = vld [vmem:[%s8715] sm:$0xf]
  %v8717 = vld [vmem:[%s8715 + $0x4] sm:$0xf]
  %v8718 = vld [vmem:[%s8715 + $0x8] sm:$0xf]
  %v8719 = vld [vmem:[%s8715 + $0xc] sm:$0xf]
  %v8720 = vld [vmem:[%s8715 + $0x10] sm:$0xf]
  %v8721 = vld [vmem:[%s8715 + $0x14] sm:$0xf]
  %v8722 = vld [vmem:[%s8715 + $0x18] sm:$0xf]
  %v8723 = vld [vmem:[%s8715 + $0x1c] sm:$0xf]
  %v8724 = vld [vmem:[%s8715 + $0x20] sm:$0xf]
  %v8725 = vld [vmem:[%s8715 + $0x24] sm:$0xf]
  %v8726 = vld [vmem:[%s8715 + $0x28] sm:$0xf]
  %v8727 = vld [vmem:[%s8715 + $0x2c] sm:$0xf]
  %v8728 = vld [vmem:[%s8715 + $0x30] sm:$0xf]
  %v8729 = vld [vmem:[%s8715 + $0x34] sm:$0xf]
  %v8730 = vld [vmem:[%s8715 + $0x38] sm:$0xf]
  %v8731 = vld [vmem:[%s8715 + $0x3c] sm:$0xf]
  %v8732 = vld [vmem:[%s8715 + $0x40] sm:$0xf]
  %v8733 = vld [vmem:[%s8715 + $0x44] sm:$0xf]
  %v8734 = vld [vmem:[%s8715 + $0x48] sm:$0xf]
  %v8735 = vld [vmem:[%s8715 + $0x4c] sm:$0xf]
  %v8736 = vld [vmem:[%s8715 + $0x50] sm:$0xf]
  %v8737 = vld [vmem:[%s8715 + $0x54] sm:$0xf]
  %v8738 = vld [vmem:[%s8715 + $0x58] sm:$0xf]
  %v8739 = vld [vmem:[%s8715 + $0x5c] sm:$0xf]
  %v8740 = vld [vmem:[%s8715 + $0x60] sm:$0xf]
  %v8741 = vld [vmem:[%s8715 + $0x64] sm:$0xf]
  %v8742 = vld [vmem:[%s8715 + $0x68] sm:$0xf]
  %v8743 = vld [vmem:[%s8715 + $0x6c] sm:$0xf]
  %v8744 = vld [vmem:[%s8715 + $0x70] sm:$0xf]
  %v8745 = vld [vmem:[%s8715 + $0x74] sm:$0xf]
  %v8746 = vld [vmem:[%s8715 + $0x78] sm:$0xf]
  %v8747 = vld [vmem:[%s8715 + $0x7c] sm:$0xf]
  %v8780 = vunpack.c.l.b16 %v8716
  %v8781 = vunpack.c.l.b16 %v8717
  %v8782 = vunpack.c.l.b16 %v8718
  %v8783 = vunpack.c.l.b16 %v8719
  %v8784 = vunpack.c.l.b16 %v8720
  %v8785 = vunpack.c.l.b16 %v8721
  %v8786 = vunpack.c.l.b16 %v8722
  %v8787 = vunpack.c.l.b16 %v8723
  %v8788 = vunpack.c.l.b16 %v8724
  %v8789 = vunpack.c.l.b16 %v8725
  %v8790 = vunpack.c.l.b16 %v8726
  %v8791 = vunpack.c.l.b16 %v8727
  %v8792 = vunpack.c.l.b16 %v8728
  %v8793 = vunpack.c.l.b16 %v8729
  %v8794 = vunpack.c.l.b16 %v8730
  %v8795 = vunpack.c.l.b16 %v8731
  %v8796 = vunpack.c.l.b16 %v8732
  %v8797 = vunpack.c.l.b16 %v8733
  %v8798 = vunpack.c.l.b16 %v8734
  %v8799 = vunpack.c.l.b16 %v8735
  %v8800 = vunpack.c.l.b16 %v8736
  %v8801 = vunpack.c.l.b16 %v8737
  %v8802 = vunpack.c.l.b16 %v8738
  %v8803 = vunpack.c.l.b16 %v8739
  %v8804 = vunpack.c.l.b16 %v8740
  %v8805 = vunpack.c.l.b16 %v8741
  %v8806 = vunpack.c.l.b16 %v8742
  %v8807 = vunpack.c.l.b16 %v8743
  %v8808 = vunpack.c.l.b16 %v8744
  %v8809 = vunpack.c.l.b16 %v8745
  %v8810 = vunpack.c.l.b16 %v8746
  %v8811 = vunpack.c.l.b16 %v8747
  %v8812 = vpack.c.b16 %v8781, %v8780
  %v8813 = vpack.c.b16 %v8783, %v8782
  %v8814 = vpack.c.b16 %v8785, %v8784
  %v8815 = vpack.c.b16 %v8787, %v8786
  %v8816 = vpack.c.b16 %v8789, %v8788
  %v8817 = vpack.c.b16 %v8791, %v8790
  %v8818 = vpack.c.b16 %v8793, %v8792
  %v8819 = vpack.c.b16 %v8795, %v8794
  %v8820 = vpack.c.b16 %v8797, %v8796
  %v8821 = vpack.c.b16 %v8799, %v8798
  %v8822 = vpack.c.b16 %v8801, %v8800
  %v8823 = vpack.c.b16 %v8803, %v8802
  %v8824 = vpack.c.b16 %v8805, %v8804
  %v8825 = vpack.c.b16 %v8807, %v8806
  %v8826 = vpack.c.b16 %v8809, %v8808
  %v8827 = vpack.c.b16 %v8811, %v8810
  %8844 = vmatprep.subr.bf16.mxu0 0
  %8845 = vmatpush1.bf16.msra.mxu0 %v8819
  %8846 = vmatprep.subr.bf16.mxu0 0
  %8847 = vmatpush1.bf16.msra.mxu0 %v8818
  %8848 = vmatprep.subr.bf16.mxu0 0
  %8849 = vmatpush1.bf16.msra.mxu0 %v8817
  %8850 = vmatprep.subr.bf16.mxu0 0
  %8851 = vmatpush1.bf16.msra.mxu0 %v8816
  %8852 = vmatprep.subr.bf16.mxu0 0
  %8853 = vmatpush1.bf16.msra.mxu0 %v8815
  %8854 = vmatprep.subr.bf16.mxu0 0
  %8855 = vmatpush1.bf16.msra.mxu0 %v8814
  %8856 = vmatprep.subr.bf16.mxu0 0
  %8857 = vmatpush1.bf16.msra.mxu0 %v8813
  %8858 = vmatprep.subr.bf16.mxu0 0
  %8859 = vmatpush1.bf16.msra.mxu0 %v8812
  %8860 = vmatprep.subr.bf16.mxu0 0
  %8861 = vmatpush2.bf16.msra.mxu0 %v8827
  %8862 = vmatprep.subr.bf16.mxu0 0
  %8863 = vmatpush2.bf16.msra.mxu0 %v8826
  %8864 = vmatprep.subr.bf16.mxu0 0
  %8865 = vmatpush2.bf16.msra.mxu0 %v8825
  %8866 = vmatprep.subr.bf16.mxu0 0
  %8867 = vmatpush2.bf16.msra.mxu0 %v8824
  %8868 = vmatprep.subr.bf16.mxu0 0
  %8869 = vmatpush2.bf16.msra.mxu0 %v8823
  %8870 = vmatprep.subr.bf16.mxu0 0
  %8871 = vmatpush2.bf16.msra.mxu0 %v8822
  %8872 = vmatprep.subr.bf16.mxu0 0
  %8873 = vmatpush2.bf16.msra.mxu0 %v8821
  %8874 = vmatprep.subr.bf16.mxu0 0
  %8875 = vmatpush2.bf16.msra.mxu0 %v8820
  %8876 = vmatprep.mubr.bf16.mxu0 %v8714
  %8877 = vmatmul.mubr.bf16.gmra.mxu0 %v8713
  %v8878 = vpop.f32.mrf.mxu0
  %v8879 = vadd.f32 0.0, %v8878
  %v8880 = vpop.f32.mrf.mxu0
  %v8881 = vpop.f32.mrf.mxu0
  %v8882 = vpop.f32.mrf.mxu0
  %8883 = vdwg.mxu0
  %v8884 = vadd.f32 %v8702, %v8879
  %8886 = vrot.lane.b32.xlu0 %v7222, 64
  %v8887 = vpop.permute.xlu0 %8886
  %8890 = vrot.lane.b32.xlu0 %v7224, 64
  %v8891 = vpop.permute.xlu0 %8890
  %v8893 = vsel %vm7257, %v7221, %v8887
  %v8894 = vsel %vm7257, %v7223, %v8891
  %v8895 = vpack.c.bf16 %v8893, %v8893
  %v8896 = vpack.c.bf16 %v8894, %v8894
  %s8897 = scalar_lea.vmem %s6, 1152
  %v8898 = vld [vmem:[%s8897] sm:$0xf]
  %v8899 = vld [vmem:[%s8897 + $0x4] sm:$0xf]
  %v8900 = vld [vmem:[%s8897 + $0x8] sm:$0xf]
  %v8901 = vld [vmem:[%s8897 + $0xc] sm:$0xf]
  %v8902 = vld [vmem:[%s8897 + $0x10] sm:$0xf]
  %v8903 = vld [vmem:[%s8897 + $0x14] sm:$0xf]
  %v8904 = vld [vmem:[%s8897 + $0x18] sm:$0xf]
  %v8905 = vld [vmem:[%s8897 + $0x1c] sm:$0xf]
  %v8906 = vld [vmem:[%s8897 + $0x20] sm:$0xf]
  %v8907 = vld [vmem:[%s8897 + $0x24] sm:$0xf]
  %v8908 = vld [vmem:[%s8897 + $0x28] sm:$0xf]
  %v8909 = vld [vmem:[%s8897 + $0x2c] sm:$0xf]
  %v8910 = vld [vmem:[%s8897 + $0x30] sm:$0xf]
  %v8911 = vld [vmem:[%s8897 + $0x34] sm:$0xf]
  %v8912 = vld [vmem:[%s8897 + $0x38] sm:$0xf]
  %v8913 = vld [vmem:[%s8897 + $0x3c] sm:$0xf]
  %v8914 = vld [vmem:[%s8897 + $0x40] sm:$0xf]
  %v8915 = vld [vmem:[%s8897 + $0x44] sm:$0xf]
  %v8916 = vld [vmem:[%s8897 + $0x48] sm:$0xf]
  %v8917 = vld [vmem:[%s8897 + $0x4c] sm:$0xf]
  %v8918 = vld [vmem:[%s8897 + $0x50] sm:$0xf]
  %v8919 = vld [vmem:[%s8897 + $0x54] sm:$0xf]
  %v8920 = vld [vmem:[%s8897 + $0x58] sm:$0xf]
  %v8921 = vld [vmem:[%s8897 + $0x5c] sm:$0xf]
  %v8922 = vld [vmem:[%s8897 + $0x60] sm:$0xf]
  %v8923 = vld [vmem:[%s8897 + $0x64] sm:$0xf]
  %v8924 = vld [vmem:[%s8897 + $0x68] sm:$0xf]
  %v8925 = vld [vmem:[%s8897 + $0x6c] sm:$0xf]
  %v8926 = vld [vmem:[%s8897 + $0x70] sm:$0xf]
  %v8927 = vld [vmem:[%s8897 + $0x74] sm:$0xf]
  %v8928 = vld [vmem:[%s8897 + $0x78] sm:$0xf]
  %v8929 = vld [vmem:[%s8897 + $0x7c] sm:$0xf]
  %v8962 = vunpack.c.l.b16 %v8898
  %v8963 = vunpack.c.l.b16 %v8899
  %v8964 = vunpack.c.l.b16 %v8900
  %v8965 = vunpack.c.l.b16 %v8901
  %v8966 = vunpack.c.l.b16 %v8902
  %v8967 = vunpack.c.l.b16 %v8903
  %v8968 = vunpack.c.l.b16 %v8904
  %v8969 = vunpack.c.l.b16 %v8905
  %v8970 = vunpack.c.l.b16 %v8906
  %v8971 = vunpack.c.l.b16 %v8907
  %v8972 = vunpack.c.l.b16 %v8908
  %v8973 = vunpack.c.l.b16 %v8909
  %v8974 = vunpack.c.l.b16 %v8910
  %v8975 = vunpack.c.l.b16 %v8911
  %v8976 = vunpack.c.l.b16 %v8912
  %v8977 = vunpack.c.l.b16 %v8913
  %v8978 = vunpack.c.l.b16 %v8914
  %v8979 = vunpack.c.l.b16 %v8915
  %v8980 = vunpack.c.l.b16 %v8916
  %v8981 = vunpack.c.l.b16 %v8917
  %v8982 = vunpack.c.l.b16 %v8918
  %v8983 = vunpack.c.l.b16 %v8919
  %v8984 = vunpack.c.l.b16 %v8920
  %v8985 = vunpack.c.l.b16 %v8921
  %v8986 = vunpack.c.l.b16 %v8922
  %v8987 = vunpack.c.l.b16 %v8923
  %v8988 = vunpack.c.l.b16 %v8924
  %v8989 = vunpack.c.l.b16 %v8925
  %v8990 = vunpack.c.l.b16 %v8926
  %v8991 = vunpack.c.l.b16 %v8927
  %v8992 = vunpack.c.l.b16 %v8928
  %v8993 = vunpack.c.l.b16 %v8929
  %v8994 = vpack.c.b16 %v8963, %v8962
  %v8995 = vpack.c.b16 %v8965, %v8964
  %v8996 = vpack.c.b16 %v8967, %v8966
  %v8997 = vpack.c.b16 %v8969, %v8968
  %v8998 = vpack.c.b16 %v8971, %v8970
  %v8999 = vpack.c.b16 %v8973, %v8972
  %v9000 = vpack.c.b16 %v8975, %v8974
  %v9001 = vpack.c.b16 %v8977, %v8976
  %v9002 = vpack.c.b16 %v8979, %v8978
  %v9003 = vpack.c.b16 %v8981, %v8980
  %v9004 = vpack.c.b16 %v8983, %v8982
  %v9005 = vpack.c.b16 %v8985, %v8984
  %v9006 = vpack.c.b16 %v8987, %v8986
  %v9007 = vpack.c.b16 %v8989, %v8988
  %v9008 = vpack.c.b16 %v8991, %v8990
  %v9009 = vpack.c.b16 %v8993, %v8992
  %9026 = vmatprep.subr.bf16.mxu0 0
  %9027 = vmatpush1.bf16.msra.mxu0 %v9001
  %9028 = vmatprep.subr.bf16.mxu0 0
  %9029 = vmatpush1.bf16.msra.mxu0 %v9000
  %9030 = vmatprep.subr.bf16.mxu0 0
  %9031 = vmatpush1.bf16.msra.mxu0 %v8999
  %9032 = vmatprep.subr.bf16.mxu0 0
  %9033 = vmatpush1.bf16.msra.mxu0 %v8998
  %9034 = vmatprep.subr.bf16.mxu0 0
  %9035 = vmatpush1.bf16.msra.mxu0 %v8997
  %9036 = vmatprep.subr.bf16.mxu0 0
  %9037 = vmatpush1.bf16.msra.mxu0 %v8996
  %9038 = vmatprep.subr.bf16.mxu0 0
  %9039 = vmatpush1.bf16.msra.mxu0 %v8995
  %9040 = vmatprep.subr.bf16.mxu0 0
  %9041 = vmatpush1.bf16.msra.mxu0 %v8994
  %9042 = vmatprep.subr.bf16.mxu0 0
  %9043 = vmatpush2.bf16.msra.mxu0 %v9009
  %9044 = vmatprep.subr.bf16.mxu0 0
  %9045 = vmatpush2.bf16.msra.mxu0 %v9008
  %9046 = vmatprep.subr.bf16.mxu0 0
  %9047 = vmatpush2.bf16.msra.mxu0 %v9007
  %9048 = vmatprep.subr.bf16.mxu0 0
  %9049 = vmatpush2.bf16.msra.mxu0 %v9006
  %9050 = vmatprep.subr.bf16.mxu0 0
  %9051 = vmatpush2.bf16.msra.mxu0 %v9005
  %9052 = vmatprep.subr.bf16.mxu0 0
  %9053 = vmatpush2.bf16.msra.mxu0 %v9004
  %9054 = vmatprep.subr.bf16.mxu0 0
  %9055 = vmatpush2.bf16.msra.mxu0 %v9003
  %9056 = vmatprep.subr.bf16.mxu0 0
  %9057 = vmatpush2.bf16.msra.mxu0 %v9002
  %9058 = vmatprep.mubr.bf16.mxu0 %v8896
  %9059 = vmatmul.mubr.bf16.gmra.mxu0 %v8895
  %v9060 = vpop.f32.mrf.mxu0
  %v9061 = vadd.f32 0.0, %v9060
  %v9062 = vpop.f32.mrf.mxu0
  %v9063 = vpop.f32.mrf.mxu0
  %v9064 = vpop.f32.mrf.mxu0
  %9065 = vdwg.mxu0
  %v9066 = vadd.f32 %v8884, %v9061
  %9068 = vrot.lane.b32.xlu0 %v7226, 64
  %v9069 = vpop.permute.xlu0 %9068
  %9072 = vrot.lane.b32.xlu0 %v7228, 64
  %v9073 = vpop.permute.xlu0 %9072
  %v9075 = vsel %vm7257, %v7225, %v9069
  %v9076 = vsel %vm7257, %v7227, %v9073
  %v9077 = vpack.c.bf16 %v9075, %v9075
  %v9078 = vpack.c.bf16 %v9076, %v9076
  %s9079 = scalar_lea.vmem %s6, 1280
  %v9080 = vld [vmem:[%s9079] sm:$0xf]
  %v9081 = vld [vmem:[%s9079 + $0x4] sm:$0xf]
  %v9082 = vld [vmem:[%s9079 + $0x8] sm:$0xf]
  %v9083 = vld [vmem:[%s9079 + $0xc] sm:$0xf]
  %v9084 = vld [vmem:[%s9079 + $0x10] sm:$0xf]
  %v9085 = vld [vmem:[%s9079 + $0x14] sm:$0xf]
  %v9086 = vld [vmem:[%s9079 + $0x18] sm:$0xf]
  %v9087 = vld [vmem:[%s9079 + $0x1c] sm:$0xf]
  %v9088 = vld [vmem:[%s9079 + $0x20] sm:$0xf]
  %v9089 = vld [vmem:[%s9079 + $0x24] sm:$0xf]
  %v9090 = vld [vmem:[%s9079 + $0x28] sm:$0xf]
  %v9091 = vld [vmem:[%s9079 + $0x2c] sm:$0xf]
  %v9092 = vld [vmem:[%s9079 + $0x30] sm:$0xf]
  %v9093 = vld [vmem:[%s9079 + $0x34] sm:$0xf]
  %v9094 = vld [vmem:[%s9079 + $0x38] sm:$0xf]
  %v9095 = vld [vmem:[%s9079 + $0x3c] sm:$0xf]
  %v9096 = vld [vmem:[%s9079 + $0x40] sm:$0xf]
  %v9097 = vld [vmem:[%s9079 + $0x44] sm:$0xf]
  %v9098 = vld [vmem:[%s9079 + $0x48] sm:$0xf]
  %v9099 = vld [vmem:[%s9079 + $0x4c] sm:$0xf]
  %v9100 = vld [vmem:[%s9079 + $0x50] sm:$0xf]
  %v9101 = vld [vmem:[%s9079 + $0x54] sm:$0xf]
  %v9102 = vld [vmem:[%s9079 + $0x58] sm:$0xf]
  %v9103 = vld [vmem:[%s9079 + $0x5c] sm:$0xf]
  %v9104 = vld [vmem:[%s9079 + $0x60] sm:$0xf]
  %v9105 = vld [vmem:[%s9079 + $0x64] sm:$0xf]
  %v9106 = vld [vmem:[%s9079 + $0x68] sm:$0xf]
  %v9107 = vld [vmem:[%s9079 + $0x6c] sm:$0xf]
  %v9108 = vld [vmem:[%s9079 + $0x70] sm:$0xf]
  %v9109 = vld [vmem:[%s9079 + $0x74] sm:$0xf]
  %v9110 = vld [vmem:[%s9079 + $0x78] sm:$0xf]
  %v9111 = vld [vmem:[%s9079 + $0x7c] sm:$0xf]
  %v9144 = vunpack.c.l.b16 %v9080
  %v9145 = vunpack.c.l.b16 %v9081
  %v9146 = vunpack.c.l.b16 %v9082
  %v9147 = vunpack.c.l.b16 %v9083
  %v9148 = vunpack.c.l.b16 %v9084
  %v9149 = vunpack.c.l.b16 %v9085
  %v9150 = vunpack.c.l.b16 %v9086
  %v9151 = vunpack.c.l.b16 %v9087
  %v9152 = vunpack.c.l.b16 %v9088
  %v9153 = vunpack.c.l.b16 %v9089
  %v9154 = vunpack.c.l.b16 %v9090
  %v9155 = vunpack.c.l.b16 %v9091
  %v9156 = vunpack.c.l.b16 %v9092
  %v9157 = vunpack.c.l.b16 %v9093
  %v9158 = vunpack.c.l.b16 %v9094
  %v9159 = vunpack.c.l.b16 %v9095
  %v9160 = vunpack.c.l.b16 %v9096
  %v9161 = vunpack.c.l.b16 %v9097
  %v9162 = vunpack.c.l.b16 %v9098
  %v9163 = vunpack.c.l.b16 %v9099
  %v9164 = vunpack.c.l.b16 %v9100
  %v9165 = vunpack.c.l.b16 %v9101
  %v9166 = vunpack.c.l.b16 %v9102
  %v9167 = vunpack.c.l.b16 %v9103
  %v9168 = vunpack.c.l.b16 %v9104
  %v9169 = vunpack.c.l.b16 %v9105
  %v9170 = vunpack.c.l.b16 %v9106
  %v9171 = vunpack.c.l.b16 %v9107
  %v9172 = vunpack.c.l.b16 %v9108
  %v9173 = vunpack.c.l.b16 %v9109
  %v9174 = vunpack.c.l.b16 %v9110
  %v9175 = vunpack.c.l.b16 %v9111
  %v9176 = vpack.c.b16 %v9145, %v9144
  %v9177 = vpack.c.b16 %v9147, %v9146
  %v9178 = vpack.c.b16 %v9149, %v9148
  %v9179 = vpack.c.b16 %v9151, %v9150
  %v9180 = vpack.c.b16 %v9153, %v9152
  %v9181 = vpack.c.b16 %v9155, %v9154
  %v9182 = vpack.c.b16 %v9157, %v9156
  %v9183 = vpack.c.b16 %v9159, %v9158
  %v9184 = vpack.c.b16 %v9161, %v9160
  %v9185 = vpack.c.b16 %v9163, %v9162
  %v9186 = vpack.c.b16 %v9165, %v9164
  %v9187 = vpack.c.b16 %v9167, %v9166
  %v9188 = vpack.c.b16 %v9169, %v9168
  %v9189 = vpack.c.b16 %v9171, %v9170
  %v9190 = vpack.c.b16 %v9173, %v9172
  %v9191 = vpack.c.b16 %v9175, %v9174
  %9208 = vmatprep.subr.bf16.mxu0 0
  %9209 = vmatpush1.bf16.msra.mxu0 %v9183
  %9210 = vmatprep.subr.bf16.mxu0 0
  %9211 = vmatpush1.bf16.msra.mxu0 %v9182
  %9212 = vmatprep.subr.bf16.mxu0 0
  %9213 = vmatpush1.bf16.msra.mxu0 %v9181
  %9214 = vmatprep.subr.bf16.mxu0 0
  %9215 = vmatpush1.bf16.msra.mxu0 %v9180
  %9216 = vmatprep.subr.bf16.mxu0 0
  %9217 = vmatpush1.bf16.msra.mxu0 %v9179
  %9218 = vmatprep.subr.bf16.mxu0 0
  %9219 = vmatpush1.bf16.msra.mxu0 %v9178
  %9220 = vmatprep.subr.bf16.mxu0 0
  %9221 = vmatpush1.bf16.msra.mxu0 %v9177
  %9222 = vmatprep.subr.bf16.mxu0 0
  %9223 = vmatpush1.bf16.msra.mxu0 %v9176
  %9224 = vmatprep.subr.bf16.mxu0 0
  %9225 = vmatpush2.bf16.msra.mxu0 %v9191
  %9226 = vmatprep.subr.bf16.mxu0 0
  %9227 = vmatpush2.bf16.msra.mxu0 %v9190
  %9228 = vmatprep.subr.bf16.mxu0 0
  %9229 = vmatpush2.bf16.msra.mxu0 %v9189
  %9230 = vmatprep.subr.bf16.mxu0 0
  %9231 = vmatpush2.bf16.msra.mxu0 %v9188
  %9232 = vmatprep.subr.bf16.mxu0 0
  %9233 = vmatpush2.bf16.msra.mxu0 %v9187
  %9234 = vmatprep.subr.bf16.mxu0 0
  %9235 = vmatpush2.bf16.msra.mxu0 %v9186
  %9236 = vmatprep.subr.bf16.mxu0 0
  %9237 = vmatpush2.bf16.msra.mxu0 %v9185
  %9238 = vmatprep.subr.bf16.mxu0 0
  %9239 = vmatpush2.bf16.msra.mxu0 %v9184
  %9240 = vmatprep.mubr.bf16.mxu0 %v9078
  %9241 = vmatmul.mubr.bf16.gmra.mxu0 %v9077
  %v9242 = vpop.f32.mrf.mxu0
  %v9243 = vadd.f32 0.0, %v9242
  %v9244 = vpop.f32.mrf.mxu0
  %v9245 = vpop.f32.mrf.mxu0
  %v9246 = vpop.f32.mrf.mxu0
  %9247 = vdwg.mxu0
  %v9248 = vadd.f32 %v9066, %v9243
  %9250 = vrot.lane.b32.xlu0 %v7230, 64
  %v9251 = vpop.permute.xlu0 %9250
  %9254 = vrot.lane.b32.xlu0 %v7232, 64
  %v9255 = vpop.permute.xlu0 %9254
  %v9257 = vsel %vm7257, %v7229, %v9251
  %v9258 = vsel %vm7257, %v7231, %v9255
  %v9259 = vpack.c.bf16 %v9257, %v9257
  %v9260 = vpack.c.bf16 %v9258, %v9258
  %s9261 = scalar_lea.vmem %s6, 1408
  %v9262 = vld [vmem:[%s9261] sm:$0xf]
  %v9263 = vld [vmem:[%s9261 + $0x4] sm:$0xf]
  %v9264 = vld [vmem:[%s9261 + $0x8] sm:$0xf]
  %v9265 = vld [vmem:[%s9261 + $0xc] sm:$0xf]
  %v9266 = vld [vmem:[%s9261 + $0x10] sm:$0xf]
  %v9267 = vld [vmem:[%s9261 + $0x14] sm:$0xf]
  %v9268 = vld [vmem:[%s9261 + $0x18] sm:$0xf]
  %v9269 = vld [vmem:[%s9261 + $0x1c] sm:$0xf]
  %v9270 = vld [vmem:[%s9261 + $0x20] sm:$0xf]
  %v9271 = vld [vmem:[%s9261 + $0x24] sm:$0xf]
  %v9272 = vld [vmem:[%s9261 + $0x28] sm:$0xf]
  %v9273 = vld [vmem:[%s9261 + $0x2c] sm:$0xf]
  %v9274 = vld [vmem:[%s9261 + $0x30] sm:$0xf]
  %v9275 = vld [vmem:[%s9261 + $0x34] sm:$0xf]
  %v9276 = vld [vmem:[%s9261 + $0x38] sm:$0xf]
  %v9277 = vld [vmem:[%s9261 + $0x3c] sm:$0xf]
  %v9278 = vld [vmem:[%s9261 + $0x40] sm:$0xf]
  %v9279 = vld [vmem:[%s9261 + $0x44] sm:$0xf]
  %v9280 = vld [vmem:[%s9261 + $0x48] sm:$0xf]
  %v9281 = vld [vmem:[%s9261 + $0x4c] sm:$0xf]
  %v9282 = vld [vmem:[%s9261 + $0x50] sm:$0xf]
  %v9283 = vld [vmem:[%s9261 + $0x54] sm:$0xf]
  %v9284 = vld [vmem:[%s9261 + $0x58] sm:$0xf]
  %v9285 = vld [vmem:[%s9261 + $0x5c] sm:$0xf]
  %v9286 = vld [vmem:[%s9261 + $0x60] sm:$0xf]
  %v9287 = vld [vmem:[%s9261 + $0x64] sm:$0xf]
  %v9288 = vld [vmem:[%s9261 + $0x68] sm:$0xf]
  %v9289 = vld [vmem:[%s9261 + $0x6c] sm:$0xf]
  %v9290 = vld [vmem:[%s9261 + $0x70] sm:$0xf]
  %v9291 = vld [vmem:[%s9261 + $0x74] sm:$0xf]
  %v9292 = vld [vmem:[%s9261 + $0x78] sm:$0xf]
  %v9293 = vld [vmem:[%s9261 + $0x7c] sm:$0xf]
  %v9326 = vunpack.c.l.b16 %v9262
  %v9327 = vunpack.c.l.b16 %v9263
  %v9328 = vunpack.c.l.b16 %v9264
  %v9329 = vunpack.c.l.b16 %v9265
  %v9330 = vunpack.c.l.b16 %v9266
  %v9331 = vunpack.c.l.b16 %v9267
  %v9332 = vunpack.c.l.b16 %v9268
  %v9333 = vunpack.c.l.b16 %v9269
  %v9334 = vunpack.c.l.b16 %v9270
  %v9335 = vunpack.c.l.b16 %v9271
  %v9336 = vunpack.c.l.b16 %v9272
  %v9337 = vunpack.c.l.b16 %v9273
  %v9338 = vunpack.c.l.b16 %v9274
  %v9339 = vunpack.c.l.b16 %v9275
  %v9340 = vunpack.c.l.b16 %v9276
  %v9341 = vunpack.c.l.b16 %v9277
  %v9342 = vunpack.c.l.b16 %v9278
  %v9343 = vunpack.c.l.b16 %v9279
  %v9344 = vunpack.c.l.b16 %v9280
  %v9345 = vunpack.c.l.b16 %v9281
  %v9346 = vunpack.c.l.b16 %v9282
  %v9347 = vunpack.c.l.b16 %v9283
  %v9348 = vunpack.c.l.b16 %v9284
  %v9349 = vunpack.c.l.b16 %v9285
  %v9350 = vunpack.c.l.b16 %v9286
  %v9351 = vunpack.c.l.b16 %v9287
  %v9352 = vunpack.c.l.b16 %v9288
  %v9353 = vunpack.c.l.b16 %v9289
  %v9354 = vunpack.c.l.b16 %v9290
  %v9355 = vunpack.c.l.b16 %v9291
  %v9356 = vunpack.c.l.b16 %v9292
  %v9357 = vunpack.c.l.b16 %v9293
  %v9358 = vpack.c.b16 %v9327, %v9326
  %v9359 = vpack.c.b16 %v9329, %v9328
  %v9360 = vpack.c.b16 %v9331, %v9330
  %v9361 = vpack.c.b16 %v9333, %v9332
  %v9362 = vpack.c.b16 %v9335, %v9334
  %v9363 = vpack.c.b16 %v9337, %v9336
  %v9364 = vpack.c.b16 %v9339, %v9338
  %v9365 = vpack.c.b16 %v9341, %v9340
  %v9366 = vpack.c.b16 %v9343, %v9342
  %v9367 = vpack.c.b16 %v9345, %v9344
  %v9368 = vpack.c.b16 %v9347, %v9346
  %v9369 = vpack.c.b16 %v9349, %v9348
  %v9370 = vpack.c.b16 %v9351, %v9350
  %v9371 = vpack.c.b16 %v9353, %v9352
  %v9372 = vpack.c.b16 %v9355, %v9354
  %v9373 = vpack.c.b16 %v9357, %v9356
  %9390 = vmatprep.subr.bf16.mxu0 0
  %9391 = vmatpush1.bf16.msra.mxu0 %v9365
  %9392 = vmatprep.subr.bf16.mxu0 0
  %9393 = vmatpush1.bf16.msra.mxu0 %v9364
  %9394 = vmatprep.subr.bf16.mxu0 0
  %9395 = vmatpush1.bf16.msra.mxu0 %v9363
  %9396 = vmatprep.subr.bf16.mxu0 0
  %9397 = vmatpush1.bf16.msra.mxu0 %v9362
  %9398 = vmatprep.subr.bf16.mxu0 0
  %9399 = vmatpush1.bf16.msra.mxu0 %v9361
  %9400 = vmatprep.subr.bf16.mxu0 0
  %9401 = vmatpush1.bf16.msra.mxu0 %v9360
  %9402 = vmatprep.subr.bf16.mxu0 0
  %9403 = vmatpush1.bf16.msra.mxu0 %v9359
  %9404 = vmatprep.subr.bf16.mxu0 0
  %9405 = vmatpush1.bf16.msra.mxu0 %v9358
  %9406 = vmatprep.subr.bf16.mxu0 0
  %9407 = vmatpush2.bf16.msra.mxu0 %v9373
  %9408 = vmatprep.subr.bf16.mxu0 0
  %9409 = vmatpush2.bf16.msra.mxu0 %v9372
  %9410 = vmatprep.subr.bf16.mxu0 0
  %9411 = vmatpush2.bf16.msra.mxu0 %v9371
  %9412 = vmatprep.subr.bf16.mxu0 0
  %9413 = vmatpush2.bf16.msra.mxu0 %v9370
  %9414 = vmatprep.subr.bf16.mxu0 0
  %9415 = vmatpush2.bf16.msra.mxu0 %v9369
  %9416 = vmatprep.subr.bf16.mxu0 0
  %9417 = vmatpush2.bf16.msra.mxu0 %v9368
  %9418 = vmatprep.subr.bf16.mxu0 0
  %9419 = vmatpush2.bf16.msra.mxu0 %v9367
  %9420 = vmatprep.subr.bf16.mxu0 0
  %9421 = vmatpush2.bf16.msra.mxu0 %v9366
  %9422 = vmatprep.mubr.bf16.mxu0 %v9260
  %9423 = vmatmul.mubr.bf16.gmra.mxu0 %v9259
  %v9424 = vpop.f32.mrf.mxu0
  %v9425 = vadd.f32 0.0, %v9424
  %v9426 = vpop.f32.mrf.mxu0
  %v9427 = vpop.f32.mrf.mxu0
  %v9428 = vpop.f32.mrf.mxu0
  %9429 = vdwg.mxu0
  %v9430 = vadd.f32 %v9248, %v9425
  %9432 = vrot.lane.b32.xlu0 %v7234, 64
  %v9433 = vpop.permute.xlu0 %9432
  %9436 = vrot.lane.b32.xlu0 %v7236, 64
  %v9437 = vpop.permute.xlu0 %9436
  %v9439 = vsel %vm7257, %v7233, %v9433
  %v9440 = vsel %vm7257, %v7235, %v9437
  %v9441 = vpack.c.bf16 %v9439, %v9439
  %v9442 = vpack.c.bf16 %v9440, %v9440
  %s9443 = scalar_lea.vmem %s6, 1536
  %v9444 = vld [vmem:[%s9443] sm:$0xf]
  %v9445 = vld [vmem:[%s9443 + $0x4] sm:$0xf]
  %v9446 = vld [vmem:[%s9443 + $0x8] sm:$0xf]
  %v9447 = vld [vmem:[%s9443 + $0xc] sm:$0xf]
  %v9448 = vld [vmem:[%s9443 + $0x10] sm:$0xf]
  %v9449 = vld [vmem:[%s9443 + $0x14] sm:$0xf]
  %v9450 = vld [vmem:[%s9443 + $0x18] sm:$0xf]
  %v9451 = vld [vmem:[%s9443 + $0x1c] sm:$0xf]
  %v9452 = vld [vmem:[%s9443 + $0x20] sm:$0xf]
  %v9453 = vld [vmem:[%s9443 + $0x24] sm:$0xf]
  %v9454 = vld [vmem:[%s9443 + $0x28] sm:$0xf]
  %v9455 = vld [vmem:[%s9443 + $0x2c] sm:$0xf]
  %v9456 = vld [vmem:[%s9443 + $0x30] sm:$0xf]
  %v9457 = vld [vmem:[%s9443 + $0x34] sm:$0xf]
  %v9458 = vld [vmem:[%s9443 + $0x38] sm:$0xf]
  %v9459 = vld [vmem:[%s9443 + $0x3c] sm:$0xf]
  %v9460 = vld [vmem:[%s9443 + $0x40] sm:$0xf]
  %v9461 = vld [vmem:[%s9443 + $0x44] sm:$0xf]
  %v9462 = vld [vmem:[%s9443 + $0x48] sm:$0xf]
  %v9463 = vld [vmem:[%s9443 + $0x4c] sm:$0xf]
  %v9464 = vld [vmem:[%s9443 + $0x50] sm:$0xf]
  %v9465 = vld [vmem:[%s9443 + $0x54] sm:$0xf]
  %v9466 = vld [vmem:[%s9443 + $0x58] sm:$0xf]
  %v9467 = vld [vmem:[%s9443 + $0x5c] sm:$0xf]
  %v9468 = vld [vmem:[%s9443 + $0x60] sm:$0xf]
  %v9469 = vld [vmem:[%s9443 + $0x64] sm:$0xf]
  %v9470 = vld [vmem:[%s9443 + $0x68] sm:$0xf]
  %v9471 = vld [vmem:[%s9443 + $0x6c] sm:$0xf]
  %v9472 = vld [vmem:[%s9443 + $0x70] sm:$0xf]
  %v9473 = vld [vmem:[%s9443 + $0x74] sm:$0xf]
  %v9474 = vld [vmem:[%s9443 + $0x78] sm:$0xf]
  %v9475 = vld [vmem:[%s9443 + $0x7c] sm:$0xf]
  %v9508 = vunpack.c.l.b16 %v9444
  %v9509 = vunpack.c.l.b16 %v9445
  %v9510 = vunpack.c.l.b16 %v9446
  %v9511 = vunpack.c.l.b16 %v9447
  %v9512 = vunpack.c.l.b16 %v9448
  %v9513 = vunpack.c.l.b16 %v9449
  %v9514 = vunpack.c.l.b16 %v9450
  %v9515 = vunpack.c.l.b16 %v9451
  %v9516 = vunpack.c.l.b16 %v9452
  %v9517 = vunpack.c.l.b16 %v9453
  %v9518 = vunpack.c.l.b16 %v9454
  %v9519 = vunpack.c.l.b16 %v9455
  %v9520 = vunpack.c.l.b16 %v9456
  %v9521 = vunpack.c.l.b16 %v9457
  %v9522 = vunpack.c.l.b16 %v9458
  %v9523 = vunpack.c.l.b16 %v9459
  %v9524 = vunpack.c.l.b16 %v9460
  %v9525 = vunpack.c.l.b16 %v9461
  %v9526 = vunpack.c.l.b16 %v9462
  %v9527 = vunpack.c.l.b16 %v9463
  %v9528 = vunpack.c.l.b16 %v9464
  %v9529 = vunpack.c.l.b16 %v9465
  %v9530 = vunpack.c.l.b16 %v9466
  %v9531 = vunpack.c.l.b16 %v9467
  %v9532 = vunpack.c.l.b16 %v9468
  %v9533 = vunpack.c.l.b16 %v9469
  %v9534 = vunpack.c.l.b16 %v9470
  %v9535 = vunpack.c.l.b16 %v9471
  %v9536 = vunpack.c.l.b16 %v9472
  %v9537 = vunpack.c.l.b16 %v9473
  %v9538 = vunpack.c.l.b16 %v9474
  %v9539 = vunpack.c.l.b16 %v9475
  %v9540 = vpack.c.b16 %v9509, %v9508
  %v9541 = vpack.c.b16 %v9511, %v9510
  %v9542 = vpack.c.b16 %v9513, %v9512
  %v9543 = vpack.c.b16 %v9515, %v9514
  %v9544 = vpack.c.b16 %v9517, %v9516
  %v9545 = vpack.c.b16 %v9519, %v9518
  %v9546 = vpack.c.b16 %v9521, %v9520
  %v9547 = vpack.c.b16 %v9523, %v9522
  %v9548 = vpack.c.b16 %v9525, %v9524
  %v9549 = vpack.c.b16 %v9527, %v9526
  %v9550 = vpack.c.b16 %v9529, %v9528
  %v9551 = vpack.c.b16 %v9531, %v9530
  %v9552 = vpack.c.b16 %v9533, %v9532
  %v9553 = vpack.c.b16 %v9535, %v9534
  %v9554 = vpack.c.b16 %v9537, %v9536
  %v9555 = vpack.c.b16 %v9539, %v9538
  %9572 = vmatprep.subr.bf16.mxu0 0
  %9573 = vmatpush1.bf16.msra.mxu0 %v9547
  %9574 = vmatprep.subr.bf16.mxu0 0
  %9575 = vmatpush1.bf16.msra.mxu0 %v9546
  %9576 = vmatprep.subr.bf16.mxu0 0
  %9577 = vmatpush1.bf16.msra.mxu0 %v9545
  %9578 = vmatprep.subr.bf16.mxu0 0
  %9579 = vmatpush1.bf16.msra.mxu0 %v9544
  %9580 = vmatprep.subr.bf16.mxu0 0
  %9581 = vmatpush1.bf16.msra.mxu0 %v9543
  %9582 = vmatprep.subr.bf16.mxu0 0
  %9583 = vmatpush1.bf16.msra.mxu0 %v9542
  %9584 = vmatprep.subr.bf16.mxu0 0
  %9585 = vmatpush1.bf16.msra.mxu0 %v9541
  %9586 = vmatprep.subr.bf16.mxu0 0
  %9587 = vmatpush1.bf16.msra.mxu0 %v9540
  %9588 = vmatprep.subr.bf16.mxu0 0
  %9589 = vmatpush2.bf16.msra.mxu0 %v9555
  %9590 = vmatprep.subr.bf16.mxu0 0
  %9591 = vmatpush2.bf16.msra.mxu0 %v9554
  %9592 = vmatprep.subr.bf16.mxu0 0
  %9593 = vmatpush2.bf16.msra.mxu0 %v9553
  %9594 = vmatprep.subr.bf16.mxu0 0
  %9595 = vmatpush2.bf16.msra.mxu0 %v9552
  %9596 = vmatprep.subr.bf16.mxu0 0
  %9597 = vmatpush2.bf16.msra.mxu0 %v9551
  %9598 = vmatprep.subr.bf16.mxu0 0
  %9599 = vmatpush2.bf16.msra.mxu0 %v9550
  %9600 = vmatprep.subr.bf16.mxu0 0
  %9601 = vmatpush2.bf16.msra.mxu0 %v9549
  %9602 = vmatprep.subr.bf16.mxu0 0
  %9603 = vmatpush2.bf16.msra.mxu0 %v9548
  %9604 = vmatprep.mubr.bf16.mxu0 %v9442
  %9605 = vmatmul.mubr.bf16.gmra.mxu0 %v9441
  %v9606 = vpop.f32.mrf.mxu0
  %v9607 = vadd.f32 0.0, %v9606
  %v9608 = vpop.f32.mrf.mxu0
  %v9609 = vpop.f32.mrf.mxu0
  %v9610 = vpop.f32.mrf.mxu0
  %9611 = vdwg.mxu0
  %v9612 = vadd.f32 %v9430, %v9607
  %9614 = vrot.lane.b32.xlu0 %v7238, 64
  %v9615 = vpop.permute.xlu0 %9614
  %9618 = vrot.lane.b32.xlu0 %v7240, 64
  %v9619 = vpop.permute.xlu0 %9618
  %v9621 = vsel %vm7257, %v7237, %v9615
  %v9622 = vsel %vm7257, %v7239, %v9619
  %v9623 = vpack.c.bf16 %v9621, %v9621
  %v9624 = vpack.c.bf16 %v9622, %v9622
  %s9625 = scalar_lea.vmem %s6, 1664
  %v9626 = vld [vmem:[%s9625] sm:$0xf]
  %v9627 = vld [vmem:[%s9625 + $0x4] sm:$0xf]
  %v9628 = vld [vmem:[%s9625 + $0x8] sm:$0xf]
  %v9629 = vld [vmem:[%s9625 + $0xc] sm:$0xf]
  %v9630 = vld [vmem:[%s9625 + $0x10] sm:$0xf]
  %v9631 = vld [vmem:[%s9625 + $0x14] sm:$0xf]
  %v9632 = vld [vmem:[%s9625 + $0x18] sm:$0xf]
  %v9633 = vld [vmem:[%s9625 + $0x1c] sm:$0xf]
  %v9634 = vld [vmem:[%s9625 + $0x20] sm:$0xf]
  %v9635 = vld [vmem:[%s9625 + $0x24] sm:$0xf]
  %v9636 = vld [vmem:[%s9625 + $0x28] sm:$0xf]
  %v9637 = vld [vmem:[%s9625 + $0x2c] sm:$0xf]
  %v9638 = vld [vmem:[%s9625 + $0x30] sm:$0xf]
  %v9639 = vld [vmem:[%s9625 + $0x34] sm:$0xf]
  %v9640 = vld [vmem:[%s9625 + $0x38] sm:$0xf]
  %v9641 = vld [vmem:[%s9625 + $0x3c] sm:$0xf]
  %v9642 = vld [vmem:[%s9625 + $0x40] sm:$0xf]
  %v9643 = vld [vmem:[%s9625 + $0x44] sm:$0xf]
  %v9644 = vld [vmem:[%s9625 + $0x48] sm:$0xf]
  %v9645 = vld [vmem:[%s9625 + $0x4c] sm:$0xf]
  %v9646 = vld [vmem:[%s9625 + $0x50] sm:$0xf]
  %v9647 = vld [vmem:[%s9625 + $0x54] sm:$0xf]
  %v9648 = vld [vmem:[%s9625 + $0x58] sm:$0xf]
  %v9649 = vld [vmem:[%s9625 + $0x5c] sm:$0xf]
  %v9650 = vld [vmem:[%s9625 + $0x60] sm:$0xf]
  %v9651 = vld [vmem:[%s9625 + $0x64] sm:$0xf]
  %v9652 = vld [vmem:[%s9625 + $0x68] sm:$0xf]
  %v9653 = vld [vmem:[%s9625 + $0x6c] sm:$0xf]
  %v9654 = vld [vmem:[%s9625 + $0x70] sm:$0xf]
  %v9655 = vld [vmem:[%s9625 + $0x74] sm:$0xf]
  %v9656 = vld [vmem:[%s9625 + $0x78] sm:$0xf]
  %v9657 = vld [vmem:[%s9625 + $0x7c] sm:$0xf]
  %v9690 = vunpack.c.l.b16 %v9626
  %v9691 = vunpack.c.l.b16 %v9627
  %v9692 = vunpack.c.l.b16 %v9628
  %v9693 = vunpack.c.l.b16 %v9629
  %v9694 = vunpack.c.l.b16 %v9630
  %v9695 = vunpack.c.l.b16 %v9631
  %v9696 = vunpack.c.l.b16 %v9632
  %v9697 = vunpack.c.l.b16 %v9633
  %v9698 = vunpack.c.l.b16 %v9634
  %v9699 = vunpack.c.l.b16 %v9635
  %v9700 = vunpack.c.l.b16 %v9636
  %v9701 = vunpack.c.l.b16 %v9637
  %v9702 = vunpack.c.l.b16 %v9638
  %v9703 = vunpack.c.l.b16 %v9639
  %v9704 = vunpack.c.l.b16 %v9640
  %v9705 = vunpack.c.l.b16 %v9641
  %v9706 = vunpack.c.l.b16 %v9642
  %v9707 = vunpack.c.l.b16 %v9643
  %v9708 = vunpack.c.l.b16 %v9644
  %v9709 = vunpack.c.l.b16 %v9645
  %v9710 = vunpack.c.l.b16 %v9646
  %v9711 = vunpack.c.l.b16 %v9647
  %v9712 = vunpack.c.l.b16 %v9648
  %v9713 = vunpack.c.l.b16 %v9649
  %v9714 = vunpack.c.l.b16 %v9650
  %v9715 = vunpack.c.l.b16 %v9651
  %v9716 = vunpack.c.l.b16 %v9652
  %v9717 = vunpack.c.l.b16 %v9653
  %v9718 = vunpack.c.l.b16 %v9654
  %v9719 = vunpack.c.l.b16 %v9655
  %v9720 = vunpack.c.l.b16 %v9656
  %v9721 = vunpack.c.l.b16 %v9657
  %v9722 = vpack.c.b16 %v9691, %v9690
  %v9723 = vpack.c.b16 %v9693, %v9692
  %v9724 = vpack.c.b16 %v9695, %v9694
  %v9725 = vpack.c.b16 %v9697, %v9696
  %v9726 = vpack.c.b16 %v9699, %v9698
  %v9727 = vpack.c.b16 %v9701, %v9700
  %v9728 = vpack.c.b16 %v9703, %v9702
  %v9729 = vpack.c.b16 %v9705, %v9704
  %v9730 = vpack.c.b16 %v9707, %v9706
  %v9731 = vpack.c.b16 %v9709, %v9708
  %v9732 = vpack.c.b16 %v9711, %v9710
  %v9733 = vpack.c.b16 %v9713, %v9712
  %v9734 = vpack.c.b16 %v9715, %v9714
  %v9735 = vpack.c.b16 %v9717, %v9716
  %v9736 = vpack.c.b16 %v9719, %v9718
  %v9737 = vpack.c.b16 %v9721, %v9720
  %9754 = vmatprep.subr.bf16.mxu0 0
  %9755 = vmatpush1.bf16.msra.mxu0 %v9729
  %9756 = vmatprep.subr.bf16.mxu0 0
  %9757 = vmatpush1.bf16.msra.mxu0 %v9728
  %9758 = vmatprep.subr.bf16.mxu0 0
  %9759 = vmatpush1.bf16.msra.mxu0 %v9727
  %9760 = vmatprep.subr.bf16.mxu0 0
  %9761 = vmatpush1.bf16.msra.mxu0 %v9726
  %9762 = vmatprep.subr.bf16.mxu0 0
  %9763 = vmatpush1.bf16.msra.mxu0 %v9725
  %9764 = vmatprep.subr.bf16.mxu0 0
  %9765 = vmatpush1.bf16.msra.mxu0 %v9724
  %9766 = vmatprep.subr.bf16.mxu0 0
  %9767 = vmatpush1.bf16.msra.mxu0 %v9723
  %9768 = vmatprep.subr.bf16.mxu0 0
  %9769 = vmatpush1.bf16.msra.mxu0 %v9722
  %9770 = vmatprep.subr.bf16.mxu0 0
  %9771 = vmatpush2.bf16.msra.mxu0 %v9737
  %9772 = vmatprep.subr.bf16.mxu0 0
  %9773 = vmatpush2.bf16.msra.mxu0 %v9736
  %9774 = vmatprep.subr.bf16.mxu0 0
  %9775 = vmatpush2.bf16.msra.mxu0 %v9735
  %9776 = vmatprep.subr.bf16.mxu0 0
  %9777 = vmatpush2.bf16.msra.mxu0 %v9734
  %9778 = vmatprep.subr.bf16.mxu0 0
  %9779 = vmatpush2.bf16.msra.mxu0 %v9733
  %9780 = vmatprep.subr.bf16.mxu0 0
  %9781 = vmatpush2.bf16.msra.mxu0 %v9732
  %9782 = vmatprep.subr.bf16.mxu0 0
  %9783 = vmatpush2.bf16.msra.mxu0 %v9731
  %9784 = vmatprep.subr.bf16.mxu0 0
  %9785 = vmatpush2.bf16.msra.mxu0 %v9730
  %9786 = vmatprep.mubr.bf16.mxu0 %v9624
  %9787 = vmatmul.mubr.bf16.gmra.mxu0 %v9623
  %v9788 = vpop.f32.mrf.mxu0
  %v9789 = vadd.f32 0.0, %v9788
  %v9790 = vpop.f32.mrf.mxu0
  %v9791 = vpop.f32.mrf.mxu0
  %v9792 = vpop.f32.mrf.mxu0
  %9793 = vdwg.mxu0
  %v9794 = vadd.f32 %v9612, %v9789
  %9796 = vrot.lane.b32.xlu0 %v7242, 64
  %v9797 = vpop.permute.xlu0 %9796
  %9800 = vrot.lane.b32.xlu0 %v7244, 64
  %v9801 = vpop.permute.xlu0 %9800
  %v9803 = vsel %vm7257, %v7241, %v9797
  %v9804 = vsel %vm7257, %v7243, %v9801
  %v9805 = vpack.c.bf16 %v9803, %v9803
  %v9806 = vpack.c.bf16 %v9804, %v9804
  %s9807 = scalar_lea.vmem %s6, 1792
  %v9808 = vld [vmem:[%s9807] sm:$0xf]
  %v9809 = vld [vmem:[%s9807 + $0x4] sm:$0xf]
  %v9810 = vld [vmem:[%s9807 + $0x8] sm:$0xf]
  %v9811 = vld [vmem:[%s9807 + $0xc] sm:$0xf]
  %v9812 = vld [vmem:[%s9807 + $0x10] sm:$0xf]
  %v9813 = vld [vmem:[%s9807 + $0x14] sm:$0xf]
  %v9814 = vld [vmem:[%s9807 + $0x18] sm:$0xf]
  %v9815 = vld [vmem:[%s9807 + $0x1c] sm:$0xf]
  %v9816 = vld [vmem:[%s9807 + $0x20] sm:$0xf]
  %v9817 = vld [vmem:[%s9807 + $0x24] sm:$0xf]
  %v9818 = vld [vmem:[%s9807 + $0x28] sm:$0xf]
  %v9819 = vld [vmem:[%s9807 + $0x2c] sm:$0xf]
  %v9820 = vld [vmem:[%s9807 + $0x30] sm:$0xf]
  %v9821 = vld [vmem:[%s9807 + $0x34] sm:$0xf]
  %v9822 = vld [vmem:[%s9807 + $0x38] sm:$0xf]
  %v9823 = vld [vmem:[%s9807 + $0x3c] sm:$0xf]
  %v9824 = vld [vmem:[%s9807 + $0x40] sm:$0xf]
  %v9825 = vld [vmem:[%s9807 + $0x44] sm:$0xf]
  %v9826 = vld [vmem:[%s9807 + $0x48] sm:$0xf]
  %v9827 = vld [vmem:[%s9807 + $0x4c] sm:$0xf]
  %v9828 = vld [vmem:[%s9807 + $0x50] sm:$0xf]
  %v9829 = vld [vmem:[%s9807 + $0x54] sm:$0xf]
  %v9830 = vld [vmem:[%s9807 + $0x58] sm:$0xf]
  %v9831 = vld [vmem:[%s9807 + $0x5c] sm:$0xf]
  %v9832 = vld [vmem:[%s9807 + $0x60] sm:$0xf]
  %v9833 = vld [vmem:[%s9807 + $0x64] sm:$0xf]
  %v9834 = vld [vmem:[%s9807 + $0x68] sm:$0xf]
  %v9835 = vld [vmem:[%s9807 + $0x6c] sm:$0xf]
  %v9836 = vld [vmem:[%s9807 + $0x70] sm:$0xf]
  %v9837 = vld [vmem:[%s9807 + $0x74] sm:$0xf]
  %v9838 = vld [vmem:[%s9807 + $0x78] sm:$0xf]
  %v9839 = vld [vmem:[%s9807 + $0x7c] sm:$0xf]
  %v9872 = vunpack.c.l.b16 %v9808
  %v9873 = vunpack.c.l.b16 %v9809
  %v9874 = vunpack.c.l.b16 %v9810
  %v9875 = vunpack.c.l.b16 %v9811
  %v9876 = vunpack.c.l.b16 %v9812
  %v9877 = vunpack.c.l.b16 %v9813
  %v9878 = vunpack.c.l.b16 %v9814
  %v9879 = vunpack.c.l.b16 %v9815
  %v9880 = vunpack.c.l.b16 %v9816
  %v9881 = vunpack.c.l.b16 %v9817
  %v9882 = vunpack.c.l.b16 %v9818
  %v9883 = vunpack.c.l.b16 %v9819
  %v9884 = vunpack.c.l.b16 %v9820
  %v9885 = vunpack.c.l.b16 %v9821
  %v9886 = vunpack.c.l.b16 %v9822
  %v9887 = vunpack.c.l.b16 %v9823
  %v9888 = vunpack.c.l.b16 %v9824
  %v9889 = vunpack.c.l.b16 %v9825
  %v9890 = vunpack.c.l.b16 %v9826
  %v9891 = vunpack.c.l.b16 %v9827
  %v9892 = vunpack.c.l.b16 %v9828
  %v9893 = vunpack.c.l.b16 %v9829
  %v9894 = vunpack.c.l.b16 %v9830
  %v9895 = vunpack.c.l.b16 %v9831
  %v9896 = vunpack.c.l.b16 %v9832
  %v9897 = vunpack.c.l.b16 %v9833
  %v9898 = vunpack.c.l.b16 %v9834
  %v9899 = vunpack.c.l.b16 %v9835
  %v9900 = vunpack.c.l.b16 %v9836
  %v9901 = vunpack.c.l.b16 %v9837
  %v9902 = vunpack.c.l.b16 %v9838
  %v9903 = vunpack.c.l.b16 %v9839
  %v9904 = vpack.c.b16 %v9873, %v9872
  %v9905 = vpack.c.b16 %v9875, %v9874
  %v9906 = vpack.c.b16 %v9877, %v9876
  %v9907 = vpack.c.b16 %v9879, %v9878
  %v9908 = vpack.c.b16 %v9881, %v9880
  %v9909 = vpack.c.b16 %v9883, %v9882
  %v9910 = vpack.c.b16 %v9885, %v9884
  %v9911 = vpack.c.b16 %v9887, %v9886
  %v9912 = vpack.c.b16 %v9889, %v9888
  %v9913 = vpack.c.b16 %v9891, %v9890
  %v9914 = vpack.c.b16 %v9893, %v9892
  %v9915 = vpack.c.b16 %v9895, %v9894
  %v9916 = vpack.c.b16 %v9897, %v9896
  %v9917 = vpack.c.b16 %v9899, %v9898
  %v9918 = vpack.c.b16 %v9901, %v9900
  %v9919 = vpack.c.b16 %v9903, %v9902
  %9936 = vmatprep.subr.bf16.mxu0 0
  %9937 = vmatpush1.bf16.msra.mxu0 %v9911
  %9938 = vmatprep.subr.bf16.mxu0 0
  %9939 = vmatpush1.bf16.msra.mxu0 %v9910
  %9940 = vmatprep.subr.bf16.mxu0 0
  %9941 = vmatpush1.bf16.msra.mxu0 %v9909
  %9942 = vmatprep.subr.bf16.mxu0 0
  %9943 = vmatpush1.bf16.msra.mxu0 %v9908
  %9944 = vmatprep.subr.bf16.mxu0 0
  %9945 = vmatpush1.bf16.msra.mxu0 %v9907
  %9946 = vmatprep.subr.bf16.mxu0 0
  %9947 = vmatpush1.bf16.msra.mxu0 %v9906
  %9948 = vmatprep.subr.bf16.mxu0 0
  %9949 = vmatpush1.bf16.msra.mxu0 %v9905
  %9950 = vmatprep.subr.bf16.mxu0 0
  %9951 = vmatpush1.bf16.msra.mxu0 %v9904
  %9952 = vmatprep.subr.bf16.mxu0 0
  %9953 = vmatpush2.bf16.msra.mxu0 %v9919
  %9954 = vmatprep.subr.bf16.mxu0 0
  %9955 = vmatpush2.bf16.msra.mxu0 %v9918
  %9956 = vmatprep.subr.bf16.mxu0 0
  %9957 = vmatpush2.bf16.msra.mxu0 %v9917
  %9958 = vmatprep.subr.bf16.mxu0 0
  %9959 = vmatpush2.bf16.msra.mxu0 %v9916
  %9960 = vmatprep.subr.bf16.mxu0 0
  %9961 = vmatpush2.bf16.msra.mxu0 %v9915
  %9962 = vmatprep.subr.bf16.mxu0 0
  %9963 = vmatpush2.bf16.msra.mxu0 %v9914
  %9964 = vmatprep.subr.bf16.mxu0 0
  %9965 = vmatpush2.bf16.msra.mxu0 %v9913
  %9966 = vmatprep.subr.bf16.mxu0 0
  %9967 = vmatpush2.bf16.msra.mxu0 %v9912
  %9968 = vmatprep.mubr.bf16.mxu0 %v9806
  %9969 = vmatmul.mubr.bf16.gmra.mxu0 %v9805
  %v9970 = vpop.f32.mrf.mxu0
  %v9971 = vadd.f32 0.0, %v9970
  %v9972 = vpop.f32.mrf.mxu0
  %v9973 = vpop.f32.mrf.mxu0
  %v9974 = vpop.f32.mrf.mxu0
  %9975 = vdwg.mxu0
  %v9976 = vadd.f32 %v9794, %v9971
  %9978 = vrot.lane.b32.xlu0 %v7246, 64
  %v9979 = vpop.permute.xlu0 %9978
  %9982 = vrot.lane.b32.xlu0 %v7248, 64
  %v9983 = vpop.permute.xlu0 %9982
  %v9985 = vsel %vm7257, %v7245, %v9979
  %v9986 = vsel %vm7257, %v7247, %v9983
  %v9987 = vpack.c.bf16 %v9985, %v9985
  %v9988 = vpack.c.bf16 %v9986, %v9986
  %s9989 = scalar_lea.vmem %s6, 1920
  %v9990 = vld [vmem:[%s9989] sm:$0xf]
  %v9991 = vld [vmem:[%s9989 + $0x4] sm:$0xf]
  %v9992 = vld [vmem:[%s9989 + $0x8] sm:$0xf]
  %v9993 = vld [vmem:[%s9989 + $0xc] sm:$0xf]
  %v9994 = vld [vmem:[%s9989 + $0x10] sm:$0xf]
  %v9995 = vld [vmem:[%s9989 + $0x14] sm:$0xf]
  %v9996 = vld [vmem:[%s9989 + $0x18] sm:$0xf]
  %v9997 = vld [vmem:[%s9989 + $0x1c] sm:$0xf]
  %v9998 = vld [vmem:[%s9989 + $0x20] sm:$0xf]
  %v9999 = vld [vmem:[%s9989 + $0x24] sm:$0xf]
  %v10000 = vld [vmem:[%s9989 + $0x28] sm:$0xf]
  %v10001 = vld [vmem:[%s9989 + $0x2c] sm:$0xf]
  %v10002 = vld [vmem:[%s9989 + $0x30] sm:$0xf]
  %v10003 = vld [vmem:[%s9989 + $0x34] sm:$0xf]
  %v10004 = vld [vmem:[%s9989 + $0x38] sm:$0xf]
  %v10005 = vld [vmem:[%s9989 + $0x3c] sm:$0xf]
  %v10006 = vld [vmem:[%s9989 + $0x40] sm:$0xf]
  %v10007 = vld [vmem:[%s9989 + $0x44] sm:$0xf]
  %v10008 = vld [vmem:[%s9989 + $0x48] sm:$0xf]
  %v10009 = vld [vmem:[%s9989 + $0x4c] sm:$0xf]
  %v10010 = vld [vmem:[%s9989 + $0x50] sm:$0xf]
  %v10011 = vld [vmem:[%s9989 + $0x54] sm:$0xf]
  %v10012 = vld [vmem:[%s9989 + $0x58] sm:$0xf]
  %v10013 = vld [vmem:[%s9989 + $0x5c] sm:$0xf]
  %v10014 = vld [vmem:[%s9989 + $0x60] sm:$0xf]
  %v10015 = vld [vmem:[%s9989 + $0x64] sm:$0xf]
  %v10016 = vld [vmem:[%s9989 + $0x68] sm:$0xf]
  %v10017 = vld [vmem:[%s9989 + $0x6c] sm:$0xf]
  %v10018 = vld [vmem:[%s9989 + $0x70] sm:$0xf]
  %v10019 = vld [vmem:[%s9989 + $0x74] sm:$0xf]
  %v10020 = vld [vmem:[%s9989 + $0x78] sm:$0xf]
  %v10021 = vld [vmem:[%s9989 + $0x7c] sm:$0xf]
  %v10054 = vunpack.c.l.b16 %v9990
  %v10055 = vunpack.c.l.b16 %v9991
  %v10056 = vunpack.c.l.b16 %v9992
  %v10057 = vunpack.c.l.b16 %v9993
  %v10058 = vunpack.c.l.b16 %v9994
  %v10059 = vunpack.c.l.b16 %v9995
  %v10060 = vunpack.c.l.b16 %v9996
  %v10061 = vunpack.c.l.b16 %v9997
  %v10062 = vunpack.c.l.b16 %v9998
  %v10063 = vunpack.c.l.b16 %v9999
  %v10064 = vunpack.c.l.b16 %v10000
  %v10065 = vunpack.c.l.b16 %v10001
  %v10066 = vunpack.c.l.b16 %v10002
  %v10067 = vunpack.c.l.b16 %v10003
  %v10068 = vunpack.c.l.b16 %v10004
  %v10069 = vunpack.c.l.b16 %v10005
  %v10070 = vunpack.c.l.b16 %v10006
  %v10071 = vunpack.c.l.b16 %v10007
  %v10072 = vunpack.c.l.b16 %v10008
  %v10073 = vunpack.c.l.b16 %v10009
  %v10074 = vunpack.c.l.b16 %v10010
  %v10075 = vunpack.c.l.b16 %v10011
  %v10076 = vunpack.c.l.b16 %v10012
  %v10077 = vunpack.c.l.b16 %v10013
  %v10078 = vunpack.c.l.b16 %v10014
  %v10079 = vunpack.c.l.b16 %v10015
  %v10080 = vunpack.c.l.b16 %v10016
  %v10081 = vunpack.c.l.b16 %v10017
  %v10082 = vunpack.c.l.b16 %v10018
  %v10083 = vunpack.c.l.b16 %v10019
  %v10084 = vunpack.c.l.b16 %v10020
  %v10085 = vunpack.c.l.b16 %v10021
  %v10086 = vpack.c.b16 %v10055, %v10054
  %v10087 = vpack.c.b16 %v10057, %v10056
  %v10088 = vpack.c.b16 %v10059, %v10058
  %v10089 = vpack.c.b16 %v10061, %v10060
  %v10090 = vpack.c.b16 %v10063, %v10062
  %v10091 = vpack.c.b16 %v10065, %v10064
  %v10092 = vpack.c.b16 %v10067, %v10066
  %v10093 = vpack.c.b16 %v10069, %v10068
  %v10094 = vpack.c.b16 %v10071, %v10070
  %v10095 = vpack.c.b16 %v10073, %v10072
  %v10096 = vpack.c.b16 %v10075, %v10074
  %v10097 = vpack.c.b16 %v10077, %v10076
  %v10098 = vpack.c.b16 %v10079, %v10078
  %v10099 = vpack.c.b16 %v10081, %v10080
  %v10100 = vpack.c.b16 %v10083, %v10082
  %v10101 = vpack.c.b16 %v10085, %v10084
  %10118 = vmatprep.subr.bf16.mxu0 0
  %10119 = vmatpush1.bf16.msra.mxu0 %v10093
  %10120 = vmatprep.subr.bf16.mxu0 0
  %10121 = vmatpush1.bf16.msra.mxu0 %v10092
  %10122 = vmatprep.subr.bf16.mxu0 0
  %10123 = vmatpush1.bf16.msra.mxu0 %v10091
  %10124 = vmatprep.subr.bf16.mxu0 0
  %10125 = vmatpush1.bf16.msra.mxu0 %v10090
  %10126 = vmatprep.subr.bf16.mxu0 0
  %10127 = vmatpush1.bf16.msra.mxu0 %v10089
  %10128 = vmatprep.subr.bf16.mxu0 0
  %10129 = vmatpush1.bf16.msra.mxu0 %v10088
  %10130 = vmatprep.subr.bf16.mxu0 0
  %10131 = vmatpush1.bf16.msra.mxu0 %v10087
  %10132 = vmatprep.subr.bf16.mxu0 0
  %10133 = vmatpush1.bf16.msra.mxu0 %v10086
  %10134 = vmatprep.subr.bf16.mxu0 0
  %10135 = vmatpush2.bf16.msra.mxu0 %v10101
  %10136 = vmatprep.subr.bf16.mxu0 0
  %10137 = vmatpush2.bf16.msra.mxu0 %v10100
  %10138 = vmatprep.subr.bf16.mxu0 0
  %10139 = vmatpush2.bf16.msra.mxu0 %v10099
  %10140 = vmatprep.subr.bf16.mxu0 0
  %10141 = vmatpush2.bf16.msra.mxu0 %v10098
  %10142 = vmatprep.subr.bf16.mxu0 0
  %10143 = vmatpush2.bf16.msra.mxu0 %v10097
  %10144 = vmatprep.subr.bf16.mxu0 0
  %10145 = vmatpush2.bf16.msra.mxu0 %v10096
  %10146 = vmatprep.subr.bf16.mxu0 0
  %10147 = vmatpush2.bf16.msra.mxu0 %v10095
  %10148 = vmatprep.subr.bf16.mxu0 0
  %10149 = vmatpush2.bf16.msra.mxu0 %v10094
  %10150 = vmatprep.mubr.bf16.mxu0 %v9988
  %10151 = vmatmul.mubr.bf16.gmra.mxu0 %v9987
  %v10152 = vpop.f32.mrf.mxu0
  %v10153 = vadd.f32 0.0, %v10152
  %v10154 = vpop.f32.mrf.mxu0
  %v10155 = vpop.f32.mrf.mxu0
  %v10156 = vpop.f32.mrf.mxu0
  %10157 = vdwg.mxu0
  %v10158 = vadd.f32 %v9976, %v10153
  %v10159 = vld [vmem:[%s7] sm:$0x1]
  %v10161 = vlaneseq
  %v10162 = vshrl.u32 %v10161, 7
  %v10163 = vsub.s32 0, %v10162
  %v10164 = vrot.slane %v10159, %v10163
  %v10166 = vadd.f32 %v10158, %v10164
  %v10167 = vmax.f32 %v10166, 0.0
  %v10168 = vpack.c.bf16 %v10167, %v10167
  %v10169 = vld [vmem:[%s8] sm:$0xff]
  %v10170 = vld [vmem:[%s8 + $0x8] sm:$0xff]
  %v10171 = vld [vmem:[%s8 + $0x10] sm:$0xff]
  %v10172 = vld [vmem:[%s8 + $0x18] sm:$0xff]
  %v10173 = vld [vmem:[%s8 + $0x20] sm:$0xff]
  %v10174 = vld [vmem:[%s8 + $0x28] sm:$0xff]
  %v10175 = vld [vmem:[%s8 + $0x30] sm:$0xff]
  %v10176 = vld [vmem:[%s8 + $0x38] sm:$0xff]
  %v10177 = vld [vmem:[%s8 + $0x40] sm:$0xff]
  %v10178 = vld [vmem:[%s8 + $0x48] sm:$0xff]
  %v10179 = vld [vmem:[%s8 + $0x50] sm:$0xff]
  %v10180 = vld [vmem:[%s8 + $0x58] sm:$0xff]
  %v10181 = vld [vmem:[%s8 + $0x60] sm:$0xff]
  %v10182 = vld [vmem:[%s8 + $0x68] sm:$0xff]
  %v10183 = vld [vmem:[%s8 + $0x70] sm:$0xff]
  %v10184 = vld [vmem:[%s8 + $0x78] sm:$0xff]
  %v10185 = vld [vmem:[%s8 + $0x80] sm:$0xff]
  %v10186 = vld [vmem:[%s8 + $0x88] sm:$0xff]
  %v10187 = vld [vmem:[%s8 + $0x90] sm:$0xff]
  %v10188 = vld [vmem:[%s8 + $0x98] sm:$0xff]
  %v10189 = vld [vmem:[%s8 + $0xa0] sm:$0xff]
  %v10190 = vld [vmem:[%s8 + $0xa8] sm:$0xff]
  %v10191 = vld [vmem:[%s8 + $0xb0] sm:$0xff]
  %v10192 = vld [vmem:[%s8 + $0xb8] sm:$0xff]
  %v10193 = vld [vmem:[%s8 + $0xc0] sm:$0xff]
  %v10194 = vld [vmem:[%s8 + $0xc8] sm:$0xff]
  %v10195 = vld [vmem:[%s8 + $0xd0] sm:$0xff]
  %v10196 = vld [vmem:[%s8 + $0xd8] sm:$0xff]
  %v10197 = vld [vmem:[%s8 + $0xe0] sm:$0xff]
  %v10198 = vld [vmem:[%s8 + $0xe8] sm:$0xff]
  %v10199 = vld [vmem:[%s8 + $0xf0] sm:$0xff]
  %v10200 = vld [vmem:[%s8 + $0xf8] sm:$0xff]
  %v10201 = vld [vmem:[%s8 + $0x100] sm:$0xff]
  %v10202 = vld [vmem:[%s8 + $0x108] sm:$0xff]
  %v10203 = vld [vmem:[%s8 + $0x110] sm:$0xff]
  %v10204 = vld [vmem:[%s8 + $0x118] sm:$0xff]
  %v10205 = vld [vmem:[%s8 + $0x120] sm:$0xff]
  %v10206 = vld [vmem:[%s8 + $0x128] sm:$0xff]
  %v10207 = vld [vmem:[%s8 + $0x130] sm:$0xff]
  %v10208 = vld [vmem:[%s8 + $0x138] sm:$0xff]
  %v10209 = vld [vmem:[%s8 + $0x140] sm:$0xff]
  %v10210 = vld [vmem:[%s8 + $0x148] sm:$0xff]
  %v10211 = vld [vmem:[%s8 + $0x150] sm:$0xff]
  %v10212 = vld [vmem:[%s8 + $0x158] sm:$0xff]
  %v10213 = vld [vmem:[%s8 + $0x160] sm:$0xff]
  %v10214 = vld [vmem:[%s8 + $0x168] sm:$0xff]
  %v10215 = vld [vmem:[%s8 + $0x170] sm:$0xff]
  %v10216 = vld [vmem:[%s8 + $0x178] sm:$0xff]
  %v10217 = vld [vmem:[%s8 + $0x180] sm:$0xff]
  %v10218 = vld [vmem:[%s8 + $0x188] sm:$0xff]
  %v10219 = vld [vmem:[%s8 + $0x190] sm:$0xff]
  %v10220 = vld [vmem:[%s8 + $0x198] sm:$0xff]
  %v10221 = vld [vmem:[%s8 + $0x1a0] sm:$0xff]
  %v10222 = vld [vmem:[%s8 + $0x1a8] sm:$0xff]
  %v10223 = vld [vmem:[%s8 + $0x1b0] sm:$0xff]
  %v10224 = vld [vmem:[%s8 + $0x1b8] sm:$0xff]
  %v10225 = vld [vmem:[%s8 + $0x1c0] sm:$0xff]
  %v10226 = vld [vmem:[%s8 + $0x1c8] sm:$0xff]
  %v10227 = vld [vmem:[%s8 + $0x1d0] sm:$0xff]
  %v10228 = vld [vmem:[%s8 + $0x1d8] sm:$0xff]
  %v10229 = vld [vmem:[%s8 + $0x1e0] sm:$0xff]
  %v10230 = vld [vmem:[%s8 + $0x1e8] sm:$0xff]
  %v10231 = vld [vmem:[%s8 + $0x1f0] sm:$0xff]
  %v10232 = vld [vmem:[%s8 + $0x1f8] sm:$0xff]
  %v10233 = vld [vmem:[%s9] sm:$0xff]
  %v10235 = vlaneseq
  %v10236 = vshrl.u32 %v10235, 7
  %v10237 = vsub.s32 0, %v10236
  %v10238 = vrot.slane %v10233, %v10237
  %v10239 = vlaneseq
  %v10240 = vshrl.u32 %v10239, 7
  %v10241 = vsub.s32 1, %v10240
  %v10242 = vrot.slane %v10233, %v10241
  %v10243 = vlaneseq
  %v10244 = vshrl.u32 %v10243, 7
  %v10245 = vsub.s32 2, %v10244
  %v10246 = vrot.slane %v10233, %v10245
  %v10247 = vlaneseq
  %v10248 = vshrl.u32 %v10247, 7
  %v10249 = vsub.s32 3, %v10248
  %v10250 = vrot.slane %v10233, %v10249
  %v10251 = vlaneseq
  %v10252 = vshrl.u32 %v10251, 7
  %v10253 = vsub.s32 4, %v10252
  %v10254 = vrot.slane %v10233, %v10253
  %v10255 = vlaneseq
  %v10256 = vshrl.u32 %v10255, 7
  %v10257 = vsub.s32 5, %v10256
  %v10258 = vrot.slane %v10233, %v10257
  %v10259 = vlaneseq
  %v10260 = vshrl.u32 %v10259, 7
  %v10261 = vsub.s32 6, %v10260
  %v10262 = vrot.slane %v10233, %v10261
  %v10263 = vlaneseq
  %v10264 = vshrl.u32 %v10263, 7
  %v10265 = vsub.s32 7, %v10264
  %v10266 = vrot.slane %v10233, %v10265
  %v10339 = vunpack.c.l.b16 %v10169
  %v10340 = vunpack.c.h.b16 %v10169
  %v10341 = vunpack.c.l.b16 %v10170
  %v10342 = vunpack.c.h.b16 %v10170
  %v10343 = vunpack.c.l.b16 %v10171
  %v10344 = vunpack.c.h.b16 %v10171
  %v10345 = vunpack.c.l.b16 %v10172
  %v10346 = vunpack.c.h.b16 %v10172
  %v10347 = vunpack.c.l.b16 %v10173
  %v10348 = vunpack.c.h.b16 %v10173
  %v10349 = vunpack.c.l.b16 %v10174
  %v10350 = vunpack.c.h.b16 %v10174
  %v10351 = vunpack.c.l.b16 %v10175
  %v10352 = vunpack.c.h.b16 %v10175
  %v10353 = vunpack.c.l.b16 %v10176
  %v10354 = vunpack.c.h.b16 %v10176
  %v10355 = vunpack.c.l.b16 %v10177
  %v10356 = vunpack.c.h.b16 %v10177
  %v10357 = vunpack.c.l.b16 %v10178
  %v10358 = vunpack.c.h.b16 %v10178
  %v10359 = vunpack.c.l.b16 %v10179
  %v10360 = vunpack.c.h.b16 %v10179
  %v10361 = vunpack.c.l.b16 %v10180
  %v10362 = vunpack.c.h.b16 %v10180
  %v10363 = vunpack.c.l.b16 %v10181
  %v10364 = vunpack.c.h.b16 %v10181
  %v10365 = vunpack.c.l.b16 %v10182
  %v10366 = vunpack.c.h.b16 %v10182
  %v10367 = vunpack.c.l.b16 %v10183
  %v10368 = vunpack.c.h.b16 %v10183
  %v10369 = vunpack.c.l.b16 %v10184
  %v10370 = vunpack.c.h.b16 %v10184
  %v10371 = vunpack.c.l.b16 %v10185
  %v10372 = vunpack.c.h.b16 %v10185
  %v10373 = vunpack.c.l.b16 %v10186
  %v10374 = vunpack.c.h.b16 %v10186
  %v10375 = vunpack.c.l.b16 %v10187
  %v10376 = vunpack.c.h.b16 %v10187
  %v10377 = vunpack.c.l.b16 %v10188
  %v10378 = vunpack.c.h.b16 %v10188
  %v10379 = vunpack.c.l.b16 %v10189
  %v10380 = vunpack.c.h.b16 %v10189
  %v10381 = vunpack.c.l.b16 %v10190
  %v10382 = vunpack.c.h.b16 %v10190
  %v10383 = vunpack.c.l.b16 %v10191
  %v10384 = vunpack.c.h.b16 %v10191
  %v10385 = vunpack.c.l.b16 %v10192
  %v10386 = vunpack.c.h.b16 %v10192
  %v10387 = vunpack.c.l.b16 %v10193
  %v10388 = vunpack.c.h.b16 %v10193
  %v10389 = vunpack.c.l.b16 %v10194
  %v10390 = vunpack.c.h.b16 %v10194
  %v10391 = vunpack.c.l.b16 %v10195
  %v10392 = vunpack.c.h.b16 %v10195
  %v10393 = vunpack.c.l.b16 %v10196
  %v10394 = vunpack.c.h.b16 %v10196
  %v10395 = vunpack.c.l.b16 %v10197
  %v10396 = vunpack.c.h.b16 %v10197
  %v10397 = vunpack.c.l.b16 %v10198
  %v10398 = vunpack.c.h.b16 %v10198
  %v10399 = vunpack.c.l.b16 %v10199
  %v10400 = vunpack.c.h.b16 %v10199
  %v10401 = vunpack.c.l.b16 %v10200
  %v10402 = vunpack.c.h.b16 %v10200
  %v10403 = vunpack.c.l.b16 %v10201
  %v10404 = vunpack.c.h.b16 %v10201
  %v10405 = vunpack.c.l.b16 %v10202
  %v10406 = vunpack.c.h.b16 %v10202
  %v10407 = vunpack.c.l.b16 %v10203
  %v10408 = vunpack.c.h.b16 %v10203
  %v10409 = vunpack.c.l.b16 %v10204
  %v10410 = vunpack.c.h.b16 %v10204
  %v10411 = vunpack.c.l.b16 %v10205
  %v10412 = vunpack.c.h.b16 %v10205
  %v10413 = vunpack.c.l.b16 %v10206
  %v10414 = vunpack.c.h.b16 %v10206
  %v10415 = vunpack.c.l.b16 %v10207
  %v10416 = vunpack.c.h.b16 %v10207
  %v10417 = vunpack.c.l.b16 %v10208
  %v10418 = vunpack.c.h.b16 %v10208
  %v10419 = vunpack.c.l.b16 %v10209
  %v10420 = vunpack.c.h.b16 %v10209
  %v10421 = vunpack.c.l.b16 %v10210
  %v10422 = vunpack.c.h.b16 %v10210
  %v10423 = vunpack.c.l.b16 %v10211
  %v10424 = vunpack.c.h.b16 %v10211
  %v10425 = vunpack.c.l.b16 %v10212
  %v10426 = vunpack.c.h.b16 %v10212
  %v10427 = vunpack.c.l.b16 %v10213
  %v10428 = vunpack.c.h.b16 %v10213
  %v10429 = vunpack.c.l.b16 %v10214
  %v10430 = vunpack.c.h.b16 %v10214
  %v10431 = vunpack.c.l.b16 %v10215
  %v10432 = vunpack.c.h.b16 %v10215
  %v10433 = vunpack.c.l.b16 %v10216
  %v10434 = vunpack.c.h.b16 %v10216
  %v10435 = vunpack.c.l.b16 %v10217
  %v10436 = vunpack.c.h.b16 %v10217
  %v10437 = vunpack.c.l.b16 %v10218
  %v10438 = vunpack.c.h.b16 %v10218
  %v10439 = vunpack.c.l.b16 %v10219
  %v10440 = vunpack.c.h.b16 %v10219
  %v10441 = vunpack.c.l.b16 %v10220
  %v10442 = vunpack.c.h.b16 %v10220
  %v10443 = vunpack.c.l.b16 %v10221
  %v10444 = vunpack.c.h.b16 %v10221
  %v10445 = vunpack.c.l.b16 %v10222
  %v10446 = vunpack.c.h.b16 %v10222
  %v10447 = vunpack.c.l.b16 %v10223
  %v10448 = vunpack.c.h.b16 %v10223
  %v10449 = vunpack.c.l.b16 %v10224
  %v10450 = vunpack.c.h.b16 %v10224
  %v10451 = vunpack.c.l.b16 %v10225
  %v10452 = vunpack.c.h.b16 %v10225
  %v10453 = vunpack.c.l.b16 %v10226
  %v10454 = vunpack.c.h.b16 %v10226
  %v10455 = vunpack.c.l.b16 %v10227
  %v10456 = vunpack.c.h.b16 %v10227
  %v10457 = vunpack.c.l.b16 %v10228
  %v10458 = vunpack.c.h.b16 %v10228
  %v10459 = vunpack.c.l.b16 %v10229
  %v10460 = vunpack.c.h.b16 %v10229
  %v10461 = vunpack.c.l.b16 %v10230
  %v10462 = vunpack.c.h.b16 %v10230
  %v10463 = vunpack.c.l.b16 %v10231
  %v10464 = vunpack.c.h.b16 %v10231
  %v10465 = vunpack.c.l.b16 %v10232
  %v10466 = vunpack.c.h.b16 %v10232
  %v10467 = vpack.c.b16 %v10347, %v10339
  %v10468 = vpack.c.b16 %v10348, %v10340
  %v10469 = vpack.c.b16 %v10349, %v10341
  %v10470 = vpack.c.b16 %v10350, %v10342
  %v10471 = vpack.c.b16 %v10351, %v10343
  %v10472 = vpack.c.b16 %v10352, %v10344
  %v10473 = vpack.c.b16 %v10353, %v10345
  %v10474 = vpack.c.b16 %v10354, %v10346
  %v10475 = vpack.c.b16 %v10363, %v10355
  %v10476 = vpack.c.b16 %v10364, %v10356
  %v10477 = vpack.c.b16 %v10365, %v10357
  %v10478 = vpack.c.b16 %v10366, %v10358
  %v10479 = vpack.c.b16 %v10367, %v10359
  %v10480 = vpack.c.b16 %v10368, %v10360
  %v10481 = vpack.c.b16 %v10369, %v10361
  %v10482 = vpack.c.b16 %v10370, %v10362
  %v10483 = vpack.c.b16 %v10379, %v10371
  %v10484 = vpack.c.b16 %v10380, %v10372
  %v10485 = vpack.c.b16 %v10381, %v10373
  %v10486 = vpack.c.b16 %v10382, %v10374
  %v10487 = vpack.c.b16 %v10383, %v10375
  %v10488 = vpack.c.b16 %v10384, %v10376
  %v10489 = vpack.c.b16 %v10385, %v10377
  %v10490 = vpack.c.b16 %v10386, %v10378
  %v10491 = vpack.c.b16 %v10395, %v10387
  %v10492 = vpack.c.b16 %v10396, %v10388
  %v10493 = vpack.c.b16 %v10397, %v10389
  %v10494 = vpack.c.b16 %v10398, %v10390
  %v10495 = vpack.c.b16 %v10399, %v10391
  %v10496 = vpack.c.b16 %v10400, %v10392
  %v10497 = vpack.c.b16 %v10401, %v10393
  %v10498 = vpack.c.b16 %v10402, %v10394
  %v10499 = vpack.c.b16 %v10411, %v10403
  %v10500 = vpack.c.b16 %v10412, %v10404
  %v10501 = vpack.c.b16 %v10413, %v10405
  %v10502 = vpack.c.b16 %v10414, %v10406
  %v10503 = vpack.c.b16 %v10415, %v10407
  %v10504 = vpack.c.b16 %v10416, %v10408
  %v10505 = vpack.c.b16 %v10417, %v10409
  %v10506 = vpack.c.b16 %v10418, %v10410
  %v10507 = vpack.c.b16 %v10427, %v10419
  %v10508 = vpack.c.b16 %v10428, %v10420
  %v10509 = vpack.c.b16 %v10429, %v10421
  %v10510 = vpack.c.b16 %v10430, %v10422
  %v10511 = vpack.c.b16 %v10431, %v10423
  %v10512 = vpack.c.b16 %v10432, %v10424
  %v10513 = vpack.c.b16 %v10433, %v10425
  %v10514 = vpack.c.b16 %v10434, %v10426
  %v10515 = vpack.c.b16 %v10443, %v10435
  %v10516 = vpack.c.b16 %v10444, %v10436
  %v10517 = vpack.c.b16 %v10445, %v10437
  %v10518 = vpack.c.b16 %v10446, %v10438
  %v10519 = vpack.c.b16 %v10447, %v10439
  %v10520 = vpack.c.b16 %v10448, %v10440
  %v10521 = vpack.c.b16 %v10449, %v10441
  %v10522 = vpack.c.b16 %v10450, %v10442
  %v10523 = vpack.c.b16 %v10459, %v10451
  %v10524 = vpack.c.b16 %v10460, %v10452
  %v10525 = vpack.c.b16 %v10461, %v10453
  %v10526 = vpack.c.b16 %v10462, %v10454
  %v10527 = vpack.c.b16 %v10463, %v10455
  %v10528 = vpack.c.b16 %v10464, %v10456
  %v10529 = vpack.c.b16 %v10465, %v10457
  %v10530 = vpack.c.b16 %v10466, %v10458
  %10595 = vmatprep.subr.bf16.mxu0 %v10524
  %10596 = vmatpush1.bf16.msra.mxu0 %v10523
  %10597 = vmatprep.subr.bf16.mxu0 %v10516
  %10598 = vmatpush1.bf16.msra.mxu0 %v10515
  %10599 = vmatprep.subr.bf16.mxu0 %v10508
  %10600 = vmatpush1.bf16.msra.mxu0 %v10507
  %10601 = vmatprep.subr.bf16.mxu0 %v10500
  %10602 = vmatpush1.bf16.msra.mxu0 %v10499
  %10603 = vmatprep.subr.bf16.mxu0 %v10492
  %10604 = vmatpush1.bf16.msra.mxu0 %v10491
  %10605 = vmatprep.subr.bf16.mxu0 %v10484
  %10606 = vmatpush1.bf16.msra.mxu0 %v10483
  %10607 = vmatprep.subr.bf16.mxu0 %v10476
  %10608 = vmatpush1.bf16.msra.mxu0 %v10475
  %10609 = vmatprep.subr.bf16.mxu0 %v10468
  %10610 = vmatpush1.bf16.msra.mxu0 %v10467
  %10611 = vmatprep.subr.bf16.mxu0 0
  %10612 = vmatpush2.bf16.msra.mxu0 0
  %10613 = vmatprep.subr.bf16.mxu0 0
  %10614 = vmatpush2.bf16.msra.mxu0 0
  %10615 = vmatprep.subr.bf16.mxu0 0
  %10616 = vmatpush2.bf16.msra.mxu0 0
  %10617 = vmatprep.subr.bf16.mxu0 0
  %10618 = vmatpush2.bf16.msra.mxu0 0
  %10619 = vmatprep.subr.bf16.mxu0 0
  %10620 = vmatpush2.bf16.msra.mxu0 0
  %10621 = vmatprep.subr.bf16.mxu0 0
  %10622 = vmatpush2.bf16.msra.mxu0 0
  %10623 = vmatprep.subr.bf16.mxu0 0
  %10624 = vmatpush2.bf16.msra.mxu0 0
  %10625 = vmatprep.subr.bf16.mxu0 0
  %10626 = vmatpush2.bf16.msra.mxu0 0
  %10627 = vmatprep.mubr.bf16.mxu0 0
  %10628 = vmatmul.mubr.bf16.gmra.mxu0 %v10168
  %v10629 = vpop.f32.mrf.mxu0
  %v10630 = vadd.f32 %v10238, %v10629
  %v10631 = vpop.f32.mrf.mxu0
  %v10632 = vadd.f32 %v10242, %v10631
  %v10633 = vpop.f32.mrf.mxu0
  %v10634 = vpop.f32.mrf.mxu0
  %10635 = vdwg.mxu0
  %10636 = vmatprep.subr.bf16.mxu0 %v10526
  %10637 = vmatpush1.bf16.msra.mxu0 %v10525
  %10638 = vmatprep.subr.bf16.mxu0 %v10518
  %10639 = vmatpush1.bf16.msra.mxu0 %v10517
  %10640 = vmatprep.subr.bf16.mxu0 %v10510
  %10641 = vmatpush1.bf16.msra.mxu0 %v10509
  %10642 = vmatprep.subr.bf16.mxu0 %v10502
  %10643 = vmatpush1.bf16.msra.mxu0 %v10501
  %10644 = vmatprep.subr.bf16.mxu0 %v10494
  %10645 = vmatpush1.bf16.msra.mxu0 %v10493
  %10646 = vmatprep.subr.bf16.mxu0 %v10486
  %10647 = vmatpush1.bf16.msra.mxu0 %v10485
  %10648 = vmatprep.subr.bf16.mxu0 %v10478
  %10649 = vmatpush1.bf16.msra.mxu0 %v10477
  %10650 = vmatprep.subr.bf16.mxu0 %v10470
  %10651 = vmatpush1.bf16.msra.mxu0 %v10469
  %10652 = vmatprep.subr.bf16.mxu0 0
  %10653 = vmatpush2.bf16.msra.mxu0 0
  %10654 = vmatprep.subr.bf16.mxu0 0
  %10655 = vmatpush2.bf16.msra.mxu0 0
  %10656 = vmatprep.subr.bf16.mxu0 0
  %10657 = vmatpush2.bf16.msra.mxu0 0
  %10658 = vmatprep.subr.bf16.mxu0 0
  %10659 = vmatpush2.bf16.msra.mxu0 0
  %10660 = vmatprep.subr.bf16.mxu0 0
  %10661 = vmatpush2.bf16.msra.mxu0 0
  %10662 = vmatprep.subr.bf16.mxu0 0
  %10663 = vmatpush2.bf16.msra.mxu0 0
  %10664 = vmatprep.subr.bf16.mxu0 0
  %10665 = vmatpush2.bf16.msra.mxu0 0
  %10666 = vmatprep.subr.bf16.mxu0 0
  %10667 = vmatpush2.bf16.msra.mxu0 0
  %10668 = vmatprep.mubr.bf16.mxu0 0
  %10669 = vmatmul.mubr.bf16.gmra.mxu0 %v10168
  %v10670 = vpop.f32.mrf.mxu0
  %v10671 = vadd.f32 %v10246, %v10670
  %v10672 = vpop.f32.mrf.mxu0
  %v10673 = vadd.f32 %v10250, %v10672
  %v10674 = vpop.f32.mrf.mxu0
  %v10675 = vpop.f32.mrf.mxu0
  %10676 = vdwg.mxu0
  %10677 = vmatprep.subr.bf16.mxu0 %v10528
  %10678 = vmatpush1.bf16.msra.mxu0 %v10527
  %10679 = vmatprep.subr.bf16.mxu0 %v10520
  %10680 = vmatpush1.bf16.msra.mxu0 %v10519
  %10681 = vmatprep.subr.bf16.mxu0 %v10512
  %10682 = vmatpush1.bf16.msra.mxu0 %v10511
  %10683 = vmatprep.subr.bf16.mxu0 %v10504
  %10684 = vmatpush1.bf16.msra.mxu0 %v10503
  %10685 = vmatprep.subr.bf16.mxu0 %v10496
  %10686 = vmatpush1.bf16.msra.mxu0 %v10495
  %10687 = vmatprep.subr.bf16.mxu0 %v10488
  %10688 = vmatpush1.bf16.msra.mxu0 %v10487
  %10689 = vmatprep.subr.bf16.mxu0 %v10480
  %10690 = vmatpush1.bf16.msra.mxu0 %v10479
  %10691 = vmatprep.subr.bf16.mxu0 %v10472
  %10692 = vmatpush1.bf16.msra.mxu0 %v10471
  %10693 = vmatprep.subr.bf16.mxu0 0
  %10694 = vmatpush2.bf16.msra.mxu0 0
  %10695 = vmatprep.subr.bf16.mxu0 0
  %10696 = vmatpush2.bf16.msra.mxu0 0
  %10697 = vmatprep.subr.bf16.mxu0 0
  %10698 = vmatpush2.bf16.msra.mxu0 0
  %10699 = vmatprep.subr.bf16.mxu0 0
  %10700 = vmatpush2.bf16.msra.mxu0 0
  %10701 = vmatprep.subr.bf16.mxu0 0
  %10702 = vmatpush2.bf16.msra.mxu0 0
  %10703 = vmatprep.subr.bf16.mxu0 0
  %10704 = vmatpush2.bf16.msra.mxu0 0
  %10705 = vmatprep.subr.bf16.mxu0 0
  %10706 = vmatpush2.bf16.msra.mxu0 0
  %10707 = vmatprep.subr.bf16.mxu0 0
  %10708 = vmatpush2.bf16.msra.mxu0 0
  %10709 = vmatprep.mubr.bf16.mxu0 0
  %10710 = vmatmul.mubr.bf16.gmra.mxu0 %v10168
  %v10711 = vpop.f32.mrf.mxu0
  %v10712 = vadd.f32 %v10254, %v10711
  %v10713 = vpop.f32.mrf.mxu0
  %v10714 = vadd.f32 %v10258, %v10713
  %v10715 = vpop.f32.mrf.mxu0
  %v10716 = vpop.f32.mrf.mxu0
  %10717 = vdwg.mxu0
  %10718 = vmatprep.subr.bf16.mxu0 %v10530
  %10719 = vmatpush1.bf16.msra.mxu0 %v10529
  %10720 = vmatprep.subr.bf16.mxu0 %v10522
  %10721 = vmatpush1.bf16.msra.mxu0 %v10521
  %10722 = vmatprep.subr.bf16.mxu0 %v10514
  %10723 = vmatpush1.bf16.msra.mxu0 %v10513
  %10724 = vmatprep.subr.bf16.mxu0 %v10506
  %10725 = vmatpush1.bf16.msra.mxu0 %v10505
  %10726 = vmatprep.subr.bf16.mxu0 %v10498
  %10727 = vmatpush1.bf16.msra.mxu0 %v10497
  %10728 = vmatprep.subr.bf16.mxu0 %v10490
  %10729 = vmatpush1.bf16.msra.mxu0 %v10489
  %10730 = vmatprep.subr.bf16.mxu0 %v10482
  %10731 = vmatpush1.bf16.msra.mxu0 %v10481
  %10732 = vmatprep.subr.bf16.mxu0 %v10474
  %10733 = vmatpush1.bf16.msra.mxu0 %v10473
  %10734 = vmatprep.subr.bf16.mxu0 0
  %10735 = vmatpush2.bf16.msra.mxu0 0
  %10736 = vmatprep.subr.bf16.mxu0 0
  %10737 = vmatpush2.bf16.msra.mxu0 0
  %10738 = vmatprep.subr.bf16.mxu0 0
  %10739 = vmatpush2.bf16.msra.mxu0 0
  %10740 = vmatprep.subr.bf16.mxu0 0
  %10741 = vmatpush2.bf16.msra.mxu0 0
  %10742 = vmatprep.subr.bf16.mxu0 0
  %10743 = vmatpush2.bf16.msra.mxu0 0
  %10744 = vmatprep.subr.bf16.mxu0 0
  %10745 = vmatpush2.bf16.msra.mxu0 0
  %10746 = vmatprep.subr.bf16.mxu0 0
  %10747 = vmatpush2.bf16.msra.mxu0 0
  %10748 = vmatprep.subr.bf16.mxu0 0
  %10749 = vmatpush2.bf16.msra.mxu0 0
  %10750 = vmatprep.mubr.bf16.mxu0 0
  %10751 = vmatmul.mubr.bf16.gmra.mxu0 %v10168
  %v10752 = vpop.f32.mrf.mxu0
  %v10753 = vadd.f32 %v10262, %v10752
  %v10754 = vpop.f32.mrf.mxu0
  %v10755 = vadd.f32 %v10266, %v10754
  %v10756 = vpop.f32.mrf.mxu0
  %v10757 = vpop.f32.mrf.mxu0
  %10758 = vdwg.mxu0
  %v10759 = vlaneseq
  %v10760 = vand.u32 %v10759, 127
  %v10761 = vadd.s32 %v10760, 128
  %v10762 = vadd.s32 %v10760, 256
  %v10763 = vadd.s32 %v10760, 384
  %v10764 = vadd.s32 %v10760, 512
  %v10765 = vadd.s32 %v10760, 640
  %v10766 = vadd.s32 %v10760, 768
  %v10767 = vadd.s32 %v10760, 896
  %s10768 = sld [smem:[#allocation4]]
  %v10769 = vstv %s10768
  %vm10770 = vcmp.lt.s32.totalorder %v10760, %v10769
  %vm10771 = vcmp.lt.s32.totalorder %v10761, %v10769
  %vm10772 = vcmp.lt.s32.totalorder %v10762, %v10769
  %vm10773 = vcmp.lt.s32.totalorder %v10763, %v10769
  %vm10774 = vcmp.lt.s32.totalorder %v10764, %v10769
  %vm10775 = vcmp.lt.s32.totalorder %v10765, %v10769
  %vm10776 = vcmp.lt.s32.totalorder %v10766, %v10769
  %vm10777 = vcmp.lt.s32.totalorder %v10767, %v10769
  %v10778 = vsel %vm10770, %v10630, -inf
  %v10779 = vsel %vm10771, %v10632, -inf
  %v10780 = vsel %vm10772, %v10671, -inf
  %v10781 = vsel %vm10773, %v10673, -inf
  %v10782 = vsel %vm10774, %v10712, -inf
  %v10783 = vsel %vm10775, %v10714, -inf
  %v10784 = vsel %vm10776, %v10753, -inf
  %v10785 = vsel %vm10777, %v10755, -inf
  %10786 = vst [vmem:[%s10] sm:$0xff] %v10778
  %10787 = vst [vmem:[%s10 + $0x8] sm:$0xff] %v10779
  %10788 = vst [vmem:[%s10 + $0x10] sm:$0xff] %v10780
  %10789 = vst [vmem:[%s10 + $0x18] sm:$0xff] %v10781
  %10790 = vst [vmem:[%s10 + $0x20] sm:$0xff] %v10782
  %10791 = vst [vmem:[%s10 + $0x28] sm:$0xff] %v10783
  %10792 = vst [vmem:[%s10 + $0x30] sm:$0xff] %v10784
  %10793 = vst [vmem:[%s10 + $0x38] sm:$0xff] %v10785
  // Predicated region
  $region38: #{actor_forward.1} parent=0 // pred_check
    _
  $region39: #{actor_forward.1} parent=0 // pred_check_branch
    %10795 = sbr.rel (0) target = $region41
  $region40: #{actor_forward.1} parent=0 // pred_region
    _
  $region41: #{actor_forward.1} parent=0 // pred_fallthru
    _
  // Predicated region
  $region42: #{actor_forward.1} parent=0 // pred_check
    _
  $region43: #{actor_forward.1} parent=0 // pred_check_branch
    %10797 = sbr.rel (0) target = $region45
  $region44: #{actor_forward.1} parent=0 // pred_region
    _
  $region45: #{actor_forward.1} parent=0 // pred_fallthru
    _

</llo_original>
